<compile_context>
chip_gen: v6e
topology: v6e:2x2x1
jax: 0.10.0
libtpu: 0.0.40
codegen_flags: <defaults>
</compile_context>

<pallas_src>
import jax
import jax.numpy as jnp
from jax.experimental import pallas as pl
from jax.experimental.pallas import tpu as pltpu

C_MID = 256          # hard-coded inside PoseDecoder
NUM_FRAMES = 1
C_OUT = 6 * NUM_FRAMES
K_IM2COL = 9 * C_MID  # 2304


def _pose_decoder_kernel(x_ref, wsq_ref, bsq_ref, w1_ref, b1_ref,
                         w2_ref, b2_ref, w3_ref, b3_ref, out_ref,
                         pad_ref, col_ref):
    BT, H, W, Cenc = x_ref.shape
    HW = H * W
    M = BT * HW

    # --- zero ONLY the 1-pixel border of the padded scratch (== PyTorch padding=1).
    #     The interior is fully overwritten before every conv, so no full zero-fill needed.
    zrow = jnp.zeros((BT, 1, W + 2, C_MID), pad_ref.dtype)
    pad_ref[:, 0:1, :, :] = zrow
    pad_ref[:, H + 1:H + 2, :, :] = zrow
    zcol = jnp.zeros((BT, H + 2, 1, C_MID), pad_ref.dtype)
    pad_ref[:, :, 0:1, :] = zcol
    pad_ref[:, :, W + 1:W + 2, :] = zcol

    # --- conv_squeeze (1x1) + ReLU : (M, Cenc) @ (Cenc, 256), bf16 in / fp32 accumulate.
    #     (num_input_features == 1, so the channel concat is just `h` itself.)
    x = x_ref[...].reshape(M, Cenc)
    h = jnp.dot(x, wsq_ref[...], preferred_element_type=jnp.float32) + bsq_ref[...]
    h = jnp.maximum(h, 0.0)

    def conv3x3(h_in, w_ref, b_ref):
        # Write current activation (bf16) into the interior of the per-batch padded scratch.
        pad_ref[:, 1:H + 1, 1:W + 1, :] = (
            h_in.astype(pad_ref.dtype).reshape(BT, H, W, C_MID))
        # im2col: one row-slab VMEM read per ky; the 3 kx taps are sliced from the
        # in-register slab and stored at lane offsets t*256 (lane-tile aligned stores).
        # Then ONE (M, 2304) @ (2304, 256) matmul lets the MXU accumulate over all 9 taps.
        for ky in range(3):
            row = pad_ref[:, ky:ky + H, :, :]                     # (BT, H, W+2, C_MID)
            for kx in range(3):
                t = ky * 3 + kx
                col_ref[:, t * C_MID:(t + 1) * C_MID] = (
                    row[:, :, kx:kx + W, :].reshape(M, C_MID))
        acc = jnp.dot(col_ref[...], w_ref[...], preferred_element_type=jnp.float32)
        return acc + b_ref[...]

    h = jnp.maximum(conv3x3(h, w1_ref, b1_ref), 0.0)
    h = jnp.maximum(conv3x3(h, w2_ref, b2_ref), 0.0)

    # --- final 1x1 conv is linear, so take the spatial mean FIRST (per batch element),
    #     then a tiny (BT, 256) @ (256, 6) dot; scale by 0.01 and write the whole block.
    hm = jnp.mean(h.reshape(BT, HW, C_MID), axis=1)              # (BT, 256) fp32
    o = jnp.dot(hm.astype(w3_ref.dtype), w3_ref[...],
                preferred_element_type=jnp.float32) + b3_ref[...]
    out_ref[...] = (0.01 * o).astype(out_ref.dtype)


def pose_decoder_forward(input_features, params, *, block_b=None):
    """input_features: list (len == num_input_features == 1) of sequences; uses f[-1] (NCHW)."""
    assert len(input_features) == 1, "kernel implemented for default num_input_features=1"
    last = input_features[0][-1]                       # (B, C_enc, H, W), PyTorch NCHW
    x = jnp.transpose(last, (0, 2, 3, 1)).astype(jnp.bfloat16)   # NHWC, bf16 for the MXU
    B, H, W, Cenc = x.shape

    if block_b is None:
        block_b = B          # fold the whole batch -> single grid step, M = B*H*W
    assert B % block_b == 0, "batch must be divisible by the batch tile"
    grid = (B // block_b,)
    M = block_b * H * W

    out = pl.pallas_call(
        _pose_decoder_kernel,
        out_shape=jax.ShapeDtypeStruct((B, C_OUT), jnp.float32),
        grid=grid,
        in_specs=[
            pl.BlockSpec((block_b, H, W, Cenc), lambda i: (i, 0, 0, 0)),   # x, batch chunk
            pl.BlockSpec((Cenc, C_MID), lambda i: (0, 0)),                 # squeeze weight
            pl.BlockSpec((1, C_MID), lambda i: (0, 0)),                    # squeeze bias (f32)
            pl.BlockSpec((K_IM2COL, C_MID), lambda i: (0, 0)),             # pose conv0 weight
            pl.BlockSpec((1, C_MID), lambda i: (0, 0)),                    # pose conv0 bias
            pl.BlockSpec((K_IM2COL, C_MID), lambda i: (0, 0)),             # pose conv1 weight
            pl.BlockSpec((1, C_MID), lambda i: (0, 0)),                    # pose conv1 bias
            pl.BlockSpec((C_MID, C_OUT), lambda i: (0, 0)),                # pose conv2 weight
            pl.BlockSpec((1, C_OUT), lambda i: (0, 0)),                    # pose conv2 bias
        ],
        # Per-chunk output block: every grid step writes its own full block -> no
        # uninitialized resident rows, and the batch axis is safely "parallel".
        out_specs=pl.BlockSpec((block_b, C_OUT), lambda i: (i, 0)),
        scratch_shapes=[
            pltpu.VMEM((block_b, H + 2, W + 2, C_MID), jnp.bfloat16),  # zero-padded activation
            pltpu.VMEM((M, K_IM2COL), jnp.bfloat16),                   # im2col slab
        ],
        compiler_params=pltpu.CompilerParams(
            dimension_semantics=("parallel",),
            vmem_limit_bytes=32 << 20),
    )(x, params["wsq"], params["bsq"], params["w1"], params["b1"],
      params["w2"], params["b2"], params["w3"], params["b3"])

    return out.reshape(-1, 6)   # 0.01 scaling already applied in-kernel


def init_params(key, num_ch_enc_last):
    """Deterministic synthetic params. Returns (pytorch-layout, kernel-layout) dicts."""
    keys = jax.random.split(key, 8)
    s = 0.05
    pt = {
        "wsq": s * jax.random.normal(keys[0], (C_MID, num_ch_enc_last, 1, 1), jnp.float32),
        "bsq": s * jax.random.normal(keys[1], (C_MID,), jnp.float32),
        "w1": s * jax.random.normal(keys[2], (C_MID, 1 * C_MID, 3, 3), jnp.float32),
        "b1": s * jax.random.normal(keys[3], (C_MID,), jnp.float32),
        "w2": s * jax.random.normal(keys[4], (C_MID, C_MID, 3, 3), jnp.float32),
        "b2": s * jax.random.normal(keys[5], (C_MID,), jnp.float32),
        "w3": s * jax.random.normal(keys[6], (C_OUT, C_MID, 1, 1), jnp.float32),
        "b3": s * jax.random.normal(keys[7], (C_OUT,), jnp.float32),
    }

    def to_im2col(w_oihw):
        # OIHW -> (Kh*Kw*Cin, Cout), row index = (ky*3 + kx)*Cin + i  (matches col layout)
        o, i, kh, kw = w_oihw.shape
        return (jnp.transpose(w_oihw, (2, 3, 1, 0))
                .reshape(kh * kw * i, o).astype(jnp.bfloat16))

    kp = {
        "wsq": jnp.transpose(pt["wsq"][:, :, 0, 0], (1, 0)).astype(jnp.bfloat16),  # (Cenc,256)
        "bsq": pt["bsq"].reshape(1, C_MID),                                        # fp32
        "w1": to_im2col(pt["w1"]),                                                 # (2304,256)
        "b1": pt["b1"].reshape(1, C_MID),
        "w2": to_im2col(pt["w2"]),
        "b2": pt["b2"].reshape(1, C_MID),
        "w3": jnp.transpose(pt["w3"][:, :, 0, 0], (1, 0)).astype(jnp.bfloat16),    # (256,6)
        "b3": pt["b3"].reshape(1, C_OUT),
    }
    return pt, kp


def reference_forward(input_features, pt):
    """Pure-JAX fp32 reference mirroring the PyTorch forward (NCHW)."""
    def conv(x, w, b, pad):
        y = jax.lax.conv_general_dilated(
            x, w, window_strides=(1, 1), padding=[(pad, pad), (pad, pad)],
            dimension_numbers=("NCHW", "OIHW", "NCHW"),
            precision=jax.lax.Precision.HIGHEST)
        return y + b[None, :, None, None]

    last = [f[-1] for f in input_features]
    cat = jnp.concatenate(
        [jax.nn.relu(conv(f, pt["wsq"], pt["bsq"], 0)) for f in last], axis=1)
    out = jax.nn.relu(conv(cat, pt["w1"], pt["b1"], 1))
    out = jax.nn.relu(conv(out, pt["w2"], pt["b2"], 1))
    out = conv(out, pt["w3"], pt["b3"], 0)
    out = out.mean(3).mean(2)
    return 0.01 * out.reshape(-1, 6)


if __name__ == "__main__":
    key = jax.random.PRNGKey(0)
    k_feat, k_par = jax.random.split(key)

    B, Cenc, H, W = 2, 32, 8, 8              # small shapes; num_ch_enc[-1] = 32
    feat = jax.random.normal(k_feat, (B, Cenc, H, W), jnp.float32)
    input_features = [[feat]]                # num_input_features=1; forward takes f[-1]

    pt_params, kernel_params = init_params(k_par, Cenc)

    pose = pose_decoder_forward(input_features, kernel_params)
    pose = jax.block_until_ready(pose)

    ref = reference_forward(input_features, pt_params)
    assert pose.shape == (B * NUM_FRAMES, 6)
    # bf16 weights/activations with fp32 accumulation: tolerance loosened accordingly.
    assert jnp.allclose(pose, ref, atol=1e-4, rtol=5e-2), (pose, ref)

    print("KERNEL_OK")
</pallas_src>

<mosaic_0001>
module attributes {stable_mosaic.version = 11 : i64} {
  func.func @_pose_decoder_kernel(%arg0: i32, %arg1: memref<2x8x8x32xbf16, #tpu.memory_space<vmem>>, %arg2: memref<32x256xbf16, #tpu.memory_space<vmem>>, %arg3: memref<1x256xf32, #tpu.memory_space<vmem>>, %arg4: memref<2304x256xbf16, #tpu.memory_space<vmem>>, %arg5: memref<1x256xf32, #tpu.memory_space<vmem>>, %arg6: memref<2304x256xbf16, #tpu.memory_space<vmem>>, %arg7: memref<1x256xf32, #tpu.memory_space<vmem>>, %arg8: memref<256x6xbf16, #tpu.memory_space<vmem>>, %arg9: memref<1x6xf32, #tpu.memory_space<vmem>>, %arg10: memref<2x6xf32, #tpu.memory_space<vmem>>, %arg11: memref<2x10x10x256xbf16, #tpu.memory_space<vmem>>, %arg12: memref<128x2304xbf16, #tpu.memory_space<vmem>>) attributes {dimension_semantics = [#tpu.dimension_semantics<parallel>], iteration_bounds = array<i64: 1>, scalar_prefetch = 0 : i64, scratch_operands = 2 : i64, tpu.core_type = #tpu.core_type<tc>, window_params = [{transform_indices = @transform_0, window_bounds = array<i64: 2, 8, 8, 32>}, {pipeline_mode = #tpu.pipeline_mode<synchronous>, transform_indices = @transform_1, window_bounds = array<i64: 32, 256>}, {pipeline_mode = #tpu.pipeline_mode<synchronous>, transform_indices = @transform_2, window_bounds = array<i64: 1, 256>}, {pipeline_mode = #tpu.pipeline_mode<synchronous>, transform_indices = @transform_3, window_bounds = array<i64: 2304, 256>}, {pipeline_mode = #tpu.pipeline_mode<synchronous>, transform_indices = @transform_4, window_bounds = array<i64: 1, 256>}, {pipeline_mode = #tpu.pipeline_mode<synchronous>, transform_indices = @transform_5, window_bounds = array<i64: 2304, 256>}, {pipeline_mode = #tpu.pipeline_mode<synchronous>, transform_indices = @transform_6, window_bounds = array<i64: 1, 256>}, {pipeline_mode = #tpu.pipeline_mode<synchronous>, transform_indices = @transform_7, window_bounds = array<i64: 256, 6>}, {pipeline_mode = #tpu.pipeline_mode<synchronous>, transform_indices = @transform_8, window_bounds = array<i64: 1, 6>}, {transform_indices = @transform_9, window_bounds = array<i64: 2, 6>}]} {
    %cst = arith.constant 0.000000e+00 : bf16
    %0 = vector.broadcast %cst : bf16 to vector<2x1x10x256xbf16>
    %c0 = arith.constant 0 : index
    %c0_0 = arith.constant 0 : index
    %c0_1 = arith.constant 0 : index
    %c0_2 = arith.constant 0 : index
    %1 = vector.load %arg11[%c0, %c0_0, %c0_1, %c0_2] : memref<2x10x10x256xbf16, #tpu.memory_space<vmem>>, vector<2x1x10x256xbf16>
    tpu.vector_store %arg11[%c0, %c0_0, %c0_1, %c0_2], %0 {strides = array<i32>} : memref<2x10x10x256xbf16, #tpu.memory_space<vmem>>, vector<2x1x10x256xbf16>,
    %c0_3 = arith.constant 0 : index
    %c9 = arith.constant 9 : index
    %c0_4 = arith.constant 0 : index
    %c0_5 = arith.constant 0 : index
    %2 = vector.load %arg11[%c0_3, %c9, %c0_4, %c0_5] : memref<2x10x10x256xbf16, #tpu.memory_space<vmem>>, vector<2x1x10x256xbf16>
    tpu.vector_store %arg11[%c0_3, %c9, %c0_4, %c0_5], %0 {strides = array<i32>} : memref<2x10x10x256xbf16, #tpu.memory_space<vmem>>, vector<2x1x10x256xbf16>,
    %cst_6 = arith.constant 0.000000e+00 : bf16
    %3 = vector.broadcast %cst_6 : bf16 to vector<2x10x1x256xbf16>
    %c0_7 = arith.constant 0 : index
    %c0_8 = arith.constant 0 : index
    %c0_9 = arith.constant 0 : index
    %c0_10 = arith.constant 0 : index
    %4 = vector.load %arg11[%c0_7, %c0_8, %c0_9, %c0_10] : memref<2x10x10x256xbf16, #tpu.memory_space<vmem>>, vector<2x10x1x256xbf16>
    tpu.vector_store %arg11[%c0_7, %c0_8, %c0_9, %c0_10], %3 {strides = array<i32>} : memref<2x10x10x256xbf16, #tpu.memory_space<vmem>>, vector<2x10x1x256xbf16>,
    %c0_11 = arith.constant 0 : index
    %c0_12 = arith.constant 0 : index
    %c9_13 = arith.constant 9 : index
    %c0_14 = arith.constant 0 : index
    %5 = vector.load %arg11[%c0_11, %c0_12, %c9_13, %c0_14] : memref<2x10x10x256xbf16, #tpu.memory_space<vmem>>, vector<2x10x1x256xbf16>
    tpu.vector_store %arg11[%c0_11, %c0_12, %c9_13, %c0_14], %3 {strides = array<i32>} : memref<2x10x10x256xbf16, #tpu.memory_space<vmem>>, vector<2x10x1x256xbf16>,
    %c0_15 = arith.constant 0 : index
    %c0_16 = arith.constant 0 : index
    %c0_17 = arith.constant 0 : index
    %c0_18 = arith.constant 0 : index
    %6 = vector.load %arg1[%c0_15, %c0_16, %c0_17, %c0_18] : memref<2x8x8x32xbf16, #tpu.memory_space<vmem>>, vector<2x8x8x32xbf16>
    %7 = vector.shape_cast %6 : vector<2x8x8x32xbf16> to vector<128x32xbf16>
    %c0_19 = arith.constant 0 : index
    %c0_20 = arith.constant 0 : index
    %8 = vector.load %arg2[%c0_19, %c0_20] : memref<32x256xbf16, #tpu.memory_space<vmem>>, vector<32x256xbf16>
    %cst_21 = arith.constant dense<0.000000e+00> : vector<128x256xf32>
    %9 = tpu.matmul %7, %8, %cst_21 {dimension_numbers = #tpu.dot_dimension_numbers<[1], [0], [0], [1], [0, 0, 1, 1], [], []>} : vector<128x32xbf16>, vector<32x256xbf16>, vector<128x256xf32> -> vector<128x256xf32>
    %c0_22 = arith.constant 0 : index
    %c0_23 = arith.constant 0 : index
    %10 = vector.load %arg3[%c0_22, %c0_23] : memref<1x256xf32, #tpu.memory_space<vmem>>, vector<1x256xf32>
    %11 = vector.broadcast %10 : vector<1x256xf32> to vector<128x256xf32>
    %12 = arith.addf %9, %11 : vector<128x256xf32>
    %cst_24 = arith.constant 0.000000e+00 : f32
    %13 = vector.broadcast %cst_24 : f32 to vector<128x256xf32>
    %14 = arith.maximumf %12, %13 : vector<128x256xf32>
    %15 = arith.truncf %14 : vector<128x256xf32> to vector<128x256xbf16>
    %16 = vector.shape_cast %15 : vector<128x256xbf16> to vector<2x8x8x256xbf16>
    %c0_25 = arith.constant 0 : index
    %c1 = arith.constant 1 : index
    %c1_26 = arith.constant 1 : index
    %c0_27 = arith.constant 0 : index
    %17 = vector.load %arg11[%c0_25, %c1, %c1_26, %c0_27] : memref<2x10x10x256xbf16, #tpu.memory_space<vmem>>, vector<2x8x8x256xbf16>
    tpu.vector_store %arg11[%c0_25, %c1, %c1_26, %c0_27], %16 {strides = array<i32>} : memref<2x10x10x256xbf16, #tpu.memory_space<vmem>>, vector<2x8x8x256xbf16>,
    %c0_28 = arith.constant 0 : index
    %c0_29 = arith.constant 0 : index
    %c0_30 = arith.constant 0 : index
    %c0_31 = arith.constant 0 : index
    %18 = vector.load %arg11[%c0_28, %c0_29, %c0_30, %c0_31] : memref<2x10x10x256xbf16, #tpu.memory_space<vmem>>, vector<2x8x10x256xbf16>
    %19 = vector.extract_strided_slice %18 {offsets = [0, 0, 0, 0], sizes = [2, 8, 8, 256], strides = [1, 1, 1, 1]} : vector<2x8x10x256xbf16> to vector<2x8x8x256xbf16>
    %20 = vector.shape_cast %19 : vector<2x8x8x256xbf16> to vector<128x256xbf16>
    %c0_32 = arith.constant 0 : index
    %c0_33 = arith.constant 0 : index
    %21 = vector.load %arg12[%c0_32, %c0_33] : memref<128x2304xbf16, #tpu.memory_space<vmem>>, vector<128x256xbf16>
    tpu.vector_store %arg12[%c0_32, %c0_33], %20 {strides = array<i32>} : memref<128x2304xbf16, #tpu.memory_space<vmem>>, vector<128x256xbf16>,
    %22 = vector.extract_strided_slice %18 {offsets = [0, 0, 1, 0], sizes = [2, 8, 8, 256], strides = [1, 1, 1, 1]} : vector<2x8x10x256xbf16> to vector<2x8x8x256xbf16>
    %23 = vector.shape_cast %22 : vector<2x8x8x256xbf16> to vector<128x256xbf16>
    %c0_34 = arith.constant 0 : index
    %c256 = arith.constant 256 : index
    %24 = vector.load %arg12[%c0_34, %c256] : memref<128x2304xbf16, #tpu.memory_space<vmem>>, vector<128x256xbf16>
    tpu.vector_store %arg12[%c0_34, %c256], %23 {strides = array<i32>} : memref<128x2304xbf16, #tpu.memory_space<vmem>>, vector<128x256xbf16>,
    %25 = vector.extract_strided_slice %18 {offsets = [0, 0, 2, 0], sizes = [2, 8, 8, 256], strides = [1, 1, 1, 1]} : vector<2x8x10x256xbf16> to vector<2x8x8x256xbf16>
    %26 = vector.shape_cast %25 : vector<2x8x8x256xbf16> to vector<128x256xbf16>
    %c0_35 = arith.constant 0 : index
    %c512 = arith.constant 512 : index
    %27 = vector.load %arg12[%c0_35, %c512] : memref<128x2304xbf16, #tpu.memory_space<vmem>>, vector<128x256xbf16>
    tpu.vector_store %arg12[%c0_35, %c512], %26 {strides = array<i32>} : memref<128x2304xbf16, #tpu.memory_space<vmem>>, vector<128x256xbf16>,
    %c0_36 = arith.constant 0 : index
    %c1_37 = arith.constant 1 : index
    %c0_38 = arith.constant 0 : index
    %c0_39 = arith.constant 0 : index
    %28 = vector.load %arg11[%c0_36, %c1_37, %c0_38, %c0_39] : memref<2x10x10x256xbf16, #tpu.memory_space<vmem>>, vector<2x8x10x256xbf16>
    %29 = vector.extract_strided_slice %28 {offsets = [0, 0, 0, 0], sizes = [2, 8, 8, 256], strides = [1, 1, 1, 1]} : vector<2x8x10x256xbf16> to vector<2x8x8x256xbf16>
    %30 = vector.shape_cast %29 : vector<2x8x8x256xbf16> to vector<128x256xbf16>
    %c0_40 = arith.constant 0 : index
    %c768 = arith.constant 768 : index
    %31 = vector.load %arg12[%c0_40, %c768] : memref<128x2304xbf16, #tpu.memory_space<vmem>>, vector<128x256xbf16>
    tpu.vector_store %arg12[%c0_40, %c768], %30 {strides = array<i32>} : memref<128x2304xbf16, #tpu.memory_space<vmem>>, vector<128x256xbf16>,
    %32 = vector.extract_strided_slice %28 {offsets = [0, 0, 1, 0], sizes = [2, 8, 8, 256], strides = [1, 1, 1, 1]} : vector<2x8x10x256xbf16> to vector<2x8x8x256xbf16>
    %33 = vector.shape_cast %32 : vector<2x8x8x256xbf16> to vector<128x256xbf16>
    %c0_41 = arith.constant 0 : index
    %c1024 = arith.constant 1024 : index
    %34 = vector.load %arg12[%c0_41, %c1024] : memref<128x2304xbf16, #tpu.memory_space<vmem>>, vector<128x256xbf16>
    tpu.vector_store %arg12[%c0_41, %c1024], %33 {strides = array<i32>} : memref<128x2304xbf16, #tpu.memory_space<vmem>>, vector<128x256xbf16>,
    %35 = vector.extract_strided_slice %28 {offsets = [0, 0, 2, 0], sizes = [2, 8, 8, 256], strides = [1, 1, 1, 1]} : vector<2x8x10x256xbf16> to vector<2x8x8x256xbf16>
    %36 = vector.shape_cast %35 : vector<2x8x8x256xbf16> to vector<128x256xbf16>
    %c0_42 = arith.constant 0 : index
    %c1280 = arith.constant 1280 : index
    %37 = vector.load %arg12[%c0_42, %c1280] : memref<128x2304xbf16, #tpu.memory_space<vmem>>, vector<128x256xbf16>
    tpu.vector_store %arg12[%c0_42, %c1280], %36 {strides = array<i32>} : memref<128x2304xbf16, #tpu.memory_space<vmem>>, vector<128x256xbf16>,
    %c0_43 = arith.constant 0 : index
    %c2 = arith.constant 2 : index
    %c0_44 = arith.constant 0 : index
    %c0_45 = arith.constant 0 : index
    %38 = vector.load %arg11[%c0_43, %c2, %c0_44, %c0_45] : memref<2x10x10x256xbf16, #tpu.memory_space<vmem>>, vector<2x8x10x256xbf16>
    %39 = vector.extract_strided_slice %38 {offsets = [0, 0, 0, 0], sizes = [2, 8, 8, 256], strides = [1, 1, 1, 1]} : vector<2x8x10x256xbf16> to vector<2x8x8x256xbf16>
    %40 = vector.shape_cast %39 : vector<2x8x8x256xbf16> to vector<128x256xbf16>
    %c0_46 = arith.constant 0 : index
    %c1536 = arith.constant 1536 : index
    %41 = vector.load %arg12[%c0_46, %c1536] : memref<128x2304xbf16, #tpu.memory_space<vmem>>, vector<128x256xbf16>
    tpu.vector_store %arg12[%c0_46, %c1536], %40 {strides = array<i32>} : memref<128x2304xbf16, #tpu.memory_space<vmem>>, vector<128x256xbf16>,
    %42 = vector.extract_strided_slice %38 {offsets = [0, 0, 1, 0], sizes = [2, 8, 8, 256], strides = [1, 1, 1, 1]} : vector<2x8x10x256xbf16> to vector<2x8x8x256xbf16>
    %43 = vector.shape_cast %42 : vector<2x8x8x256xbf16> to vector<128x256xbf16>
    %c0_47 = arith.constant 0 : index
    %c1792 = arith.constant 1792 : index
    %44 = vector.load %arg12[%c0_47, %c1792] : memref<128x2304xbf16, #tpu.memory_space<vmem>>, vector<128x256xbf16>
    tpu.vector_store %arg12[%c0_47, %c1792], %43 {strides = array<i32>} : memref<128x2304xbf16, #tpu.memory_space<vmem>>, vector<128x256xbf16>,
    %45 = vector.extract_strided_slice %38 {offsets = [0, 0, 2, 0], sizes = [2, 8, 8, 256], strides = [1, 1, 1, 1]} : vector<2x8x10x256xbf16> to vector<2x8x8x256xbf16>
    %46 = vector.shape_cast %45 : vector<2x8x8x256xbf16> to vector<128x256xbf16>
    %c0_48 = arith.constant 0 : index
    %c2048 = arith.constant 2048 : index
    %47 = vector.load %arg12[%c0_48, %c2048] : memref<128x2304xbf16, #tpu.memory_space<vmem>>, vector<128x256xbf16>
    tpu.vector_store %arg12[%c0_48, %c2048], %46 {strides = array<i32>} : memref<128x2304xbf16, #tpu.memory_space<vmem>>, vector<128x256xbf16>,
    %c0_49 = arith.constant 0 : index
    %c0_50 = arith.constant 0 : index
    %48 = vector.load %arg12[%c0_49, %c0_50] : memref<128x2304xbf16, #tpu.memory_space<vmem>>, vector<128x2304xbf16>
    %c0_51 = arith.constant 0 : index
    %c0_52 = arith.constant 0 : index
    %49 = vector.load %arg4[%c0_51, %c0_52] : memref<2304x256xbf16, #tpu.memory_space<vmem>>, vector<2304x256xbf16>
    %cst_53 = arith.constant dense<0.000000e+00> : vector<128x256xf32>
    %50 = tpu.matmul %48, %49, %cst_53 {dimension_numbers = #tpu.dot_dimension_numbers<[1], [0], [0], [1], [0, 0, 1, 1], [], []>} : vector<128x2304xbf16>, vector<2304x256xbf16>, vector<128x256xf32> -> vector<128x256xf32>
    %c0_54 = arith.constant 0 : index
    %c0_55 = arith.constant 0 : index
    %51 = vector.load %arg5[%c0_54, %c0_55] : memref<1x256xf32, #tpu.memory_space<vmem>>, vector<1x256xf32>
    %52 = vector.broadcast %51 : vector<1x256xf32> to vector<128x256xf32>
    %53 = arith.addf %50, %52 : vector<128x256xf32>
    %cst_56 = arith.constant 0.000000e+00 : f32
    %54 = vector.broadcast %cst_56 : f32 to vector<128x256xf32>
    %55 = arith.maximumf %53, %54 : vector<128x256xf32>
    %56 = arith.truncf %55 : vector<128x256xf32> to vector<128x256xbf16>
    %57 = vector.shape_cast %56 : vector<128x256xbf16> to vector<2x8x8x256xbf16>
    %c0_57 = arith.constant 0 : index
    %c1_58 = arith.constant 1 : index
    %c1_59 = arith.constant 1 : index
    %c0_60 = arith.constant 0 : index
    %58 = vector.load %arg11[%c0_57, %c1_58, %c1_59, %c0_60] : memref<2x10x10x256xbf16, #tpu.memory_space<vmem>>, vector<2x8x8x256xbf16>
    tpu.vector_store %arg11[%c0_57, %c1_58, %c1_59, %c0_60], %57 {strides = array<i32>} : memref<2x10x10x256xbf16, #tpu.memory_space<vmem>>, vector<2x8x8x256xbf16>,
    %c0_61 = arith.constant 0 : index
    %c0_62 = arith.constant 0 : index
    %c0_63 = arith.constant 0 : index
    %c0_64 = arith.constant 0 : index
    %59 = vector.load %arg11[%c0_61, %c0_62, %c0_63, %c0_64] : memref<2x10x10x256xbf16, #tpu.memory_space<vmem>>, vector<2x8x10x256xbf16>
    %60 = vector.extract_strided_slice %59 {offsets = [0, 0, 0, 0], sizes = [2, 8, 8, 256], strides = [1, 1, 1, 1]} : vector<2x8x10x256xbf16> to vector<2x8x8x256xbf16>
    %61 = vector.shape_cast %60 : vector<2x8x8x256xbf16> to vector<128x256xbf16>
    %c0_65 = arith.constant 0 : index
    %c0_66 = arith.constant 0 : index
    %62 = vector.load %arg12[%c0_65, %c0_66] : memref<128x2304xbf16, #tpu.memory_space<vmem>>, vector<128x256xbf16>
    tpu.vector_store %arg12[%c0_65, %c0_66], %61 {strides = array<i32>} : memref<128x2304xbf16, #tpu.memory_space<vmem>>, vector<128x256xbf16>,
    %63 = vector.extract_strided_slice %59 {offsets = [0, 0, 1, 0], sizes = [2, 8, 8, 256], strides = [1, 1, 1, 1]} : vector<2x8x10x256xbf16> to vector<2x8x8x256xbf16>
    %64 = vector.shape_cast %63 : vector<2x8x8x256xbf16> to vector<128x256xbf16>
    %c0_67 = arith.constant 0 : index
    %c256_68 = arith.constant 256 : index
    %65 = vector.load %arg12[%c0_67, %c256_68] : memref<128x2304xbf16, #tpu.memory_space<vmem>>, vector<128x256xbf16>
    tpu.vector_store %arg12[%c0_67, %c256_68], %64 {strides = array<i32>} : memref<128x2304xbf16, #tpu.memory_space<vmem>>, vector<128x256xbf16>,
    %66 = vector.extract_strided_slice %59 {offsets = [0, 0, 2, 0], sizes = [2, 8, 8, 256], strides = [1, 1, 1, 1]} : vector<2x8x10x256xbf16> to vector<2x8x8x256xbf16>
    %67 = vector.shape_cast %66 : vector<2x8x8x256xbf16> to vector<128x256xbf16>
    %c0_69 = arith.constant 0 : index
    %c512_70 = arith.constant 512 : index
    %68 = vector.load %arg12[%c0_69, %c512_70] : memref<128x2304xbf16, #tpu.memory_space<vmem>>, vector<128x256xbf16>
    tpu.vector_store %arg12[%c0_69, %c512_70], %67 {strides = array<i32>} : memref<128x2304xbf16, #tpu.memory_space<vmem>>, vector<128x256xbf16>,
    %c0_71 = arith.constant 0 : index
    %c1_72 = arith.constant 1 : index
    %c0_73 = arith.constant 0 : index
    %c0_74 = arith.constant 0 : index
    %69 = vector.load %arg11[%c0_71, %c1_72, %c0_73, %c0_74] : memref<2x10x10x256xbf16, #tpu.memory_space<vmem>>, vector<2x8x10x256xbf16>
    %70 = vector.extract_strided_slice %69 {offsets = [0, 0, 0, 0], sizes = [2, 8, 8, 256], strides = [1, 1, 1, 1]} : vector<2x8x10x256xbf16> to vector<2x8x8x256xbf16>
    %71 = vector.shape_cast %70 : vector<2x8x8x256xbf16> to vector<128x256xbf16>
    %c0_75 = arith.constant 0 : index
    %c768_76 = arith.constant 768 : index
    %72 = vector.load %arg12[%c0_75, %c768_76] : memref<128x2304xbf16, #tpu.memory_space<vmem>>, vector<128x256xbf16>
    tpu.vector_store %arg12[%c0_75, %c768_76], %71 {strides = array<i32>} : memref<128x2304xbf16, #tpu.memory_space<vmem>>, vector<128x256xbf16>,
    %73 = vector.extract_strided_slice %69 {offsets = [0, 0, 1, 0], sizes = [2, 8, 8, 256], strides = [1, 1, 1, 1]} : vector<2x8x10x256xbf16> to vector<2x8x8x256xbf16>
    %74 = vector.shape_cast %73 : vector<2x8x8x256xbf16> to vector<128x256xbf16>
    %c0_77 = arith.constant 0 : index
    %c1024_78 = arith.constant 1024 : index
    %75 = vector.load %arg12[%c0_77, %c1024_78] : memref<128x2304xbf16, #tpu.memory_space<vmem>>, vector<128x256xbf16>
    tpu.vector_store %arg12[%c0_77, %c1024_78], %74 {strides = array<i32>} : memref<128x2304xbf16, #tpu.memory_space<vmem>>, vector<128x256xbf16>,
    %76 = vector.extract_strided_slice %69 {offsets = [0, 0, 2, 0], sizes = [2, 8, 8, 256], strides = [1, 1, 1, 1]} : vector<2x8x10x256xbf16> to vector<2x8x8x256xbf16>
    %77 = vector.shape_cast %76 : vector<2x8x8x256xbf16> to vector<128x256xbf16>
    %c0_79 = arith.constant 0 : index
    %c1280_80 = arith.constant 1280 : index
    %78 = vector.load %arg12[%c0_79, %c1280_80] : memref<128x2304xbf16, #tpu.memory_space<vmem>>, vector<128x256xbf16>
    tpu.vector_store %arg12[%c0_79, %c1280_80], %77 {strides = array<i32>} : memref<128x2304xbf16, #tpu.memory_space<vmem>>, vector<128x256xbf16>,
    %c0_81 = arith.constant 0 : index
    %c2_82 = arith.constant 2 : index
    %c0_83 = arith.constant 0 : index
    %c0_84 = arith.constant 0 : index
    %79 = vector.load %arg11[%c0_81, %c2_82, %c0_83, %c0_84] : memref<2x10x10x256xbf16, #tpu.memory_space<vmem>>, vector<2x8x10x256xbf16>
    %80 = vector.extract_strided_slice %79 {offsets = [0, 0, 0, 0], sizes = [2, 8, 8, 256], strides = [1, 1, 1, 1]} : vector<2x8x10x256xbf16> to vector<2x8x8x256xbf16>
    %81 = vector.shape_cast %80 : vector<2x8x8x256xbf16> to vector<128x256xbf16>
    %c0_85 = arith.constant 0 : index
    %c1536_86 = arith.constant 1536 : index
    %82 = vector.load %arg12[%c0_85, %c1536_86] : memref<128x2304xbf16, #tpu.memory_space<vmem>>, vector<128x256xbf16>
    tpu.vector_store %arg12[%c0_85, %c1536_86], %81 {strides = array<i32>} : memref<128x2304xbf16, #tpu.memory_space<vmem>>, vector<128x256xbf16>,
    %83 = vector.extract_strided_slice %79 {offsets = [0, 0, 1, 0], sizes = [2, 8, 8, 256], strides = [1, 1, 1, 1]} : vector<2x8x10x256xbf16> to vector<2x8x8x256xbf16>
    %84 = vector.shape_cast %83 : vector<2x8x8x256xbf16> to vector<128x256xbf16>
    %c0_87 = arith.constant 0 : index
    %c1792_88 = arith.constant 1792 : index
    %85 = vector.load %arg12[%c0_87, %c1792_88] : memref<128x2304xbf16, #tpu.memory_space<vmem>>, vector<128x256xbf16>
    tpu.vector_store %arg12[%c0_87, %c1792_88], %84 {strides = array<i32>} : memref<128x2304xbf16, #tpu.memory_space<vmem>>, vector<128x256xbf16>,
    %86 = vector.extract_strided_slice %79 {offsets = [0, 0, 2, 0], sizes = [2, 8, 8, 256], strides = [1, 1, 1, 1]} : vector<2x8x10x256xbf16> to vector<2x8x8x256xbf16>
    %87 = vector.shape_cast %86 : vector<2x8x8x256xbf16> to vector<128x256xbf16>
    %c0_89 = arith.constant 0 : index
    %c2048_90 = arith.constant 2048 : index
    %88 = vector.load %arg12[%c0_89, %c2048_90] : memref<128x2304xbf16, #tpu.memory_space<vmem>>, vector<128x256xbf16>
    tpu.vector_store %arg12[%c0_89, %c2048_90], %87 {strides = array<i32>} : memref<128x2304xbf16, #tpu.memory_space<vmem>>, vector<128x256xbf16>,
    %c0_91 = arith.constant 0 : index
    %c0_92 = arith.constant 0 : index
    %89 = vector.load %arg12[%c0_91, %c0_92] : memref<128x2304xbf16, #tpu.memory_space<vmem>>, vector<128x2304xbf16>
    %c0_93 = arith.constant 0 : index
    %c0_94 = arith.constant 0 : index
    %90 = vector.load %arg6[%c0_93, %c0_94] : memref<2304x256xbf16, #tpu.memory_space<vmem>>, vector<2304x256xbf16>
    %cst_95 = arith.constant dense<0.000000e+00> : vector<128x256xf32>
    %91 = tpu.matmul %89, %90, %cst_95 {dimension_numbers = #tpu.dot_dimension_numbers<[1], [0], [0], [1], [0, 0, 1, 1], [], []>} : vector<128x2304xbf16>, vector<2304x256xbf16>, vector<128x256xf32> -> vector<128x256xf32>
    %c0_96 = arith.constant 0 : index
    %c0_97 = arith.constant 0 : index
    %92 = vector.load %arg7[%c0_96, %c0_97] : memref<1x256xf32, #tpu.memory_space<vmem>>, vector<1x256xf32>
    %93 = vector.broadcast %92 : vector<1x256xf32> to vector<128x256xf32>
    %94 = arith.addf %91, %93 : vector<128x256xf32>
    %cst_98 = arith.constant 0.000000e+00 : f32
    %95 = vector.broadcast %cst_98 : f32 to vector<128x256xf32>
    %96 = arith.maximumf %94, %95 : vector<128x256xf32>
    %97 = vector.shape_cast %96 : vector<128x256xf32> to vector<2x64x256xf32>
    %cst_99 = arith.constant dense<0.000000e+00> : vector<2x256xf32>
    %98 = vector.multi_reduction <add>, %97, %cst_99 [1] : vector<2x64x256xf32> to vector<2x256xf32>
    %cst_100 = arith.constant 6.400000e+01 : f32
    %99 = vector.broadcast %cst_100 : f32 to vector<2x256xf32>
    %100 = arith.divf %98, %99 : vector<2x256xf32>
    %101 = arith.truncf %100 : vector<2x256xf32> to vector<2x256xbf16>
    %c0_101 = arith.constant 0 : index
    %c0_102 = arith.constant 0 : index
    %102 = vector.load %arg8[%c0_101, %c0_102] : memref<256x6xbf16, #tpu.memory_space<vmem>>, vector<256x6xbf16>
    %cst_103 = arith.constant dense<0.000000e+00> : vector<2x6xf32>
    %103 = tpu.matmul %101, %102, %cst_103 {dimension_numbers = #tpu.dot_dimension_numbers<[1], [0], [0], [1], [0, 0, 1, 1], [], []>} : vector<2x256xbf16>, vector<256x6xbf16>, vector<2x6xf32> -> vector<2x6xf32>
    %c0_104 = arith.constant 0 : index
    %c0_105 = arith.constant 0 : index
    %104 = vector.load %arg9[%c0_104, %c0_105] : memref<1x6xf32, #tpu.memory_space<vmem>>, vector<1x6xf32>
    %105 = vector.broadcast %104 : vector<1x6xf32> to vector<2x6xf32>
    %106 = arith.addf %103, %105 : vector<2x6xf32>
    %cst_106 = arith.constant 0.00999999977 : f32
    %107 = vector.broadcast %cst_106 : f32 to vector<2x6xf32>
    %108 = arith.mulf %107, %106 : vector<2x6xf32>
    %c0_107 = arith.constant 0 : index
    %c0_108 = arith.constant 0 : index
    %109 = vector.load %arg10[%c0_107, %c0_108] : memref<2x6xf32, #tpu.memory_space<vmem>>, vector<2x6xf32>
    tpu.vector_store %arg10[%c0_107, %c0_108], %108 {strides = array<i32>} : memref<2x6xf32, #tpu.memory_space<vmem>>, vector<2x6xf32>,
    return
  }
  func.func @transform_0(%arg0: i32) -> (i32, i32, i32, i32) {
    %c0_i32 = arith.constant 0 : i32
    %c0_i32_0 = arith.constant 0 : i32
    %c0_i32_1 = arith.constant 0 : i32
    %c0_i32_2 = arith.constant 0 : i32
    return %arg0, %c0_i32, %c0_i32_0, %c0_i32_1 : i32, i32, i32, i32
  }
  func.func @transform_1(%arg0: i32) -> (i32, i32) {
    %c0_i32 = arith.constant 0 : i32
    %c0_i32_0 = arith.constant 0 : i32
    %c0_i32_1 = arith.constant 0 : i32
    return %c0_i32, %c0_i32_0 : i32, i32
  }
  func.func @transform_2(%arg0: i32) -> (i32, i32) {
    %c0_i32 = arith.constant 0 : i32
    %c0_i32_0 = arith.constant 0 : i32
    %c0_i32_1 = arith.constant 0 : i32
    return %c0_i32, %c0_i32_0 : i32, i32
  }
  func.func @transform_3(%arg0: i32) -> (i32, i32) {
    %c0_i32 = arith.constant 0 : i32
    %c0_i32_0 = arith.constant 0 : i32
    %c0_i32_1 = arith.constant 0 : i32
    return %c0_i32, %c0_i32_0 : i32, i32
  }
  func.func @transform_4(%arg0: i32) -> (i32, i32) {
    %c0_i32 = arith.constant 0 : i32
    %c0_i32_0 = arith.constant 0 : i32
    %c0_i32_1 = arith.constant 0 : i32
    return %c0_i32, %c0_i32_0 : i32, i32
  }
  func.func @transform_5(%arg0: i32) -> (i32, i32) {
    %c0_i32 = arith.constant 0 : i32
    %c0_i32_0 = arith.constant 0 : i32
    %c0_i32_1 = arith.constant 0 : i32
    return %c0_i32, %c0_i32_0 : i32, i32
  }
  func.func @transform_6(%arg0: i32) -> (i32, i32) {
    %c0_i32 = arith.constant 0 : i32
    %c0_i32_0 = arith.constant 0 : i32
    %c0_i32_1 = arith.constant 0 : i32
    return %c0_i32, %c0_i32_0 : i32, i32
  }
  func.func @transform_7(%arg0: i32) -> (i32, i32) {
    %c0_i32 = arith.constant 0 : i32
    %c0_i32_0 = arith.constant 0 : i32
    %c0_i32_1 = arith.constant 0 : i32
    return %c0_i32, %c0_i32_0 : i32, i32
  }
  func.func @transform_8(%arg0: i32) -> (i32, i32) {
    %c0_i32 = arith.constant 0 : i32
    %c0_i32_0 = arith.constant 0 : i32
    %c0_i32_1 = arith.constant 0 : i32
    return %c0_i32, %c0_i32_0 : i32, i32
  }
  func.func @transform_9(%arg0: i32) -> (i32, i32) {
    %c0_i32 = arith.constant 0 : i32
    %c0_i32_0 = arith.constant 0 : i32
    return %arg0, %c0_i32 : i32, i32
  }
}

</mosaic_0001>

<llo_original>
// kernel: tpu_custom_call.1
$region0: #{tpu_custom_call.1}
  #allocation0 [shape = 'u32[]', space=smem, size = 0x4, offset = 0x4, fixed_abs, tag = 'smem constant byte address 0x4 - core index']
  #allocation1 [shape = 'u32[144,128]{1,0:T(1,128)}', space=vmem, size = 0x12000, scoped, tag = 'internal scratch']
  #allocation2 [shape = 'bf16[2,10,10,256]{3,2,1,0:T(8,128)(2,1)}', space=vmem, size = 0x28000, scoped, tag = 'scratch operand']
  #allocation3 [shape = 'bf16[128,2304]{1,0:T(8,128)(2,1)}', space=vmem, size = 0x90000, scoped, tag = 'scratch operand']
  %s0 = inlined_call_operand.hbm [shape: bf16[2,8,8,32], index: 0, kind: input, shape index: {}]
  %s1 = inlined_call_operand.hbm [shape: bf16[32,256], index: 1, kind: input, shape index: {}]
  %s2 = inlined_call_operand.hbm [shape: f32[1,256], index: 2, kind: input, shape index: {}]
  %s3 = inlined_call_operand.hbm [shape: bf16[2304,256], index: 3, kind: input, shape index: {}]
  %s4 = inlined_call_operand.hbm [shape: f32[1,256], index: 4, kind: input, shape index: {}]
  %s5 = inlined_call_operand.hbm [shape: bf16[2304,256], index: 5, kind: input, shape index: {}]
  %s6 = inlined_call_operand.hbm [shape: f32[1,256], index: 6, kind: input, shape index: {}]
  %s7 = inlined_call_operand.vmem [shape: bf16[256,6], index: 7, kind: input, shape index: {}]
  %s8 = inlined_call_operand.hbm [shape: f32[1,6], index: 8, kind: input, shape index: {}]
  %s9 = inlined_call_operand.hbm [shape: f32[2,6], index: 9, kind: output, shape index: {}]
  %s10 = sld [smem:[#allocation0]]
  $region78: #{tpu_custom_call.1} parent=0
    _
  %s12 = ssub.s32 1, %s10
  %s13 = scalar_select 0, %s12, %s10
  $region1: #{tpu_custom_call.1} parent=0
    #allocation4 [shape = 'u8[32768]{0}', space=vmem, size = 0x8000, scoped, tag = 'input window, operand 0, single buffered']
    #allocation5 [shape = 's32[1]{0}', space=sflag, size = 0x4, scoped, tag = 'scoped memory for tpu_custom_call.1']
    #allocation6 [shape = 's32[1]{0}', space=sflag, size = 0x4, scoped, tag = 'scoped memory for tpu_custom_call.1']
    #allocation7 [shape = 'u8[16384]{0}', space=vmem, size = 0x4000, scoped, tag = 'input window, operand 1, single buffered']
    #allocation8 [shape = 's32[1]{0}', space=sflag, size = 0x4, scoped, tag = 'scoped memory for tpu_custom_call.1']
    #allocation9 [shape = 'u8[1024]{0}', space=vmem, size = 0x400, scoped, tag = 'input window, operand 2, single buffered']
    #allocation10 [shape = 'u8[1179648]{0}', space=vmem, size = 0x120000, scoped, tag = 'input window, operand 3, single buffered']
    #allocation11 [shape = 's32[1]{0}', space=sflag, size = 0x4, scoped, tag = 'scoped memory for tpu_custom_call.1']
    #allocation12 [shape = 'u8[1024]{0}', space=vmem, size = 0x400, scoped, tag = 'input window, operand 4, single buffered']
    #allocation13 [shape = 'u8[1179648]{0}', space=vmem, size = 0x120000, scoped, tag = 'input window, operand 5, single buffered']
    #allocation14 [shape = 's32[1]{0}', space=sflag, size = 0x4, scoped, tag = 'scoped memory for tpu_custom_call.1']
    #allocation15 [shape = 'u8[1024]{0}', space=vmem, size = 0x400, scoped, tag = 'input window, operand 6, single buffered']
    #allocation16 [shape = 'u8[512]{0}', space=vmem, size = 0x400, scoped, tag = 'input window, operand 8, single buffered']
    #allocation17 [shape = 's32[1]{0}', space=sflag, size = 0x4, scoped, tag = 'scoped memory for tpu_custom_call.1']
    #allocation18 [shape = 'u8[1024]{0}', space=vmem, size = 0x400, scoped, tag = 'output window, operand 0, single buffered']
    %14 = vsyncpa [#allocation5], 0
    %15 = vsyncpa [#allocation8], 0
    %16 = vsyncpa [#allocation11], 0
    %17 = vsyncpa [#allocation14], 0
    %18 = vsyncpa [#allocation17], 0
    %19 = vsyncpa [#allocation6], 0
    // Predicated region
    $region2: #{tpu_custom_call.1} parent=1 // pred_check
      _
    $region3: #{tpu_custom_call.1} parent=1 // pred_check_branch
      %21 = sbr.rel (0) target = $region5
    $region4: #{tpu_custom_call.1} parent=1 // pred_region
      %s23 = ssub.s32 1024, 1024
      %24 = vsyncadd [#allocation5], %s23
      %s25 = sshll.u32 [#allocation4], 4
      %s26 = int_to_ptr.vmem [resolvable:$true] %s25
      %31 = dma.hbm_to_vmem [thread:$0]  %s0, 1024, %s26, [#allocation5], 64, 64, 4
    $region5: #{tpu_custom_call.1} parent=1 // pred_fallthru
      _
    // Predicated region
    $region6: #{tpu_custom_call.1} parent=1 // pred_check
      _
    $region7: #{tpu_custom_call.1} parent=1 // pred_check_branch
      %33 = sbr.rel (0) target = $region9
    $region8: #{tpu_custom_call.1} parent=1 // pred_region
      %s35 = ssub.s32 512, 512
      %36 = vsyncadd [#allocation8], %s35
      %s37 = sshll.u32 [#allocation7], 4
      %s38 = int_to_ptr.vmem [resolvable:$true] %s37
      %43 = dma.hbm_to_vmem [thread:$0]  %s1, 512, %s38, [#allocation8], 128, 128, 8
    $region9: #{tpu_custom_call.1} parent=1 // pred_fallthru
      _
    // Predicated region
    $region10: #{tpu_custom_call.1} parent=1 // pred_check
      _
    $region11: #{tpu_custom_call.1} parent=1 // pred_check_branch
      %45 = sbr.rel (0) target = $region13
    $region12: #{tpu_custom_call.1} parent=1 // pred_region
      %s47 = ssub.s32 32, 32
      %48 = vsyncadd [#allocation8], %s47
      %s50 = sshll.u32 [#allocation9], 4
      %s51 = int_to_ptr.vmem [resolvable:$true] %s50
      %53 = dma.hbm_to_vmem [thread:$0]  %s2, 32, %s51, [#allocation8]
    $region13: #{tpu_custom_call.1} parent=1 // pred_fallthru
      _
    // Predicated region
    $region14: #{tpu_custom_call.1} parent=1 // pred_check
      _
    $region15: #{tpu_custom_call.1} parent=1 // pred_check_branch
      %55 = sbr.rel (0) target = $region17
    $region16: #{tpu_custom_call.1} parent=1 // pred_region
      %s57 = ssub.s32 36864, 36864
      %58 = vsyncadd [#allocation11], %s57
      %s59 = sshll.u32 [#allocation10], 4
      %s60 = int_to_ptr.vmem [resolvable:$true] %s59
      %65 = dma.hbm_to_vmem [thread:$0]  %s3, 36864, %s60, [#allocation11], 128, 128, 8
    $region17: #{tpu_custom_call.1} parent=1 // pred_fallthru
      _
    // Predicated region
    $region18: #{tpu_custom_call.1} parent=1 // pred_check
      _
    $region19: #{tpu_custom_call.1} parent=1 // pred_check_branch
      %67 = sbr.rel (0) target = $region21
    $region20: #{tpu_custom_call.1} parent=1 // pred_region
      %s69 = ssub.s32 32, 32
      %70 = vsyncadd [#allocation11], %s69
      %s72 = sshll.u32 [#allocation12], 4
      %s73 = int_to_ptr.vmem [resolvable:$true] %s72
      %75 = dma.hbm_to_vmem [thread:$0]  %s4, 32, %s73, [#allocation11]
    $region21: #{tpu_custom_call.1} parent=1 // pred_fallthru
      _
    // Predicated region
    $region22: #{tpu_custom_call.1} parent=1 // pred_check
      _
    $region23: #{tpu_custom_call.1} parent=1 // pred_check_branch
      %77 = sbr.rel (0) target = $region25
    $region24: #{tpu_custom_call.1} parent=1 // pred_region
      %s79 = ssub.s32 36864, 36864
      %80 = vsyncadd [#allocation14], %s79
      %s81 = sshll.u32 [#allocation13], 4
      %s82 = int_to_ptr.vmem [resolvable:$true] %s81
      %87 = dma.hbm_to_vmem [thread:$0]  %s5, 36864, %s82, [#allocation14], 128, 128, 8
    $region25: #{tpu_custom_call.1} parent=1 // pred_fallthru
      _
    // Predicated region
    $region26: #{tpu_custom_call.1} parent=1 // pred_check
      _
    $region27: #{tpu_custom_call.1} parent=1 // pred_check_branch
      %89 = sbr.rel (0) target = $region29
    $region28: #{tpu_custom_call.1} parent=1 // pred_region
      %s91 = ssub.s32 32, 32
      %92 = vsyncadd [#allocation14], %s91
      %s94 = sshll.u32 [#allocation15], 4
      %s95 = int_to_ptr.vmem [resolvable:$true] %s94
      %97 = dma.hbm_to_vmem [thread:$0]  %s6, 32, %s95, [#allocation14]
    $region29: #{tpu_custom_call.1} parent=1 // pred_fallthru
      _
    // Predicated region
    $region30: #{tpu_custom_call.1} parent=1 // pred_check
      _
    $region31: #{tpu_custom_call.1} parent=1 // pred_check_branch
      %99 = sbr.rel (0) target = $region33
    $region32: #{tpu_custom_call.1} parent=1 // pred_region
      _
    $region33: #{tpu_custom_call.1} parent=1 // pred_fallthru
      _
    // Predicated region
    $region34: #{tpu_custom_call.1} parent=1 // pred_check
      _
    $region35: #{tpu_custom_call.1} parent=1 // pred_check_branch
      %101 = sbr.rel (0) target = $region37
    $region36: #{tpu_custom_call.1} parent=1 // pred_region
      %s103 = ssub.s32 16, 16
      %104 = vsyncadd [#allocation17], %s103
      %s106 = sshll.u32 [#allocation16], 4
      %s107 = int_to_ptr.vmem [resolvable:$true] %s106
      %109 = dma.hbm_to_vmem [thread:$0]  %s8, 16, %s107, [#allocation17]
    $region37: #{tpu_custom_call.1} parent=1 // pred_fallthru
      _
    // Predicated region
    $region38: #{tpu_custom_call.1} parent=1 // pred_check
      _
    $region39: #{tpu_custom_call.1} parent=1 // pred_check_branch
      %111 = sbr.rel (0) target = $region41
    $region40: #{tpu_custom_call.1} parent=1 // pred_region
      %112 = dma.done [#allocation5], 1024
    $region41: #{tpu_custom_call.1} parent=1 // pred_fallthru
      _
    // Predicated region
    $region42: #{tpu_custom_call.1} parent=1 // pred_check
      _
    $region43: #{tpu_custom_call.1} parent=1 // pred_check_branch
      %114 = sbr.rel (0) target = $region45
    $region44: #{tpu_custom_call.1} parent=1 // pred_region
      %115 = dma.done [#allocation8], 512
    $region45: #{tpu_custom_call.1} parent=1 // pred_fallthru
      _
    // Predicated region
    $region46: #{tpu_custom_call.1} parent=1 // pred_check
      _
    $region47: #{tpu_custom_call.1} parent=1 // pred_check_branch
      %117 = sbr.rel (0) target = $region49
    $region48: #{tpu_custom_call.1} parent=1 // pred_region
      %118 = dma.done [#allocation8], 32
    $region49: #{tpu_custom_call.1} parent=1 // pred_fallthru
      _
    // Predicated region
    $region50: #{tpu_custom_call.1} parent=1 // pred_check
      _
    $region51: #{tpu_custom_call.1} parent=1 // pred_check_branch
      %120 = sbr.rel (0) target = $region53
    $region52: #{tpu_custom_call.1} parent=1 // pred_region
      %121 = dma.done [#allocation11], 36864
    $region53: #{tpu_custom_call.1} parent=1 // pred_fallthru
      _
    // Predicated region
    $region54: #{tpu_custom_call.1} parent=1 // pred_check
      _
    $region55: #{tpu_custom_call.1} parent=1 // pred_check_branch
      %123 = sbr.rel (0) target = $region57
    $region56: #{tpu_custom_call.1} parent=1 // pred_region
      %124 = dma.done [#allocation11], 32
    $region57: #{tpu_custom_call.1} parent=1 // pred_fallthru
      _
    // Predicated region
    $region58: #{tpu_custom_call.1} parent=1 // pred_check
      _
    $region59: #{tpu_custom_call.1} parent=1 // pred_check_branch
      %126 = sbr.rel (0) target = $region61
    $region60: #{tpu_custom_call.1} parent=1 // pred_region
      %127 = dma.done [#allocation14], 36864
    $region61: #{tpu_custom_call.1} parent=1 // pred_fallthru
      _
    // Predicated region
    $region62: #{tpu_custom_call.1} parent=1 // pred_check
      _
    $region63: #{tpu_custom_call.1} parent=1 // pred_check_branch
      %129 = sbr.rel (0) target = $region65
    $region64: #{tpu_custom_call.1} parent=1 // pred_region
      %130 = dma.done [#allocation14], 32
    $region65: #{tpu_custom_call.1} parent=1 // pred_fallthru
      _
    // Predicated region
    $region66: #{tpu_custom_call.1} parent=1 // pred_check
      _
    $region67: #{tpu_custom_call.1} parent=1 // pred_check_branch
      %132 = sbr.rel (0) target = $region69
    $region68: #{tpu_custom_call.1} parent=1 // pred_region
      %133 = dma.done [#allocation17], 16
    $region69: #{tpu_custom_call.1} parent=1 // pred_fallthru
      _
    %135 = vst [vmem:[#allocation2] sm:$0xff] 0
    %136 = vst [vmem:[#allocation2 + $0x8] sm:$0x11] 0
    %137 = vst [vmem:[#allocation2 + $0xa0] sm:$0xff] 0
    %138 = vst [vmem:[#allocation2 + $0xa8] sm:$0x11] 0
    %s139 = scalar_lea.vmem [#allocation2], 144
    %140 = vst [vmem:[%s139] sm:$0xff] 0
    %141 = vst [vmem:[%s139 + $0x8] sm:$0x11] 0
    %142 = vst [vmem:[%s139 + $0xa0] sm:$0xff] 0
    %143 = vst [vmem:[%s139 + $0xa8] sm:$0x11] 0
    %vm144 = vcmask 1040384
    %vm145 = vsmask.f32 256
    %vm146 = vmand %vm144, %vm145
    %vm147 = vcmask 1044484
    %vm148 = vsmask.f32 4352
    %vm149 = vmand %vm147, %vm148
    %vm150 = vmor %vm149, %vm146
    %v151 = vld [vmem:[#allocation2] sm:$0x11]
    %v152 = vsel %vm150, 0, %v151
    %153 = vst [vmem:[#allocation2] sm:$0x11] %v152
    %v154 = vld [vmem:[#allocation2 + $0x10] sm:$0x11]
    %v155 = vsel %vm150, 0, %v154
    %156 = vst [vmem:[#allocation2 + $0x10] sm:$0x11] %v155
    %v157 = vld [vmem:[#allocation2 + $0x20] sm:$0x11]
    %v158 = vsel %vm150, 0, %v157
    %159 = vst [vmem:[#allocation2 + $0x20] sm:$0x11] %v158
    %v160 = vld [vmem:[#allocation2 + $0x30] sm:$0x11]
    %v161 = vsel %vm150, 0, %v160
    %162 = vst [vmem:[#allocation2 + $0x30] sm:$0x11] %v161
    %v163 = vld [vmem:[#allocation2 + $0x40] sm:$0x11]
    %v164 = vsel %vm150, 0, %v163
    %165 = vst [vmem:[#allocation2 + $0x40] sm:$0x11] %v164
    %v166 = vld [vmem:[#allocation2 + $0x50] sm:$0x11]
    %v167 = vsel %vm150, 0, %v166
    %168 = vst [vmem:[#allocation2 + $0x50] sm:$0x11] %v167
    %v169 = vld [vmem:[#allocation2 + $0x60] sm:$0x11]
    %v170 = vsel %vm150, 0, %v169
    %171 = vst [vmem:[#allocation2 + $0x60] sm:$0x11] %v170
    %v172 = vld [vmem:[#allocation2 + $0x70] sm:$0x11]
    %v173 = vsel %vm150, 0, %v172
    %174 = vst [vmem:[#allocation2 + $0x70] sm:$0x11] %v173
    %v175 = vld [vmem:[#allocation2 + $0x80] sm:$0x11]
    %v176 = vsel %vm150, 0, %v175
    %177 = vst [vmem:[#allocation2 + $0x80] sm:$0x11] %v176
    %v178 = vld [vmem:[#allocation2 + $0x90] sm:$0x11]
    %v179 = vsel %vm150, 0, %v178
    %180 = vst [vmem:[#allocation2 + $0x90] sm:$0x11] %v179
    %v181 = vld [vmem:[#allocation2 + $0xa0] sm:$0x11]
    %v182 = vsel %vm150, 0, %v181
    %183 = vst [vmem:[#allocation2 + $0xa0] sm:$0x11] %v182
    %v184 = vld [vmem:[#allocation2 + $0xb0] sm:$0x11]
    %v185 = vsel %vm150, 0, %v184
    %186 = vst [vmem:[#allocation2 + $0xb0] sm:$0x11] %v185
    %v187 = vld [vmem:[#allocation2 + $0xc0] sm:$0x11]
    %v188 = vsel %vm150, 0, %v187
    %189 = vst [vmem:[#allocation2 + $0xc0] sm:$0x11] %v188
    %v190 = vld [vmem:[#allocation2 + $0xd0] sm:$0x11]
    %v191 = vsel %vm150, 0, %v190
    %192 = vst [vmem:[#allocation2 + $0xd0] sm:$0x11] %v191
    %v193 = vld [vmem:[#allocation2 + $0xe0] sm:$0x11]
    %v194 = vsel %vm150, 0, %v193
    %195 = vst [vmem:[#allocation2 + $0xe0] sm:$0x11] %v194
    %v196 = vld [vmem:[#allocation2 + $0xf0] sm:$0x11]
    %v197 = vsel %vm150, 0, %v196
    %198 = vst [vmem:[#allocation2 + $0xf0] sm:$0x11] %v197
    %v199 = vld [vmem:[#allocation2 + $0x100] sm:$0x11]
    %v200 = vsel %vm150, 0, %v199
    %201 = vst [vmem:[#allocation2 + $0x100] sm:$0x11] %v200
    %v202 = vld [vmem:[#allocation2 + $0x110] sm:$0x11]
    %v203 = vsel %vm150, 0, %v202
    %204 = vst [vmem:[#allocation2 + $0x110] sm:$0x11] %v203
    %v205 = vld [vmem:[#allocation2 + $0x120] sm:$0x11]
    %v206 = vsel %vm150, 0, %v205
    %207 = vst [vmem:[#allocation2 + $0x120] sm:$0x11] %v206
    %v208 = vld [vmem:[#allocation2 + $0x130] sm:$0x11]
    %v209 = vsel %vm150, 0, %v208
    %210 = vst [vmem:[#allocation2 + $0x130] sm:$0x11] %v209
    %vm211 = vsmask.f32 7938
    %vm212 = vmand %vm144, %vm211
    %vm213 = vsmask.f32 7954
    %vm214 = vmand %vm147, %vm213
    %vm215 = vmor %vm214, %vm212
    %v216 = vld [vmem:[#allocation2 + $0x8] sm:$0x11]
    %v217 = vsel %vm215, 0, %v216
    %218 = vst [vmem:[#allocation2 + $0x8] sm:$0x11] %v217
    %v219 = vld [vmem:[#allocation2 + $0x18] sm:$0x11]
    %v220 = vsel %vm215, 0, %v219
    %221 = vst [vmem:[#allocation2 + $0x18] sm:$0x11] %v220
    %v222 = vld [vmem:[#allocation2 + $0x28] sm:$0x11]
    %v223 = vsel %vm215, 0, %v222
    %224 = vst [vmem:[#allocation2 + $0x28] sm:$0x11] %v223
    %v225 = vld [vmem:[#allocation2 + $0x38] sm:$0x11]
    %v226 = vsel %vm215, 0, %v225
    %227 = vst [vmem:[#allocation2 + $0x38] sm:$0x11] %v226
    %v228 = vld [vmem:[#allocation2 + $0x48] sm:$0x11]
    %v229 = vsel %vm215, 0, %v228
    %230 = vst [vmem:[#allocation2 + $0x48] sm:$0x11] %v229
    %v231 = vld [vmem:[#allocation2 + $0x58] sm:$0x11]
    %v232 = vsel %vm215, 0, %v231
    %233 = vst [vmem:[#allocation2 + $0x58] sm:$0x11] %v232
    %v234 = vld [vmem:[#allocation2 + $0x68] sm:$0x11]
    %v235 = vsel %vm215, 0, %v234
    %236 = vst [vmem:[#allocation2 + $0x68] sm:$0x11] %v235
    %v237 = vld [vmem:[#allocation2 + $0x78] sm:$0x11]
    %v238 = vsel %vm215, 0, %v237
    %239 = vst [vmem:[#allocation2 + $0x78] sm:$0x11] %v238
    %v240 = vld [vmem:[#allocation2 + $0x88] sm:$0x11]
    %v241 = vsel %vm215, 0, %v240
    %242 = vst [vmem:[#allocation2 + $0x88] sm:$0x11] %v241
    %v243 = vld [vmem:[#allocation2 + $0x98] sm:$0x11]
    %v244 = vsel %vm215, 0, %v243
    %245 = vst [vmem:[#allocation2 + $0x98] sm:$0x11] %v244
    %v246 = vld [vmem:[#allocation2 + $0xa8] sm:$0x11]
    %v247 = vsel %vm215, 0, %v246
    %248 = vst [vmem:[#allocation2 + $0xa8] sm:$0x11] %v247
    %v249 = vld [vmem:[#allocation2 + $0xb8] sm:$0x11]
    %v250 = vsel %vm215, 0, %v249
    %251 = vst [vmem:[#allocation2 + $0xb8] sm:$0x11] %v250
    %v252 = vld [vmem:[#allocation2 + $0xc8] sm:$0x11]
    %v253 = vsel %vm215, 0, %v252
    %254 = vst [vmem:[#allocation2 + $0xc8] sm:$0x11] %v253
    %v255 = vld [vmem:[#allocation2 + $0xd8] sm:$0x11]
    %v256 = vsel %vm215, 0, %v255
    %257 = vst [vmem:[#allocation2 + $0xd8] sm:$0x11] %v256
    %v258 = vld [vmem:[#allocation2 + $0xe8] sm:$0x11]
    %v259 = vsel %vm215, 0, %v258
    %260 = vst [vmem:[#allocation2 + $0xe8] sm:$0x11] %v259
    %v261 = vld [vmem:[#allocation2 + $0xf8] sm:$0x11]
    %v262 = vsel %vm215, 0, %v261
    %263 = vst [vmem:[#allocation2 + $0xf8] sm:$0x11] %v262
    %v264 = vld [vmem:[#allocation2 + $0x108] sm:$0x11]
    %v265 = vsel %vm215, 0, %v264
    %266 = vst [vmem:[#allocation2 + $0x108] sm:$0x11] %v265
    %v267 = vld [vmem:[#allocation2 + $0x118] sm:$0x11]
    %v268 = vsel %vm215, 0, %v267
    %269 = vst [vmem:[#allocation2 + $0x118] sm:$0x11] %v268
    %v270 = vld [vmem:[#allocation2 + $0x128] sm:$0x11]
    %v271 = vsel %vm215, 0, %v270
    %272 = vst [vmem:[#allocation2 + $0x128] sm:$0x11] %v271
    %v273 = vld [vmem:[#allocation2 + $0x138] sm:$0x11]
    %v274 = vsel %vm215, 0, %v273
    %275 = vst [vmem:[#allocation2 + $0x138] sm:$0x11] %v274
    %v276 = vld [vmem:[#allocation4] sm:$0xf]
    %v277 = vld [vmem:[#allocation4 + $0x4] sm:$0xf]
    %v278 = vld [vmem:[#allocation4 + $0x8] sm:$0xf]
    %v279 = vld [vmem:[#allocation4 + $0xc] sm:$0xf]
    %v280 = vld [vmem:[#allocation4 + $0x10] sm:$0xf]
    %v281 = vld [vmem:[#allocation4 + $0x14] sm:$0xf]
    %v282 = vld [vmem:[#allocation4 + $0x18] sm:$0xf]
    %v283 = vld [vmem:[#allocation4 + $0x1c] sm:$0xf]
    %v284 = vld [vmem:[#allocation4 + $0x20] sm:$0xf]
    %v285 = vld [vmem:[#allocation4 + $0x24] sm:$0xf]
    %v286 = vld [vmem:[#allocation4 + $0x28] sm:$0xf]
    %v287 = vld [vmem:[#allocation4 + $0x2c] sm:$0xf]
    %v288 = vld [vmem:[#allocation4 + $0x30] sm:$0xf]
    %v289 = vld [vmem:[#allocation4 + $0x34] sm:$0xf]
    %v290 = vld [vmem:[#allocation4 + $0x38] sm:$0xf]
    %v291 = vld [vmem:[#allocation4 + $0x3c] sm:$0xf]
    %v292 = vld [vmem:[#allocation7] sm:$0xff]
    %v293 = vld [vmem:[#allocation7 + $0x8] sm:$0xff]
    %v294 = vld [vmem:[#allocation7 + $0x10] sm:$0xff]
    %v295 = vld [vmem:[#allocation7 + $0x18] sm:$0xff]
    %v296 = vld [vmem:[#allocation9] sm:$0x3]
    %v298 = vlaneseq
    %v299 = vshrl.u32 %v298, 7
    %v300 = vsub.s32 0, %v299
    %v301 = vrot.slane %v296, %v300
    %v302 = vlaneseq
    %v303 = vshrl.u32 %v302, 7
    %v304 = vsub.s32 1, %v303
    %v305 = vrot.slane %v296, %v304
    %v324 = vunpack.c.l.b16 %v276
    %v325 = vunpack.c.l.b16 %v277
    %v326 = vunpack.c.l.b16 %v278
    %v327 = vunpack.c.l.b16 %v279
    %v328 = vunpack.c.l.b16 %v280
    %v329 = vunpack.c.l.b16 %v281
    %v330 = vunpack.c.l.b16 %v282
    %v331 = vunpack.c.l.b16 %v283
    %v332 = vunpack.c.l.b16 %v284
    %v333 = vunpack.c.l.b16 %v285
    %v334 = vunpack.c.l.b16 %v286
    %v335 = vunpack.c.l.b16 %v287
    %v336 = vunpack.c.l.b16 %v288
    %v337 = vunpack.c.l.b16 %v289
    %v338 = vunpack.c.l.b16 %v290
    %v339 = vunpack.c.l.b16 %v291
    %v340 = vpack.c.b16 %v325, %v324
    %v341 = vpack.c.b16 %v327, %v326
    %v342 = vpack.c.b16 %v329, %v328
    %v343 = vpack.c.b16 %v331, %v330
    %v344 = vpack.c.b16 %v333, %v332
    %v345 = vpack.c.b16 %v335, %v334
    %v346 = vpack.c.b16 %v337, %v336
    %v347 = vpack.c.b16 %v339, %v338
    %v352 = vunpack.c.l.b16 %v292
    %v353 = vunpack.c.h.b16 %v292
    %v354 = vunpack.c.l.b16 %v293
    %v355 = vunpack.c.h.b16 %v293
    %v356 = vunpack.c.l.b16 %v294
    %v357 = vunpack.c.h.b16 %v294
    %v358 = vunpack.c.l.b16 %v295
    %v359 = vunpack.c.h.b16 %v295
    %v360 = vpack.c.b16 %v354, %v352
    %v361 = vpack.c.b16 %v355, %v353
    %v362 = vpack.c.b16 %v358, %v356
    %v363 = vpack.c.b16 %v359, %v357
    %vm368 = vcmask 261120
    %v370 = vsel %vm368, %v340, 0
    %v373 = vsel %vm368, %v341, 0
    %v376 = vsel %vm368, %v342, 0
    %v379 = vsel %vm368, %v343, 0
    %v382 = vsel %vm368, %v344, 0
    %v385 = vsel %vm368, %v345, 0
    %v388 = vsel %vm368, %v346, 0
    %v391 = vsel %vm368, %v347, 0
    %393 = vmatprep.subr.bf16.mxu0 0
    %394 = vmatpush1.bf16.msra.mxu0 0
    %395 = vmatprep.subr.bf16.mxu0 0
    %396 = vmatpush1.bf16.msra.mxu0 0
    %397 = vmatprep.subr.bf16.mxu0 0
    %398 = vmatpush1.bf16.msra.mxu0 0
    %399 = vmatprep.subr.bf16.mxu0 0
    %400 = vmatpush1.bf16.msra.mxu0 0
    %401 = vmatprep.subr.bf16.mxu0 0
    %402 = vmatpush1.bf16.msra.mxu0 0
    %403 = vmatprep.subr.bf16.mxu0 0
    %404 = vmatpush1.bf16.msra.mxu0 0
    %405 = vmatprep.subr.bf16.mxu0 %v363
    %406 = vmatpush1.bf16.msra.mxu0 %v362
    %407 = vmatprep.subr.bf16.mxu0 %v361
    %408 = vmatpush1.bf16.msra.mxu0 %v360
    %409 = vmatprep.subr.bf16.mxu0 0
    %410 = vmatpush2.bf16.msra.mxu0 0
    %411 = vmatprep.subr.bf16.mxu0 0
    %412 = vmatpush2.bf16.msra.mxu0 0
    %413 = vmatprep.subr.bf16.mxu0 0
    %414 = vmatpush2.bf16.msra.mxu0 0
    %415 = vmatprep.subr.bf16.mxu0 0
    %416 = vmatpush2.bf16.msra.mxu0 0
    %417 = vmatprep.subr.bf16.mxu0 0
    %418 = vmatpush2.bf16.msra.mxu0 0
    %419 = vmatprep.subr.bf16.mxu0 0
    %420 = vmatpush2.bf16.msra.mxu0 0
    %421 = vmatprep.subr.bf16.mxu0 0
    %422 = vmatpush2.bf16.msra.mxu0 0
    %423 = vmatprep.subr.bf16.mxu0 0
    %424 = vmatpush2.bf16.msra.mxu0 0
    %425 = vmatprep.mubr.bf16.mxu0 0
    %426 = vmatmul.mubr.bf16.gmra.mxu0 %v370
    %v427 = vpop.f32.mrf.mxu0
    %v428 = vadd.f32 %v301, %v427
    %v429 = vpop.f32.mrf.mxu0
    %v430 = vadd.f32 %v305, %v429
    %v431 = vpop.f32.mrf.mxu0
    %v432 = vadd.f32 %v301, %v431
    %v433 = vpop.f32.mrf.mxu0
    %v434 = vadd.f32 %v305, %v433
    %435 = vmatprep.mubr.bf16.mxu0 0
    %436 = vmatmul.mubr.bf16.gmra.mxu0 %v373
    %v437 = vpop.f32.mrf.mxu0
    %v438 = vadd.f32 %v301, %v437
    %v439 = vpop.f32.mrf.mxu0
    %v440 = vadd.f32 %v305, %v439
    %v441 = vpop.f32.mrf.mxu0
    %v442 = vadd.f32 %v301, %v441
    %v443 = vpop.f32.mrf.mxu0
    %v444 = vadd.f32 %v305, %v443
    %445 = vmatprep.mubr.bf16.mxu0 0
    %446 = vmatmul.mubr.bf16.gmra.mxu0 %v376
    %v447 = vpop.f32.mrf.mxu0
    %v448 = vadd.f32 %v301, %v447
    %v449 = vpop.f32.mrf.mxu0
    %v450 = vadd.f32 %v305, %v449
    %v451 = vpop.f32.mrf.mxu0
    %v452 = vadd.f32 %v301, %v451
    %v453 = vpop.f32.mrf.mxu0
    %v454 = vadd.f32 %v305, %v453
    %455 = vmatprep.mubr.bf16.mxu0 0
    %456 = vmatmul.mubr.bf16.gmra.mxu0 %v379
    %v457 = vpop.f32.mrf.mxu0
    %v458 = vadd.f32 %v301, %v457
    %v459 = vpop.f32.mrf.mxu0
    %v460 = vadd.f32 %v305, %v459
    %v461 = vpop.f32.mrf.mxu0
    %v462 = vadd.f32 %v301, %v461
    %v463 = vpop.f32.mrf.mxu0
    %v464 = vadd.f32 %v305, %v463
    %465 = vmatprep.mubr.bf16.mxu0 0
    %466 = vmatmul.mubr.bf16.gmra.mxu0 %v382
    %v467 = vpop.f32.mrf.mxu0
    %v468 = vadd.f32 %v301, %v467
    %v469 = vpop.f32.mrf.mxu0
    %v470 = vadd.f32 %v305, %v469
    %v471 = vpop.f32.mrf.mxu0
    %v472 = vadd.f32 %v301, %v471
    %v473 = vpop.f32.mrf.mxu0
    %v474 = vadd.f32 %v305, %v473
    %475 = vmatprep.mubr.bf16.mxu0 0
    %476 = vmatmul.mubr.bf16.gmra.mxu0 %v385
    %v477 = vpop.f32.mrf.mxu0
    %v478 = vadd.f32 %v301, %v477
    %v479 = vpop.f32.mrf.mxu0
    %v480 = vadd.f32 %v305, %v479
    %v481 = vpop.f32.mrf.mxu0
    %v482 = vadd.f32 %v301, %v481
    %v483 = vpop.f32.mrf.mxu0
    %v484 = vadd.f32 %v305, %v483
    %485 = vmatprep.mubr.bf16.mxu0 0
    %486 = vmatmul.mubr.bf16.gmra.mxu0 %v388
    %v487 = vpop.f32.mrf.mxu0
    %v488 = vadd.f32 %v301, %v487
    %v489 = vpop.f32.mrf.mxu0
    %v490 = vadd.f32 %v305, %v489
    %v491 = vpop.f32.mrf.mxu0
    %v492 = vadd.f32 %v301, %v491
    %v493 = vpop.f32.mrf.mxu0
    %v494 = vadd.f32 %v305, %v493
    %495 = vmatprep.mubr.bf16.mxu0 0
    %496 = vmatmul.mubr.bf16.gmra.mxu0 %v391
    %v497 = vpop.f32.mrf.mxu0
    %v498 = vadd.f32 %v301, %v497
    %v499 = vpop.f32.mrf.mxu0
    %v500 = vadd.f32 %v305, %v499
    %v501 = vpop.f32.mrf.mxu0
    %v502 = vadd.f32 %v301, %v501
    %v503 = vpop.f32.mrf.mxu0
    %v504 = vadd.f32 %v305, %v503
    %505 = vdwg.mxu0
    %v506 = vmax.f32 %v428, 0.0
    %v507 = vmax.f32 %v430, 0.0
    %v508 = vmax.f32 %v432, 0.0
    %v509 = vmax.f32 %v434, 0.0
    %v510 = vmax.f32 %v438, 0.0
    %v511 = vmax.f32 %v440, 0.0
    %v512 = vmax.f32 %v442, 0.0
    %v513 = vmax.f32 %v444, 0.0
    %v514 = vmax.f32 %v448, 0.0
    %v515 = vmax.f32 %v450, 0.0
    %v516 = vmax.f32 %v452, 0.0
    %v517 = vmax.f32 %v454, 0.0
    %v518 = vmax.f32 %v458, 0.0
    %v519 = vmax.f32 %v460, 0.0
    %v520 = vmax.f32 %v462, 0.0
    %v521 = vmax.f32 %v464, 0.0
    %v522 = vmax.f32 %v468, 0.0
    %v523 = vmax.f32 %v470, 0.0
    %v524 = vmax.f32 %v472, 0.0
    %v525 = vmax.f32 %v474, 0.0
    %v526 = vmax.f32 %v478, 0.0
    %v527 = vmax.f32 %v480, 0.0
    %v528 = vmax.f32 %v482, 0.0
    %v529 = vmax.f32 %v484, 0.0
    %v530 = vmax.f32 %v488, 0.0
    %v531 = vmax.f32 %v490, 0.0
    %v532 = vmax.f32 %v492, 0.0
    %v533 = vmax.f32 %v494, 0.0
    %v534 = vmax.f32 %v498, 0.0
    %v535 = vmax.f32 %v500, 0.0
    %v536 = vmax.f32 %v502, 0.0
    %v537 = vmax.f32 %v504, 0.0
    %v538 = vpack.c.bf16 %v508, %v506
    %v539 = vpack.c.bf16 %v509, %v507
    %v540 = vpack.c.bf16 %v512, %v510
    %v541 = vpack.c.bf16 %v513, %v511
    %v542 = vpack.c.bf16 %v516, %v514
    %v543 = vpack.c.bf16 %v517, %v515
    %v544 = vpack.c.bf16 %v520, %v518
    %v545 = vpack.c.bf16 %v521, %v519
    %v546 = vpack.c.bf16 %v524, %v522
    %v547 = vpack.c.bf16 %v525, %v523
    %v548 = vpack.c.bf16 %v528, %v526
    %v549 = vpack.c.bf16 %v529, %v527
    %v550 = vpack.c.bf16 %v532, %v530
    %v551 = vpack.c.bf16 %v533, %v531
    %v552 = vpack.c.bf16 %v536, %v534
    %v553 = vpack.c.bf16 %v537, %v535
    %v570 = vunpack.c.l.b16 %v538
    %v571 = vunpack.c.l.b16 %v539
    %v572 = vunpack.c.h.b16 %v538
    %v573 = vunpack.c.h.b16 %v539
    %v574 = vunpack.c.l.b16 %v540
    %v575 = vunpack.c.l.b16 %v541
    %v576 = vunpack.c.h.b16 %v540
    %v577 = vunpack.c.h.b16 %v541
    %v578 = vunpack.c.l.b16 %v542
    %v579 = vunpack.c.l.b16 %v543
    %v580 = vunpack.c.h.b16 %v542
    %v581 = vunpack.c.h.b16 %v543
    %v582 = vunpack.c.l.b16 %v544
    %v583 = vunpack.c.l.b16 %v545
    %v584 = vunpack.c.h.b16 %v544
    %v585 = vunpack.c.h.b16 %v545
    %v586 = vunpack.c.l.b16 %v546
    %v587 = vunpack.c.l.b16 %v547
    %v588 = vunpack.c.h.b16 %v546
    %v589 = vunpack.c.h.b16 %v547
    %v590 = vunpack.c.l.b16 %v548
    %v591 = vunpack.c.l.b16 %v549
    %v592 = vunpack.c.h.b16 %v548
    %v593 = vunpack.c.h.b16 %v549
    %v594 = vunpack.c.l.b16 %v550
    %v595 = vunpack.c.l.b16 %v551
    %v596 = vunpack.c.h.b16 %v550
    %v597 = vunpack.c.h.b16 %v551
    %v598 = vunpack.c.l.b16 %v552
    %v599 = vunpack.c.l.b16 %v553
    %v600 = vunpack.c.h.b16 %v552
    %v601 = vunpack.c.h.b16 %v553
    %v602 = vpack.c.b16 %v571, %v570
    %v603 = vpack.c.b16 %v573, %v572
    %v604 = vpack.c.b16 %v575, %v574
    %v605 = vpack.c.b16 %v577, %v576
    %v606 = vpack.c.b16 %v579, %v578
    %v607 = vpack.c.b16 %v581, %v580
    %v608 = vpack.c.b16 %v583, %v582
    %v609 = vpack.c.b16 %v585, %v584
    %v610 = vpack.c.b16 %v587, %v586
    %v611 = vpack.c.b16 %v589, %v588
    %v612 = vpack.c.b16 %v591, %v590
    %v613 = vpack.c.b16 %v593, %v592
    %v614 = vpack.c.b16 %v595, %v594
    %v615 = vpack.c.b16 %v597, %v596
    %v616 = vpack.c.b16 %v599, %v598
    %v617 = vpack.c.b16 %v601, %v600
    %v619 = vshrl.u32 %v602, 16
    %v621 = vrot.slane %v619, 7
    %v622 = vshll.u32 %v602, 16
    %v624 = vor.u32 %v621, %v622
    %v625 = vrot.slane %v621, 4
    %v627 = vshrl.u32 %v603, 16
    %v629 = vrot.slane %v627, 7
    %v630 = vshll.u32 %v603, 16
    %v632 = vor.u32 %v629, %v630
    %v633 = vrot.slane %v629, 4
    %v635 = vshrl.u32 %v604, 16
    %v637 = vrot.slane %v635, 7
    %v638 = vshll.u32 %v604, 16
    %v640 = vor.u32 %v637, %v638
    %v641 = vrot.slane %v637, 4
    %v643 = vshrl.u32 %v605, 16
    %v645 = vrot.slane %v643, 7
    %v646 = vshll.u32 %v605, 16
    %v648 = vor.u32 %v645, %v646
    %v649 = vrot.slane %v645, 4
    %v651 = vshrl.u32 %v606, 16
    %v653 = vrot.slane %v651, 7
    %v654 = vshll.u32 %v606, 16
    %v656 = vor.u32 %v653, %v654
    %v657 = vrot.slane %v653, 4
    %v659 = vshrl.u32 %v607, 16
    %v661 = vrot.slane %v659, 7
    %v662 = vshll.u32 %v607, 16
    %v664 = vor.u32 %v661, %v662
    %v665 = vrot.slane %v661, 4
    %v667 = vshrl.u32 %v608, 16
    %v669 = vrot.slane %v667, 7
    %v670 = vshll.u32 %v608, 16
    %v672 = vor.u32 %v669, %v670
    %v673 = vrot.slane %v669, 4
    %v675 = vshrl.u32 %v609, 16
    %v677 = vrot.slane %v675, 7
    %v678 = vshll.u32 %v609, 16
    %v680 = vor.u32 %v677, %v678
    %v681 = vrot.slane %v677, 4
    %v683 = vshrl.u32 %v610, 16
    %v685 = vrot.slane %v683, 7
    %v686 = vshll.u32 %v610, 16
    %v688 = vor.u32 %v685, %v686
    %v689 = vrot.slane %v685, 4
    %v691 = vshrl.u32 %v611, 16
    %v693 = vrot.slane %v691, 7
    %v694 = vshll.u32 %v611, 16
    %v696 = vor.u32 %v693, %v694
    %v697 = vrot.slane %v693, 4
    %v699 = vshrl.u32 %v612, 16
    %v701 = vrot.slane %v699, 7
    %v702 = vshll.u32 %v612, 16
    %v704 = vor.u32 %v701, %v702
    %v705 = vrot.slane %v701, 4
    %v707 = vshrl.u32 %v613, 16
    %v709 = vrot.slane %v707, 7
    %v710 = vshll.u32 %v613, 16
    %v712 = vor.u32 %v709, %v710
    %v713 = vrot.slane %v709, 4
    %v715 = vshrl.u32 %v614, 16
    %v717 = vrot.slane %v715, 7
    %v718 = vshll.u32 %v614, 16
    %v720 = vor.u32 %v717, %v718
    %v721 = vrot.slane %v717, 4
    %v723 = vshrl.u32 %v615, 16
    %v725 = vrot.slane %v723, 7
    %v726 = vshll.u32 %v615, 16
    %v728 = vor.u32 %v725, %v726
    %v729 = vrot.slane %v725, 4
    %v731 = vshrl.u32 %v616, 16
    %v733 = vrot.slane %v731, 7
    %v734 = vshll.u32 %v616, 16
    %v736 = vor.u32 %v733, %v734
    %v737 = vrot.slane %v733, 4
    %v739 = vshrl.u32 %v617, 16
    %v741 = vrot.slane %v739, 7
    %v742 = vshll.u32 %v617, 16
    %v744 = vor.u32 %v741, %v742
    %v745 = vrot.slane %v741, 4
    %s778 = scalar_lea.vmem [#allocation2], 16
    %vm779 = vcmask 1043456
    %vm780 = vmand %vm779, %vm211
    %vm781 = vcmask 1047556
    %vm782 = vmand %vm781, %vm213
    %vm783 = vmor %vm782, %vm780
    %v784 = vld [vmem:[%s778] sm:$0xff]
    %v785 = vsel %vm783, %v624, %v784
    %786 = vst [vmem:[%s778] sm:$0xff] %v785
    %v787 = vld [vmem:[%s778 + $0x8] sm:$0x11]
    %v788 = vsel %vm150, %v625, %v787
    %789 = vst [vmem:[%s778 + $0x8] sm:$0x11] %v788
    %v790 = vld [vmem:[%s778 + $0x10] sm:$0xff]
    %v791 = vsel %vm783, %v632, %v790
    %792 = vst [vmem:[%s778 + $0x10] sm:$0xff] %v791
    %v793 = vld [vmem:[%s778 + $0x18] sm:$0x11]
    %v794 = vsel %vm150, %v633, %v793
    %795 = vst [vmem:[%s778 + $0x18] sm:$0x11] %v794
    %v796 = vld [vmem:[%s778 + $0x20] sm:$0xff]
    %v797 = vsel %vm783, %v640, %v796
    %798 = vst [vmem:[%s778 + $0x20] sm:$0xff] %v797
    %v799 = vld [vmem:[%s778 + $0x28] sm:$0x11]
    %v800 = vsel %vm150, %v641, %v799
    %801 = vst [vmem:[%s778 + $0x28] sm:$0x11] %v800
    %v802 = vld [vmem:[%s778 + $0x30] sm:$0xff]
    %v803 = vsel %vm783, %v648, %v802
    %804 = vst [vmem:[%s778 + $0x30] sm:$0xff] %v803
    %v805 = vld [vmem:[%s778 + $0x38] sm:$0x11]
    %v806 = vsel %vm150, %v649, %v805
    %807 = vst [vmem:[%s778 + $0x38] sm:$0x11] %v806
    %v808 = vld [vmem:[%s778 + $0x40] sm:$0xff]
    %v809 = vsel %vm783, %v656, %v808
    %810 = vst [vmem:[%s778 + $0x40] sm:$0xff] %v809
    %v811 = vld [vmem:[%s778 + $0x48] sm:$0x11]
    %v812 = vsel %vm150, %v657, %v811
    %813 = vst [vmem:[%s778 + $0x48] sm:$0x11] %v812
    %v814 = vld [vmem:[%s778 + $0x50] sm:$0xff]
    %v815 = vsel %vm783, %v664, %v814
    %816 = vst [vmem:[%s778 + $0x50] sm:$0xff] %v815
    %v817 = vld [vmem:[%s778 + $0x58] sm:$0x11]
    %v818 = vsel %vm150, %v665, %v817
    %819 = vst [vmem:[%s778 + $0x58] sm:$0x11] %v818
    %v820 = vld [vmem:[%s778 + $0x60] sm:$0xff]
    %v821 = vsel %vm783, %v672, %v820
    %822 = vst [vmem:[%s778 + $0x60] sm:$0xff] %v821
    %v823 = vld [vmem:[%s778 + $0x68] sm:$0x11]
    %v824 = vsel %vm150, %v673, %v823
    %825 = vst [vmem:[%s778 + $0x68] sm:$0x11] %v824
    %v826 = vld [vmem:[%s778 + $0x70] sm:$0xff]
    %v827 = vsel %vm783, %v680, %v826
    %828 = vst [vmem:[%s778 + $0x70] sm:$0xff] %v827
    %v829 = vld [vmem:[%s778 + $0x78] sm:$0x11]
    %v830 = vsel %vm150, %v681, %v829
    %831 = vst [vmem:[%s778 + $0x78] sm:$0x11] %v830
    %v832 = vld [vmem:[%s778 + $0xa0] sm:$0xff]
    %v833 = vsel %vm783, %v688, %v832
    %834 = vst [vmem:[%s778 + $0xa0] sm:$0xff] %v833
    %v835 = vld [vmem:[%s778 + $0xa8] sm:$0x11]
    %v836 = vsel %vm150, %v689, %v835
    %837 = vst [vmem:[%s778 + $0xa8] sm:$0x11] %v836
    %v838 = vld [vmem:[%s778 + $0xb0] sm:$0xff]
    %v839 = vsel %vm783, %v696, %v838
    %840 = vst [vmem:[%s778 + $0xb0] sm:$0xff] %v839
    %v841 = vld [vmem:[%s778 + $0xb8] sm:$0x11]
    %v842 = vsel %vm150, %v697, %v841
    %843 = vst [vmem:[%s778 + $0xb8] sm:$0x11] %v842
    %v844 = vld [vmem:[%s778 + $0xc0] sm:$0xff]
    %v845 = vsel %vm783, %v704, %v844
    %846 = vst [vmem:[%s778 + $0xc0] sm:$0xff] %v845
    %v847 = vld [vmem:[%s778 + $0xc8] sm:$0x11]
    %v848 = vsel %vm150, %v705, %v847
    %849 = vst [vmem:[%s778 + $0xc8] sm:$0x11] %v848
    %v850 = vld [vmem:[%s778 + $0xd0] sm:$0xff]
    %v851 = vsel %vm783, %v712, %v850
    %852 = vst [vmem:[%s778 + $0xd0] sm:$0xff] %v851
    %v853 = vld [vmem:[%s778 + $0xd8] sm:$0x11]
    %v854 = vsel %vm150, %v713, %v853
    %855 = vst [vmem:[%s778 + $0xd8] sm:$0x11] %v854
    %v856 = vld [vmem:[%s778 + $0xe0] sm:$0xff]
    %v857 = vsel %vm783, %v720, %v856
    %858 = vst [vmem:[%s778 + $0xe0] sm:$0xff] %v857
    %v859 = vld [vmem:[%s778 + $0xe8] sm:$0x11]
    %v860 = vsel %vm150, %v721, %v859
    %861 = vst [vmem:[%s778 + $0xe8] sm:$0x11] %v860
    %v862 = vld [vmem:[%s778 + $0xf0] sm:$0xff]
    %v863 = vsel %vm783, %v728, %v862
    %864 = vst [vmem:[%s778 + $0xf0] sm:$0xff] %v863
    %v865 = vld [vmem:[%s778 + $0xf8] sm:$0x11]
    %v866 = vsel %vm150, %v729, %v865
    %867 = vst [vmem:[%s778 + $0xf8] sm:$0x11] %v866
    %v868 = vld [vmem:[%s778 + $0x100] sm:$0xff]
    %v869 = vsel %vm783, %v736, %v868
    %870 = vst [vmem:[%s778 + $0x100] sm:$0xff] %v869
    %v871 = vld [vmem:[%s778 + $0x108] sm:$0x11]
    %v872 = vsel %vm150, %v737, %v871
    %873 = vst [vmem:[%s778 + $0x108] sm:$0x11] %v872
    %v874 = vld [vmem:[%s778 + $0x110] sm:$0xff]
    %v875 = vsel %vm783, %v744, %v874
    %876 = vst [vmem:[%s778 + $0x110] sm:$0xff] %v875
    %v877 = vld [vmem:[%s778 + $0x118] sm:$0x11]
    %v878 = vsel %vm150, %v745, %v877
    %879 = vst [vmem:[%s778 + $0x118] sm:$0x11] %v878
    %v880 = vld [vmem:[#allocation2] sm:$0xff]
    %v881 = vld [vmem:[#allocation2 + $0x8] sm:$0x11]
    %v882 = vld [vmem:[#allocation2 + $0x10] sm:$0xff]
    %v883 = vld [vmem:[#allocation2 + $0x18] sm:$0x11]
    %v884 = vld [vmem:[#allocation2 + $0x20] sm:$0xff]
    %v885 = vld [vmem:[#allocation2 + $0x28] sm:$0x11]
    %v886 = vld [vmem:[#allocation2 + $0x30] sm:$0xff]
    %v887 = vld [vmem:[#allocation2 + $0x38] sm:$0x11]
    %v888 = vld [vmem:[#allocation2 + $0x40] sm:$0xff]
    %v889 = vld [vmem:[#allocation2 + $0x48] sm:$0x11]
    %v890 = vld [vmem:[#allocation2 + $0x50] sm:$0xff]
    %v891 = vld [vmem:[#allocation2 + $0x58] sm:$0x11]
    %v892 = vld [vmem:[#allocation2 + $0x60] sm:$0xff]
    %v893 = vld [vmem:[#allocation2 + $0x68] sm:$0x11]
    %v894 = vld [vmem:[#allocation2 + $0x70] sm:$0xff]
    %v895 = vld [vmem:[#allocation2 + $0x78] sm:$0x11]
    %v896 = vld [vmem:[#allocation2 + $0xa0] sm:$0xff]
    %v897 = vld [vmem:[#allocation2 + $0xa8] sm:$0x11]
    %v898 = vld [vmem:[#allocation2 + $0xb0] sm:$0xff]
    %v899 = vld [vmem:[#allocation2 + $0xb8] sm:$0x11]
    %v900 = vld [vmem:[#allocation2 + $0xc0] sm:$0xff]
    %v901 = vld [vmem:[#allocation2 + $0xc8] sm:$0x11]
    %v902 = vld [vmem:[#allocation2 + $0xd0] sm:$0xff]
    %v903 = vld [vmem:[#allocation2 + $0xd8] sm:$0x11]
    %v904 = vld [vmem:[#allocation2 + $0xe0] sm:$0xff]
    %v905 = vld [vmem:[#allocation2 + $0xe8] sm:$0x11]
    %v906 = vld [vmem:[#allocation2 + $0xf0] sm:$0xff]
    %v907 = vld [vmem:[#allocation2 + $0xf8] sm:$0x11]
    %v908 = vld [vmem:[#allocation2 + $0x100] sm:$0xff]
    %v909 = vld [vmem:[#allocation2 + $0x108] sm:$0x11]
    %v910 = vld [vmem:[#allocation2 + $0x110] sm:$0xff]
    %v911 = vld [vmem:[#allocation2 + $0x118] sm:$0x11]
    %912 = vst [vmem:[#allocation3] sm:$0xff] %v880
    %913 = vst [vmem:[#allocation3 + $0x48] sm:$0xff] %v882
    %914 = vst [vmem:[#allocation3 + $0x90] sm:$0xff] %v884
    %915 = vst [vmem:[#allocation3 + $0xd8] sm:$0xff] %v886
    %916 = vst [vmem:[#allocation3 + $0x120] sm:$0xff] %v888
    %917 = vst [vmem:[#allocation3 + $0x168] sm:$0xff] %v890
    %918 = vst [vmem:[#allocation3 + $0x1b0] sm:$0xff] %v892
    %919 = vst [vmem:[#allocation3 + $0x1f8] sm:$0xff] %v894
    %920 = vst [vmem:[#allocation3 + $0x240] sm:$0xff] %v896
    %921 = vst [vmem:[#allocation3 + $0x288] sm:$0xff] %v898
    %922 = vst [vmem:[#allocation3 + $0x2d0] sm:$0xff] %v900
    %923 = vst [vmem:[#allocation3 + $0x318] sm:$0xff] %v902
    %924 = vst [vmem:[#allocation3 + $0x360] sm:$0xff] %v904
    %925 = vst [vmem:[#allocation3 + $0x3a8] sm:$0xff] %v906
    %926 = vst [vmem:[#allocation3 + $0x3f0] sm:$0xff] %v908
    %927 = vst [vmem:[#allocation3 + $0x438] sm:$0xff] %v910
    %vm928 = vsmask.f32 3328
    %vm929 = vsmask.f32 7440
    %vm930 = vmor %vm928, %vm929
    %v932 = vshrl.u32 %v880, 16
    %v934 = vrot.slane %v932, 4
    %v935 = vshll.u32 %v880, 16
    %v937 = vrot.slane %v935, 5
    %v938 = vor.u32 %v934, %v937
    %v939 = vrot.slane %v938, 4
    %v941 = vshll.u32 %v881, 16
    %v943 = vrot.slane %v941, 5
    %v944 = vsel %vm930, %v939, %v943
    %v946 = vshrl.u32 %v882, 16
    %v948 = vrot.slane %v946, 4
    %v949 = vshll.u32 %v882, 16
    %v951 = vrot.slane %v949, 5
    %v952 = vor.u32 %v948, %v951
    %v953 = vrot.slane %v952, 4
    %v955 = vshll.u32 %v883, 16
    %v957 = vrot.slane %v955, 5
    %v958 = vsel %vm930, %v953, %v957
    %v960 = vshrl.u32 %v884, 16
    %v962 = vrot.slane %v960, 4
    %v963 = vshll.u32 %v884, 16
    %v965 = vrot.slane %v963, 5
    %v966 = vor.u32 %v962, %v965
    %v967 = vrot.slane %v966, 4
    %v969 = vshll.u32 %v885, 16
    %v971 = vrot.slane %v969, 5
    %v972 = vsel %vm930, %v967, %v971
    %v974 = vshrl.u32 %v886, 16
    %v976 = vrot.slane %v974, 4
    %v977 = vshll.u32 %v886, 16
    %v979 = vrot.slane %v977, 5
    %v980 = vor.u32 %v976, %v979
    %v981 = vrot.slane %v980, 4
    %v983 = vshll.u32 %v887, 16
    %v985 = vrot.slane %v983, 5
    %v986 = vsel %vm930, %v981, %v985
    %v988 = vshrl.u32 %v888, 16
    %v990 = vrot.slane %v988, 4
    %v991 = vshll.u32 %v888, 16
    %v993 = vrot.slane %v991, 5
    %v994 = vor.u32 %v990, %v993
    %v995 = vrot.slane %v994, 4
    %v997 = vshll.u32 %v889, 16
    %v999 = vrot.slane %v997, 5
    %v1000 = vsel %vm930, %v995, %v999
    %v1002 = vshrl.u32 %v890, 16
    %v1004 = vrot.slane %v1002, 4
    %v1005 = vshll.u32 %v890, 16
    %v1007 = vrot.slane %v1005, 5
    %v1008 = vor.u32 %v1004, %v1007
    %v1009 = vrot.slane %v1008, 4
    %v1011 = vshll.u32 %v891, 16
    %v1013 = vrot.slane %v1011, 5
    %v1014 = vsel %vm930, %v1009, %v1013
    %v1016 = vshrl.u32 %v892, 16
    %v1018 = vrot.slane %v1016, 4
    %v1019 = vshll.u32 %v892, 16
    %v1021 = vrot.slane %v1019, 5
    %v1022 = vor.u32 %v1018, %v1021
    %v1023 = vrot.slane %v1022, 4
    %v1025 = vshll.u32 %v893, 16
    %v1027 = vrot.slane %v1025, 5
    %v1028 = vsel %vm930, %v1023, %v1027
    %v1030 = vshrl.u32 %v894, 16
    %v1032 = vrot.slane %v1030, 4
    %v1033 = vshll.u32 %v894, 16
    %v1035 = vrot.slane %v1033, 5
    %v1036 = vor.u32 %v1032, %v1035
    %v1037 = vrot.slane %v1036, 4
    %v1039 = vshll.u32 %v895, 16
    %v1041 = vrot.slane %v1039, 5
    %v1042 = vsel %vm930, %v1037, %v1041
    %v1044 = vshrl.u32 %v896, 16
    %v1046 = vrot.slane %v1044, 4
    %v1047 = vshll.u32 %v896, 16
    %v1049 = vrot.slane %v1047, 5
    %v1050 = vor.u32 %v1046, %v1049
    %v1051 = vrot.slane %v1050, 4
    %v1053 = vshll.u32 %v897, 16
    %v1055 = vrot.slane %v1053, 5
    %v1056 = vsel %vm930, %v1051, %v1055
    %v1058 = vshrl.u32 %v898, 16
    %v1060 = vrot.slane %v1058, 4
    %v1061 = vshll.u32 %v898, 16
    %v1063 = vrot.slane %v1061, 5
    %v1064 = vor.u32 %v1060, %v1063
    %v1065 = vrot.slane %v1064, 4
    %v1067 = vshll.u32 %v899, 16
    %v1069 = vrot.slane %v1067, 5
    %v1070 = vsel %vm930, %v1065, %v1069
    %v1072 = vshrl.u32 %v900, 16
    %v1074 = vrot.slane %v1072, 4
    %v1075 = vshll.u32 %v900, 16
    %v1077 = vrot.slane %v1075, 5
    %v1078 = vor.u32 %v1074, %v1077
    %v1079 = vrot.slane %v1078, 4
    %v1081 = vshll.u32 %v901, 16
    %v1083 = vrot.slane %v1081, 5
    %v1084 = vsel %vm930, %v1079, %v1083
    %v1086 = vshrl.u32 %v902, 16
    %v1088 = vrot.slane %v1086, 4
    %v1089 = vshll.u32 %v902, 16
    %v1091 = vrot.slane %v1089, 5
    %v1092 = vor.u32 %v1088, %v1091
    %v1093 = vrot.slane %v1092, 4
    %v1095 = vshll.u32 %v903, 16
    %v1097 = vrot.slane %v1095, 5
    %v1098 = vsel %vm930, %v1093, %v1097
    %v1100 = vshrl.u32 %v904, 16
    %v1102 = vrot.slane %v1100, 4
    %v1103 = vshll.u32 %v904, 16
    %v1105 = vrot.slane %v1103, 5
    %v1106 = vor.u32 %v1102, %v1105
    %v1107 = vrot.slane %v1106, 4
    %v1109 = vshll.u32 %v905, 16
    %v1111 = vrot.slane %v1109, 5
    %v1112 = vsel %vm930, %v1107, %v1111
    %v1114 = vshrl.u32 %v906, 16
    %v1116 = vrot.slane %v1114, 4
    %v1117 = vshll.u32 %v906, 16
    %v1119 = vrot.slane %v1117, 5
    %v1120 = vor.u32 %v1116, %v1119
    %v1121 = vrot.slane %v1120, 4
    %v1123 = vshll.u32 %v907, 16
    %v1125 = vrot.slane %v1123, 5
    %v1126 = vsel %vm930, %v1121, %v1125
    %v1128 = vshrl.u32 %v908, 16
    %v1130 = vrot.slane %v1128, 4
    %v1131 = vshll.u32 %v908, 16
    %v1133 = vrot.slane %v1131, 5
    %v1134 = vor.u32 %v1130, %v1133
    %v1135 = vrot.slane %v1134, 4
    %v1137 = vshll.u32 %v909, 16
    %v1139 = vrot.slane %v1137, 5
    %v1140 = vsel %vm930, %v1135, %v1139
    %v1142 = vshrl.u32 %v910, 16
    %v1144 = vrot.slane %v1142, 4
    %v1145 = vshll.u32 %v910, 16
    %v1147 = vrot.slane %v1145, 5
    %v1148 = vor.u32 %v1144, %v1147
    %v1149 = vrot.slane %v1148, 4
    %v1151 = vshll.u32 %v911, 16
    %v1153 = vrot.slane %v1151, 5
    %v1154 = vsel %vm930, %v1149, %v1153
    %1171 = vst [vmem:[#allocation3 + $0x8] sm:$0xff] %v944
    %1172 = vst [vmem:[#allocation3 + $0x50] sm:$0xff] %v958
    %1173 = vst [vmem:[#allocation3 + $0x98] sm:$0xff] %v972
    %1174 = vst [vmem:[#allocation3 + $0xe0] sm:$0xff] %v986
    %1175 = vst [vmem:[#allocation3 + $0x128] sm:$0xff] %v1000
    %1176 = vst [vmem:[#allocation3 + $0x170] sm:$0xff] %v1014
    %1177 = vst [vmem:[#allocation3 + $0x1b8] sm:$0xff] %v1028
    %1178 = vst [vmem:[#allocation3 + $0x200] sm:$0xff] %v1042
    %1179 = vst [vmem:[#allocation3 + $0x248] sm:$0xff] %v1056
    %1180 = vst [vmem:[#allocation3 + $0x290] sm:$0xff] %v1070
    %1181 = vst [vmem:[#allocation3 + $0x2d8] sm:$0xff] %v1084
    %1182 = vst [vmem:[#allocation3 + $0x320] sm:$0xff] %v1098
    %1183 = vst [vmem:[#allocation3 + $0x368] sm:$0xff] %v1112
    %1184 = vst [vmem:[#allocation3 + $0x3b0] sm:$0xff] %v1126
    %1185 = vst [vmem:[#allocation3 + $0x3f8] sm:$0xff] %v1140
    %1186 = vst [vmem:[#allocation3 + $0x440] sm:$0xff] %v1154
    %vm1219 = vcmask 1042432
    %vm1220 = vcmask 1046532
    %vm1221 = vmor %vm1219, %vm1220
    %v1222 = vrot.slane %v880, 5
    %v1223 = vrot.slane %v1222, 4
    %v1224 = vrot.slane %v881, 5
    %v1225 = vsel %vm1221, %v1223, %v1224
    %v1226 = vrot.slane %v882, 5
    %v1227 = vrot.slane %v1226, 4
    %v1228 = vrot.slane %v883, 5
    %v1229 = vsel %vm1221, %v1227, %v1228
    %v1230 = vrot.slane %v884, 5
    %v1231 = vrot.slane %v1230, 4
    %v1232 = vrot.slane %v885, 5
    %v1233 = vsel %vm1221, %v1231, %v1232
    %v1234 = vrot.slane %v886, 5
    %v1235 = vrot.slane %v1234, 4
    %v1236 = vrot.slane %v887, 5
    %v1237 = vsel %vm1221, %v1235, %v1236
    %v1238 = vrot.slane %v888, 5
    %v1239 = vrot.slane %v1238, 4
    %v1240 = vrot.slane %v889, 5
    %v1241 = vsel %vm1221, %v1239, %v1240
    %v1242 = vrot.slane %v890, 5
    %v1243 = vrot.slane %v1242, 4
    %v1244 = vrot.slane %v891, 5
    %v1245 = vsel %vm1221, %v1243, %v1244
    %v1246 = vrot.slane %v892, 5
    %v1247 = vrot.slane %v1246, 4
    %v1248 = vrot.slane %v893, 5
    %v1249 = vsel %vm1221, %v1247, %v1248
    %v1250 = vrot.slane %v894, 5
    %v1251 = vrot.slane %v1250, 4
    %v1252 = vrot.slane %v895, 5
    %v1253 = vsel %vm1221, %v1251, %v1252
    %v1254 = vrot.slane %v896, 5
    %v1255 = vrot.slane %v1254, 4
    %v1256 = vrot.slane %v897, 5
    %v1257 = vsel %vm1221, %v1255, %v1256
    %v1258 = vrot.slane %v898, 5
    %v1259 = vrot.slane %v1258, 4
    %v1260 = vrot.slane %v899, 5
    %v1261 = vsel %vm1221, %v1259, %v1260
    %v1262 = vrot.slane %v900, 5
    %v1263 = vrot.slane %v1262, 4
    %v1264 = vrot.slane %v901, 5
    %v1265 = vsel %vm1221, %v1263, %v1264
    %v1266 = vrot.slane %v902, 5
    %v1267 = vrot.slane %v1266, 4
    %v1268 = vrot.slane %v903, 5
    %v1269 = vsel %vm1221, %v1267, %v1268
    %v1270 = vrot.slane %v904, 5
    %v1271 = vrot.slane %v1270, 4
    %v1272 = vrot.slane %v905, 5
    %v1273 = vsel %vm1221, %v1271, %v1272
    %v1274 = vrot.slane %v906, 5
    %v1275 = vrot.slane %v1274, 4
    %v1276 = vrot.slane %v907, 5
    %v1277 = vsel %vm1221, %v1275, %v1276
    %v1278 = vrot.slane %v908, 5
    %v1279 = vrot.slane %v1278, 4
    %v1280 = vrot.slane %v909, 5
    %v1281 = vsel %vm1221, %v1279, %v1280
    %v1282 = vrot.slane %v910, 5
    %v1283 = vrot.slane %v1282, 4
    %v1284 = vrot.slane %v911, 5
    %v1285 = vsel %vm1221, %v1283, %v1284
    %1302 = vst [vmem:[#allocation3 + $0x10] sm:$0xff] %v1225
    %1303 = vst [vmem:[#allocation3 + $0x58] sm:$0xff] %v1229
    %1304 = vst [vmem:[#allocation3 + $0xa0] sm:$0xff] %v1233
    %1305 = vst [vmem:[#allocation3 + $0xe8] sm:$0xff] %v1237
    %1306 = vst [vmem:[#allocation3 + $0x130] sm:$0xff] %v1241
    %1307 = vst [vmem:[#allocation3 + $0x178] sm:$0xff] %v1245
    %1308 = vst [vmem:[#allocation3 + $0x1c0] sm:$0xff] %v1249
    %1309 = vst [vmem:[#allocation3 + $0x208] sm:$0xff] %v1253
    %1310 = vst [vmem:[#allocation3 + $0x250] sm:$0xff] %v1257
    %1311 = vst [vmem:[#allocation3 + $0x298] sm:$0xff] %v1261
    %1312 = vst [vmem:[#allocation3 + $0x2e0] sm:$0xff] %v1265
    %1313 = vst [vmem:[#allocation3 + $0x328] sm:$0xff] %v1269
    %1314 = vst [vmem:[#allocation3 + $0x370] sm:$0xff] %v1273
    %1315 = vst [vmem:[#allocation3 + $0x3b8] sm:$0xff] %v1277
    %1316 = vst [vmem:[#allocation3 + $0x400] sm:$0xff] %v1281
    %1317 = vst [vmem:[#allocation3 + $0x448] sm:$0xff] %v1285
    %v1318 = vld [vmem:[%s778] sm:$0xff]
    %v1319 = vld [vmem:[%s778 + $0x8] sm:$0x11]
    %v1320 = vld [vmem:[%s778 + $0x10] sm:$0xff]
    %v1321 = vld [vmem:[%s778 + $0x18] sm:$0x11]
    %v1322 = vld [vmem:[%s778 + $0x20] sm:$0xff]
    %v1323 = vld [vmem:[%s778 + $0x28] sm:$0x11]
    %v1324 = vld [vmem:[%s778 + $0x30] sm:$0xff]
    %v1325 = vld [vmem:[%s778 + $0x38] sm:$0x11]
    %v1326 = vld [vmem:[%s778 + $0x40] sm:$0xff]
    %v1327 = vld [vmem:[%s778 + $0x48] sm:$0x11]
    %v1328 = vld [vmem:[%s778 + $0x50] sm:$0xff]
    %v1329 = vld [vmem:[%s778 + $0x58] sm:$0x11]
    %v1330 = vld [vmem:[%s778 + $0x60] sm:$0xff]
    %v1331 = vld [vmem:[%s778 + $0x68] sm:$0x11]
    %v1332 = vld [vmem:[%s778 + $0x70] sm:$0xff]
    %v1333 = vld [vmem:[%s778 + $0x78] sm:$0x11]
    %v1334 = vld [vmem:[%s778 + $0xa0] sm:$0xff]
    %v1335 = vld [vmem:[%s778 + $0xa8] sm:$0x11]
    %v1336 = vld [vmem:[%s778 + $0xb0] sm:$0xff]
    %v1337 = vld [vmem:[%s778 + $0xb8] sm:$0x11]
    %v1338 = vld [vmem:[%s778 + $0xc0] sm:$0xff]
    %v1339 = vld [vmem:[%s778 + $0xc8] sm:$0x11]
    %v1340 = vld [vmem:[%s778 + $0xd0] sm:$0xff]
    %v1341 = vld [vmem:[%s778 + $0xd8] sm:$0x11]
    %v1342 = vld [vmem:[%s778 + $0xe0] sm:$0xff]
    %v1343 = vld [vmem:[%s778 + $0xe8] sm:$0x11]
    %v1344 = vld [vmem:[%s778 + $0xf0] sm:$0xff]
    %v1345 = vld [vmem:[%s778 + $0xf8] sm:$0x11]
    %v1346 = vld [vmem:[%s778 + $0x100] sm:$0xff]
    %v1347 = vld [vmem:[%s778 + $0x108] sm:$0x11]
    %v1348 = vld [vmem:[%s778 + $0x110] sm:$0xff]
    %v1349 = vld [vmem:[%s778 + $0x118] sm:$0x11]
    %1350 = vst [vmem:[#allocation3 + $0x18] sm:$0xff] %v1318
    %1351 = vst [vmem:[#allocation3 + $0x60] sm:$0xff] %v1320
    %1352 = vst [vmem:[#allocation3 + $0xa8] sm:$0xff] %v1322
    %1353 = vst [vmem:[#allocation3 + $0xf0] sm:$0xff] %v1324
    %1354 = vst [vmem:[#allocation3 + $0x138] sm:$0xff] %v1326
    %1355 = vst [vmem:[#allocation3 + $0x180] sm:$0xff] %v1328
    %1356 = vst [vmem:[#allocation3 + $0x1c8] sm:$0xff] %v1330
    %1357 = vst [vmem:[#allocation3 + $0x210] sm:$0xff] %v1332
    %1358 = vst [vmem:[#allocation3 + $0x258] sm:$0xff] %v1334
    %1359 = vst [vmem:[#allocation3 + $0x2a0] sm:$0xff] %v1336
    %1360 = vst [vmem:[#allocation3 + $0x2e8] sm:$0xff] %v1338
    %1361 = vst [vmem:[#allocation3 + $0x330] sm:$0xff] %v1340
    %1362 = vst [vmem:[#allocation3 + $0x378] sm:$0xff] %v1342
    %1363 = vst [vmem:[#allocation3 + $0x3c0] sm:$0xff] %v1344
    %1364 = vst [vmem:[#allocation3 + $0x408] sm:$0xff] %v1346
    %1365 = vst [vmem:[#allocation3 + $0x450] sm:$0xff] %v1348
    %v1367 = vshrl.u32 %v1318, 16
    %v1369 = vrot.slane %v1367, 4
    %v1370 = vshll.u32 %v1318, 16
    %v1372 = vrot.slane %v1370, 5
    %v1373 = vor.u32 %v1369, %v1372
    %v1374 = vrot.slane %v1373, 4
    %v1376 = vshll.u32 %v1319, 16
    %v1378 = vrot.slane %v1376, 5
    %v1379 = vsel %vm930, %v1374, %v1378
    %v1381 = vshrl.u32 %v1320, 16
    %v1383 = vrot.slane %v1381, 4
    %v1384 = vshll.u32 %v1320, 16
    %v1386 = vrot.slane %v1384, 5
    %v1387 = vor.u32 %v1383, %v1386
    %v1388 = vrot.slane %v1387, 4
    %v1390 = vshll.u32 %v1321, 16
    %v1392 = vrot.slane %v1390, 5
    %v1393 = vsel %vm930, %v1388, %v1392
    %v1395 = vshrl.u32 %v1322, 16
    %v1397 = vrot.slane %v1395, 4
    %v1398 = vshll.u32 %v1322, 16
    %v1400 = vrot.slane %v1398, 5
    %v1401 = vor.u32 %v1397, %v1400
    %v1402 = vrot.slane %v1401, 4
    %v1404 = vshll.u32 %v1323, 16
    %v1406 = vrot.slane %v1404, 5
    %v1407 = vsel %vm930, %v1402, %v1406
    %v1409 = vshrl.u32 %v1324, 16
    %v1411 = vrot.slane %v1409, 4
    %v1412 = vshll.u32 %v1324, 16
    %v1414 = vrot.slane %v1412, 5
    %v1415 = vor.u32 %v1411, %v1414
    %v1416 = vrot.slane %v1415, 4
    %v1418 = vshll.u32 %v1325, 16
    %v1420 = vrot.slane %v1418, 5
    %v1421 = vsel %vm930, %v1416, %v1420
    %v1423 = vshrl.u32 %v1326, 16
    %v1425 = vrot.slane %v1423, 4
    %v1426 = vshll.u32 %v1326, 16
    %v1428 = vrot.slane %v1426, 5
    %v1429 = vor.u32 %v1425, %v1428
    %v1430 = vrot.slane %v1429, 4
    %v1432 = vshll.u32 %v1327, 16
    %v1434 = vrot.slane %v1432, 5
    %v1435 = vsel %vm930, %v1430, %v1434
    %v1437 = vshrl.u32 %v1328, 16
    %v1439 = vrot.slane %v1437, 4
    %v1440 = vshll.u32 %v1328, 16
    %v1442 = vrot.slane %v1440, 5
    %v1443 = vor.u32 %v1439, %v1442
    %v1444 = vrot.slane %v1443, 4
    %v1446 = vshll.u32 %v1329, 16
    %v1448 = vrot.slane %v1446, 5
    %v1449 = vsel %vm930, %v1444, %v1448
    %v1451 = vshrl.u32 %v1330, 16
    %v1453 = vrot.slane %v1451, 4
    %v1454 = vshll.u32 %v1330, 16
    %v1456 = vrot.slane %v1454, 5
    %v1457 = vor.u32 %v1453, %v1456
    %v1458 = vrot.slane %v1457, 4
    %v1460 = vshll.u32 %v1331, 16
    %v1462 = vrot.slane %v1460, 5
    %v1463 = vsel %vm930, %v1458, %v1462
    %v1465 = vshrl.u32 %v1332, 16
    %v1467 = vrot.slane %v1465, 4
    %v1468 = vshll.u32 %v1332, 16
    %v1470 = vrot.slane %v1468, 5
    %v1471 = vor.u32 %v1467, %v1470
    %v1472 = vrot.slane %v1471, 4
    %v1474 = vshll.u32 %v1333, 16
    %v1476 = vrot.slane %v1474, 5
    %v1477 = vsel %vm930, %v1472, %v1476
    %v1479 = vshrl.u32 %v1334, 16
    %v1481 = vrot.slane %v1479, 4
    %v1482 = vshll.u32 %v1334, 16
    %v1484 = vrot.slane %v1482, 5
    %v1485 = vor.u32 %v1481, %v1484
    %v1486 = vrot.slane %v1485, 4
    %v1488 = vshll.u32 %v1335, 16
    %v1490 = vrot.slane %v1488, 5
    %v1491 = vsel %vm930, %v1486, %v1490
    %v1493 = vshrl.u32 %v1336, 16
    %v1495 = vrot.slane %v1493, 4
    %v1496 = vshll.u32 %v1336, 16
    %v1498 = vrot.slane %v1496, 5
    %v1499 = vor.u32 %v1495, %v1498
    %v1500 = vrot.slane %v1499, 4
    %v1502 = vshll.u32 %v1337, 16
    %v1504 = vrot.slane %v1502, 5
    %v1505 = vsel %vm930, %v1500, %v1504
    %v1507 = vshrl.u32 %v1338, 16
    %v1509 = vrot.slane %v1507, 4
    %v1510 = vshll.u32 %v1338, 16
    %v1512 = vrot.slane %v1510, 5
    %v1513 = vor.u32 %v1509, %v1512
    %v1514 = vrot.slane %v1513, 4
    %v1516 = vshll.u32 %v1339, 16
    %v1518 = vrot.slane %v1516, 5
    %v1519 = vsel %vm930, %v1514, %v1518
    %v1521 = vshrl.u32 %v1340, 16
    %v1523 = vrot.slane %v1521, 4
    %v1524 = vshll.u32 %v1340, 16
    %v1526 = vrot.slane %v1524, 5
    %v1527 = vor.u32 %v1523, %v1526
    %v1528 = vrot.slane %v1527, 4
    %v1530 = vshll.u32 %v1341, 16
    %v1532 = vrot.slane %v1530, 5
    %v1533 = vsel %vm930, %v1528, %v1532
    %v1535 = vshrl.u32 %v1342, 16
    %v1537 = vrot.slane %v1535, 4
    %v1538 = vshll.u32 %v1342, 16
    %v1540 = vrot.slane %v1538, 5
    %v1541 = vor.u32 %v1537, %v1540
    %v1542 = vrot.slane %v1541, 4
    %v1544 = vshll.u32 %v1343, 16
    %v1546 = vrot.slane %v1544, 5
    %v1547 = vsel %vm930, %v1542, %v1546
    %v1549 = vshrl.u32 %v1344, 16
    %v1551 = vrot.slane %v1549, 4
    %v1552 = vshll.u32 %v1344, 16
    %v1554 = vrot.slane %v1552, 5
    %v1555 = vor.u32 %v1551, %v1554
    %v1556 = vrot.slane %v1555, 4
    %v1558 = vshll.u32 %v1345, 16
    %v1560 = vrot.slane %v1558, 5
    %v1561 = vsel %vm930, %v1556, %v1560
    %v1563 = vshrl.u32 %v1346, 16
    %v1565 = vrot.slane %v1563, 4
    %v1566 = vshll.u32 %v1346, 16
    %v1568 = vrot.slane %v1566, 5
    %v1569 = vor.u32 %v1565, %v1568
    %v1570 = vrot.slane %v1569, 4
    %v1572 = vshll.u32 %v1347, 16
    %v1574 = vrot.slane %v1572, 5
    %v1575 = vsel %vm930, %v1570, %v1574
    %v1577 = vshrl.u32 %v1348, 16
    %v1579 = vrot.slane %v1577, 4
    %v1580 = vshll.u32 %v1348, 16
    %v1582 = vrot.slane %v1580, 5
    %v1583 = vor.u32 %v1579, %v1582
    %v1584 = vrot.slane %v1583, 4
    %v1586 = vshll.u32 %v1349, 16
    %v1588 = vrot.slane %v1586, 5
    %v1589 = vsel %vm930, %v1584, %v1588
    %1606 = vst [vmem:[#allocation3 + $0x20] sm:$0xff] %v1379
    %1607 = vst [vmem:[#allocation3 + $0x68] sm:$0xff] %v1393
    %1608 = vst [vmem:[#allocation3 + $0xb0] sm:$0xff] %v1407
    %1609 = vst [vmem:[#allocation3 + $0xf8] sm:$0xff] %v1421
    %1610 = vst [vmem:[#allocation3 + $0x140] sm:$0xff] %v1435
    %1611 = vst [vmem:[#allocation3 + $0x188] sm:$0xff] %v1449
    %1612 = vst [vmem:[#allocation3 + $0x1d0] sm:$0xff] %v1463
    %1613 = vst [vmem:[#allocation3 + $0x218] sm:$0xff] %v1477
    %1614 = vst [vmem:[#allocation3 + $0x260] sm:$0xff] %v1491
    %1615 = vst [vmem:[#allocation3 + $0x2a8] sm:$0xff] %v1505
    %1616 = vst [vmem:[#allocation3 + $0x2f0] sm:$0xff] %v1519
    %1617 = vst [vmem:[#allocation3 + $0x338] sm:$0xff] %v1533
    %1618 = vst [vmem:[#allocation3 + $0x380] sm:$0xff] %v1547
    %1619 = vst [vmem:[#allocation3 + $0x3c8] sm:$0xff] %v1561
    %1620 = vst [vmem:[#allocation3 + $0x410] sm:$0xff] %v1575
    %1621 = vst [vmem:[#allocation3 + $0x458] sm:$0xff] %v1589
    %v1654 = vrot.slane %v1318, 5
    %v1655 = vrot.slane %v1654, 4
    %v1656 = vrot.slane %v1319, 5
    %v1657 = vsel %vm1221, %v1655, %v1656
    %v1658 = vrot.slane %v1320, 5
    %v1659 = vrot.slane %v1658, 4
    %v1660 = vrot.slane %v1321, 5
    %v1661 = vsel %vm1221, %v1659, %v1660
    %v1662 = vrot.slane %v1322, 5
    %v1663 = vrot.slane %v1662, 4
    %v1664 = vrot.slane %v1323, 5
    %v1665 = vsel %vm1221, %v1663, %v1664
    %v1666 = vrot.slane %v1324, 5
    %v1667 = vrot.slane %v1666, 4
    %v1668 = vrot.slane %v1325, 5
    %v1669 = vsel %vm1221, %v1667, %v1668
    %v1670 = vrot.slane %v1326, 5
    %v1671 = vrot.slane %v1670, 4
    %v1672 = vrot.slane %v1327, 5
    %v1673 = vsel %vm1221, %v1671, %v1672
    %v1674 = vrot.slane %v1328, 5
    %v1675 = vrot.slane %v1674, 4
    %v1676 = vrot.slane %v1329, 5
    %v1677 = vsel %vm1221, %v1675, %v1676
    %v1678 = vrot.slane %v1330, 5
    %v1679 = vrot.slane %v1678, 4
    %v1680 = vrot.slane %v1331, 5
    %v1681 = vsel %vm1221, %v1679, %v1680
    %v1682 = vrot.slane %v1332, 5
    %v1683 = vrot.slane %v1682, 4
    %v1684 = vrot.slane %v1333, 5
    %v1685 = vsel %vm1221, %v1683, %v1684
    %v1686 = vrot.slane %v1334, 5
    %v1687 = vrot.slane %v1686, 4
    %v1688 = vrot.slane %v1335, 5
    %v1689 = vsel %vm1221, %v1687, %v1688
    %v1690 = vrot.slane %v1336, 5
    %v1691 = vrot.slane %v1690, 4
    %v1692 = vrot.slane %v1337, 5
    %v1693 = vsel %vm1221, %v1691, %v1692
    %v1694 = vrot.slane %v1338, 5
    %v1695 = vrot.slane %v1694, 4
    %v1696 = vrot.slane %v1339, 5
    %v1697 = vsel %vm1221, %v1695, %v1696
    %v1698 = vrot.slane %v1340, 5
    %v1699 = vrot.slane %v1698, 4
    %v1700 = vrot.slane %v1341, 5
    %v1701 = vsel %vm1221, %v1699, %v1700
    %v1702 = vrot.slane %v1342, 5
    %v1703 = vrot.slane %v1702, 4
    %v1704 = vrot.slane %v1343, 5
    %v1705 = vsel %vm1221, %v1703, %v1704
    %v1706 = vrot.slane %v1344, 5
    %v1707 = vrot.slane %v1706, 4
    %v1708 = vrot.slane %v1345, 5
    %v1709 = vsel %vm1221, %v1707, %v1708
    %v1710 = vrot.slane %v1346, 5
    %v1711 = vrot.slane %v1710, 4
    %v1712 = vrot.slane %v1347, 5
    %v1713 = vsel %vm1221, %v1711, %v1712
    %v1714 = vrot.slane %v1348, 5
    %v1715 = vrot.slane %v1714, 4
    %v1716 = vrot.slane %v1349, 5
    %v1717 = vsel %vm1221, %v1715, %v1716
    %1734 = vst [vmem:[#allocation3 + $0x28] sm:$0xff] %v1657
    %1735 = vst [vmem:[#allocation3 + $0x70] sm:$0xff] %v1661
    %1736 = vst [vmem:[#allocation3 + $0xb8] sm:$0xff] %v1665
    %1737 = vst [vmem:[#allocation3 + $0x100] sm:$0xff] %v1669
    %1738 = vst [vmem:[#allocation3 + $0x148] sm:$0xff] %v1673
    %1739 = vst [vmem:[#allocation3 + $0x190] sm:$0xff] %v1677
    %1740 = vst [vmem:[#allocation3 + $0x1d8] sm:$0xff] %v1681
    %1741 = vst [vmem:[#allocation3 + $0x220] sm:$0xff] %v1685
    %1742 = vst [vmem:[#allocation3 + $0x268] sm:$0xff] %v1689
    %1743 = vst [vmem:[#allocation3 + $0x2b0] sm:$0xff] %v1693
    %1744 = vst [vmem:[#allocation3 + $0x2f8] sm:$0xff] %v1697
    %1745 = vst [vmem:[#allocation3 + $0x340] sm:$0xff] %v1701
    %1746 = vst [vmem:[#allocation3 + $0x388] sm:$0xff] %v1705
    %1747 = vst [vmem:[#allocation3 + $0x3d0] sm:$0xff] %v1709
    %1748 = vst [vmem:[#allocation3 + $0x418] sm:$0xff] %v1713
    %1749 = vst [vmem:[#allocation3 + $0x460] sm:$0xff] %v1717
    %s1750 = scalar_lea.vmem [#allocation2], 32
    %v1751 = vld [vmem:[%s1750] sm:$0xff]
    %v1752 = vld [vmem:[%s1750 + $0x8] sm:$0x11]
    %v1753 = vld [vmem:[%s1750 + $0x10] sm:$0xff]
    %v1754 = vld [vmem:[%s1750 + $0x18] sm:$0x11]
    %v1755 = vld [vmem:[%s1750 + $0x20] sm:$0xff]
    %v1756 = vld [vmem:[%s1750 + $0x28] sm:$0x11]
    %v1757 = vld [vmem:[%s1750 + $0x30] sm:$0xff]
    %v1758 = vld [vmem:[%s1750 + $0x38] sm:$0x11]
    %v1759 = vld [vmem:[%s1750 + $0x40] sm:$0xff]
    %v1760 = vld [vmem:[%s1750 + $0x48] sm:$0x11]
    %v1761 = vld [vmem:[%s1750 + $0x50] sm:$0xff]
    %v1762 = vld [vmem:[%s1750 + $0x58] sm:$0x11]
    %v1763 = vld [vmem:[%s1750 + $0x60] sm:$0xff]
    %v1764 = vld [vmem:[%s1750 + $0x68] sm:$0x11]
    %v1765 = vld [vmem:[%s1750 + $0x70] sm:$0xff]
    %v1766 = vld [vmem:[%s1750 + $0x78] sm:$0x11]
    %v1767 = vld [vmem:[%s1750 + $0xa0] sm:$0xff]
    %v1768 = vld [vmem:[%s1750 + $0xa8] sm:$0x11]
    %v1769 = vld [vmem:[%s1750 + $0xb0] sm:$0xff]
    %v1770 = vld [vmem:[%s1750 + $0xb8] sm:$0x11]
    %v1771 = vld [vmem:[%s1750 + $0xc0] sm:$0xff]
    %v1772 = vld [vmem:[%s1750 + $0xc8] sm:$0x11]
    %v1773 = vld [vmem:[%s1750 + $0xd0] sm:$0xff]
    %v1774 = vld [vmem:[%s1750 + $0xd8] sm:$0x11]
    %v1775 = vld [vmem:[%s1750 + $0xe0] sm:$0xff]
    %v1776 = vld [vmem:[%s1750 + $0xe8] sm:$0x11]
    %v1777 = vld [vmem:[%s1750 + $0xf0] sm:$0xff]
    %v1778 = vld [vmem:[%s1750 + $0xf8] sm:$0x11]
    %v1779 = vld [vmem:[%s1750 + $0x100] sm:$0xff]
    %v1780 = vld [vmem:[%s1750 + $0x108] sm:$0x11]
    %v1781 = vld [vmem:[%s1750 + $0x110] sm:$0xff]
    %v1782 = vld [vmem:[%s1750 + $0x118] sm:$0x11]
    %1783 = vst [vmem:[#allocation3 + $0x30] sm:$0xff] %v1751
    %1784 = vst [vmem:[#allocation3 + $0x78] sm:$0xff] %v1753
    %1785 = vst [vmem:[#allocation3 + $0xc0] sm:$0xff] %v1755
    %1786 = vst [vmem:[#allocation3 + $0x108] sm:$0xff] %v1757
    %1787 = vst [vmem:[#allocation3 + $0x150] sm:$0xff] %v1759
    %1788 = vst [vmem:[#allocation3 + $0x198] sm:$0xff] %v1761
    %1789 = vst [vmem:[#allocation3 + $0x1e0] sm:$0xff] %v1763
    %1790 = vst [vmem:[#allocation3 + $0x228] sm:$0xff] %v1765
    %1791 = vst [vmem:[#allocation3 + $0x270] sm:$0xff] %v1767
    %1792 = vst [vmem:[#allocation3 + $0x2b8] sm:$0xff] %v1769
    %1793 = vst [vmem:[#allocation3 + $0x300] sm:$0xff] %v1771
    %1794 = vst [vmem:[#allocation3 + $0x348] sm:$0xff] %v1773
    %1795 = vst [vmem:[#allocation3 + $0x390] sm:$0xff] %v1775
    %1796 = vst [vmem:[#allocation3 + $0x3d8] sm:$0xff] %v1777
    %1797 = vst [vmem:[#allocation3 + $0x420] sm:$0xff] %v1779
    %1798 = vst [vmem:[#allocation3 + $0x468] sm:$0xff] %v1781
    %v1800 = vshrl.u32 %v1751, 16
    %v1802 = vrot.slane %v1800, 4
    %v1803 = vshll.u32 %v1751, 16
    %v1805 = vrot.slane %v1803, 5
    %v1806 = vor.u32 %v1802, %v1805
    %v1807 = vrot.slane %v1806, 4
    %v1809 = vshll.u32 %v1752, 16
    %v1811 = vrot.slane %v1809, 5
    %v1812 = vsel %vm930, %v1807, %v1811
    %v1814 = vshrl.u32 %v1753, 16
    %v1816 = vrot.slane %v1814, 4
    %v1817 = vshll.u32 %v1753, 16
    %v1819 = vrot.slane %v1817, 5
    %v1820 = vor.u32 %v1816, %v1819
    %v1821 = vrot.slane %v1820, 4
    %v1823 = vshll.u32 %v1754, 16
    %v1825 = vrot.slane %v1823, 5
    %v1826 = vsel %vm930, %v1821, %v1825
    %v1828 = vshrl.u32 %v1755, 16
    %v1830 = vrot.slane %v1828, 4
    %v1831 = vshll.u32 %v1755, 16
    %v1833 = vrot.slane %v1831, 5
    %v1834 = vor.u32 %v1830, %v1833
    %v1835 = vrot.slane %v1834, 4
    %v1837 = vshll.u32 %v1756, 16
    %v1839 = vrot.slane %v1837, 5
    %v1840 = vsel %vm930, %v1835, %v1839
    %v1842 = vshrl.u32 %v1757, 16
    %v1844 = vrot.slane %v1842, 4
    %v1845 = vshll.u32 %v1757, 16
    %v1847 = vrot.slane %v1845, 5
    %v1848 = vor.u32 %v1844, %v1847
    %v1849 = vrot.slane %v1848, 4
    %v1851 = vshll.u32 %v1758, 16
    %v1853 = vrot.slane %v1851, 5
    %v1854 = vsel %vm930, %v1849, %v1853
    %v1856 = vshrl.u32 %v1759, 16
    %v1858 = vrot.slane %v1856, 4
    %v1859 = vshll.u32 %v1759, 16
    %v1861 = vrot.slane %v1859, 5
    %v1862 = vor.u32 %v1858, %v1861
    %v1863 = vrot.slane %v1862, 4
    %v1865 = vshll.u32 %v1760, 16
    %v1867 = vrot.slane %v1865, 5
    %v1868 = vsel %vm930, %v1863, %v1867
    %v1870 = vshrl.u32 %v1761, 16
    %v1872 = vrot.slane %v1870, 4
    %v1873 = vshll.u32 %v1761, 16
    %v1875 = vrot.slane %v1873, 5
    %v1876 = vor.u32 %v1872, %v1875
    %v1877 = vrot.slane %v1876, 4
    %v1879 = vshll.u32 %v1762, 16
    %v1881 = vrot.slane %v1879, 5
    %v1882 = vsel %vm930, %v1877, %v1881
    %v1884 = vshrl.u32 %v1763, 16
    %v1886 = vrot.slane %v1884, 4
    %v1887 = vshll.u32 %v1763, 16
    %v1889 = vrot.slane %v1887, 5
    %v1890 = vor.u32 %v1886, %v1889
    %v1891 = vrot.slane %v1890, 4
    %v1893 = vshll.u32 %v1764, 16
    %v1895 = vrot.slane %v1893, 5
    %v1896 = vsel %vm930, %v1891, %v1895
    %v1898 = vshrl.u32 %v1765, 16
    %v1900 = vrot.slane %v1898, 4
    %v1901 = vshll.u32 %v1765, 16
    %v1903 = vrot.slane %v1901, 5
    %v1904 = vor.u32 %v1900, %v1903
    %v1905 = vrot.slane %v1904, 4
    %v1907 = vshll.u32 %v1766, 16
    %v1909 = vrot.slane %v1907, 5
    %v1910 = vsel %vm930, %v1905, %v1909
    %v1912 = vshrl.u32 %v1767, 16
    %v1914 = vrot.slane %v1912, 4
    %v1915 = vshll.u32 %v1767, 16
    %v1917 = vrot.slane %v1915, 5
    %v1918 = vor.u32 %v1914, %v1917
    %v1919 = vrot.slane %v1918, 4
    %v1921 = vshll.u32 %v1768, 16
    %v1923 = vrot.slane %v1921, 5
    %v1924 = vsel %vm930, %v1919, %v1923
    %v1926 = vshrl.u32 %v1769, 16
    %v1928 = vrot.slane %v1926, 4
    %v1929 = vshll.u32 %v1769, 16
    %v1931 = vrot.slane %v1929, 5
    %v1932 = vor.u32 %v1928, %v1931
    %v1933 = vrot.slane %v1932, 4
    %v1935 = vshll.u32 %v1770, 16
    %v1937 = vrot.slane %v1935, 5
    %v1938 = vsel %vm930, %v1933, %v1937
    %v1940 = vshrl.u32 %v1771, 16
    %v1942 = vrot.slane %v1940, 4
    %v1943 = vshll.u32 %v1771, 16
    %v1945 = vrot.slane %v1943, 5
    %v1946 = vor.u32 %v1942, %v1945
    %v1947 = vrot.slane %v1946, 4
    %v1949 = vshll.u32 %v1772, 16
    %v1951 = vrot.slane %v1949, 5
    %v1952 = vsel %vm930, %v1947, %v1951
    %v1954 = vshrl.u32 %v1773, 16
    %v1956 = vrot.slane %v1954, 4
    %v1957 = vshll.u32 %v1773, 16
    %v1959 = vrot.slane %v1957, 5
    %v1960 = vor.u32 %v1956, %v1959
    %v1961 = vrot.slane %v1960, 4
    %v1963 = vshll.u32 %v1774, 16
    %v1965 = vrot.slane %v1963, 5
    %v1966 = vsel %vm930, %v1961, %v1965
    %v1968 = vshrl.u32 %v1775, 16
    %v1970 = vrot.slane %v1968, 4
    %v1971 = vshll.u32 %v1775, 16
    %v1973 = vrot.slane %v1971, 5
    %v1974 = vor.u32 %v1970, %v1973
    %v1975 = vrot.slane %v1974, 4
    %v1977 = vshll.u32 %v1776, 16
    %v1979 = vrot.slane %v1977, 5
    %v1980 = vsel %vm930, %v1975, %v1979
    %v1982 = vshrl.u32 %v1777, 16
    %v1984 = vrot.slane %v1982, 4
    %v1985 = vshll.u32 %v1777, 16
    %v1987 = vrot.slane %v1985, 5
    %v1988 = vor.u32 %v1984, %v1987
    %v1989 = vrot.slane %v1988, 4
    %v1991 = vshll.u32 %v1778, 16
    %v1993 = vrot.slane %v1991, 5
    %v1994 = vsel %vm930, %v1989, %v1993
    %v1996 = vshrl.u32 %v1779, 16
    %v1998 = vrot.slane %v1996, 4
    %v1999 = vshll.u32 %v1779, 16
    %v2001 = vrot.slane %v1999, 5
    %v2002 = vor.u32 %v1998, %v2001
    %v2003 = vrot.slane %v2002, 4
    %v2005 = vshll.u32 %v1780, 16
    %v2007 = vrot.slane %v2005, 5
    %v2008 = vsel %vm930, %v2003, %v2007
    %v2010 = vshrl.u32 %v1781, 16
    %v2012 = vrot.slane %v2010, 4
    %v2013 = vshll.u32 %v1781, 16
    %v2015 = vrot.slane %v2013, 5
    %v2016 = vor.u32 %v2012, %v2015
    %v2017 = vrot.slane %v2016, 4
    %v2019 = vshll.u32 %v1782, 16
    %v2021 = vrot.slane %v2019, 5
    %v2022 = vsel %vm930, %v2017, %v2021
    %2039 = vst [vmem:[#allocation3 + $0x38] sm:$0xff] %v1812
    %2040 = vst [vmem:[#allocation3 + $0x80] sm:$0xff] %v1826
    %2041 = vst [vmem:[#allocation3 + $0xc8] sm:$0xff] %v1840
    %2042 = vst [vmem:[#allocation3 + $0x110] sm:$0xff] %v1854
    %2043 = vst [vmem:[#allocation3 + $0x158] sm:$0xff] %v1868
    %2044 = vst [vmem:[#allocation3 + $0x1a0] sm:$0xff] %v1882
    %2045 = vst [vmem:[#allocation3 + $0x1e8] sm:$0xff] %v1896
    %2046 = vst [vmem:[#allocation3 + $0x230] sm:$0xff] %v1910
    %2047 = vst [vmem:[#allocation3 + $0x278] sm:$0xff] %v1924
    %2048 = vst [vmem:[#allocation3 + $0x2c0] sm:$0xff] %v1938
    %2049 = vst [vmem:[#allocation3 + $0x308] sm:$0xff] %v1952
    %2050 = vst [vmem:[#allocation3 + $0x350] sm:$0xff] %v1966
    %2051 = vst [vmem:[#allocation3 + $0x398] sm:$0xff] %v1980
    %2052 = vst [vmem:[#allocation3 + $0x3e0] sm:$0xff] %v1994
    %2053 = vst [vmem:[#allocation3 + $0x428] sm:$0xff] %v2008
    %2054 = vst [vmem:[#allocation3 + $0x470] sm:$0xff] %v2022
    %v2087 = vrot.slane %v1751, 5
    %v2088 = vrot.slane %v2087, 4
    %v2089 = vrot.slane %v1752, 5
    %v2090 = vsel %vm1221, %v2088, %v2089
    %v2091 = vrot.slane %v1753, 5
    %v2092 = vrot.slane %v2091, 4
    %v2093 = vrot.slane %v1754, 5
    %v2094 = vsel %vm1221, %v2092, %v2093
    %v2095 = vrot.slane %v1755, 5
    %v2096 = vrot.slane %v2095, 4
    %v2097 = vrot.slane %v1756, 5
    %v2098 = vsel %vm1221, %v2096, %v2097
    %v2099 = vrot.slane %v1757, 5
    %v2100 = vrot.slane %v2099, 4
    %v2101 = vrot.slane %v1758, 5
    %v2102 = vsel %vm1221, %v2100, %v2101
    %v2103 = vrot.slane %v1759, 5
    %v2104 = vrot.slane %v2103, 4
    %v2105 = vrot.slane %v1760, 5
    %v2106 = vsel %vm1221, %v2104, %v2105
    %v2107 = vrot.slane %v1761, 5
    %v2108 = vrot.slane %v2107, 4
    %v2109 = vrot.slane %v1762, 5
    %v2110 = vsel %vm1221, %v2108, %v2109
    %v2111 = vrot.slane %v1763, 5
    %v2112 = vrot.slane %v2111, 4
    %v2113 = vrot.slane %v1764, 5
    %v2114 = vsel %vm1221, %v2112, %v2113
    %v2115 = vrot.slane %v1765, 5
    %v2116 = vrot.slane %v2115, 4
    %v2117 = vrot.slane %v1766, 5
    %v2118 = vsel %vm1221, %v2116, %v2117
    %v2119 = vrot.slane %v1767, 5
    %v2120 = vrot.slane %v2119, 4
    %v2121 = vrot.slane %v1768, 5
    %v2122 = vsel %vm1221, %v2120, %v2121
    %v2123 = vrot.slane %v1769, 5
    %v2124 = vrot.slane %v2123, 4
    %v2125 = vrot.slane %v1770, 5
    %v2126 = vsel %vm1221, %v2124, %v2125
    %v2127 = vrot.slane %v1771, 5
    %v2128 = vrot.slane %v2127, 4
    %v2129 = vrot.slane %v1772, 5
    %v2130 = vsel %vm1221, %v2128, %v2129
    %v2131 = vrot.slane %v1773, 5
    %v2132 = vrot.slane %v2131, 4
    %v2133 = vrot.slane %v1774, 5
    %v2134 = vsel %vm1221, %v2132, %v2133
    %v2135 = vrot.slane %v1775, 5
    %v2136 = vrot.slane %v2135, 4
    %v2137 = vrot.slane %v1776, 5
    %v2138 = vsel %vm1221, %v2136, %v2137
    %v2139 = vrot.slane %v1777, 5
    %v2140 = vrot.slane %v2139, 4
    %v2141 = vrot.slane %v1778, 5
    %v2142 = vsel %vm1221, %v2140, %v2141
    %v2143 = vrot.slane %v1779, 5
    %v2144 = vrot.slane %v2143, 4
    %v2145 = vrot.slane %v1780, 5
    %v2146 = vsel %vm1221, %v2144, %v2145
    %v2147 = vrot.slane %v1781, 5
    %v2148 = vrot.slane %v2147, 4
    %v2149 = vrot.slane %v1782, 5
    %v2150 = vsel %vm1221, %v2148, %v2149
    %2167 = vst [vmem:[#allocation3 + $0x40] sm:$0xff] %v2090
    %2168 = vst [vmem:[#allocation3 + $0x88] sm:$0xff] %v2094
    %2169 = vst [vmem:[#allocation3 + $0xd0] sm:$0xff] %v2098
    %2170 = vst [vmem:[#allocation3 + $0x118] sm:$0xff] %v2102
    %2171 = vst [vmem:[#allocation3 + $0x160] sm:$0xff] %v2106
    %2172 = vst [vmem:[#allocation3 + $0x1a8] sm:$0xff] %v2110
    %2173 = vst [vmem:[#allocation3 + $0x1f0] sm:$0xff] %v2114
    %2174 = vst [vmem:[#allocation3 + $0x238] sm:$0xff] %v2118
    %2175 = vst [vmem:[#allocation3 + $0x280] sm:$0xff] %v2122
    %2176 = vst [vmem:[#allocation3 + $0x2c8] sm:$0xff] %v2126
    %2177 = vst [vmem:[#allocation3 + $0x310] sm:$0xff] %v2130
    %2178 = vst [vmem:[#allocation3 + $0x358] sm:$0xff] %v2134
    %2179 = vst [vmem:[#allocation3 + $0x3a0] sm:$0xff] %v2138
    %2180 = vst [vmem:[#allocation3 + $0x3e8] sm:$0xff] %v2142
    %2181 = vst [vmem:[#allocation3 + $0x430] sm:$0xff] %v2146
    %2182 = vst [vmem:[#allocation3 + $0x478] sm:$0xff] %v2150
    %v2183 = vld [vmem:[#allocation3] sm:$0xff]
    %v2184 = vld [vmem:[#allocation3 + $0x8] sm:$0xff]
    %v2185 = vld [vmem:[#allocation3 + $0x10] sm:$0xff]
    %v2186 = vld [vmem:[#allocation3 + $0x18] sm:$0xff]
    %v2187 = vld [vmem:[#allocation3 + $0x20] sm:$0xff]
    %v2188 = vld [vmem:[#allocation3 + $0x28] sm:$0xff]
    %v2189 = vld [vmem:[#allocation3 + $0x30] sm:$0xff]
    %v2190 = vld [vmem:[#allocation3 + $0x38] sm:$0xff]
    %v2191 = vld [vmem:[#allocation3 + $0x40] sm:$0xff]
    %v2192 = vld [vmem:[#allocation3 + $0x48] sm:$0xff]
    %v2193 = vld [vmem:[#allocation3 + $0x50] sm:$0xff]
    %v2194 = vld [vmem:[#allocation3 + $0x58] sm:$0xff]
    %v2195 = vld [vmem:[#allocation3 + $0x60] sm:$0xff]
    %v2196 = vld [vmem:[#allocation3 + $0x68] sm:$0xff]
    %v2197 = vld [vmem:[#allocation3 + $0x70] sm:$0xff]
    %v2198 = vld [vmem:[#allocation3 + $0x78] sm:$0xff]
    %v2199 = vld [vmem:[#allocation3 + $0x80] sm:$0xff]
    %v2200 = vld [vmem:[#allocation3 + $0x88] sm:$0xff]
    %v2201 = vld [vmem:[#allocation3 + $0x90] sm:$0xff]
    %v2202 = vld [vmem:[#allocation3 + $0x98] sm:$0xff]
    %v2203 = vld [vmem:[#allocation3 + $0xa0] sm:$0xff]
    %v2204 = vld [vmem:[#allocation3 + $0xa8] sm:$0xff]
    %v2205 = vld [vmem:[#allocation3 + $0xb0] sm:$0xff]
    %v2206 = vld [vmem:[#allocation3 + $0xb8] sm:$0xff]
    %v2207 = vld [vmem:[#allocation3 + $0xc0] sm:$0xff]
    %v2208 = vld [vmem:[#allocation3 + $0xc8] sm:$0xff]
    %v2209 = vld [vmem:[#allocation3 + $0xd0] sm:$0xff]
    %v2210 = vld [vmem:[#allocation3 + $0xd8] sm:$0xff]
    %v2211 = vld [vmem:[#allocation3 + $0xe0] sm:$0xff]
    %v2212 = vld [vmem:[#allocation3 + $0xe8] sm:$0xff]
    %v2213 = vld [vmem:[#allocation3 + $0xf0] sm:$0xff]
    %v2214 = vld [vmem:[#allocation3 + $0xf8] sm:$0xff]
    %v2215 = vld [vmem:[#allocation3 + $0x100] sm:$0xff]
    %v2216 = vld [vmem:[#allocation3 + $0x108] sm:$0xff]
    %v2217 = vld [vmem:[#allocation3 + $0x110] sm:$0xff]
    %v2218 = vld [vmem:[#allocation3 + $0x118] sm:$0xff]
    %v2219 = vld [vmem:[#allocation3 + $0x120] sm:$0xff]
    %v2220 = vld [vmem:[#allocation3 + $0x128] sm:$0xff]
    %v2221 = vld [vmem:[#allocation3 + $0x130] sm:$0xff]
    %v2222 = vld [vmem:[#allocation3 + $0x138] sm:$0xff]
    %v2223 = vld [vmem:[#allocation3 + $0x140] sm:$0xff]
    %v2224 = vld [vmem:[#allocation3 + $0x148] sm:$0xff]
    %v2225 = vld [vmem:[#allocation3 + $0x150] sm:$0xff]
    %v2226 = vld [vmem:[#allocation3 + $0x158] sm:$0xff]
    %v2227 = vld [vmem:[#allocation3 + $0x160] sm:$0xff]
    %v2228 = vld [vmem:[#allocation3 + $0x168] sm:$0xff]
    %v2229 = vld [vmem:[#allocation3 + $0x170] sm:$0xff]
    %v2230 = vld [vmem:[#allocation3 + $0x178] sm:$0xff]
    %v2231 = vld [vmem:[#allocation3 + $0x180] sm:$0xff]
    %v2232 = vld [vmem:[#allocation3 + $0x188] sm:$0xff]
    %v2233 = vld [vmem:[#allocation3 + $0x190] sm:$0xff]
    %v2234 = vld [vmem:[#allocation3 + $0x198] sm:$0xff]
    %v2235 = vld [vmem:[#allocation3 + $0x1a0] sm:$0xff]
    %v2236 = vld [vmem:[#allocation3 + $0x1a8] sm:$0xff]
    %v2237 = vld [vmem:[#allocation3 + $0x1b0] sm:$0xff]
    %v2238 = vld [vmem:[#allocation3 + $0x1b8] sm:$0xff]
    %v2239 = vld [vmem:[#allocation3 + $0x1c0] sm:$0xff]
    %v2240 = vld [vmem:[#allocation3 + $0x1c8] sm:$0xff]
    %v2241 = vld [vmem:[#allocation3 + $0x1d0] sm:$0xff]
    %v2242 = vld [vmem:[#allocation3 + $0x1d8] sm:$0xff]
    %v2243 = vld [vmem:[#allocation3 + $0x1e0] sm:$0xff]
    %v2244 = vld [vmem:[#allocation3 + $0x1e8] sm:$0xff]
    %v2245 = vld [vmem:[#allocation3 + $0x1f0] sm:$0xff]
    %v2246 = vld [vmem:[#allocation3 + $0x1f8] sm:$0xff]
    %v2247 = vld [vmem:[#allocation3 + $0x200] sm:$0xff]
    %v2248 = vld [vmem:[#allocation3 + $0x208] sm:$0xff]
    %v2249 = vld [vmem:[#allocation3 + $0x210] sm:$0xff]
    %v2250 = vld [vmem:[#allocation3 + $0x218] sm:$0xff]
    %v2251 = vld [vmem:[#allocation3 + $0x220] sm:$0xff]
    %v2252 = vld [vmem:[#allocation3 + $0x228] sm:$0xff]
    %v2253 = vld [vmem:[#allocation3 + $0x230] sm:$0xff]
    %v2254 = vld [vmem:[#allocation3 + $0x238] sm:$0xff]
    %v2255 = vld [vmem:[#allocation3 + $0x240] sm:$0xff]
    %v2256 = vld [vmem:[#allocation3 + $0x248] sm:$0xff]
    %v2257 = vld [vmem:[#allocation3 + $0x250] sm:$0xff]
    %v2258 = vld [vmem:[#allocation3 + $0x258] sm:$0xff]
    %v2259 = vld [vmem:[#allocation3 + $0x260] sm:$0xff]
    %v2260 = vld [vmem:[#allocation3 + $0x268] sm:$0xff]
    %v2261 = vld [vmem:[#allocation3 + $0x270] sm:$0xff]
    %v2262 = vld [vmem:[#allocation3 + $0x278] sm:$0xff]
    %v2263 = vld [vmem:[#allocation3 + $0x280] sm:$0xff]
    %v2264 = vld [vmem:[#allocation3 + $0x288] sm:$0xff]
    %v2265 = vld [vmem:[#allocation3 + $0x290] sm:$0xff]
    %v2266 = vld [vmem:[#allocation3 + $0x298] sm:$0xff]
    %v2267 = vld [vmem:[#allocation3 + $0x2a0] sm:$0xff]
    %v2268 = vld [vmem:[#allocation3 + $0x2a8] sm:$0xff]
    %v2269 = vld [vmem:[#allocation3 + $0x2b0] sm:$0xff]
    %v2270 = vld [vmem:[#allocation3 + $0x2b8] sm:$0xff]
    %v2271 = vld [vmem:[#allocation3 + $0x2c0] sm:$0xff]
    %v2272 = vld [vmem:[#allocation3 + $0x2c8] sm:$0xff]
    %v2273 = vld [vmem:[#allocation3 + $0x2d0] sm:$0xff]
    %v2274 = vld [vmem:[#allocation3 + $0x2d8] sm:$0xff]
    %v2275 = vld [vmem:[#allocation3 + $0x2e0] sm:$0xff]
    %v2276 = vld [vmem:[#allocation3 + $0x2e8] sm:$0xff]
    %v2277 = vld [vmem:[#allocation3 + $0x2f0] sm:$0xff]
    %v2278 = vld [vmem:[#allocation3 + $0x2f8] sm:$0xff]
    %v2279 = vld [vmem:[#allocation3 + $0x300] sm:$0xff]
    %v2280 = vld [vmem:[#allocation3 + $0x308] sm:$0xff]
    %v2281 = vld [vmem:[#allocation3 + $0x310] sm:$0xff]
    %v2282 = vld [vmem:[#allocation3 + $0x318] sm:$0xff]
    %v2283 = vld [vmem:[#allocation3 + $0x320] sm:$0xff]
    %v2284 = vld [vmem:[#allocation3 + $0x328] sm:$0xff]
    %v2285 = vld [vmem:[#allocation3 + $0x330] sm:$0xff]
    %v2286 = vld [vmem:[#allocation3 + $0x338] sm:$0xff]
    %v2287 = vld [vmem:[#allocation3 + $0x340] sm:$0xff]
    %v2288 = vld [vmem:[#allocation3 + $0x348] sm:$0xff]
    %v2289 = vld [vmem:[#allocation3 + $0x350] sm:$0xff]
    %v2290 = vld [vmem:[#allocation3 + $0x358] sm:$0xff]
    %v2291 = vld [vmem:[#allocation3 + $0x360] sm:$0xff]
    %v2292 = vld [vmem:[#allocation3 + $0x368] sm:$0xff]
    %v2293 = vld [vmem:[#allocation3 + $0x370] sm:$0xff]
    %v2294 = vld [vmem:[#allocation3 + $0x378] sm:$0xff]
    %v2295 = vld [vmem:[#allocation3 + $0x380] sm:$0xff]
    %v2296 = vld [vmem:[#allocation3 + $0x388] sm:$0xff]
    %v2297 = vld [vmem:[#allocation3 + $0x390] sm:$0xff]
    %v2298 = vld [vmem:[#allocation3 + $0x398] sm:$0xff]
    %v2299 = vld [vmem:[#allocation3 + $0x3a0] sm:$0xff]
    %v2300 = vld [vmem:[#allocation3 + $0x3a8] sm:$0xff]
    %v2301 = vld [vmem:[#allocation3 + $0x3b0] sm:$0xff]
    %v2302 = vld [vmem:[#allocation3 + $0x3b8] sm:$0xff]
    %v2303 = vld [vmem:[#allocation3 + $0x3c0] sm:$0xff]
    %v2304 = vld [vmem:[#allocation3 + $0x3c8] sm:$0xff]
    %v2305 = vld [vmem:[#allocation3 + $0x3d0] sm:$0xff]
    %v2306 = vld [vmem:[#allocation3 + $0x3d8] sm:$0xff]
    %v2307 = vld [vmem:[#allocation3 + $0x3e0] sm:$0xff]
    %v2308 = vld [vmem:[#allocation3 + $0x3e8] sm:$0xff]
    %v2309 = vld [vmem:[#allocation3 + $0x3f0] sm:$0xff]
    %v2310 = vld [vmem:[#allocation3 + $0x3f8] sm:$0xff]
    %v2311 = vld [vmem:[#allocation3 + $0x400] sm:$0xff]
    %v2312 = vld [vmem:[#allocation3 + $0x408] sm:$0xff]
    %v2313 = vld [vmem:[#allocation3 + $0x410] sm:$0xff]
    %v2314 = vld [vmem:[#allocation3 + $0x418] sm:$0xff]
    %v2315 = vld [vmem:[#allocation3 + $0x420] sm:$0xff]
    %v2316 = vld [vmem:[#allocation3 + $0x428] sm:$0xff]
    %v2317 = vld [vmem:[#allocation3 + $0x430] sm:$0xff]
    %v2318 = vld [vmem:[#allocation3 + $0x438] sm:$0xff]
    %v2319 = vld [vmem:[#allocation3 + $0x440] sm:$0xff]
    %v2320 = vld [vmem:[#allocation3 + $0x448] sm:$0xff]
    %v2321 = vld [vmem:[#allocation3 + $0x450] sm:$0xff]
    %v2322 = vld [vmem:[#allocation3 + $0x458] sm:$0xff]
    %v2323 = vld [vmem:[#allocation3 + $0x460] sm:$0xff]
    %v2324 = vld [vmem:[#allocation3 + $0x468] sm:$0xff]
    %v2325 = vld [vmem:[#allocation3 + $0x470] sm:$0xff]
    %v2326 = vld [vmem:[#allocation3 + $0x478] sm:$0xff]
    %v2327 = vld [vmem:[#allocation10] sm:$0xff]
    %v2328 = vld [vmem:[#allocation10 + $0x8] sm:$0xff]
    %v2329 = vld [vmem:[#allocation10 + $0x10] sm:$0xff]
    %v2330 = vld [vmem:[#allocation10 + $0x18] sm:$0xff]
    %v2331 = vld [vmem:[#allocation10 + $0x20] sm:$0xff]
    %v2332 = vld [vmem:[#allocation10 + $0x28] sm:$0xff]
    %v2333 = vld [vmem:[#allocation10 + $0x30] sm:$0xff]
    %v2334 = vld [vmem:[#allocation10 + $0x38] sm:$0xff]
    %v2335 = vld [vmem:[#allocation10 + $0x40] sm:$0xff]
    %v2336 = vld [vmem:[#allocation10 + $0x48] sm:$0xff]
    %v2337 = vld [vmem:[#allocation10 + $0x50] sm:$0xff]
    %v2338 = vld [vmem:[#allocation10 + $0x58] sm:$0xff]
    %v2339 = vld [vmem:[#allocation10 + $0x60] sm:$0xff]
    %v2340 = vld [vmem:[#allocation10 + $0x68] sm:$0xff]
    %v2341 = vld [vmem:[#allocation10 + $0x70] sm:$0xff]
    %v2342 = vld [vmem:[#allocation10 + $0x78] sm:$0xff]
    %v2343 = vld [vmem:[#allocation10 + $0x80] sm:$0xff]
    %v2344 = vld [vmem:[#allocation10 + $0x88] sm:$0xff]
    %v2345 = vld [vmem:[#allocation10 + $0x90] sm:$0xff]
    %v2346 = vld [vmem:[#allocation10 + $0x98] sm:$0xff]
    %v2347 = vld [vmem:[#allocation10 + $0xa0] sm:$0xff]
    %v2348 = vld [vmem:[#allocation10 + $0xa8] sm:$0xff]
    %v2349 = vld [vmem:[#allocation10 + $0xb0] sm:$0xff]
    %v2350 = vld [vmem:[#allocation10 + $0xb8] sm:$0xff]
    %v2351 = vld [vmem:[#allocation10 + $0xc0] sm:$0xff]
    %v2352 = vld [vmem:[#allocation10 + $0xc8] sm:$0xff]
    %v2353 = vld [vmem:[#allocation10 + $0xd0] sm:$0xff]
    %v2354 = vld [vmem:[#allocation10 + $0xd8] sm:$0xff]
    %v2355 = vld [vmem:[#allocation10 + $0xe0] sm:$0xff]
    %v2356 = vld [vmem:[#allocation10 + $0xe8] sm:$0xff]
    %v2357 = vld [vmem:[#allocation10 + $0xf0] sm:$0xff]
    %v2358 = vld [vmem:[#allocation10 + $0xf8] sm:$0xff]
    %v2359 = vld [vmem:[#allocation10 + $0x100] sm:$0xff]
    %v2360 = vld [vmem:[#allocation10 + $0x108] sm:$0xff]
    %v2361 = vld [vmem:[#allocation10 + $0x110] sm:$0xff]
    %v2362 = vld [vmem:[#allocation10 + $0x118] sm:$0xff]
    %v2363 = vld [vmem:[#allocation10 + $0x120] sm:$0xff]
    %v2364 = vld [vmem:[#allocation10 + $0x128] sm:$0xff]
    %v2365 = vld [vmem:[#allocation10 + $0x130] sm:$0xff]
    %v2366 = vld [vmem:[#allocation10 + $0x138] sm:$0xff]
    %v2367 = vld [vmem:[#allocation10 + $0x140] sm:$0xff]
    %v2368 = vld [vmem:[#allocation10 + $0x148] sm:$0xff]
    %v2369 = vld [vmem:[#allocation10 + $0x150] sm:$0xff]
    %v2370 = vld [vmem:[#allocation10 + $0x158] sm:$0xff]
    %v2371 = vld [vmem:[#allocation10 + $0x160] sm:$0xff]
    %v2372 = vld [vmem:[#allocation10 + $0x168] sm:$0xff]
    %v2373 = vld [vmem:[#allocation10 + $0x170] sm:$0xff]
    %v2374 = vld [vmem:[#allocation10 + $0x178] sm:$0xff]
    %v2375 = vld [vmem:[#allocation10 + $0x180] sm:$0xff]
    %v2376 = vld [vmem:[#allocation10 + $0x188] sm:$0xff]
    %v2377 = vld [vmem:[#allocation10 + $0x190] sm:$0xff]
    %v2378 = vld [vmem:[#allocation10 + $0x198] sm:$0xff]
    %v2379 = vld [vmem:[#allocation10 + $0x1a0] sm:$0xff]
    %v2380 = vld [vmem:[#allocation10 + $0x1a8] sm:$0xff]
    %v2381 = vld [vmem:[#allocation10 + $0x1b0] sm:$0xff]
    %v2382 = vld [vmem:[#allocation10 + $0x1b8] sm:$0xff]
    %v2383 = vld [vmem:[#allocation10 + $0x1c0] sm:$0xff]
    %v2384 = vld [vmem:[#allocation10 + $0x1c8] sm:$0xff]
    %v2385 = vld [vmem:[#allocation10 + $0x1d0] sm:$0xff]
    %v2386 = vld [vmem:[#allocation10 + $0x1d8] sm:$0xff]
    %v2387 = vld [vmem:[#allocation10 + $0x1e0] sm:$0xff]
    %v2388 = vld [vmem:[#allocation10 + $0x1e8] sm:$0xff]
    %v2389 = vld [vmem:[#allocation10 + $0x1f0] sm:$0xff]
    %v2390 = vld [vmem:[#allocation10 + $0x1f8] sm:$0xff]
    %v2391 = vld [vmem:[#allocation10 + $0x200] sm:$0xff]
    %v2392 = vld [vmem:[#allocation10 + $0x208] sm:$0xff]
    %v2393 = vld [vmem:[#allocation10 + $0x210] sm:$0xff]
    %v2394 = vld [vmem:[#allocation10 + $0x218] sm:$0xff]
    %v2395 = vld [vmem:[#allocation10 + $0x220] sm:$0xff]
    %v2396 = vld [vmem:[#allocation10 + $0x228] sm:$0xff]
    %v2397 = vld [vmem:[#allocation10 + $0x230] sm:$0xff]
    %v2398 = vld [vmem:[#allocation10 + $0x238] sm:$0xff]
    %v2399 = vld [vmem:[#allocation10 + $0x240] sm:$0xff]
    %v2400 = vld [vmem:[#allocation10 + $0x248] sm:$0xff]
    %v2401 = vld [vmem:[#allocation10 + $0x250] sm:$0xff]
    %v2402 = vld [vmem:[#allocation10 + $0x258] sm:$0xff]
    %v2403 = vld [vmem:[#allocation10 + $0x260] sm:$0xff]
    %v2404 = vld [vmem:[#allocation10 + $0x268] sm:$0xff]
    %v2405 = vld [vmem:[#allocation10 + $0x270] sm:$0xff]
    %v2406 = vld [vmem:[#allocation10 + $0x278] sm:$0xff]
    %v2407 = vld [vmem:[#allocation10 + $0x280] sm:$0xff]
    %v2408 = vld [vmem:[#allocation10 + $0x288] sm:$0xff]
    %v2409 = vld [vmem:[#allocation10 + $0x290] sm:$0xff]
    %v2410 = vld [vmem:[#allocation10 + $0x298] sm:$0xff]
    %v2411 = vld [vmem:[#allocation10 + $0x2a0] sm:$0xff]
    %v2412 = vld [vmem:[#allocation10 + $0x2a8] sm:$0xff]
    %v2413 = vld [vmem:[#allocation10 + $0x2b0] sm:$0xff]
    %v2414 = vld [vmem:[#allocation10 + $0x2b8] sm:$0xff]
    %v2415 = vld [vmem:[#allocation10 + $0x2c0] sm:$0xff]
    %v2416 = vld [vmem:[#allocation10 + $0x2c8] sm:$0xff]
    %v2417 = vld [vmem:[#allocation10 + $0x2d0] sm:$0xff]
    %v2418 = vld [vmem:[#allocation10 + $0x2d8] sm:$0xff]
    %v2419 = vld [vmem:[#allocation10 + $0x2e0] sm:$0xff]
    %v2420 = vld [vmem:[#allocation10 + $0x2e8] sm:$0xff]
    %v2421 = vld [vmem:[#allocation10 + $0x2f0] sm:$0xff]
    %v2422 = vld [vmem:[#allocation10 + $0x2f8] sm:$0xff]
    %v2423 = vld [vmem:[#allocation10 + $0x300] sm:$0xff]
    %v2424 = vld [vmem:[#allocation10 + $0x308] sm:$0xff]
    %v2425 = vld [vmem:[#allocation10 + $0x310] sm:$0xff]
    %v2426 = vld [vmem:[#allocation10 + $0x318] sm:$0xff]
    %v2427 = vld [vmem:[#allocation10 + $0x320] sm:$0xff]
    %v2428 = vld [vmem:[#allocation10 + $0x328] sm:$0xff]
    %v2429 = vld [vmem:[#allocation10 + $0x330] sm:$0xff]
    %v2430 = vld [vmem:[#allocation10 + $0x338] sm:$0xff]
    %v2431 = vld [vmem:[#allocation10 + $0x340] sm:$0xff]
    %v2432 = vld [vmem:[#allocation10 + $0x348] sm:$0xff]
    %v2433 = vld [vmem:[#allocation10 + $0x350] sm:$0xff]
    %v2434 = vld [vmem:[#allocation10 + $0x358] sm:$0xff]
    %v2435 = vld [vmem:[#allocation10 + $0x360] sm:$0xff]
    %v2436 = vld [vmem:[#allocation10 + $0x368] sm:$0xff]
    %v2437 = vld [vmem:[#allocation10 + $0x370] sm:$0xff]
    %v2438 = vld [vmem:[#allocation10 + $0x378] sm:$0xff]
    %v2439 = vld [vmem:[#allocation10 + $0x380] sm:$0xff]
    %v2440 = vld [vmem:[#allocation10 + $0x388] sm:$0xff]
    %v2441 = vld [vmem:[#allocation10 + $0x390] sm:$0xff]
    %v2442 = vld [vmem:[#allocation10 + $0x398] sm:$0xff]
    %v2443 = vld [vmem:[#allocation10 + $0x3a0] sm:$0xff]
    %v2444 = vld [vmem:[#allocation10 + $0x3a8] sm:$0xff]
    %v2445 = vld [vmem:[#allocation10 + $0x3b0] sm:$0xff]
    %v2446 = vld [vmem:[#allocation10 + $0x3b8] sm:$0xff]
    %v2447 = vld [vmem:[#allocation10 + $0x3c0] sm:$0xff]
    %v2448 = vld [vmem:[#allocation10 + $0x3c8] sm:$0xff]
    %v2449 = vld [vmem:[#allocation10 + $0x3d0] sm:$0xff]
    %v2450 = vld [vmem:[#allocation10 + $0x3d8] sm:$0xff]
    %v2451 = vld [vmem:[#allocation10 + $0x3e0] sm:$0xff]
    %v2452 = vld [vmem:[#allocation10 + $0x3e8] sm:$0xff]
    %v2453 = vld [vmem:[#allocation10 + $0x3f0] sm:$0xff]
    %v2454 = vld [vmem:[#allocation10 + $0x3f8] sm:$0xff]
    %v2455 = vld [vmem:[#allocation10 + $0x400] sm:$0xff]
    %v2456 = vld [vmem:[#allocation10 + $0x408] sm:$0xff]
    %v2457 = vld [vmem:[#allocation10 + $0x410] sm:$0xff]
    %v2458 = vld [vmem:[#allocation10 + $0x418] sm:$0xff]
    %v2459 = vld [vmem:[#allocation10 + $0x420] sm:$0xff]
    %v2460 = vld [vmem:[#allocation10 + $0x428] sm:$0xff]
    %v2461 = vld [vmem:[#allocation10 + $0x430] sm:$0xff]
    %v2462 = vld [vmem:[#allocation10 + $0x438] sm:$0xff]
    %v2463 = vld [vmem:[#allocation10 + $0x440] sm:$0xff]
    %v2464 = vld [vmem:[#allocation10 + $0x448] sm:$0xff]
    %v2465 = vld [vmem:[#allocation10 + $0x450] sm:$0xff]
    %v2466 = vld [vmem:[#allocation10 + $0x458] sm:$0xff]
    %v2467 = vld [vmem:[#allocation10 + $0x460] sm:$0xff]
    %v2468 = vld [vmem:[#allocation10 + $0x468] sm:$0xff]
    %v2469 = vld [vmem:[#allocation10 + $0x470] sm:$0xff]
    %v2470 = vld [vmem:[#allocation10 + $0x478] sm:$0xff]
    %v2471 = vld [vmem:[#allocation10 + $0x480] sm:$0xff]
    %v2472 = vld [vmem:[#allocation10 + $0x488] sm:$0xff]
    %v2473 = vld [vmem:[#allocation10 + $0x490] sm:$0xff]
    %v2474 = vld [vmem:[#allocation10 + $0x498] sm:$0xff]
    %v2475 = vld [vmem:[#allocation10 + $0x4a0] sm:$0xff]
    %v2476 = vld [vmem:[#allocation10 + $0x4a8] sm:$0xff]
    %v2477 = vld [vmem:[#allocation10 + $0x4b0] sm:$0xff]
    %v2478 = vld [vmem:[#allocation10 + $0x4b8] sm:$0xff]
    %v2479 = vld [vmem:[#allocation10 + $0x4c0] sm:$0xff]
    %v2480 = vld [vmem:[#allocation10 + $0x4c8] sm:$0xff]
    %v2481 = vld [vmem:[#allocation10 + $0x4d0] sm:$0xff]
    %v2482 = vld [vmem:[#allocation10 + $0x4d8] sm:$0xff]
    %v2483 = vld [vmem:[#allocation10 + $0x4e0] sm:$0xff]
    %v2484 = vld [vmem:[#allocation10 + $0x4e8] sm:$0xff]
    %v2485 = vld [vmem:[#allocation10 + $0x4f0] sm:$0xff]
    %v2486 = vld [vmem:[#allocation10 + $0x4f8] sm:$0xff]
    %v2487 = vld [vmem:[#allocation10 + $0x500] sm:$0xff]
    %v2488 = vld [vmem:[#allocation10 + $0x508] sm:$0xff]
    %v2489 = vld [vmem:[#allocation10 + $0x510] sm:$0xff]
    %v2490 = vld [vmem:[#allocation10 + $0x518] sm:$0xff]
    %v2491 = vld [vmem:[#allocation10 + $0x520] sm:$0xff]
    %v2492 = vld [vmem:[#allocation10 + $0x528] sm:$0xff]
    %v2493 = vld [vmem:[#allocation10 + $0x530] sm:$0xff]
    %v2494 = vld [vmem:[#allocation10 + $0x538] sm:$0xff]
    %v2495 = vld [vmem:[#allocation10 + $0x540] sm:$0xff]
    %v2496 = vld [vmem:[#allocation10 + $0x548] sm:$0xff]
    %v2497 = vld [vmem:[#allocation10 + $0x550] sm:$0xff]
    %v2498 = vld [vmem:[#allocation10 + $0x558] sm:$0xff]
    %v2499 = vld [vmem:[#allocation10 + $0x560] sm:$0xff]
    %v2500 = vld [vmem:[#allocation10 + $0x568] sm:$0xff]
    %v2501 = vld [vmem:[#allocation10 + $0x570] sm:$0xff]
    %v2502 = vld [vmem:[#allocation10 + $0x578] sm:$0xff]
    %v2503 = vld [vmem:[#allocation10 + $0x580] sm:$0xff]
    %v2504 = vld [vmem:[#allocation10 + $0x588] sm:$0xff]
    %v2505 = vld [vmem:[#allocation10 + $0x590] sm:$0xff]
    %v2506 = vld [vmem:[#allocation10 + $0x598] sm:$0xff]
    %v2507 = vld [vmem:[#allocation10 + $0x5a0] sm:$0xff]
    %v2508 = vld [vmem:[#allocation10 + $0x5a8] sm:$0xff]
    %v2509 = vld [vmem:[#allocation10 + $0x5b0] sm:$0xff]
    %v2510 = vld [vmem:[#allocation10 + $0x5b8] sm:$0xff]
    %v2511 = vld [vmem:[#allocation10 + $0x5c0] sm:$0xff]
    %v2512 = vld [vmem:[#allocation10 + $0x5c8] sm:$0xff]
    %v2513 = vld [vmem:[#allocation10 + $0x5d0] sm:$0xff]
    %v2514 = vld [vmem:[#allocation10 + $0x5d8] sm:$0xff]
    %v2515 = vld [vmem:[#allocation10 + $0x5e0] sm:$0xff]
    %v2516 = vld [vmem:[#allocation10 + $0x5e8] sm:$0xff]
    %v2517 = vld [vmem:[#allocation10 + $0x5f0] sm:$0xff]
    %v2518 = vld [vmem:[#allocation10 + $0x5f8] sm:$0xff]
    %v2519 = vld [vmem:[#allocation10 + $0x600] sm:$0xff]
    %v2520 = vld [vmem:[#allocation10 + $0x608] sm:$0xff]
    %v2521 = vld [vmem:[#allocation10 + $0x610] sm:$0xff]
    %v2522 = vld [vmem:[#allocation10 + $0x618] sm:$0xff]
    %v2523 = vld [vmem:[#allocation10 + $0x620] sm:$0xff]
    %v2524 = vld [vmem:[#allocation10 + $0x628] sm:$0xff]
    %v2525 = vld [vmem:[#allocation10 + $0x630] sm:$0xff]
    %v2526 = vld [vmem:[#allocation10 + $0x638] sm:$0xff]
    %v2527 = vld [vmem:[#allocation10 + $0x640] sm:$0xff]
    %v2528 = vld [vmem:[#allocation10 + $0x648] sm:$0xff]
    %v2529 = vld [vmem:[#allocation10 + $0x650] sm:$0xff]
    %v2530 = vld [vmem:[#allocation10 + $0x658] sm:$0xff]
    %v2531 = vld [vmem:[#allocation10 + $0x660] sm:$0xff]
    %v2532 = vld [vmem:[#allocation10 + $0x668] sm:$0xff]
    %v2533 = vld [vmem:[#allocation10 + $0x670] sm:$0xff]
    %v2534 = vld [vmem:[#allocation10 + $0x678] sm:$0xff]
    %v2535 = vld [vmem:[#allocation10 + $0x680] sm:$0xff]
    %v2536 = vld [vmem:[#allocation10 + $0x688] sm:$0xff]
    %v2537 = vld [vmem:[#allocation10 + $0x690] sm:$0xff]
    %v2538 = vld [vmem:[#allocation10 + $0x698] sm:$0xff]
    %v2539 = vld [vmem:[#allocation10 + $0x6a0] sm:$0xff]
    %v2540 = vld [vmem:[#allocation10 + $0x6a8] sm:$0xff]
    %v2541 = vld [vmem:[#allocation10 + $0x6b0] sm:$0xff]
    %v2542 = vld [vmem:[#allocation10 + $0x6b8] sm:$0xff]
    %v2543 = vld [vmem:[#allocation10 + $0x6c0] sm:$0xff]
    %v2544 = vld [vmem:[#allocation10 + $0x6c8] sm:$0xff]
    %v2545 = vld [vmem:[#allocation10 + $0x6d0] sm:$0xff]
    %v2546 = vld [vmem:[#allocation10 + $0x6d8] sm:$0xff]
    %v2547 = vld [vmem:[#allocation10 + $0x6e0] sm:$0xff]
    %v2548 = vld [vmem:[#allocation10 + $0x6e8] sm:$0xff]
    %v2549 = vld [vmem:[#allocation10 + $0x6f0] sm:$0xff]
    %v2550 = vld [vmem:[#allocation10 + $0x6f8] sm:$0xff]
    %v2551 = vld [vmem:[#allocation10 + $0x700] sm:$0xff]
    %v2552 = vld [vmem:[#allocation10 + $0x708] sm:$0xff]
    %v2553 = vld [vmem:[#allocation10 + $0x710] sm:$0xff]
    %v2554 = vld [vmem:[#allocation10 + $0x718] sm:$0xff]
    %v2555 = vld [vmem:[#allocation10 + $0x720] sm:$0xff]
    %v2556 = vld [vmem:[#allocation10 + $0x728] sm:$0xff]
    %v2557 = vld [vmem:[#allocation10 + $0x730] sm:$0xff]
    %v2558 = vld [vmem:[#allocation10 + $0x738] sm:$0xff]
    %v2559 = vld [vmem:[#allocation10 + $0x740] sm:$0xff]
    %v2560 = vld [vmem:[#allocation10 + $0x748] sm:$0xff]
    %v2561 = vld [vmem:[#allocation10 + $0x750] sm:$0xff]
    %v2562 = vld [vmem:[#allocation10 + $0x758] sm:$0xff]
    %v2563 = vld [vmem:[#allocation10 + $0x760] sm:$0xff]
    %v2564 = vld [vmem:[#allocation10 + $0x768] sm:$0xff]
    %v2565 = vld [vmem:[#allocation10 + $0x770] sm:$0xff]
    %v2566 = vld [vmem:[#allocation10 + $0x778] sm:$0xff]
    %v2567 = vld [vmem:[#allocation10 + $0x780] sm:$0xff]
    %v2568 = vld [vmem:[#allocation10 + $0x788] sm:$0xff]
    %v2569 = vld [vmem:[#allocation10 + $0x790] sm:$0xff]
    %v2570 = vld [vmem:[#allocation10 + $0x798] sm:$0xff]
    %v2571 = vld [vmem:[#allocation10 + $0x7a0] sm:$0xff]
    %v2572 = vld [vmem:[#allocation10 + $0x7a8] sm:$0xff]
    %v2573 = vld [vmem:[#allocation10 + $0x7b0] sm:$0xff]
    %v2574 = vld [vmem:[#allocation10 + $0x7b8] sm:$0xff]
    %v2575 = vld [vmem:[#allocation10 + $0x7c0] sm:$0xff]
    %v2576 = vld [vmem:[#allocation10 + $0x7c8] sm:$0xff]
    %v2577 = vld [vmem:[#allocation10 + $0x7d0] sm:$0xff]
    %v2578 = vld [vmem:[#allocation10 + $0x7d8] sm:$0xff]
    %v2579 = vld [vmem:[#allocation10 + $0x7e0] sm:$0xff]
    %v2580 = vld [vmem:[#allocation10 + $0x7e8] sm:$0xff]
    %v2581 = vld [vmem:[#allocation10 + $0x7f0] sm:$0xff]
    %v2582 = vld [vmem:[#allocation10 + $0x7f8] sm:$0xff]
    %v2583 = vld [vmem:[#allocation10 + $0x800] sm:$0xff]
    %v2584 = vld [vmem:[#allocation10 + $0x808] sm:$0xff]
    %v2585 = vld [vmem:[#allocation10 + $0x810] sm:$0xff]
    %v2586 = vld [vmem:[#allocation10 + $0x818] sm:$0xff]
    %v2587 = vld [vmem:[#allocation10 + $0x820] sm:$0xff]
    %v2588 = vld [vmem:[#allocation10 + $0x828] sm:$0xff]
    %v2589 = vld [vmem:[#allocation10 + $0x830] sm:$0xff]
    %v2590 = vld [vmem:[#allocation10 + $0x838] sm:$0xff]
    %v2591 = vld [vmem:[#allocation10 + $0x840] sm:$0xff]
    %v2592 = vld [vmem:[#allocation10 + $0x848] sm:$0xff]
    %v2593 = vld [vmem:[#allocation10 + $0x850] sm:$0xff]
    %v2594 = vld [vmem:[#allocation10 + $0x858] sm:$0xff]
    %v2595 = vld [vmem:[#allocation10 + $0x860] sm:$0xff]
    %v2596 = vld [vmem:[#allocation10 + $0x868] sm:$0xff]
    %v2597 = vld [vmem:[#allocation10 + $0x870] sm:$0xff]
    %v2598 = vld [vmem:[#allocation10 + $0x878] sm:$0xff]
    %v2599 = vld [vmem:[#allocation10 + $0x880] sm:$0xff]
    %v2600 = vld [vmem:[#allocation10 + $0x888] sm:$0xff]
    %v2601 = vld [vmem:[#allocation10 + $0x890] sm:$0xff]
    %v2602 = vld [vmem:[#allocation10 + $0x898] sm:$0xff]
    %v2603 = vld [vmem:[#allocation10 + $0x8a0] sm:$0xff]
    %v2604 = vld [vmem:[#allocation10 + $0x8a8] sm:$0xff]
    %v2605 = vld [vmem:[#allocation10 + $0x8b0] sm:$0xff]
    %v2606 = vld [vmem:[#allocation10 + $0x8b8] sm:$0xff]
    %v2607 = vld [vmem:[#allocation10 + $0x8c0] sm:$0xff]
    %v2608 = vld [vmem:[#allocation10 + $0x8c8] sm:$0xff]
    %v2609 = vld [vmem:[#allocation10 + $0x8d0] sm:$0xff]
    %v2610 = vld [vmem:[#allocation10 + $0x8d8] sm:$0xff]
    %v2611 = vld [vmem:[#allocation10 + $0x8e0] sm:$0xff]
    %v2612 = vld [vmem:[#allocation10 + $0x8e8] sm:$0xff]
    %v2613 = vld [vmem:[#allocation10 + $0x8f0] sm:$0xff]
    %v2614 = vld [vmem:[#allocation10 + $0x8f8] sm:$0xff]
    %v2615 = vld [vmem:[#allocation12] sm:$0x3]
    %v2617 = vlaneseq
    %v2618 = vshrl.u32 %v2617, 7
    %v2619 = vsub.s32 0, %v2618
    %v2620 = vrot.slane %v2615, %v2619
    %v2621 = vlaneseq
    %v2622 = vshrl.u32 %v2621, 7
    %v2623 = vsub.s32 1, %v2622
    %v2624 = vrot.slane %v2615, %v2623
    %v2771 = vunpack.c.l.b16 %v2183
    %v2772 = vunpack.c.h.b16 %v2183
    %v2773 = vunpack.c.l.b16 %v2184
    %v2774 = vunpack.c.h.b16 %v2184
    %v2775 = vunpack.c.l.b16 %v2185
    %v2776 = vunpack.c.h.b16 %v2185
    %v2777 = vunpack.c.l.b16 %v2186
    %v2778 = vunpack.c.h.b16 %v2186
    %v2779 = vunpack.c.l.b16 %v2187
    %v2780 = vunpack.c.h.b16 %v2187
    %v2781 = vunpack.c.l.b16 %v2188
    %v2782 = vunpack.c.h.b16 %v2188
    %v2783 = vunpack.c.l.b16 %v2189
    %v2784 = vunpack.c.h.b16 %v2189
    %v2785 = vunpack.c.l.b16 %v2190
    %v2786 = vunpack.c.h.b16 %v2190
    %v2787 = vunpack.c.l.b16 %v2191
    %v2788 = vunpack.c.h.b16 %v2191
    %v2789 = vunpack.c.l.b16 %v2192
    %v2790 = vunpack.c.h.b16 %v2192
    %v2791 = vunpack.c.l.b16 %v2193
    %v2792 = vunpack.c.h.b16 %v2193
    %v2793 = vunpack.c.l.b16 %v2194
    %v2794 = vunpack.c.h.b16 %v2194
    %v2795 = vunpack.c.l.b16 %v2195
    %v2796 = vunpack.c.h.b16 %v2195
    %v2797 = vunpack.c.l.b16 %v2196
    %v2798 = vunpack.c.h.b16 %v2196
    %v2799 = vunpack.c.l.b16 %v2197
    %v2800 = vunpack.c.h.b16 %v2197
    %v2801 = vunpack.c.l.b16 %v2198
    %v2802 = vunpack.c.h.b16 %v2198
    %v2803 = vunpack.c.l.b16 %v2199
    %v2804 = vunpack.c.h.b16 %v2199
    %v2805 = vunpack.c.l.b16 %v2200
    %v2806 = vunpack.c.h.b16 %v2200
    %v2807 = vunpack.c.l.b16 %v2201
    %v2808 = vunpack.c.h.b16 %v2201
    %v2809 = vunpack.c.l.b16 %v2202
    %v2810 = vunpack.c.h.b16 %v2202
    %v2811 = vunpack.c.l.b16 %v2203
    %v2812 = vunpack.c.h.b16 %v2203
    %v2813 = vunpack.c.l.b16 %v2204
    %v2814 = vunpack.c.h.b16 %v2204
    %v2815 = vunpack.c.l.b16 %v2205
    %v2816 = vunpack.c.h.b16 %v2205
    %v2817 = vunpack.c.l.b16 %v2206
    %v2818 = vunpack.c.h.b16 %v2206
    %v2819 = vunpack.c.l.b16 %v2207
    %v2820 = vunpack.c.h.b16 %v2207
    %v2821 = vunpack.c.l.b16 %v2208
    %v2822 = vunpack.c.h.b16 %v2208
    %v2823 = vunpack.c.l.b16 %v2209
    %v2824 = vunpack.c.h.b16 %v2209
    %v2825 = vunpack.c.l.b16 %v2210
    %v2826 = vunpack.c.h.b16 %v2210
    %v2827 = vunpack.c.l.b16 %v2211
    %v2828 = vunpack.c.h.b16 %v2211
    %v2829 = vunpack.c.l.b16 %v2212
    %v2830 = vunpack.c.h.b16 %v2212
    %v2831 = vunpack.c.l.b16 %v2213
    %v2832 = vunpack.c.h.b16 %v2213
    %v2833 = vunpack.c.l.b16 %v2214
    %v2834 = vunpack.c.h.b16 %v2214
    %v2835 = vunpack.c.l.b16 %v2215
    %v2836 = vunpack.c.h.b16 %v2215
    %v2837 = vunpack.c.l.b16 %v2216
    %v2838 = vunpack.c.h.b16 %v2216
    %v2839 = vunpack.c.l.b16 %v2217
    %v2840 = vunpack.c.h.b16 %v2217
    %v2841 = vunpack.c.l.b16 %v2218
    %v2842 = vunpack.c.h.b16 %v2218
    %v2843 = vunpack.c.l.b16 %v2219
    %v2844 = vunpack.c.h.b16 %v2219
    %v2845 = vunpack.c.l.b16 %v2220
    %v2846 = vunpack.c.h.b16 %v2220
    %v2847 = vunpack.c.l.b16 %v2221
    %v2848 = vunpack.c.h.b16 %v2221
    %v2849 = vunpack.c.l.b16 %v2222
    %v2850 = vunpack.c.h.b16 %v2222
    %v2851 = vunpack.c.l.b16 %v2223
    %v2852 = vunpack.c.h.b16 %v2223
    %v2853 = vunpack.c.l.b16 %v2224
    %v2854 = vunpack.c.h.b16 %v2224
    %v2855 = vunpack.c.l.b16 %v2225
    %v2856 = vunpack.c.h.b16 %v2225
    %v2857 = vunpack.c.l.b16 %v2226
    %v2858 = vunpack.c.h.b16 %v2226
    %v2859 = vunpack.c.l.b16 %v2227
    %v2860 = vunpack.c.h.b16 %v2227
    %v2861 = vunpack.c.l.b16 %v2228
    %v2862 = vunpack.c.h.b16 %v2228
    %v2863 = vunpack.c.l.b16 %v2229
    %v2864 = vunpack.c.h.b16 %v2229
    %v2865 = vunpack.c.l.b16 %v2230
    %v2866 = vunpack.c.h.b16 %v2230
    %v2867 = vunpack.c.l.b16 %v2231
    %v2868 = vunpack.c.h.b16 %v2231
    %v2869 = vunpack.c.l.b16 %v2232
    %v2870 = vunpack.c.h.b16 %v2232
    %v2871 = vunpack.c.l.b16 %v2233
    %v2872 = vunpack.c.h.b16 %v2233
    %v2873 = vunpack.c.l.b16 %v2234
    %v2874 = vunpack.c.h.b16 %v2234
    %v2875 = vunpack.c.l.b16 %v2235
    %v2876 = vunpack.c.h.b16 %v2235
    %v2877 = vunpack.c.l.b16 %v2236
    %v2878 = vunpack.c.h.b16 %v2236
    %v2879 = vunpack.c.l.b16 %v2237
    %v2880 = vunpack.c.h.b16 %v2237
    %v2881 = vunpack.c.l.b16 %v2238
    %v2882 = vunpack.c.h.b16 %v2238
    %v2883 = vunpack.c.l.b16 %v2239
    %v2884 = vunpack.c.h.b16 %v2239
    %v2885 = vunpack.c.l.b16 %v2240
    %v2886 = vunpack.c.h.b16 %v2240
    %v2887 = vunpack.c.l.b16 %v2241
    %v2888 = vunpack.c.h.b16 %v2241
    %v2889 = vunpack.c.l.b16 %v2242
    %v2890 = vunpack.c.h.b16 %v2242
    %v2891 = vunpack.c.l.b16 %v2243
    %v2892 = vunpack.c.h.b16 %v2243
    %v2893 = vunpack.c.l.b16 %v2244
    %v2894 = vunpack.c.h.b16 %v2244
    %v2895 = vunpack.c.l.b16 %v2245
    %v2896 = vunpack.c.h.b16 %v2245
    %v2897 = vunpack.c.l.b16 %v2246
    %v2898 = vunpack.c.h.b16 %v2246
    %v2899 = vunpack.c.l.b16 %v2247
    %v2900 = vunpack.c.h.b16 %v2247
    %v2901 = vunpack.c.l.b16 %v2248
    %v2902 = vunpack.c.h.b16 %v2248
    %v2903 = vunpack.c.l.b16 %v2249
    %v2904 = vunpack.c.h.b16 %v2249
    %v2905 = vunpack.c.l.b16 %v2250
    %v2906 = vunpack.c.h.b16 %v2250
    %v2907 = vunpack.c.l.b16 %v2251
    %v2908 = vunpack.c.h.b16 %v2251
    %v2909 = vunpack.c.l.b16 %v2252
    %v2910 = vunpack.c.h.b16 %v2252
    %v2911 = vunpack.c.l.b16 %v2253
    %v2912 = vunpack.c.h.b16 %v2253
    %v2913 = vunpack.c.l.b16 %v2254
    %v2914 = vunpack.c.h.b16 %v2254
    %v2915 = vunpack.c.l.b16 %v2255
    %v2916 = vunpack.c.h.b16 %v2255
    %v2917 = vunpack.c.l.b16 %v2256
    %v2918 = vunpack.c.h.b16 %v2256
    %v2919 = vunpack.c.l.b16 %v2257
    %v2920 = vunpack.c.h.b16 %v2257
    %v2921 = vunpack.c.l.b16 %v2258
    %v2922 = vunpack.c.h.b16 %v2258
    %v2923 = vunpack.c.l.b16 %v2259
    %v2924 = vunpack.c.h.b16 %v2259
    %v2925 = vunpack.c.l.b16 %v2260
    %v2926 = vunpack.c.h.b16 %v2260
    %v2927 = vunpack.c.l.b16 %v2261
    %v2928 = vunpack.c.h.b16 %v2261
    %v2929 = vunpack.c.l.b16 %v2262
    %v2930 = vunpack.c.h.b16 %v2262
    %v2931 = vunpack.c.l.b16 %v2263
    %v2932 = vunpack.c.h.b16 %v2263
    %v2933 = vunpack.c.l.b16 %v2264
    %v2934 = vunpack.c.h.b16 %v2264
    %v2935 = vunpack.c.l.b16 %v2265
    %v2936 = vunpack.c.h.b16 %v2265
    %v2937 = vunpack.c.l.b16 %v2266
    %v2938 = vunpack.c.h.b16 %v2266
    %v2939 = vunpack.c.l.b16 %v2267
    %v2940 = vunpack.c.h.b16 %v2267
    %v2941 = vunpack.c.l.b16 %v2268
    %v2942 = vunpack.c.h.b16 %v2268
    %v2943 = vunpack.c.l.b16 %v2269
    %v2944 = vunpack.c.h.b16 %v2269
    %v2945 = vunpack.c.l.b16 %v2270
    %v2946 = vunpack.c.h.b16 %v2270
    %v2947 = vunpack.c.l.b16 %v2271
    %v2948 = vunpack.c.h.b16 %v2271
    %v2949 = vunpack.c.l.b16 %v2272
    %v2950 = vunpack.c.h.b16 %v2272
    %v2951 = vunpack.c.l.b16 %v2273
    %v2952 = vunpack.c.h.b16 %v2273
    %v2953 = vunpack.c.l.b16 %v2274
    %v2954 = vunpack.c.h.b16 %v2274
    %v2955 = vunpack.c.l.b16 %v2275
    %v2956 = vunpack.c.h.b16 %v2275
    %v2957 = vunpack.c.l.b16 %v2276
    %v2958 = vunpack.c.h.b16 %v2276
    %v2959 = vunpack.c.l.b16 %v2277
    %v2960 = vunpack.c.h.b16 %v2277
    %v2961 = vunpack.c.l.b16 %v2278
    %v2962 = vunpack.c.h.b16 %v2278
    %v2963 = vunpack.c.l.b16 %v2279
    %v2964 = vunpack.c.h.b16 %v2279
    %v2965 = vunpack.c.l.b16 %v2280
    %v2966 = vunpack.c.h.b16 %v2280
    %v2967 = vunpack.c.l.b16 %v2281
    %v2968 = vunpack.c.h.b16 %v2281
    %v2969 = vunpack.c.l.b16 %v2282
    %v2970 = vunpack.c.h.b16 %v2282
    %v2971 = vunpack.c.l.b16 %v2283
    %v2972 = vunpack.c.h.b16 %v2283
    %v2973 = vunpack.c.l.b16 %v2284
    %v2974 = vunpack.c.h.b16 %v2284
    %v2975 = vunpack.c.l.b16 %v2285
    %v2976 = vunpack.c.h.b16 %v2285
    %v2977 = vunpack.c.l.b16 %v2286
    %v2978 = vunpack.c.h.b16 %v2286
    %v2979 = vunpack.c.l.b16 %v2287
    %v2980 = vunpack.c.h.b16 %v2287
    %v2981 = vunpack.c.l.b16 %v2288
    %v2982 = vunpack.c.h.b16 %v2288
    %v2983 = vunpack.c.l.b16 %v2289
    %v2984 = vunpack.c.h.b16 %v2289
    %v2985 = vunpack.c.l.b16 %v2290
    %v2986 = vunpack.c.h.b16 %v2290
    %v2987 = vunpack.c.l.b16 %v2291
    %v2988 = vunpack.c.h.b16 %v2291
    %v2989 = vunpack.c.l.b16 %v2292
    %v2990 = vunpack.c.h.b16 %v2292
    %v2991 = vunpack.c.l.b16 %v2293
    %v2992 = vunpack.c.h.b16 %v2293
    %v2993 = vunpack.c.l.b16 %v2294
    %v2994 = vunpack.c.h.b16 %v2294
    %v2995 = vunpack.c.l.b16 %v2295
    %v2996 = vunpack.c.h.b16 %v2295
    %v2997 = vunpack.c.l.b16 %v2296
    %v2998 = vunpack.c.h.b16 %v2296
    %v2999 = vunpack.c.l.b16 %v2297
    %v3000 = vunpack.c.h.b16 %v2297
    %v3001 = vunpack.c.l.b16 %v2298
    %v3002 = vunpack.c.h.b16 %v2298
    %v3003 = vunpack.c.l.b16 %v2299
    %v3004 = vunpack.c.h.b16 %v2299
    %v3005 = vunpack.c.l.b16 %v2300
    %v3006 = vunpack.c.h.b16 %v2300
    %v3007 = vunpack.c.l.b16 %v2301
    %v3008 = vunpack.c.h.b16 %v2301
    %v3009 = vunpack.c.l.b16 %v2302
    %v3010 = vunpack.c.h.b16 %v2302
    %v3011 = vunpack.c.l.b16 %v2303
    %v3012 = vunpack.c.h.b16 %v2303
    %v3013 = vunpack.c.l.b16 %v2304
    %v3014 = vunpack.c.h.b16 %v2304
    %v3015 = vunpack.c.l.b16 %v2305
    %v3016 = vunpack.c.h.b16 %v2305
    %v3017 = vunpack.c.l.b16 %v2306
    %v3018 = vunpack.c.h.b16 %v2306
    %v3019 = vunpack.c.l.b16 %v2307
    %v3020 = vunpack.c.h.b16 %v2307
    %v3021 = vunpack.c.l.b16 %v2308
    %v3022 = vunpack.c.h.b16 %v2308
    %v3023 = vunpack.c.l.b16 %v2309
    %v3024 = vunpack.c.h.b16 %v2309
    %v3025 = vunpack.c.l.b16 %v2310
    %v3026 = vunpack.c.h.b16 %v2310
    %v3027 = vunpack.c.l.b16 %v2311
    %v3028 = vunpack.c.h.b16 %v2311
    %v3029 = vunpack.c.l.b16 %v2312
    %v3030 = vunpack.c.h.b16 %v2312
    %v3031 = vunpack.c.l.b16 %v2313
    %v3032 = vunpack.c.h.b16 %v2313
    %v3033 = vunpack.c.l.b16 %v2314
    %v3034 = vunpack.c.h.b16 %v2314
    %v3035 = vunpack.c.l.b16 %v2315
    %v3036 = vunpack.c.h.b16 %v2315
    %v3037 = vunpack.c.l.b16 %v2316
    %v3038 = vunpack.c.h.b16 %v2316
    %v3039 = vunpack.c.l.b16 %v2317
    %v3040 = vunpack.c.h.b16 %v2317
    %v3041 = vunpack.c.l.b16 %v2318
    %v3042 = vunpack.c.h.b16 %v2318
    %v3043 = vunpack.c.l.b16 %v2319
    %v3044 = vunpack.c.h.b16 %v2319
    %v3045 = vunpack.c.l.b16 %v2320
    %v3046 = vunpack.c.h.b16 %v2320
    %v3047 = vunpack.c.l.b16 %v2321
    %v3048 = vunpack.c.h.b16 %v2321
    %v3049 = vunpack.c.l.b16 %v2322
    %v3050 = vunpack.c.h.b16 %v2322
    %v3051 = vunpack.c.l.b16 %v2323
    %v3052 = vunpack.c.h.b16 %v2323
    %v3053 = vunpack.c.l.b16 %v2324
    %v3054 = vunpack.c.h.b16 %v2324
    %v3055 = vunpack.c.l.b16 %v2325
    %v3056 = vunpack.c.h.b16 %v2325
    %v3057 = vunpack.c.l.b16 %v2326
    %v3058 = vunpack.c.h.b16 %v2326
    %v3059 = vpack.c.b16 %v2789, %v2771
    %v3060 = vpack.c.b16 %v2790, %v2772
    %v3061 = vpack.c.b16 %v2791, %v2773
    %v3062 = vpack.c.b16 %v2792, %v2774
    %v3063 = vpack.c.b16 %v2793, %v2775
    %v3064 = vpack.c.b16 %v2794, %v2776
    %v3065 = vpack.c.b16 %v2795, %v2777
    %v3066 = vpack.c.b16 %v2796, %v2778
    %v3067 = vpack.c.b16 %v2797, %v2779
    %v3068 = vpack.c.b16 %v2798, %v2780
    %v3069 = vpack.c.b16 %v2799, %v2781
    %v3070 = vpack.c.b16 %v2800, %v2782
    %v3071 = vpack.c.b16 %v2801, %v2783
    %v3072 = vpack.c.b16 %v2802, %v2784
    %v3073 = vpack.c.b16 %v2803, %v2785
    %v3074 = vpack.c.b16 %v2804, %v2786
    %v3075 = vpack.c.b16 %v2805, %v2787
    %v3076 = vpack.c.b16 %v2806, %v2788
    %v3077 = vpack.c.b16 %v2825, %v2807
    %v3078 = vpack.c.b16 %v2826, %v2808
    %v3079 = vpack.c.b16 %v2827, %v2809
    %v3080 = vpack.c.b16 %v2828, %v2810
    %v3081 = vpack.c.b16 %v2829, %v2811
    %v3082 = vpack.c.b16 %v2830, %v2812
    %v3083 = vpack.c.b16 %v2831, %v2813
    %v3084 = vpack.c.b16 %v2832, %v2814
    %v3085 = vpack.c.b16 %v2833, %v2815
    %v3086 = vpack.c.b16 %v2834, %v2816
    %v3087 = vpack.c.b16 %v2835, %v2817
    %v3088 = vpack.c.b16 %v2836, %v2818
    %v3089 = vpack.c.b16 %v2837, %v2819
    %v3090 = vpack.c.b16 %v2838, %v2820
    %v3091 = vpack.c.b16 %v2839, %v2821
    %v3092 = vpack.c.b16 %v2840, %v2822
    %v3093 = vpack.c.b16 %v2841, %v2823
    %v3094 = vpack.c.b16 %v2842, %v2824
    %v3095 = vpack.c.b16 %v2861, %v2843
    %v3096 = vpack.c.b16 %v2862, %v2844
    %v3097 = vpack.c.b16 %v2863, %v2845
    %v3098 = vpack.c.b16 %v2864, %v2846
    %v3099 = vpack.c.b16 %v2865, %v2847
    %v3100 = vpack.c.b16 %v2866, %v2848
    %v3101 = vpack.c.b16 %v2867, %v2849
    %v3102 = vpack.c.b16 %v2868, %v2850
    %v3103 = vpack.c.b16 %v2869, %v2851
    %v3104 = vpack.c.b16 %v2870, %v2852
    %v3105 = vpack.c.b16 %v2871, %v2853
    %v3106 = vpack.c.b16 %v2872, %v2854
    %v3107 = vpack.c.b16 %v2873, %v2855
    %v3108 = vpack.c.b16 %v2874, %v2856
    %v3109 = vpack.c.b16 %v2875, %v2857
    %v3110 = vpack.c.b16 %v2876, %v2858
    %v3111 = vpack.c.b16 %v2877, %v2859
    %v3112 = vpack.c.b16 %v2878, %v2860
    %v3113 = vpack.c.b16 %v2897, %v2879
    %v3114 = vpack.c.b16 %v2898, %v2880
    %v3115 = vpack.c.b16 %v2899, %v2881
    %v3116 = vpack.c.b16 %v2900, %v2882
    %v3117 = vpack.c.b16 %v2901, %v2883
    %v3118 = vpack.c.b16 %v2902, %v2884
    %v3119 = vpack.c.b16 %v2903, %v2885
    %v3120 = vpack.c.b16 %v2904, %v2886
    %v3121 = vpack.c.b16 %v2905, %v2887
    %v3122 = vpack.c.b16 %v2906, %v2888
    %v3123 = vpack.c.b16 %v2907, %v2889
    %v3124 = vpack.c.b16 %v2908, %v2890
    %v3125 = vpack.c.b16 %v2909, %v2891
    %v3126 = vpack.c.b16 %v2910, %v2892
    %v3127 = vpack.c.b16 %v2911, %v2893
    %v3128 = vpack.c.b16 %v2912, %v2894
    %v3129 = vpack.c.b16 %v2913, %v2895
    %v3130 = vpack.c.b16 %v2914, %v2896
    %v3131 = vpack.c.b16 %v2933, %v2915
    %v3132 = vpack.c.b16 %v2934, %v2916
    %v3133 = vpack.c.b16 %v2935, %v2917
    %v3134 = vpack.c.b16 %v2936, %v2918
    %v3135 = vpack.c.b16 %v2937, %v2919
    %v3136 = vpack.c.b16 %v2938, %v2920
    %v3137 = vpack.c.b16 %v2939, %v2921
    %v3138 = vpack.c.b16 %v2940, %v2922
    %v3139 = vpack.c.b16 %v2941, %v2923
    %v3140 = vpack.c.b16 %v2942, %v2924
    %v3141 = vpack.c.b16 %v2943, %v2925
    %v3142 = vpack.c.b16 %v2944, %v2926
    %v3143 = vpack.c.b16 %v2945, %v2927
    %v3144 = vpack.c.b16 %v2946, %v2928
    %v3145 = vpack.c.b16 %v2947, %v2929
    %v3146 = vpack.c.b16 %v2948, %v2930
    %v3147 = vpack.c.b16 %v2949, %v2931
    %v3148 = vpack.c.b16 %v2950, %v2932
    %v3149 = vpack.c.b16 %v2969, %v2951
    %v3150 = vpack.c.b16 %v2970, %v2952
    %v3151 = vpack.c.b16 %v2971, %v2953
    %v3152 = vpack.c.b16 %v2972, %v2954
    %v3153 = vpack.c.b16 %v2973, %v2955
    %v3154 = vpack.c.b16 %v2974, %v2956
    %v3155 = vpack.c.b16 %v2975, %v2957
    %v3156 = vpack.c.b16 %v2976, %v2958
    %v3157 = vpack.c.b16 %v2977, %v2959
    %v3158 = vpack.c.b16 %v2978, %v2960
    %v3159 = vpack.c.b16 %v2979, %v2961
    %v3160 = vpack.c.b16 %v2980, %v2962
    %v3161 = vpack.c.b16 %v2981, %v2963
    %v3162 = vpack.c.b16 %v2982, %v2964
    %v3163 = vpack.c.b16 %v2983, %v2965
    %v3164 = vpack.c.b16 %v2984, %v2966
    %v3165 = vpack.c.b16 %v2985, %v2967
    %v3166 = vpack.c.b16 %v2986, %v2968
    %v3167 = vpack.c.b16 %v3005, %v2987
    %v3168 = vpack.c.b16 %v3006, %v2988
    %v3169 = vpack.c.b16 %v3007, %v2989
    %v3170 = vpack.c.b16 %v3008, %v2990
    %v3171 = vpack.c.b16 %v3009, %v2991
    %v3172 = vpack.c.b16 %v3010, %v2992
    %v3173 = vpack.c.b16 %v3011, %v2993
    %v3174 = vpack.c.b16 %v3012, %v2994
    %v3175 = vpack.c.b16 %v3013, %v2995
    %v3176 = vpack.c.b16 %v3014, %v2996
    %v3177 = vpack.c.b16 %v3015, %v2997
    %v3178 = vpack.c.b16 %v3016, %v2998
    %v3179 = vpack.c.b16 %v3017, %v2999
    %v3180 = vpack.c.b16 %v3018, %v3000
    %v3181 = vpack.c.b16 %v3019, %v3001
    %v3182 = vpack.c.b16 %v3020, %v3002
    %v3183 = vpack.c.b16 %v3021, %v3003
    %v3184 = vpack.c.b16 %v3022, %v3004
    %v3185 = vpack.c.b16 %v3041, %v3023
    %v3186 = vpack.c.b16 %v3042, %v3024
    %v3187 = vpack.c.b16 %v3043, %v3025
    %v3188 = vpack.c.b16 %v3044, %v3026
    %v3189 = vpack.c.b16 %v3045, %v3027
    %v3190 = vpack.c.b16 %v3046, %v3028
    %v3191 = vpack.c.b16 %v3047, %v3029
    %v3192 = vpack.c.b16 %v3048, %v3030
    %v3193 = vpack.c.b16 %v3049, %v3031
    %v3194 = vpack.c.b16 %v3050, %v3032
    %v3195 = vpack.c.b16 %v3051, %v3033
    %v3196 = vpack.c.b16 %v3052, %v3034
    %v3197 = vpack.c.b16 %v3053, %v3035
    %v3198 = vpack.c.b16 %v3054, %v3036
    %v3199 = vpack.c.b16 %v3055, %v3037
    %v3200 = vpack.c.b16 %v3056, %v3038
    %v3201 = vpack.c.b16 %v3057, %v3039
    %v3202 = vpack.c.b16 %v3058, %v3040
    %v3635 = vunpack.c.l.b16 %v2327
    %v3636 = vunpack.c.h.b16 %v2327
    %v3637 = vunpack.c.l.b16 %v2328
    %v3638 = vunpack.c.h.b16 %v2328
    %v3639 = vunpack.c.l.b16 %v2329
    %v3640 = vunpack.c.h.b16 %v2329
    %v3641 = vunpack.c.l.b16 %v2330
    %v3642 = vunpack.c.h.b16 %v2330
    %v3643 = vunpack.c.l.b16 %v2331
    %v3644 = vunpack.c.h.b16 %v2331
    %v3645 = vunpack.c.l.b16 %v2332
    %v3646 = vunpack.c.h.b16 %v2332
    %v3647 = vunpack.c.l.b16 %v2333
    %v3648 = vunpack.c.h.b16 %v2333
    %v3649 = vunpack.c.l.b16 %v2334
    %v3650 = vunpack.c.h.b16 %v2334
    %v3651 = vunpack.c.l.b16 %v2335
    %v3652 = vunpack.c.h.b16 %v2335
    %v3653 = vunpack.c.l.b16 %v2336
    %v3654 = vunpack.c.h.b16 %v2336
    %v3655 = vunpack.c.l.b16 %v2337
    %v3656 = vunpack.c.h.b16 %v2337
    %v3657 = vunpack.c.l.b16 %v2338
    %v3658 = vunpack.c.h.b16 %v2338
    %v3659 = vunpack.c.l.b16 %v2339
    %v3660 = vunpack.c.h.b16 %v2339
    %v3661 = vunpack.c.l.b16 %v2340
    %v3662 = vunpack.c.h.b16 %v2340
    %v3663 = vunpack.c.l.b16 %v2341
    %v3664 = vunpack.c.h.b16 %v2341
    %v3665 = vunpack.c.l.b16 %v2342
    %v3666 = vunpack.c.h.b16 %v2342
    %v3667 = vunpack.c.l.b16 %v2343
    %v3668 = vunpack.c.h.b16 %v2343
    %v3669 = vunpack.c.l.b16 %v2344
    %v3670 = vunpack.c.h.b16 %v2344
    %v3671 = vunpack.c.l.b16 %v2345
    %v3672 = vunpack.c.h.b16 %v2345
    %v3673 = vunpack.c.l.b16 %v2346
    %v3674 = vunpack.c.h.b16 %v2346
    %v3675 = vunpack.c.l.b16 %v2347
    %v3676 = vunpack.c.h.b16 %v2347
    %v3677 = vunpack.c.l.b16 %v2348
    %v3678 = vunpack.c.h.b16 %v2348
    %v3679 = vunpack.c.l.b16 %v2349
    %v3680 = vunpack.c.h.b16 %v2349
    %v3681 = vunpack.c.l.b16 %v2350
    %v3682 = vunpack.c.h.b16 %v2350
    %v3683 = vunpack.c.l.b16 %v2351
    %v3684 = vunpack.c.h.b16 %v2351
    %v3685 = vunpack.c.l.b16 %v2352
    %v3686 = vunpack.c.h.b16 %v2352
    %v3687 = vunpack.c.l.b16 %v2353
    %v3688 = vunpack.c.h.b16 %v2353
    %v3689 = vunpack.c.l.b16 %v2354
    %v3690 = vunpack.c.h.b16 %v2354
    %v3691 = vunpack.c.l.b16 %v2355
    %v3692 = vunpack.c.h.b16 %v2355
    %v3693 = vunpack.c.l.b16 %v2356
    %v3694 = vunpack.c.h.b16 %v2356
    %v3695 = vunpack.c.l.b16 %v2357
    %v3696 = vunpack.c.h.b16 %v2357
    %v3697 = vunpack.c.l.b16 %v2358
    %v3698 = vunpack.c.h.b16 %v2358
    %v3699 = vunpack.c.l.b16 %v2359
    %v3700 = vunpack.c.h.b16 %v2359
    %v3701 = vunpack.c.l.b16 %v2360
    %v3702 = vunpack.c.h.b16 %v2360
    %v3703 = vunpack.c.l.b16 %v2361
    %v3704 = vunpack.c.h.b16 %v2361
    %v3705 = vunpack.c.l.b16 %v2362
    %v3706 = vunpack.c.h.b16 %v2362
    %v3707 = vunpack.c.l.b16 %v2363
    %v3708 = vunpack.c.h.b16 %v2363
    %v3709 = vunpack.c.l.b16 %v2364
    %v3710 = vunpack.c.h.b16 %v2364
    %v3711 = vunpack.c.l.b16 %v2365
    %v3712 = vunpack.c.h.b16 %v2365
    %v3713 = vunpack.c.l.b16 %v2366
    %v3714 = vunpack.c.h.b16 %v2366
    %v3715 = vunpack.c.l.b16 %v2367
    %v3716 = vunpack.c.h.b16 %v2367
    %v3717 = vunpack.c.l.b16 %v2368
    %v3718 = vunpack.c.h.b16 %v2368
    %v3719 = vunpack.c.l.b16 %v2369
    %v3720 = vunpack.c.h.b16 %v2369
    %v3721 = vunpack.c.l.b16 %v2370
    %v3722 = vunpack.c.h.b16 %v2370
    %v3723 = vunpack.c.l.b16 %v2371
    %v3724 = vunpack.c.h.b16 %v2371
    %v3725 = vunpack.c.l.b16 %v2372
    %v3726 = vunpack.c.h.b16 %v2372
    %v3727 = vunpack.c.l.b16 %v2373
    %v3728 = vunpack.c.h.b16 %v2373
    %v3729 = vunpack.c.l.b16 %v2374
    %v3730 = vunpack.c.h.b16 %v2374
    %v3731 = vunpack.c.l.b16 %v2375
    %v3732 = vunpack.c.h.b16 %v2375
    %v3733 = vunpack.c.l.b16 %v2376
    %v3734 = vunpack.c.h.b16 %v2376
    %v3735 = vunpack.c.l.b16 %v2377
    %v3736 = vunpack.c.h.b16 %v2377
    %v3737 = vunpack.c.l.b16 %v2378
    %v3738 = vunpack.c.h.b16 %v2378
    %v3739 = vunpack.c.l.b16 %v2379
    %v3740 = vunpack.c.h.b16 %v2379
    %v3741 = vunpack.c.l.b16 %v2380
    %v3742 = vunpack.c.h.b16 %v2380
    %v3743 = vunpack.c.l.b16 %v2381
    %v3744 = vunpack.c.h.b16 %v2381
    %v3745 = vunpack.c.l.b16 %v2382
    %v3746 = vunpack.c.h.b16 %v2382
    %v3747 = vunpack.c.l.b16 %v2383
    %v3748 = vunpack.c.h.b16 %v2383
    %v3749 = vunpack.c.l.b16 %v2384
    %v3750 = vunpack.c.h.b16 %v2384
    %v3751 = vunpack.c.l.b16 %v2385
    %v3752 = vunpack.c.h.b16 %v2385
    %v3753 = vunpack.c.l.b16 %v2386
    %v3754 = vunpack.c.h.b16 %v2386
    %v3755 = vunpack.c.l.b16 %v2387
    %v3756 = vunpack.c.h.b16 %v2387
    %v3757 = vunpack.c.l.b16 %v2388
    %v3758 = vunpack.c.h.b16 %v2388
    %v3759 = vunpack.c.l.b16 %v2389
    %v3760 = vunpack.c.h.b16 %v2389
    %v3761 = vunpack.c.l.b16 %v2390
    %v3762 = vunpack.c.h.b16 %v2390
    %v3763 = vunpack.c.l.b16 %v2391
    %v3764 = vunpack.c.h.b16 %v2391
    %v3765 = vunpack.c.l.b16 %v2392
    %v3766 = vunpack.c.h.b16 %v2392
    %v3767 = vunpack.c.l.b16 %v2393
    %v3768 = vunpack.c.h.b16 %v2393
    %v3769 = vunpack.c.l.b16 %v2394
    %v3770 = vunpack.c.h.b16 %v2394
    %v3771 = vunpack.c.l.b16 %v2395
    %v3772 = vunpack.c.h.b16 %v2395
    %v3773 = vunpack.c.l.b16 %v2396
    %v3774 = vunpack.c.h.b16 %v2396
    %v3775 = vunpack.c.l.b16 %v2397
    %v3776 = vunpack.c.h.b16 %v2397
    %v3777 = vunpack.c.l.b16 %v2398
    %v3778 = vunpack.c.h.b16 %v2398
    %v3779 = vunpack.c.l.b16 %v2399
    %v3780 = vunpack.c.h.b16 %v2399
    %v3781 = vunpack.c.l.b16 %v2400
    %v3782 = vunpack.c.h.b16 %v2400
    %v3783 = vunpack.c.l.b16 %v2401
    %v3784 = vunpack.c.h.b16 %v2401
    %v3785 = vunpack.c.l.b16 %v2402
    %v3786 = vunpack.c.h.b16 %v2402
    %v3787 = vunpack.c.l.b16 %v2403
    %v3788 = vunpack.c.h.b16 %v2403
    %v3789 = vunpack.c.l.b16 %v2404
    %v3790 = vunpack.c.h.b16 %v2404
    %v3791 = vunpack.c.l.b16 %v2405
    %v3792 = vunpack.c.h.b16 %v2405
    %v3793 = vunpack.c.l.b16 %v2406
    %v3794 = vunpack.c.h.b16 %v2406
    %v3795 = vunpack.c.l.b16 %v2407
    %v3796 = vunpack.c.h.b16 %v2407
    %v3797 = vunpack.c.l.b16 %v2408
    %v3798 = vunpack.c.h.b16 %v2408
    %v3799 = vunpack.c.l.b16 %v2409
    %v3800 = vunpack.c.h.b16 %v2409
    %v3801 = vunpack.c.l.b16 %v2410
    %v3802 = vunpack.c.h.b16 %v2410
    %v3803 = vunpack.c.l.b16 %v2411
    %v3804 = vunpack.c.h.b16 %v2411
    %v3805 = vunpack.c.l.b16 %v2412
    %v3806 = vunpack.c.h.b16 %v2412
    %v3807 = vunpack.c.l.b16 %v2413
    %v3808 = vunpack.c.h.b16 %v2413
    %v3809 = vunpack.c.l.b16 %v2414
    %v3810 = vunpack.c.h.b16 %v2414
    %v3811 = vunpack.c.l.b16 %v2415
    %v3812 = vunpack.c.h.b16 %v2415
    %v3813 = vunpack.c.l.b16 %v2416
    %v3814 = vunpack.c.h.b16 %v2416
    %v3815 = vunpack.c.l.b16 %v2417
    %v3816 = vunpack.c.h.b16 %v2417
    %v3817 = vunpack.c.l.b16 %v2418
    %v3818 = vunpack.c.h.b16 %v2418
    %v3819 = vunpack.c.l.b16 %v2419
    %v3820 = vunpack.c.h.b16 %v2419
    %v3821 = vunpack.c.l.b16 %v2420
    %v3822 = vunpack.c.h.b16 %v2420
    %v3823 = vunpack.c.l.b16 %v2421
    %v3824 = vunpack.c.h.b16 %v2421
    %v3825 = vunpack.c.l.b16 %v2422
    %v3826 = vunpack.c.h.b16 %v2422
    %v3827 = vunpack.c.l.b16 %v2423
    %v3828 = vunpack.c.h.b16 %v2423
    %v3829 = vunpack.c.l.b16 %v2424
    %v3830 = vunpack.c.h.b16 %v2424
    %v3831 = vunpack.c.l.b16 %v2425
    %v3832 = vunpack.c.h.b16 %v2425
    %v3833 = vunpack.c.l.b16 %v2426
    %v3834 = vunpack.c.h.b16 %v2426
    %v3835 = vunpack.c.l.b16 %v2427
    %v3836 = vunpack.c.h.b16 %v2427
    %v3837 = vunpack.c.l.b16 %v2428
    %v3838 = vunpack.c.h.b16 %v2428
    %v3839 = vunpack.c.l.b16 %v2429
    %v3840 = vunpack.c.h.b16 %v2429
    %v3841 = vunpack.c.l.b16 %v2430
    %v3842 = vunpack.c.h.b16 %v2430
    %v3843 = vunpack.c.l.b16 %v2431
    %v3844 = vunpack.c.h.b16 %v2431
    %v3845 = vunpack.c.l.b16 %v2432
    %v3846 = vunpack.c.h.b16 %v2432
    %v3847 = vunpack.c.l.b16 %v2433
    %v3848 = vunpack.c.h.b16 %v2433
    %v3849 = vunpack.c.l.b16 %v2434
    %v3850 = vunpack.c.h.b16 %v2434
    %v3851 = vunpack.c.l.b16 %v2435
    %v3852 = vunpack.c.h.b16 %v2435
    %v3853 = vunpack.c.l.b16 %v2436
    %v3854 = vunpack.c.h.b16 %v2436
    %v3855 = vunpack.c.l.b16 %v2437
    %v3856 = vunpack.c.h.b16 %v2437
    %v3857 = vunpack.c.l.b16 %v2438
    %v3858 = vunpack.c.h.b16 %v2438
    %v3859 = vunpack.c.l.b16 %v2439
    %v3860 = vunpack.c.h.b16 %v2439
    %v3861 = vunpack.c.l.b16 %v2440
    %v3862 = vunpack.c.h.b16 %v2440
    %v3863 = vunpack.c.l.b16 %v2441
    %v3864 = vunpack.c.h.b16 %v2441
    %v3865 = vunpack.c.l.b16 %v2442
    %v3866 = vunpack.c.h.b16 %v2442
    %v3867 = vunpack.c.l.b16 %v2443
    %v3868 = vunpack.c.h.b16 %v2443
    %v3869 = vunpack.c.l.b16 %v2444
    %v3870 = vunpack.c.h.b16 %v2444
    %v3871 = vunpack.c.l.b16 %v2445
    %v3872 = vunpack.c.h.b16 %v2445
    %v3873 = vunpack.c.l.b16 %v2446
    %v3874 = vunpack.c.h.b16 %v2446
    %v3875 = vunpack.c.l.b16 %v2447
    %v3876 = vunpack.c.h.b16 %v2447
    %v3877 = vunpack.c.l.b16 %v2448
    %v3878 = vunpack.c.h.b16 %v2448
    %v3879 = vunpack.c.l.b16 %v2449
    %v3880 = vunpack.c.h.b16 %v2449
    %v3881 = vunpack.c.l.b16 %v2450
    %v3882 = vunpack.c.h.b16 %v2450
    %v3883 = vunpack.c.l.b16 %v2451
    %v3884 = vunpack.c.h.b16 %v2451
    %v3885 = vunpack.c.l.b16 %v2452
    %v3886 = vunpack.c.h.b16 %v2452
    %v3887 = vunpack.c.l.b16 %v2453
    %v3888 = vunpack.c.h.b16 %v2453
    %v3889 = vunpack.c.l.b16 %v2454
    %v3890 = vunpack.c.h.b16 %v2454
    %v3891 = vunpack.c.l.b16 %v2455
    %v3892 = vunpack.c.h.b16 %v2455
    %v3893 = vunpack.c.l.b16 %v2456
    %v3894 = vunpack.c.h.b16 %v2456
    %v3895 = vunpack.c.l.b16 %v2457
    %v3896 = vunpack.c.h.b16 %v2457
    %v3897 = vunpack.c.l.b16 %v2458
    %v3898 = vunpack.c.h.b16 %v2458
    %v3899 = vunpack.c.l.b16 %v2459
    %v3900 = vunpack.c.h.b16 %v2459
    %v3901 = vunpack.c.l.b16 %v2460
    %v3902 = vunpack.c.h.b16 %v2460
    %v3903 = vunpack.c.l.b16 %v2461
    %v3904 = vunpack.c.h.b16 %v2461
    %v3905 = vunpack.c.l.b16 %v2462
    %v3906 = vunpack.c.h.b16 %v2462
    %v3907 = vunpack.c.l.b16 %v2463
    %v3908 = vunpack.c.h.b16 %v2463
    %v3909 = vunpack.c.l.b16 %v2464
    %v3910 = vunpack.c.h.b16 %v2464
    %v3911 = vunpack.c.l.b16 %v2465
    %v3912 = vunpack.c.h.b16 %v2465
    %v3913 = vunpack.c.l.b16 %v2466
    %v3914 = vunpack.c.h.b16 %v2466
    %v3915 = vunpack.c.l.b16 %v2467
    %v3916 = vunpack.c.h.b16 %v2467
    %v3917 = vunpack.c.l.b16 %v2468
    %v3918 = vunpack.c.h.b16 %v2468
    %v3919 = vunpack.c.l.b16 %v2469
    %v3920 = vunpack.c.h.b16 %v2469
    %v3921 = vunpack.c.l.b16 %v2470
    %v3922 = vunpack.c.h.b16 %v2470
    %v3923 = vunpack.c.l.b16 %v2471
    %v3924 = vunpack.c.h.b16 %v2471
    %v3925 = vunpack.c.l.b16 %v2472
    %v3926 = vunpack.c.h.b16 %v2472
    %v3927 = vunpack.c.l.b16 %v2473
    %v3928 = vunpack.c.h.b16 %v2473
    %v3929 = vunpack.c.l.b16 %v2474
    %v3930 = vunpack.c.h.b16 %v2474
    %v3931 = vunpack.c.l.b16 %v2475
    %v3932 = vunpack.c.h.b16 %v2475
    %v3933 = vunpack.c.l.b16 %v2476
    %v3934 = vunpack.c.h.b16 %v2476
    %v3935 = vunpack.c.l.b16 %v2477
    %v3936 = vunpack.c.h.b16 %v2477
    %v3937 = vunpack.c.l.b16 %v2478
    %v3938 = vunpack.c.h.b16 %v2478
    %v3939 = vunpack.c.l.b16 %v2479
    %v3940 = vunpack.c.h.b16 %v2479
    %v3941 = vunpack.c.l.b16 %v2480
    %v3942 = vunpack.c.h.b16 %v2480
    %v3943 = vunpack.c.l.b16 %v2481
    %v3944 = vunpack.c.h.b16 %v2481
    %v3945 = vunpack.c.l.b16 %v2482
    %v3946 = vunpack.c.h.b16 %v2482
    %v3947 = vunpack.c.l.b16 %v2483
    %v3948 = vunpack.c.h.b16 %v2483
    %v3949 = vunpack.c.l.b16 %v2484
    %v3950 = vunpack.c.h.b16 %v2484
    %v3951 = vunpack.c.l.b16 %v2485
    %v3952 = vunpack.c.h.b16 %v2485
    %v3953 = vunpack.c.l.b16 %v2486
    %v3954 = vunpack.c.h.b16 %v2486
    %v3955 = vunpack.c.l.b16 %v2487
    %v3956 = vunpack.c.h.b16 %v2487
    %v3957 = vunpack.c.l.b16 %v2488
    %v3958 = vunpack.c.h.b16 %v2488
    %v3959 = vunpack.c.l.b16 %v2489
    %v3960 = vunpack.c.h.b16 %v2489
    %v3961 = vunpack.c.l.b16 %v2490
    %v3962 = vunpack.c.h.b16 %v2490
    %v3963 = vunpack.c.l.b16 %v2491
    %v3964 = vunpack.c.h.b16 %v2491
    %v3965 = vunpack.c.l.b16 %v2492
    %v3966 = vunpack.c.h.b16 %v2492
    %v3967 = vunpack.c.l.b16 %v2493
    %v3968 = vunpack.c.h.b16 %v2493
    %v3969 = vunpack.c.l.b16 %v2494
    %v3970 = vunpack.c.h.b16 %v2494
    %v3971 = vunpack.c.l.b16 %v2495
    %v3972 = vunpack.c.h.b16 %v2495
    %v3973 = vunpack.c.l.b16 %v2496
    %v3974 = vunpack.c.h.b16 %v2496
    %v3975 = vunpack.c.l.b16 %v2497
    %v3976 = vunpack.c.h.b16 %v2497
    %v3977 = vunpack.c.l.b16 %v2498
    %v3978 = vunpack.c.h.b16 %v2498
    %v3979 = vunpack.c.l.b16 %v2499
    %v3980 = vunpack.c.h.b16 %v2499
    %v3981 = vunpack.c.l.b16 %v2500
    %v3982 = vunpack.c.h.b16 %v2500
    %v3983 = vunpack.c.l.b16 %v2501
    %v3984 = vunpack.c.h.b16 %v2501
    %v3985 = vunpack.c.l.b16 %v2502
    %v3986 = vunpack.c.h.b16 %v2502
    %v3987 = vunpack.c.l.b16 %v2503
    %v3988 = vunpack.c.h.b16 %v2503
    %v3989 = vunpack.c.l.b16 %v2504
    %v3990 = vunpack.c.h.b16 %v2504
    %v3991 = vunpack.c.l.b16 %v2505
    %v3992 = vunpack.c.h.b16 %v2505
    %v3993 = vunpack.c.l.b16 %v2506
    %v3994 = vunpack.c.h.b16 %v2506
    %v3995 = vunpack.c.l.b16 %v2507
    %v3996 = vunpack.c.h.b16 %v2507
    %v3997 = vunpack.c.l.b16 %v2508
    %v3998 = vunpack.c.h.b16 %v2508
    %v3999 = vunpack.c.l.b16 %v2509
    %v4000 = vunpack.c.h.b16 %v2509
    %v4001 = vunpack.c.l.b16 %v2510
    %v4002 = vunpack.c.h.b16 %v2510
    %v4003 = vunpack.c.l.b16 %v2511
    %v4004 = vunpack.c.h.b16 %v2511
    %v4005 = vunpack.c.l.b16 %v2512
    %v4006 = vunpack.c.h.b16 %v2512
    %v4007 = vunpack.c.l.b16 %v2513
    %v4008 = vunpack.c.h.b16 %v2513
    %v4009 = vunpack.c.l.b16 %v2514
    %v4010 = vunpack.c.h.b16 %v2514
    %v4011 = vunpack.c.l.b16 %v2515
    %v4012 = vunpack.c.h.b16 %v2515
    %v4013 = vunpack.c.l.b16 %v2516
    %v4014 = vunpack.c.h.b16 %v2516
    %v4015 = vunpack.c.l.b16 %v2517
    %v4016 = vunpack.c.h.b16 %v2517
    %v4017 = vunpack.c.l.b16 %v2518
    %v4018 = vunpack.c.h.b16 %v2518
    %v4019 = vunpack.c.l.b16 %v2519
    %v4020 = vunpack.c.h.b16 %v2519
    %v4021 = vunpack.c.l.b16 %v2520
    %v4022 = vunpack.c.h.b16 %v2520
    %v4023 = vunpack.c.l.b16 %v2521
    %v4024 = vunpack.c.h.b16 %v2521
    %v4025 = vunpack.c.l.b16 %v2522
    %v4026 = vunpack.c.h.b16 %v2522
    %v4027 = vunpack.c.l.b16 %v2523
    %v4028 = vunpack.c.h.b16 %v2523
    %v4029 = vunpack.c.l.b16 %v2524
    %v4030 = vunpack.c.h.b16 %v2524
    %v4031 = vunpack.c.l.b16 %v2525
    %v4032 = vunpack.c.h.b16 %v2525
    %v4033 = vunpack.c.l.b16 %v2526
    %v4034 = vunpack.c.h.b16 %v2526
    %v4035 = vunpack.c.l.b16 %v2527
    %v4036 = vunpack.c.h.b16 %v2527
    %v4037 = vunpack.c.l.b16 %v2528
    %v4038 = vunpack.c.h.b16 %v2528
    %v4039 = vunpack.c.l.b16 %v2529
    %v4040 = vunpack.c.h.b16 %v2529
    %v4041 = vunpack.c.l.b16 %v2530
    %v4042 = vunpack.c.h.b16 %v2530
    %v4043 = vunpack.c.l.b16 %v2531
    %v4044 = vunpack.c.h.b16 %v2531
    %v4045 = vunpack.c.l.b16 %v2532
    %v4046 = vunpack.c.h.b16 %v2532
    %v4047 = vunpack.c.l.b16 %v2533
    %v4048 = vunpack.c.h.b16 %v2533
    %v4049 = vunpack.c.l.b16 %v2534
    %v4050 = vunpack.c.h.b16 %v2534
    %v4051 = vunpack.c.l.b16 %v2535
    %v4052 = vunpack.c.h.b16 %v2535
    %v4053 = vunpack.c.l.b16 %v2536
    %v4054 = vunpack.c.h.b16 %v2536
    %v4055 = vunpack.c.l.b16 %v2537
    %v4056 = vunpack.c.h.b16 %v2537
    %v4057 = vunpack.c.l.b16 %v2538
    %v4058 = vunpack.c.h.b16 %v2538
    %v4059 = vunpack.c.l.b16 %v2539
    %v4060 = vunpack.c.h.b16 %v2539
    %v4061 = vunpack.c.l.b16 %v2540
    %v4062 = vunpack.c.h.b16 %v2540
    %v4063 = vunpack.c.l.b16 %v2541
    %v4064 = vunpack.c.h.b16 %v2541
    %v4065 = vunpack.c.l.b16 %v2542
    %v4066 = vunpack.c.h.b16 %v2542
    %v4067 = vunpack.c.l.b16 %v2543
    %v4068 = vunpack.c.h.b16 %v2543
    %v4069 = vunpack.c.l.b16 %v2544
    %v4070 = vunpack.c.h.b16 %v2544
    %v4071 = vunpack.c.l.b16 %v2545
    %v4072 = vunpack.c.h.b16 %v2545
    %v4073 = vunpack.c.l.b16 %v2546
    %v4074 = vunpack.c.h.b16 %v2546
    %v4075 = vunpack.c.l.b16 %v2547
    %v4076 = vunpack.c.h.b16 %v2547
    %v4077 = vunpack.c.l.b16 %v2548
    %v4078 = vunpack.c.h.b16 %v2548
    %v4079 = vunpack.c.l.b16 %v2549
    %v4080 = vunpack.c.h.b16 %v2549
    %v4081 = vunpack.c.l.b16 %v2550
    %v4082 = vunpack.c.h.b16 %v2550
    %v4083 = vunpack.c.l.b16 %v2551
    %v4084 = vunpack.c.h.b16 %v2551
    %v4085 = vunpack.c.l.b16 %v2552
    %v4086 = vunpack.c.h.b16 %v2552
    %v4087 = vunpack.c.l.b16 %v2553
    %v4088 = vunpack.c.h.b16 %v2553
    %v4089 = vunpack.c.l.b16 %v2554
    %v4090 = vunpack.c.h.b16 %v2554
    %v4091 = vunpack.c.l.b16 %v2555
    %v4092 = vunpack.c.h.b16 %v2555
    %v4093 = vunpack.c.l.b16 %v2556
    %v4094 = vunpack.c.h.b16 %v2556
    %v4095 = vunpack.c.l.b16 %v2557
    %v4096 = vunpack.c.h.b16 %v2557
    %v4097 = vunpack.c.l.b16 %v2558
    %v4098 = vunpack.c.h.b16 %v2558
    %v4099 = vunpack.c.l.b16 %v2559
    %v4100 = vunpack.c.h.b16 %v2559
    %v4101 = vunpack.c.l.b16 %v2560
    %v4102 = vunpack.c.h.b16 %v2560
    %v4103 = vunpack.c.l.b16 %v2561
    %v4104 = vunpack.c.h.b16 %v2561
    %v4105 = vunpack.c.l.b16 %v2562
    %v4106 = vunpack.c.h.b16 %v2562
    %v4107 = vunpack.c.l.b16 %v2563
    %v4108 = vunpack.c.h.b16 %v2563
    %v4109 = vunpack.c.l.b16 %v2564
    %v4110 = vunpack.c.h.b16 %v2564
    %v4111 = vunpack.c.l.b16 %v2565
    %v4112 = vunpack.c.h.b16 %v2565
    %v4113 = vunpack.c.l.b16 %v2566
    %v4114 = vunpack.c.h.b16 %v2566
    %v4115 = vunpack.c.l.b16 %v2567
    %v4116 = vunpack.c.h.b16 %v2567
    %v4117 = vunpack.c.l.b16 %v2568
    %v4118 = vunpack.c.h.b16 %v2568
    %v4119 = vunpack.c.l.b16 %v2569
    %v4120 = vunpack.c.h.b16 %v2569
    %v4121 = vunpack.c.l.b16 %v2570
    %v4122 = vunpack.c.h.b16 %v2570
    %v4123 = vunpack.c.l.b16 %v2571
    %v4124 = vunpack.c.h.b16 %v2571
    %v4125 = vunpack.c.l.b16 %v2572
    %v4126 = vunpack.c.h.b16 %v2572
    %v4127 = vunpack.c.l.b16 %v2573
    %v4128 = vunpack.c.h.b16 %v2573
    %v4129 = vunpack.c.l.b16 %v2574
    %v4130 = vunpack.c.h.b16 %v2574
    %v4131 = vunpack.c.l.b16 %v2575
    %v4132 = vunpack.c.h.b16 %v2575
    %v4133 = vunpack.c.l.b16 %v2576
    %v4134 = vunpack.c.h.b16 %v2576
    %v4135 = vunpack.c.l.b16 %v2577
    %v4136 = vunpack.c.h.b16 %v2577
    %v4137 = vunpack.c.l.b16 %v2578
    %v4138 = vunpack.c.h.b16 %v2578
    %v4139 = vunpack.c.l.b16 %v2579
    %v4140 = vunpack.c.h.b16 %v2579
    %v4141 = vunpack.c.l.b16 %v2580
    %v4142 = vunpack.c.h.b16 %v2580
    %v4143 = vunpack.c.l.b16 %v2581
    %v4144 = vunpack.c.h.b16 %v2581
    %v4145 = vunpack.c.l.b16 %v2582
    %v4146 = vunpack.c.h.b16 %v2582
    %v4147 = vunpack.c.l.b16 %v2583
    %v4148 = vunpack.c.h.b16 %v2583
    %v4149 = vunpack.c.l.b16 %v2584
    %v4150 = vunpack.c.h.b16 %v2584
    %v4151 = vunpack.c.l.b16 %v2585
    %v4152 = vunpack.c.h.b16 %v2585
    %v4153 = vunpack.c.l.b16 %v2586
    %v4154 = vunpack.c.h.b16 %v2586
    %v4155 = vunpack.c.l.b16 %v2587
    %v4156 = vunpack.c.h.b16 %v2587
    %v4157 = vunpack.c.l.b16 %v2588
    %v4158 = vunpack.c.h.b16 %v2588
    %v4159 = vunpack.c.l.b16 %v2589
    %v4160 = vunpack.c.h.b16 %v2589
    %v4161 = vunpack.c.l.b16 %v2590
    %v4162 = vunpack.c.h.b16 %v2590
    %v4163 = vunpack.c.l.b16 %v2591
    %v4164 = vunpack.c.h.b16 %v2591
    %v4165 = vunpack.c.l.b16 %v2592
    %v4166 = vunpack.c.h.b16 %v2592
    %v4167 = vunpack.c.l.b16 %v2593
    %v4168 = vunpack.c.h.b16 %v2593
    %v4169 = vunpack.c.l.b16 %v2594
    %v4170 = vunpack.c.h.b16 %v2594
    %v4171 = vunpack.c.l.b16 %v2595
    %v4172 = vunpack.c.h.b16 %v2595
    %v4173 = vunpack.c.l.b16 %v2596
    %v4174 = vunpack.c.h.b16 %v2596
    %v4175 = vunpack.c.l.b16 %v2597
    %v4176 = vunpack.c.h.b16 %v2597
    %v4177 = vunpack.c.l.b16 %v2598
    %v4178 = vunpack.c.h.b16 %v2598
    %v4179 = vunpack.c.l.b16 %v2599
    %v4180 = vunpack.c.h.b16 %v2599
    %v4181 = vunpack.c.l.b16 %v2600
    %v4182 = vunpack.c.h.b16 %v2600
    %v4183 = vunpack.c.l.b16 %v2601
    %v4184 = vunpack.c.h.b16 %v2601
    %v4185 = vunpack.c.l.b16 %v2602
    %v4186 = vunpack.c.h.b16 %v2602
    %v4187 = vunpack.c.l.b16 %v2603
    %v4188 = vunpack.c.h.b16 %v2603
    %v4189 = vunpack.c.l.b16 %v2604
    %v4190 = vunpack.c.h.b16 %v2604
    %v4191 = vunpack.c.l.b16 %v2605
    %v4192 = vunpack.c.h.b16 %v2605
    %v4193 = vunpack.c.l.b16 %v2606
    %v4194 = vunpack.c.h.b16 %v2606
    %v4195 = vunpack.c.l.b16 %v2607
    %v4196 = vunpack.c.h.b16 %v2607
    %v4197 = vunpack.c.l.b16 %v2608
    %v4198 = vunpack.c.h.b16 %v2608
    %v4199 = vunpack.c.l.b16 %v2609
    %v4200 = vunpack.c.h.b16 %v2609
    %v4201 = vunpack.c.l.b16 %v2610
    %v4202 = vunpack.c.h.b16 %v2610
    %v4203 = vunpack.c.l.b16 %v2611
    %v4204 = vunpack.c.h.b16 %v2611
    %v4205 = vunpack.c.l.b16 %v2612
    %v4206 = vunpack.c.h.b16 %v2612
    %v4207 = vunpack.c.l.b16 %v2613
    %v4208 = vunpack.c.h.b16 %v2613
    %v4209 = vunpack.c.l.b16 %v2614
    %v4210 = vunpack.c.h.b16 %v2614
    %v4211 = vpack.c.b16 %v3637, %v3635
    %v4212 = vpack.c.b16 %v3638, %v3636
    %v4213 = vpack.c.b16 %v3641, %v3639
    %v4214 = vpack.c.b16 %v3642, %v3640
    %v4215 = vpack.c.b16 %v3645, %v3643
    %v4216 = vpack.c.b16 %v3646, %v3644
    %v4217 = vpack.c.b16 %v3649, %v3647
    %v4218 = vpack.c.b16 %v3650, %v3648
    %v4219 = vpack.c.b16 %v3653, %v3651
    %v4220 = vpack.c.b16 %v3654, %v3652
    %v4221 = vpack.c.b16 %v3657, %v3655
    %v4222 = vpack.c.b16 %v3658, %v3656
    %v4223 = vpack.c.b16 %v3661, %v3659
    %v4224 = vpack.c.b16 %v3662, %v3660
    %v4225 = vpack.c.b16 %v3665, %v3663
    %v4226 = vpack.c.b16 %v3666, %v3664
    %v4227 = vpack.c.b16 %v3669, %v3667
    %v4228 = vpack.c.b16 %v3670, %v3668
    %v4229 = vpack.c.b16 %v3673, %v3671
    %v4230 = vpack.c.b16 %v3674, %v3672
    %v4231 = vpack.c.b16 %v3677, %v3675
    %v4232 = vpack.c.b16 %v3678, %v3676
    %v4233 = vpack.c.b16 %v3681, %v3679
    %v4234 = vpack.c.b16 %v3682, %v3680
    %v4235 = vpack.c.b16 %v3685, %v3683
    %v4236 = vpack.c.b16 %v3686, %v3684
    %v4237 = vpack.c.b16 %v3689, %v3687
    %v4238 = vpack.c.b16 %v3690, %v3688
    %v4239 = vpack.c.b16 %v3693, %v3691
    %v4240 = vpack.c.b16 %v3694, %v3692
    %v4241 = vpack.c.b16 %v3697, %v3695
    %v4242 = vpack.c.b16 %v3698, %v3696
    %v4243 = vpack.c.b16 %v3701, %v3699
    %v4244 = vpack.c.b16 %v3702, %v3700
    %v4245 = vpack.c.b16 %v3705, %v3703
    %v4246 = vpack.c.b16 %v3706, %v3704
    %v4247 = vpack.c.b16 %v3709, %v3707
    %v4248 = vpack.c.b16 %v3710, %v3708
    %v4249 = vpack.c.b16 %v3713, %v3711
    %v4250 = vpack.c.b16 %v3714, %v3712
    %v4251 = vpack.c.b16 %v3717, %v3715
    %v4252 = vpack.c.b16 %v3718, %v3716
    %v4253 = vpack.c.b16 %v3721, %v3719
    %v4254 = vpack.c.b16 %v3722, %v3720
    %v4255 = vpack.c.b16 %v3725, %v3723
    %v4256 = vpack.c.b16 %v3726, %v3724
    %v4257 = vpack.c.b16 %v3729, %v3727
    %v4258 = vpack.c.b16 %v3730, %v3728
    %v4259 = vpack.c.b16 %v3733, %v3731
    %v4260 = vpack.c.b16 %v3734, %v3732
    %v4261 = vpack.c.b16 %v3737, %v3735
    %v4262 = vpack.c.b16 %v3738, %v3736
    %v4263 = vpack.c.b16 %v3741, %v3739
    %v4264 = vpack.c.b16 %v3742, %v3740
    %v4265 = vpack.c.b16 %v3745, %v3743
    %v4266 = vpack.c.b16 %v3746, %v3744
    %v4267 = vpack.c.b16 %v3749, %v3747
    %v4268 = vpack.c.b16 %v3750, %v3748
    %v4269 = vpack.c.b16 %v3753, %v3751
    %v4270 = vpack.c.b16 %v3754, %v3752
    %v4271 = vpack.c.b16 %v3757, %v3755
    %v4272 = vpack.c.b16 %v3758, %v3756
    %v4273 = vpack.c.b16 %v3761, %v3759
    %v4274 = vpack.c.b16 %v3762, %v3760
    %v4275 = vpack.c.b16 %v3765, %v3763
    %v4276 = vpack.c.b16 %v3766, %v3764
    %v4277 = vpack.c.b16 %v3769, %v3767
    %v4278 = vpack.c.b16 %v3770, %v3768
    %v4279 = vpack.c.b16 %v3773, %v3771
    %v4280 = vpack.c.b16 %v3774, %v3772
    %v4281 = vpack.c.b16 %v3777, %v3775
    %v4282 = vpack.c.b16 %v3778, %v3776
    %v4283 = vpack.c.b16 %v3781, %v3779
    %v4284 = vpack.c.b16 %v3782, %v3780
    %v4285 = vpack.c.b16 %v3785, %v3783
    %v4286 = vpack.c.b16 %v3786, %v3784
    %v4287 = vpack.c.b16 %v3789, %v3787
    %v4288 = vpack.c.b16 %v3790, %v3788
    %v4289 = vpack.c.b16 %v3793, %v3791
    %v4290 = vpack.c.b16 %v3794, %v3792
    %v4291 = vpack.c.b16 %v3797, %v3795
    %v4292 = vpack.c.b16 %v3798, %v3796
    %v4293 = vpack.c.b16 %v3801, %v3799
    %v4294 = vpack.c.b16 %v3802, %v3800
    %v4295 = vpack.c.b16 %v3805, %v3803
    %v4296 = vpack.c.b16 %v3806, %v3804
    %v4297 = vpack.c.b16 %v3809, %v3807
    %v4298 = vpack.c.b16 %v3810, %v3808
    %v4299 = vpack.c.b16 %v3813, %v3811
    %v4300 = vpack.c.b16 %v3814, %v3812
    %v4301 = vpack.c.b16 %v3817, %v3815
    %v4302 = vpack.c.b16 %v3818, %v3816
    %v4303 = vpack.c.b16 %v3821, %v3819
    %v4304 = vpack.c.b16 %v3822, %v3820
    %v4305 = vpack.c.b16 %v3825, %v3823
    %v4306 = vpack.c.b16 %v3826, %v3824
    %v4307 = vpack.c.b16 %v3829, %v3827
    %v4308 = vpack.c.b16 %v3830, %v3828
    %v4309 = vpack.c.b16 %v3833, %v3831
    %v4310 = vpack.c.b16 %v3834, %v3832
    %v4311 = vpack.c.b16 %v3837, %v3835
    %v4312 = vpack.c.b16 %v3838, %v3836
    %v4313 = vpack.c.b16 %v3841, %v3839
    %v4314 = vpack.c.b16 %v3842, %v3840
    %v4315 = vpack.c.b16 %v3845, %v3843
    %v4316 = vpack.c.b16 %v3846, %v3844
    %v4317 = vpack.c.b16 %v3849, %v3847
    %v4318 = vpack.c.b16 %v3850, %v3848
    %v4319 = vpack.c.b16 %v3853, %v3851
    %v4320 = vpack.c.b16 %v3854, %v3852
    %v4321 = vpack.c.b16 %v3857, %v3855
    %v4322 = vpack.c.b16 %v3858, %v3856
    %v4323 = vpack.c.b16 %v3861, %v3859
    %v4324 = vpack.c.b16 %v3862, %v3860
    %v4325 = vpack.c.b16 %v3865, %v3863
    %v4326 = vpack.c.b16 %v3866, %v3864
    %v4327 = vpack.c.b16 %v3869, %v3867
    %v4328 = vpack.c.b16 %v3870, %v3868
    %v4329 = vpack.c.b16 %v3873, %v3871
    %v4330 = vpack.c.b16 %v3874, %v3872
    %v4331 = vpack.c.b16 %v3877, %v3875
    %v4332 = vpack.c.b16 %v3878, %v3876
    %v4333 = vpack.c.b16 %v3881, %v3879
    %v4334 = vpack.c.b16 %v3882, %v3880
    %v4335 = vpack.c.b16 %v3885, %v3883
    %v4336 = vpack.c.b16 %v3886, %v3884
    %v4337 = vpack.c.b16 %v3889, %v3887
    %v4338 = vpack.c.b16 %v3890, %v3888
    %v4339 = vpack.c.b16 %v3893, %v3891
    %v4340 = vpack.c.b16 %v3894, %v3892
    %v4341 = vpack.c.b16 %v3897, %v3895
    %v4342 = vpack.c.b16 %v3898, %v3896
    %v4343 = vpack.c.b16 %v3901, %v3899
    %v4344 = vpack.c.b16 %v3902, %v3900
    %v4345 = vpack.c.b16 %v3905, %v3903
    %v4346 = vpack.c.b16 %v3906, %v3904
    %v4347 = vpack.c.b16 %v3909, %v3907
    %v4348 = vpack.c.b16 %v3910, %v3908
    %v4349 = vpack.c.b16 %v3913, %v3911
    %v4350 = vpack.c.b16 %v3914, %v3912
    %v4351 = vpack.c.b16 %v3917, %v3915
    %v4352 = vpack.c.b16 %v3918, %v3916
    %v4353 = vpack.c.b16 %v3921, %v3919
    %v4354 = vpack.c.b16 %v3922, %v3920
    %v4355 = vpack.c.b16 %v3925, %v3923
    %v4356 = vpack.c.b16 %v3926, %v3924
    %v4357 = vpack.c.b16 %v3929, %v3927
    %v4358 = vpack.c.b16 %v3930, %v3928
    %v4359 = vpack.c.b16 %v3933, %v3931
    %v4360 = vpack.c.b16 %v3934, %v3932
    %v4361 = vpack.c.b16 %v3937, %v3935
    %v4362 = vpack.c.b16 %v3938, %v3936
    %v4363 = vpack.c.b16 %v3941, %v3939
    %v4364 = vpack.c.b16 %v3942, %v3940
    %v4365 = vpack.c.b16 %v3945, %v3943
    %v4366 = vpack.c.b16 %v3946, %v3944
    %v4367 = vpack.c.b16 %v3949, %v3947
    %v4368 = vpack.c.b16 %v3950, %v3948
    %v4369 = vpack.c.b16 %v3953, %v3951
    %v4370 = vpack.c.b16 %v3954, %v3952
    %v4371 = vpack.c.b16 %v3957, %v3955
    %v4372 = vpack.c.b16 %v3958, %v3956
    %v4373 = vpack.c.b16 %v3961, %v3959
    %v4374 = vpack.c.b16 %v3962, %v3960
    %v4375 = vpack.c.b16 %v3965, %v3963
    %v4376 = vpack.c.b16 %v3966, %v3964
    %v4377 = vpack.c.b16 %v3969, %v3967
    %v4378 = vpack.c.b16 %v3970, %v3968
    %v4379 = vpack.c.b16 %v3973, %v3971
    %v4380 = vpack.c.b16 %v3974, %v3972
    %v4381 = vpack.c.b16 %v3977, %v3975
    %v4382 = vpack.c.b16 %v3978, %v3976
    %v4383 = vpack.c.b16 %v3981, %v3979
    %v4384 = vpack.c.b16 %v3982, %v3980
    %v4385 = vpack.c.b16 %v3985, %v3983
    %v4386 = vpack.c.b16 %v3986, %v3984
    %v4387 = vpack.c.b16 %v3989, %v3987
    %v4388 = vpack.c.b16 %v3990, %v3988
    %v4389 = vpack.c.b16 %v3993, %v3991
    %v4390 = vpack.c.b16 %v3994, %v3992
    %v4391 = vpack.c.b16 %v3997, %v3995
    %v4392 = vpack.c.b16 %v3998, %v3996
    %v4393 = vpack.c.b16 %v4001, %v3999
    %v4394 = vpack.c.b16 %v4002, %v4000
    %v4395 = vpack.c.b16 %v4005, %v4003
    %v4396 = vpack.c.b16 %v4006, %v4004
    %v4397 = vpack.c.b16 %v4009, %v4007
    %v4398 = vpack.c.b16 %v4010, %v4008
    %v4399 = vpack.c.b16 %v4013, %v4011
    %v4400 = vpack.c.b16 %v4014, %v4012
    %v4401 = vpack.c.b16 %v4017, %v4015
    %v4402 = vpack.c.b16 %v4018, %v4016
    %v4403 = vpack.c.b16 %v4021, %v4019
    %v4404 = vpack.c.b16 %v4022, %v4020
    %v4405 = vpack.c.b16 %v4025, %v4023
    %v4406 = vpack.c.b16 %v4026, %v4024
    %v4407 = vpack.c.b16 %v4029, %v4027
    %v4408 = vpack.c.b16 %v4030, %v4028
    %v4409 = vpack.c.b16 %v4033, %v4031
    %v4410 = vpack.c.b16 %v4034, %v4032
    %v4411 = vpack.c.b16 %v4037, %v4035
    %v4412 = vpack.c.b16 %v4038, %v4036
    %v4413 = vpack.c.b16 %v4041, %v4039
    %v4414 = vpack.c.b16 %v4042, %v4040
    %v4415 = vpack.c.b16 %v4045, %v4043
    %v4416 = vpack.c.b16 %v4046, %v4044
    %v4417 = vpack.c.b16 %v4049, %v4047
    %v4418 = vpack.c.b16 %v4050, %v4048
    %v4419 = vpack.c.b16 %v4053, %v4051
    %v4420 = vpack.c.b16 %v4054, %v4052
    %v4421 = vpack.c.b16 %v4057, %v4055
    %v4422 = vpack.c.b16 %v4058, %v4056
    %v4423 = vpack.c.b16 %v4061, %v4059
    %v4424 = vpack.c.b16 %v4062, %v4060
    %v4425 = vpack.c.b16 %v4065, %v4063
    %v4426 = vpack.c.b16 %v4066, %v4064
    %v4427 = vpack.c.b16 %v4069, %v4067
    %v4428 = vpack.c.b16 %v4070, %v4068
    %v4429 = vpack.c.b16 %v4073, %v4071
    %v4430 = vpack.c.b16 %v4074, %v4072
    %v4431 = vpack.c.b16 %v4077, %v4075
    %v4432 = vpack.c.b16 %v4078, %v4076
    %v4433 = vpack.c.b16 %v4081, %v4079
    %v4434 = vpack.c.b16 %v4082, %v4080
    %v4435 = vpack.c.b16 %v4085, %v4083
    %v4436 = vpack.c.b16 %v4086, %v4084
    %v4437 = vpack.c.b16 %v4089, %v4087
    %v4438 = vpack.c.b16 %v4090, %v4088
    %v4439 = vpack.c.b16 %v4093, %v4091
    %v4440 = vpack.c.b16 %v4094, %v4092
    %v4441 = vpack.c.b16 %v4097, %v4095
    %v4442 = vpack.c.b16 %v4098, %v4096
    %v4443 = vpack.c.b16 %v4101, %v4099
    %v4444 = vpack.c.b16 %v4102, %v4100
    %v4445 = vpack.c.b16 %v4105, %v4103
    %v4446 = vpack.c.b16 %v4106, %v4104
    %v4447 = vpack.c.b16 %v4109, %v4107
    %v4448 = vpack.c.b16 %v4110, %v4108
    %v4449 = vpack.c.b16 %v4113, %v4111
    %v4450 = vpack.c.b16 %v4114, %v4112
    %v4451 = vpack.c.b16 %v4117, %v4115
    %v4452 = vpack.c.b16 %v4118, %v4116
    %v4453 = vpack.c.b16 %v4121, %v4119
    %v4454 = vpack.c.b16 %v4122, %v4120
    %v4455 = vpack.c.b16 %v4125, %v4123
    %v4456 = vpack.c.b16 %v4126, %v4124
    %v4457 = vpack.c.b16 %v4129, %v4127
    %v4458 = vpack.c.b16 %v4130, %v4128
    %v4459 = vpack.c.b16 %v4133, %v4131
    %v4460 = vpack.c.b16 %v4134, %v4132
    %v4461 = vpack.c.b16 %v4137, %v4135
    %v4462 = vpack.c.b16 %v4138, %v4136
    %v4463 = vpack.c.b16 %v4141, %v4139
    %v4464 = vpack.c.b16 %v4142, %v4140
    %v4465 = vpack.c.b16 %v4145, %v4143
    %v4466 = vpack.c.b16 %v4146, %v4144
    %v4467 = vpack.c.b16 %v4149, %v4147
    %v4468 = vpack.c.b16 %v4150, %v4148
    %v4469 = vpack.c.b16 %v4153, %v4151
    %v4470 = vpack.c.b16 %v4154, %v4152
    %v4471 = vpack.c.b16 %v4157, %v4155
    %v4472 = vpack.c.b16 %v4158, %v4156
    %v4473 = vpack.c.b16 %v4161, %v4159
    %v4474 = vpack.c.b16 %v4162, %v4160
    %v4475 = vpack.c.b16 %v4165, %v4163
    %v4476 = vpack.c.b16 %v4166, %v4164
    %v4477 = vpack.c.b16 %v4169, %v4167
    %v4478 = vpack.c.b16 %v4170, %v4168
    %v4479 = vpack.c.b16 %v4173, %v4171
    %v4480 = vpack.c.b16 %v4174, %v4172
    %v4481 = vpack.c.b16 %v4177, %v4175
    %v4482 = vpack.c.b16 %v4178, %v4176
    %v4483 = vpack.c.b16 %v4181, %v4179
    %v4484 = vpack.c.b16 %v4182, %v4180
    %v4485 = vpack.c.b16 %v4185, %v4183
    %v4486 = vpack.c.b16 %v4186, %v4184
    %v4487 = vpack.c.b16 %v4189, %v4187
    %v4488 = vpack.c.b16 %v4190, %v4188
    %v4489 = vpack.c.b16 %v4193, %v4191
    %v4490 = vpack.c.b16 %v4194, %v4192
    %v4491 = vpack.c.b16 %v4197, %v4195
    %v4492 = vpack.c.b16 %v4198, %v4196
    %v4493 = vpack.c.b16 %v4201, %v4199
    %v4494 = vpack.c.b16 %v4202, %v4200
    %v4495 = vpack.c.b16 %v4205, %v4203
    %v4496 = vpack.c.b16 %v4206, %v4204
    %v4497 = vpack.c.b16 %v4209, %v4207
    %v4498 = vpack.c.b16 %v4210, %v4208
    %4787 = vmatprep.subr.bf16.mxu0 %v4226
    %4788 = vmatpush1.bf16.msra.mxu0 %v4225
    %4789 = vmatprep.subr.bf16.mxu0 %v4224
    %4790 = vmatpush1.bf16.msra.mxu0 %v4223
    %4791 = vmatprep.subr.bf16.mxu0 %v4222
    %4792 = vmatpush1.bf16.msra.mxu0 %v4221
    %4793 = vmatprep.subr.bf16.mxu0 %v4220
    %4794 = vmatpush1.bf16.msra.mxu0 %v4219
    %4795 = vmatprep.subr.bf16.mxu0 %v4218
    %4796 = vmatpush1.bf16.msra.mxu0 %v4217
    %4797 = vmatprep.subr.bf16.mxu0 %v4216
    %4798 = vmatpush1.bf16.msra.mxu0 %v4215
    %4799 = vmatprep.subr.bf16.mxu0 %v4214
    %4800 = vmatpush1.bf16.msra.mxu0 %v4213
    %4801 = vmatprep.subr.bf16.mxu0 %v4212
    %4802 = vmatpush1.bf16.msra.mxu0 %v4211
    %4803 = vmatprep.subr.bf16.mxu0 %v4242
    %4804 = vmatpush2.bf16.msra.mxu0 %v4241
    %4805 = vmatprep.subr.bf16.mxu0 %v4240
    %4806 = vmatpush2.bf16.msra.mxu0 %v4239
    %4807 = vmatprep.subr.bf16.mxu0 %v4238
    %4808 = vmatpush2.bf16.msra.mxu0 %v4237
    %4809 = vmatprep.subr.bf16.mxu0 %v4236
    %4810 = vmatpush2.bf16.msra.mxu0 %v4235
    %4811 = vmatprep.subr.bf16.mxu0 %v4234
    %4812 = vmatpush2.bf16.msra.mxu0 %v4233
    %4813 = vmatprep.subr.bf16.mxu0 %v4232
    %4814 = vmatpush2.bf16.msra.mxu0 %v4231
    %4815 = vmatprep.subr.bf16.mxu0 %v4230
    %4816 = vmatpush2.bf16.msra.mxu0 %v4229
    %4817 = vmatprep.subr.bf16.mxu0 %v4228
    %4818 = vmatpush2.bf16.msra.mxu0 %v4227
    %4819 = vmatprep.mubr.bf16.mxu0 %v3060
    %4820 = vmatmul.mubr.bf16.gmra.mxu0 %v3059
    %v4821 = vpop.f32.mrf.mxu0
    %v4822 = vadd.f32 %v2620, %v4821
    %v4823 = vpop.f32.mrf.mxu0
    %v4824 = vadd.f32 %v2624, %v4823
    %v4825 = vpop.f32.mrf.mxu0
    %v4826 = vadd.f32 %v2620, %v4825
    %v4827 = vpop.f32.mrf.mxu0
    %v4828 = vadd.f32 %v2624, %v4827
    %4829 = vmatprep.mubr.bf16.mxu0 %v3078
    %4830 = vmatmul.mubr.bf16.gmra.mxu0 %v3077
    %v4831 = vpop.f32.mrf.mxu0
    %v4832 = vadd.f32 %v2620, %v4831
    %v4833 = vpop.f32.mrf.mxu0
    %v4834 = vadd.f32 %v2624, %v4833
    %v4835 = vpop.f32.mrf.mxu0
    %v4836 = vadd.f32 %v2620, %v4835
    %v4837 = vpop.f32.mrf.mxu0
    %v4838 = vadd.f32 %v2624, %v4837
    %4839 = vmatprep.mubr.bf16.mxu0 %v3096
    %4840 = vmatmul.mubr.bf16.gmra.mxu0 %v3095
    %v4841 = vpop.f32.mrf.mxu0
    %v4842 = vadd.f32 %v2620, %v4841
    %v4843 = vpop.f32.mrf.mxu0
    %v4844 = vadd.f32 %v2624, %v4843
    %v4845 = vpop.f32.mrf.mxu0
    %v4846 = vadd.f32 %v2620, %v4845
    %v4847 = vpop.f32.mrf.mxu0
    %v4848 = vadd.f32 %v2624, %v4847
    %4849 = vmatprep.mubr.bf16.mxu0 %v3114
    %4850 = vmatmul.mubr.bf16.gmra.mxu0 %v3113
    %v4851 = vpop.f32.mrf.mxu0
    %v4852 = vadd.f32 %v2620, %v4851
    %v4853 = vpop.f32.mrf.mxu0
    %v4854 = vadd.f32 %v2624, %v4853
    %v4855 = vpop.f32.mrf.mxu0
    %v4856 = vadd.f32 %v2620, %v4855
    %v4857 = vpop.f32.mrf.mxu0
    %v4858 = vadd.f32 %v2624, %v4857
    %4859 = vmatprep.mubr.bf16.mxu0 %v3132
    %4860 = vmatmul.mubr.bf16.gmra.mxu0 %v3131
    %v4861 = vpop.f32.mrf.mxu0
    %v4862 = vadd.f32 %v2620, %v4861
    %v4863 = vpop.f32.mrf.mxu0
    %v4864 = vadd.f32 %v2624, %v4863
    %v4865 = vpop.f32.mrf.mxu0
    %v4866 = vadd.f32 %v2620, %v4865
    %v4867 = vpop.f32.mrf.mxu0
    %v4868 = vadd.f32 %v2624, %v4867
    %4869 = vmatprep.mubr.bf16.mxu0 %v3150
    %4870 = vmatmul.mubr.bf16.gmra.mxu0 %v3149
    %v4871 = vpop.f32.mrf.mxu0
    %v4872 = vadd.f32 %v2620, %v4871
    %v4873 = vpop.f32.mrf.mxu0
    %v4874 = vadd.f32 %v2624, %v4873
    %v4875 = vpop.f32.mrf.mxu0
    %v4876 = vadd.f32 %v2620, %v4875
    %v4877 = vpop.f32.mrf.mxu0
    %v4878 = vadd.f32 %v2624, %v4877
    %4879 = vmatprep.mubr.bf16.mxu0 %v3168
    %4880 = vmatmul.mubr.bf16.gmra.mxu0 %v3167
    %v4881 = vpop.f32.mrf.mxu0
    %v4882 = vadd.f32 %v2620, %v4881
    %v4883 = vpop.f32.mrf.mxu0
    %v4884 = vadd.f32 %v2624, %v4883
    %v4885 = vpop.f32.mrf.mxu0
    %v4886 = vadd.f32 %v2620, %v4885
    %v4887 = vpop.f32.mrf.mxu0
    %v4888 = vadd.f32 %v2624, %v4887
    %4889 = vmatprep.mubr.bf16.mxu0 %v3186
    %4890 = vmatmul.mubr.bf16.gmra.mxu0 %v3185
    %v4891 = vpop.f32.mrf.mxu0
    %v4892 = vadd.f32 %v2620, %v4891
    %v4893 = vpop.f32.mrf.mxu0
    %v4894 = vadd.f32 %v2624, %v4893
    %v4895 = vpop.f32.mrf.mxu0
    %v4896 = vadd.f32 %v2620, %v4895
    %v4897 = vpop.f32.mrf.mxu0
    %v4898 = vadd.f32 %v2624, %v4897
    %4899 = vdwg.mxu0
    %4900 = vmatprep.subr.bf16.mxu0 %v4258
    %4901 = vmatpush1.bf16.msra.mxu0 %v4257
    %4902 = vmatprep.subr.bf16.mxu0 %v4256
    %4903 = vmatpush1.bf16.msra.mxu0 %v4255
    %4904 = vmatprep.subr.bf16.mxu0 %v4254
    %4905 = vmatpush1.bf16.msra.mxu0 %v4253
    %4906 = vmatprep.subr.bf16.mxu0 %v4252
    %4907 = vmatpush1.bf16.msra.mxu0 %v4251
    %4908 = vmatprep.subr.bf16.mxu0 %v4250
    %4909 = vmatpush1.bf16.msra.mxu0 %v4249
    %4910 = vmatprep.subr.bf16.mxu0 %v4248
    %4911 = vmatpush1.bf16.msra.mxu0 %v4247
    %4912 = vmatprep.subr.bf16.mxu0 %v4246
    %4913 = vmatpush1.bf16.msra.mxu0 %v4245
    %4914 = vmatprep.subr.bf16.mxu0 %v4244
    %4915 = vmatpush1.bf16.msra.mxu0 %v4243
    %4916 = vmatprep.subr.bf16.mxu0 %v4274
    %4917 = vmatpush2.bf16.msra.mxu0 %v4273
    %4918 = vmatprep.subr.bf16.mxu0 %v4272
    %4919 = vmatpush2.bf16.msra.mxu0 %v4271
    %4920 = vmatprep.subr.bf16.mxu0 %v4270
    %4921 = vmatpush2.bf16.msra.mxu0 %v4269
    %4922 = vmatprep.subr.bf16.mxu0 %v4268
    %4923 = vmatpush2.bf16.msra.mxu0 %v4267
    %4924 = vmatprep.subr.bf16.mxu0 %v4266
    %4925 = vmatpush2.bf16.msra.mxu0 %v4265
    %4926 = vmatprep.subr.bf16.mxu0 %v4264
    %4927 = vmatpush2.bf16.msra.mxu0 %v4263
    %4928 = vmatprep.subr.bf16.mxu0 %v4262
    %4929 = vmatpush2.bf16.msra.mxu0 %v4261
    %4930 = vmatprep.subr.bf16.mxu0 %v4260
    %4931 = vmatpush2.bf16.msra.mxu0 %v4259
    %4932 = vmatprep.mubr.bf16.mxu0 %v3062
    %4933 = vmatmul.mubr.bf16.gmra.mxu0 %v3061
    %v4934 = vpop.f32.mrf.mxu0
    %v4935 = vadd.f32 %v4822, %v4934
    %v4936 = vpop.f32.mrf.mxu0
    %v4937 = vadd.f32 %v4824, %v4936
    %v4938 = vpop.f32.mrf.mxu0
    %v4939 = vadd.f32 %v4826, %v4938
    %v4940 = vpop.f32.mrf.mxu0
    %v4941 = vadd.f32 %v4828, %v4940
    %4942 = vmatprep.mubr.bf16.mxu0 %v3080
    %4943 = vmatmul.mubr.bf16.gmra.mxu0 %v3079
    %v4944 = vpop.f32.mrf.mxu0
    %v4945 = vadd.f32 %v4832, %v4944
    %v4946 = vpop.f32.mrf.mxu0
    %v4947 = vadd.f32 %v4834, %v4946
    %v4948 = vpop.f32.mrf.mxu0
    %v4949 = vadd.f32 %v4836, %v4948
    %v4950 = vpop.f32.mrf.mxu0
    %v4951 = vadd.f32 %v4838, %v4950
    %4952 = vmatprep.mubr.bf16.mxu0 %v3098
    %4953 = vmatmul.mubr.bf16.gmra.mxu0 %v3097
    %v4954 = vpop.f32.mrf.mxu0
    %v4955 = vadd.f32 %v4842, %v4954
    %v4956 = vpop.f32.mrf.mxu0
    %v4957 = vadd.f32 %v4844, %v4956
    %v4958 = vpop.f32.mrf.mxu0
    %v4959 = vadd.f32 %v4846, %v4958
    %v4960 = vpop.f32.mrf.mxu0
    %v4961 = vadd.f32 %v4848, %v4960
    %4962 = vmatprep.mubr.bf16.mxu0 %v3116
    %4963 = vmatmul.mubr.bf16.gmra.mxu0 %v3115
    %v4964 = vpop.f32.mrf.mxu0
    %v4965 = vadd.f32 %v4852, %v4964
    %v4966 = vpop.f32.mrf.mxu0
    %v4967 = vadd.f32 %v4854, %v4966
    %v4968 = vpop.f32.mrf.mxu0
    %v4969 = vadd.f32 %v4856, %v4968
    %v4970 = vpop.f32.mrf.mxu0
    %v4971 = vadd.f32 %v4858, %v4970
    %4972 = vmatprep.mubr.bf16.mxu0 %v3134
    %4973 = vmatmul.mubr.bf16.gmra.mxu0 %v3133
    %v4974 = vpop.f32.mrf.mxu0
    %v4975 = vadd.f32 %v4862, %v4974
    %v4976 = vpop.f32.mrf.mxu0
    %v4977 = vadd.f32 %v4864, %v4976
    %v4978 = vpop.f32.mrf.mxu0
    %v4979 = vadd.f32 %v4866, %v4978
    %v4980 = vpop.f32.mrf.mxu0
    %v4981 = vadd.f32 %v4868, %v4980
    %4982 = vmatprep.mubr.bf16.mxu0 %v3152
    %4983 = vmatmul.mubr.bf16.gmra.mxu0 %v3151
    %v4984 = vpop.f32.mrf.mxu0
    %v4985 = vadd.f32 %v4872, %v4984
    %v4986 = vpop.f32.mrf.mxu0
    %v4987 = vadd.f32 %v4874, %v4986
    %v4988 = vpop.f32.mrf.mxu0
    %v4989 = vadd.f32 %v4876, %v4988
    %v4990 = vpop.f32.mrf.mxu0
    %v4991 = vadd.f32 %v4878, %v4990
    %4992 = vmatprep.mubr.bf16.mxu0 %v3170
    %4993 = vmatmul.mubr.bf16.gmra.mxu0 %v3169
    %v4994 = vpop.f32.mrf.mxu0
    %v4995 = vadd.f32 %v4882, %v4994
    %v4996 = vpop.f32.mrf.mxu0
    %v4997 = vadd.f32 %v4884, %v4996
    %v4998 = vpop.f32.mrf.mxu0
    %v4999 = vadd.f32 %v4886, %v4998
    %v5000 = vpop.f32.mrf.mxu0
    %v5001 = vadd.f32 %v4888, %v5000
    %5002 = vmatprep.mubr.bf16.mxu0 %v3188
    %5003 = vmatmul.mubr.bf16.gmra.mxu0 %v3187
    %v5004 = vpop.f32.mrf.mxu0
    %v5005 = vadd.f32 %v4892, %v5004
    %v5006 = vpop.f32.mrf.mxu0
    %v5007 = vadd.f32 %v4894, %v5006
    %v5008 = vpop.f32.mrf.mxu0
    %v5009 = vadd.f32 %v4896, %v5008
    %v5010 = vpop.f32.mrf.mxu0
    %v5011 = vadd.f32 %v4898, %v5010
    %5012 = vdwg.mxu0
    %5013 = vmatprep.subr.bf16.mxu0 %v4290
    %5014 = vmatpush1.bf16.msra.mxu0 %v4289
    %5015 = vmatprep.subr.bf16.mxu0 %v4288
    %5016 = vmatpush1.bf16.msra.mxu0 %v4287
    %5017 = vmatprep.subr.bf16.mxu0 %v4286
    %5018 = vmatpush1.bf16.msra.mxu0 %v4285
    %5019 = vmatprep.subr.bf16.mxu0 %v4284
    %5020 = vmatpush1.bf16.msra.mxu0 %v4283
    %5021 = vmatprep.subr.bf16.mxu0 %v4282
    %5022 = vmatpush1.bf16.msra.mxu0 %v4281
    %5023 = vmatprep.subr.bf16.mxu0 %v4280
    %5024 = vmatpush1.bf16.msra.mxu0 %v4279
    %5025 = vmatprep.subr.bf16.mxu0 %v4278
    %5026 = vmatpush1.bf16.msra.mxu0 %v4277
    %5027 = vmatprep.subr.bf16.mxu0 %v4276
    %5028 = vmatpush1.bf16.msra.mxu0 %v4275
    %5029 = vmatprep.subr.bf16.mxu0 %v4306
    %5030 = vmatpush2.bf16.msra.mxu0 %v4305
    %5031 = vmatprep.subr.bf16.mxu0 %v4304
    %5032 = vmatpush2.bf16.msra.mxu0 %v4303
    %5033 = vmatprep.subr.bf16.mxu0 %v4302
    %5034 = vmatpush2.bf16.msra.mxu0 %v4301
    %5035 = vmatprep.subr.bf16.mxu0 %v4300
    %5036 = vmatpush2.bf16.msra.mxu0 %v4299
    %5037 = vmatprep.subr.bf16.mxu0 %v4298
    %5038 = vmatpush2.bf16.msra.mxu0 %v4297
    %5039 = vmatprep.subr.bf16.mxu0 %v4296
    %5040 = vmatpush2.bf16.msra.mxu0 %v4295
    %5041 = vmatprep.subr.bf16.mxu0 %v4294
    %5042 = vmatpush2.bf16.msra.mxu0 %v4293
    %5043 = vmatprep.subr.bf16.mxu0 %v4292
    %5044 = vmatpush2.bf16.msra.mxu0 %v4291
    %5045 = vmatprep.mubr.bf16.mxu0 %v3064
    %5046 = vmatmul.mubr.bf16.gmra.mxu0 %v3063
    %v5047 = vpop.f32.mrf.mxu0
    %v5048 = vadd.f32 %v4935, %v5047
    %v5049 = vpop.f32.mrf.mxu0
    %v5050 = vadd.f32 %v4937, %v5049
    %v5051 = vpop.f32.mrf.mxu0
    %v5052 = vadd.f32 %v4939, %v5051
    %v5053 = vpop.f32.mrf.mxu0
    %v5054 = vadd.f32 %v4941, %v5053
    %5055 = vmatprep.mubr.bf16.mxu0 %v3082
    %5056 = vmatmul.mubr.bf16.gmra.mxu0 %v3081
    %v5057 = vpop.f32.mrf.mxu0
    %v5058 = vadd.f32 %v4945, %v5057
    %v5059 = vpop.f32.mrf.mxu0
    %v5060 = vadd.f32 %v4947, %v5059
    %v5061 = vpop.f32.mrf.mxu0
    %v5062 = vadd.f32 %v4949, %v5061
    %v5063 = vpop.f32.mrf.mxu0
    %v5064 = vadd.f32 %v4951, %v5063
    %5065 = vmatprep.mubr.bf16.mxu0 %v3100
    %5066 = vmatmul.mubr.bf16.gmra.mxu0 %v3099
    %v5067 = vpop.f32.mrf.mxu0
    %v5068 = vadd.f32 %v4955, %v5067
    %v5069 = vpop.f32.mrf.mxu0
    %v5070 = vadd.f32 %v4957, %v5069
    %v5071 = vpop.f32.mrf.mxu0
    %v5072 = vadd.f32 %v4959, %v5071
    %v5073 = vpop.f32.mrf.mxu0
    %v5074 = vadd.f32 %v4961, %v5073
    %5075 = vmatprep.mubr.bf16.mxu0 %v3118
    %5076 = vmatmul.mubr.bf16.gmra.mxu0 %v3117
    %v5077 = vpop.f32.mrf.mxu0
    %v5078 = vadd.f32 %v4965, %v5077
    %v5079 = vpop.f32.mrf.mxu0
    %v5080 = vadd.f32 %v4967, %v5079
    %v5081 = vpop.f32.mrf.mxu0
    %v5082 = vadd.f32 %v4969, %v5081
    %v5083 = vpop.f32.mrf.mxu0
    %v5084 = vadd.f32 %v4971, %v5083
    %5085 = vmatprep.mubr.bf16.mxu0 %v3136
    %5086 = vmatmul.mubr.bf16.gmra.mxu0 %v3135
    %v5087 = vpop.f32.mrf.mxu0
    %v5088 = vadd.f32 %v4975, %v5087
    %v5089 = vpop.f32.mrf.mxu0
    %v5090 = vadd.f32 %v4977, %v5089
    %v5091 = vpop.f32.mrf.mxu0
    %v5092 = vadd.f32 %v4979, %v5091
    %v5093 = vpop.f32.mrf.mxu0
    %v5094 = vadd.f32 %v4981, %v5093
    %5095 = vmatprep.mubr.bf16.mxu0 %v3154
    %5096 = vmatmul.mubr.bf16.gmra.mxu0 %v3153
    %v5097 = vpop.f32.mrf.mxu0
    %v5098 = vadd.f32 %v4985, %v5097
    %v5099 = vpop.f32.mrf.mxu0
    %v5100 = vadd.f32 %v4987, %v5099
    %v5101 = vpop.f32.mrf.mxu0
    %v5102 = vadd.f32 %v4989, %v5101
    %v5103 = vpop.f32.mrf.mxu0
    %v5104 = vadd.f32 %v4991, %v5103
    %5105 = vmatprep.mubr.bf16.mxu0 %v3172
    %5106 = vmatmul.mubr.bf16.gmra.mxu0 %v3171
    %v5107 = vpop.f32.mrf.mxu0
    %v5108 = vadd.f32 %v4995, %v5107
    %v5109 = vpop.f32.mrf.mxu0
    %v5110 = vadd.f32 %v4997, %v5109
    %v5111 = vpop.f32.mrf.mxu0
    %v5112 = vadd.f32 %v4999, %v5111
    %v5113 = vpop.f32.mrf.mxu0
    %v5114 = vadd.f32 %v5001, %v5113
    %5115 = vmatprep.mubr.bf16.mxu0 %v3190
    %5116 = vmatmul.mubr.bf16.gmra.mxu0 %v3189
    %v5117 = vpop.f32.mrf.mxu0
    %v5118 = vadd.f32 %v5005, %v5117
    %v5119 = vpop.f32.mrf.mxu0
    %v5120 = vadd.f32 %v5007, %v5119
    %v5121 = vpop.f32.mrf.mxu0
    %v5122 = vadd.f32 %v5009, %v5121
    %v5123 = vpop.f32.mrf.mxu0
    %v5124 = vadd.f32 %v5011, %v5123
    %5125 = vdwg.mxu0
    %5126 = vmatprep.subr.bf16.mxu0 %v4322
    %5127 = vmatpush1.bf16.msra.mxu0 %v4321
    %5128 = vmatprep.subr.bf16.mxu0 %v4320
    %5129 = vmatpush1.bf16.msra.mxu0 %v4319
    %5130 = vmatprep.subr.bf16.mxu0 %v4318
    %5131 = vmatpush1.bf16.msra.mxu0 %v4317
    %5132 = vmatprep.subr.bf16.mxu0 %v4316
    %5133 = vmatpush1.bf16.msra.mxu0 %v4315
    %5134 = vmatprep.subr.bf16.mxu0 %v4314
    %5135 = vmatpush1.bf16.msra.mxu0 %v4313
    %5136 = vmatprep.subr.bf16.mxu0 %v4312
    %5137 = vmatpush1.bf16.msra.mxu0 %v4311
    %5138 = vmatprep.subr.bf16.mxu0 %v4310
    %5139 = vmatpush1.bf16.msra.mxu0 %v4309
    %5140 = vmatprep.subr.bf16.mxu0 %v4308
    %5141 = vmatpush1.bf16.msra.mxu0 %v4307
    %5142 = vmatprep.subr.bf16.mxu0 %v4338
    %5143 = vmatpush2.bf16.msra.mxu0 %v4337
    %5144 = vmatprep.subr.bf16.mxu0 %v4336
    %5145 = vmatpush2.bf16.msra.mxu0 %v4335
    %5146 = vmatprep.subr.bf16.mxu0 %v4334
    %5147 = vmatpush2.bf16.msra.mxu0 %v4333
    %5148 = vmatprep.subr.bf16.mxu0 %v4332
    %5149 = vmatpush2.bf16.msra.mxu0 %v4331
    %5150 = vmatprep.subr.bf16.mxu0 %v4330
    %5151 = vmatpush2.bf16.msra.mxu0 %v4329
    %5152 = vmatprep.subr.bf16.mxu0 %v4328
    %5153 = vmatpush2.bf16.msra.mxu0 %v4327
    %5154 = vmatprep.subr.bf16.mxu0 %v4326
    %5155 = vmatpush2.bf16.msra.mxu0 %v4325
    %5156 = vmatprep.subr.bf16.mxu0 %v4324
    %5157 = vmatpush2.bf16.msra.mxu0 %v4323
    %5158 = vmatprep.mubr.bf16.mxu0 %v3066
    %5159 = vmatmul.mubr.bf16.gmra.mxu0 %v3065
    %v5160 = vpop.f32.mrf.mxu0
    %v5161 = vadd.f32 %v5048, %v5160
    %v5162 = vpop.f32.mrf.mxu0
    %v5163 = vadd.f32 %v5050, %v5162
    %v5164 = vpop.f32.mrf.mxu0
    %v5165 = vadd.f32 %v5052, %v5164
    %v5166 = vpop.f32.mrf.mxu0
    %v5167 = vadd.f32 %v5054, %v5166
    %5168 = vmatprep.mubr.bf16.mxu0 %v3084
    %5169 = vmatmul.mubr.bf16.gmra.mxu0 %v3083
    %v5170 = vpop.f32.mrf.mxu0
    %v5171 = vadd.f32 %v5058, %v5170
    %v5172 = vpop.f32.mrf.mxu0
    %v5173 = vadd.f32 %v5060, %v5172
    %v5174 = vpop.f32.mrf.mxu0
    %v5175 = vadd.f32 %v5062, %v5174
    %v5176 = vpop.f32.mrf.mxu0
    %v5177 = vadd.f32 %v5064, %v5176
    %5178 = vmatprep.mubr.bf16.mxu0 %v3102
    %5179 = vmatmul.mubr.bf16.gmra.mxu0 %v3101
    %v5180 = vpop.f32.mrf.mxu0
    %v5181 = vadd.f32 %v5068, %v5180
    %v5182 = vpop.f32.mrf.mxu0
    %v5183 = vadd.f32 %v5070, %v5182
    %v5184 = vpop.f32.mrf.mxu0
    %v5185 = vadd.f32 %v5072, %v5184
    %v5186 = vpop.f32.mrf.mxu0
    %v5187 = vadd.f32 %v5074, %v5186
    %5188 = vmatprep.mubr.bf16.mxu0 %v3120
    %5189 = vmatmul.mubr.bf16.gmra.mxu0 %v3119
    %v5190 = vpop.f32.mrf.mxu0
    %v5191 = vadd.f32 %v5078, %v5190
    %v5192 = vpop.f32.mrf.mxu0
    %v5193 = vadd.f32 %v5080, %v5192
    %v5194 = vpop.f32.mrf.mxu0
    %v5195 = vadd.f32 %v5082, %v5194
    %v5196 = vpop.f32.mrf.mxu0
    %v5197 = vadd.f32 %v5084, %v5196
    %5198 = vmatprep.mubr.bf16.mxu0 %v3138
    %5199 = vmatmul.mubr.bf16.gmra.mxu0 %v3137
    %v5200 = vpop.f32.mrf.mxu0
    %v5201 = vadd.f32 %v5088, %v5200
    %v5202 = vpop.f32.mrf.mxu0
    %v5203 = vadd.f32 %v5090, %v5202
    %v5204 = vpop.f32.mrf.mxu0
    %v5205 = vadd.f32 %v5092, %v5204
    %v5206 = vpop.f32.mrf.mxu0
    %v5207 = vadd.f32 %v5094, %v5206
    %5208 = vmatprep.mubr.bf16.mxu0 %v3156
    %5209 = vmatmul.mubr.bf16.gmra.mxu0 %v3155
    %v5210 = vpop.f32.mrf.mxu0
    %v5211 = vadd.f32 %v5098, %v5210
    %v5212 = vpop.f32.mrf.mxu0
    %v5213 = vadd.f32 %v5100, %v5212
    %v5214 = vpop.f32.mrf.mxu0
    %v5215 = vadd.f32 %v5102, %v5214
    %v5216 = vpop.f32.mrf.mxu0
    %v5217 = vadd.f32 %v5104, %v5216
    %5218 = vmatprep.mubr.bf16.mxu0 %v3174
    %5219 = vmatmul.mubr.bf16.gmra.mxu0 %v3173
    %v5220 = vpop.f32.mrf.mxu0
    %v5221 = vadd.f32 %v5108, %v5220
    %v5222 = vpop.f32.mrf.mxu0
    %v5223 = vadd.f32 %v5110, %v5222
    %v5224 = vpop.f32.mrf.mxu0
    %v5225 = vadd.f32 %v5112, %v5224
    %v5226 = vpop.f32.mrf.mxu0
    %v5227 = vadd.f32 %v5114, %v5226
    %5228 = vmatprep.mubr.bf16.mxu0 %v3192
    %5229 = vmatmul.mubr.bf16.gmra.mxu0 %v3191
    %v5230 = vpop.f32.mrf.mxu0
    %v5231 = vadd.f32 %v5118, %v5230
    %v5232 = vpop.f32.mrf.mxu0
    %v5233 = vadd.f32 %v5120, %v5232
    %v5234 = vpop.f32.mrf.mxu0
    %v5235 = vadd.f32 %v5122, %v5234
    %v5236 = vpop.f32.mrf.mxu0
    %v5237 = vadd.f32 %v5124, %v5236
    %5238 = vdwg.mxu0
    %5239 = vmatprep.subr.bf16.mxu0 %v4354
    %5240 = vmatpush1.bf16.msra.mxu0 %v4353
    %5241 = vmatprep.subr.bf16.mxu0 %v4352
    %5242 = vmatpush1.bf16.msra.mxu0 %v4351
    %5243 = vmatprep.subr.bf16.mxu0 %v4350
    %5244 = vmatpush1.bf16.msra.mxu0 %v4349
    %5245 = vmatprep.subr.bf16.mxu0 %v4348
    %5246 = vmatpush1.bf16.msra.mxu0 %v4347
    %5247 = vmatprep.subr.bf16.mxu0 %v4346
    %5248 = vmatpush1.bf16.msra.mxu0 %v4345
    %5249 = vmatprep.subr.bf16.mxu0 %v4344
    %5250 = vmatpush1.bf16.msra.mxu0 %v4343
    %5251 = vmatprep.subr.bf16.mxu0 %v4342
    %5252 = vmatpush1.bf16.msra.mxu0 %v4341
    %5253 = vmatprep.subr.bf16.mxu0 %v4340
    %5254 = vmatpush1.bf16.msra.mxu0 %v4339
    %5255 = vmatprep.subr.bf16.mxu0 %v4370
    %5256 = vmatpush2.bf16.msra.mxu0 %v4369
    %5257 = vmatprep.subr.bf16.mxu0 %v4368
    %5258 = vmatpush2.bf16.msra.mxu0 %v4367
    %5259 = vmatprep.subr.bf16.mxu0 %v4366
    %5260 = vmatpush2.bf16.msra.mxu0 %v4365
    %5261 = vmatprep.subr.bf16.mxu0 %v4364
    %5262 = vmatpush2.bf16.msra.mxu0 %v4363
    %5263 = vmatprep.subr.bf16.mxu0 %v4362
    %5264 = vmatpush2.bf16.msra.mxu0 %v4361
    %5265 = vmatprep.subr.bf16.mxu0 %v4360
    %5266 = vmatpush2.bf16.msra.mxu0 %v4359
    %5267 = vmatprep.subr.bf16.mxu0 %v4358
    %5268 = vmatpush2.bf16.msra.mxu0 %v4357
    %5269 = vmatprep.subr.bf16.mxu0 %v4356
    %5270 = vmatpush2.bf16.msra.mxu0 %v4355
    %5271 = vmatprep.mubr.bf16.mxu0 %v3068
    %5272 = vmatmul.mubr.bf16.gmra.mxu0 %v3067
    %v5273 = vpop.f32.mrf.mxu0
    %v5274 = vadd.f32 %v5161, %v5273
    %v5275 = vpop.f32.mrf.mxu0
    %v5276 = vadd.f32 %v5163, %v5275
    %v5277 = vpop.f32.mrf.mxu0
    %v5278 = vadd.f32 %v5165, %v5277
    %v5279 = vpop.f32.mrf.mxu0
    %v5280 = vadd.f32 %v5167, %v5279
    %5281 = vmatprep.mubr.bf16.mxu0 %v3086
    %5282 = vmatmul.mubr.bf16.gmra.mxu0 %v3085
    %v5283 = vpop.f32.mrf.mxu0
    %v5284 = vadd.f32 %v5171, %v5283
    %v5285 = vpop.f32.mrf.mxu0
    %v5286 = vadd.f32 %v5173, %v5285
    %v5287 = vpop.f32.mrf.mxu0
    %v5288 = vadd.f32 %v5175, %v5287
    %v5289 = vpop.f32.mrf.mxu0
    %v5290 = vadd.f32 %v5177, %v5289
    %5291 = vmatprep.mubr.bf16.mxu0 %v3104
    %5292 = vmatmul.mubr.bf16.gmra.mxu0 %v3103
    %v5293 = vpop.f32.mrf.mxu0
    %v5294 = vadd.f32 %v5181, %v5293
    %v5295 = vpop.f32.mrf.mxu0
    %v5296 = vadd.f32 %v5183, %v5295
    %v5297 = vpop.f32.mrf.mxu0
    %v5298 = vadd.f32 %v5185, %v5297
    %v5299 = vpop.f32.mrf.mxu0
    %v5300 = vadd.f32 %v5187, %v5299
    %5301 = vmatprep.mubr.bf16.mxu0 %v3122
    %5302 = vmatmul.mubr.bf16.gmra.mxu0 %v3121
    %v5303 = vpop.f32.mrf.mxu0
    %v5304 = vadd.f32 %v5191, %v5303
    %v5305 = vpop.f32.mrf.mxu0
    %v5306 = vadd.f32 %v5193, %v5305
    %v5307 = vpop.f32.mrf.mxu0
    %v5308 = vadd.f32 %v5195, %v5307
    %v5309 = vpop.f32.mrf.mxu0
    %v5310 = vadd.f32 %v5197, %v5309
    %5311 = vmatprep.mubr.bf16.mxu0 %v3140
    %5312 = vmatmul.mubr.bf16.gmra.mxu0 %v3139
    %v5313 = vpop.f32.mrf.mxu0
    %v5314 = vadd.f32 %v5201, %v5313
    %v5315 = vpop.f32.mrf.mxu0
    %v5316 = vadd.f32 %v5203, %v5315
    %v5317 = vpop.f32.mrf.mxu0
    %v5318 = vadd.f32 %v5205, %v5317
    %v5319 = vpop.f32.mrf.mxu0
    %v5320 = vadd.f32 %v5207, %v5319
    %5321 = vmatprep.mubr.bf16.mxu0 %v3158
    %5322 = vmatmul.mubr.bf16.gmra.mxu0 %v3157
    %v5323 = vpop.f32.mrf.mxu0
    %v5324 = vadd.f32 %v5211, %v5323
    %v5325 = vpop.f32.mrf.mxu0
    %v5326 = vadd.f32 %v5213, %v5325
    %v5327 = vpop.f32.mrf.mxu0
    %v5328 = vadd.f32 %v5215, %v5327
    %v5329 = vpop.f32.mrf.mxu0
    %v5330 = vadd.f32 %v5217, %v5329
    %5331 = vmatprep.mubr.bf16.mxu0 %v3176
    %5332 = vmatmul.mubr.bf16.gmra.mxu0 %v3175
    %v5333 = vpop.f32.mrf.mxu0
    %v5334 = vadd.f32 %v5221, %v5333
    %v5335 = vpop.f32.mrf.mxu0
    %v5336 = vadd.f32 %v5223, %v5335
    %v5337 = vpop.f32.mrf.mxu0
    %v5338 = vadd.f32 %v5225, %v5337
    %v5339 = vpop.f32.mrf.mxu0
    %v5340 = vadd.f32 %v5227, %v5339
    %5341 = vmatprep.mubr.bf16.mxu0 %v3194
    %5342 = vmatmul.mubr.bf16.gmra.mxu0 %v3193
    %v5343 = vpop.f32.mrf.mxu0
    %v5344 = vadd.f32 %v5231, %v5343
    %v5345 = vpop.f32.mrf.mxu0
    %v5346 = vadd.f32 %v5233, %v5345
    %v5347 = vpop.f32.mrf.mxu0
    %v5348 = vadd.f32 %v5235, %v5347
    %v5349 = vpop.f32.mrf.mxu0
    %v5350 = vadd.f32 %v5237, %v5349
    %5351 = vdwg.mxu0
    %5352 = vmatprep.subr.bf16.mxu0 %v4386
    %5353 = vmatpush1.bf16.msra.mxu0 %v4385
    %5354 = vmatprep.subr.bf16.mxu0 %v4384
    %5355 = vmatpush1.bf16.msra.mxu0 %v4383
    %5356 = vmatprep.subr.bf16.mxu0 %v4382
    %5357 = vmatpush1.bf16.msra.mxu0 %v4381
    %5358 = vmatprep.subr.bf16.mxu0 %v4380
    %5359 = vmatpush1.bf16.msra.mxu0 %v4379
    %5360 = vmatprep.subr.bf16.mxu0 %v4378
    %5361 = vmatpush1.bf16.msra.mxu0 %v4377
    %5362 = vmatprep.subr.bf16.mxu0 %v4376
    %5363 = vmatpush1.bf16.msra.mxu0 %v4375
    %5364 = vmatprep.subr.bf16.mxu0 %v4374
    %5365 = vmatpush1.bf16.msra.mxu0 %v4373
    %5366 = vmatprep.subr.bf16.mxu0 %v4372
    %5367 = vmatpush1.bf16.msra.mxu0 %v4371
    %5368 = vmatprep.subr.bf16.mxu0 %v4402
    %5369 = vmatpush2.bf16.msra.mxu0 %v4401
    %5370 = vmatprep.subr.bf16.mxu0 %v4400
    %5371 = vmatpush2.bf16.msra.mxu0 %v4399
    %5372 = vmatprep.subr.bf16.mxu0 %v4398
    %5373 = vmatpush2.bf16.msra.mxu0 %v4397
    %5374 = vmatprep.subr.bf16.mxu0 %v4396
    %5375 = vmatpush2.bf16.msra.mxu0 %v4395
    %5376 = vmatprep.subr.bf16.mxu0 %v4394
    %5377 = vmatpush2.bf16.msra.mxu0 %v4393
    %5378 = vmatprep.subr.bf16.mxu0 %v4392
    %5379 = vmatpush2.bf16.msra.mxu0 %v4391
    %5380 = vmatprep.subr.bf16.mxu0 %v4390
    %5381 = vmatpush2.bf16.msra.mxu0 %v4389
    %5382 = vmatprep.subr.bf16.mxu0 %v4388
    %5383 = vmatpush2.bf16.msra.mxu0 %v4387
    %5384 = vmatprep.mubr.bf16.mxu0 %v3070
    %5385 = vmatmul.mubr.bf16.gmra.mxu0 %v3069
    %v5386 = vpop.f32.mrf.mxu0
    %v5387 = vadd.f32 %v5274, %v5386
    %v5388 = vpop.f32.mrf.mxu0
    %v5389 = vadd.f32 %v5276, %v5388
    %v5390 = vpop.f32.mrf.mxu0
    %v5391 = vadd.f32 %v5278, %v5390
    %v5392 = vpop.f32.mrf.mxu0
    %v5393 = vadd.f32 %v5280, %v5392
    %5394 = vmatprep.mubr.bf16.mxu0 %v3088
    %5395 = vmatmul.mubr.bf16.gmra.mxu0 %v3087
    %v5396 = vpop.f32.mrf.mxu0
    %v5397 = vadd.f32 %v5284, %v5396
    %v5398 = vpop.f32.mrf.mxu0
    %v5399 = vadd.f32 %v5286, %v5398
    %v5400 = vpop.f32.mrf.mxu0
    %v5401 = vadd.f32 %v5288, %v5400
    %v5402 = vpop.f32.mrf.mxu0
    %v5403 = vadd.f32 %v5290, %v5402
    %5404 = vmatprep.mubr.bf16.mxu0 %v3106
    %5405 = vmatmul.mubr.bf16.gmra.mxu0 %v3105
    %v5406 = vpop.f32.mrf.mxu0
    %v5407 = vadd.f32 %v5294, %v5406
    %v5408 = vpop.f32.mrf.mxu0
    %v5409 = vadd.f32 %v5296, %v5408
    %v5410 = vpop.f32.mrf.mxu0
    %v5411 = vadd.f32 %v5298, %v5410
    %v5412 = vpop.f32.mrf.mxu0
    %v5413 = vadd.f32 %v5300, %v5412
    %5414 = vmatprep.mubr.bf16.mxu0 %v3124
    %5415 = vmatmul.mubr.bf16.gmra.mxu0 %v3123
    %v5416 = vpop.f32.mrf.mxu0
    %v5417 = vadd.f32 %v5304, %v5416
    %v5418 = vpop.f32.mrf.mxu0
    %v5419 = vadd.f32 %v5306, %v5418
    %v5420 = vpop.f32.mrf.mxu0
    %v5421 = vadd.f32 %v5308, %v5420
    %v5422 = vpop.f32.mrf.mxu0
    %v5423 = vadd.f32 %v5310, %v5422
    %5424 = vmatprep.mubr.bf16.mxu0 %v3142
    %5425 = vmatmul.mubr.bf16.gmra.mxu0 %v3141
    %v5426 = vpop.f32.mrf.mxu0
    %v5427 = vadd.f32 %v5314, %v5426
    %v5428 = vpop.f32.mrf.mxu0
    %v5429 = vadd.f32 %v5316, %v5428
    %v5430 = vpop.f32.mrf.mxu0
    %v5431 = vadd.f32 %v5318, %v5430
    %v5432 = vpop.f32.mrf.mxu0
    %v5433 = vadd.f32 %v5320, %v5432
    %5434 = vmatprep.mubr.bf16.mxu0 %v3160
    %5435 = vmatmul.mubr.bf16.gmra.mxu0 %v3159
    %v5436 = vpop.f32.mrf.mxu0
    %v5437 = vadd.f32 %v5324, %v5436
    %v5438 = vpop.f32.mrf.mxu0
    %v5439 = vadd.f32 %v5326, %v5438
    %v5440 = vpop.f32.mrf.mxu0
    %v5441 = vadd.f32 %v5328, %v5440
    %v5442 = vpop.f32.mrf.mxu0
    %v5443 = vadd.f32 %v5330, %v5442
    %5444 = vmatprep.mubr.bf16.mxu0 %v3178
    %5445 = vmatmul.mubr.bf16.gmra.mxu0 %v3177
    %v5446 = vpop.f32.mrf.mxu0
    %v5447 = vadd.f32 %v5334, %v5446
    %v5448 = vpop.f32.mrf.mxu0
    %v5449 = vadd.f32 %v5336, %v5448
    %v5450 = vpop.f32.mrf.mxu0
    %v5451 = vadd.f32 %v5338, %v5450
    %v5452 = vpop.f32.mrf.mxu0
    %v5453 = vadd.f32 %v5340, %v5452
    %5454 = vmatprep.mubr.bf16.mxu0 %v3196
    %5455 = vmatmul.mubr.bf16.gmra.mxu0 %v3195
    %v5456 = vpop.f32.mrf.mxu0
    %v5457 = vadd.f32 %v5344, %v5456
    %v5458 = vpop.f32.mrf.mxu0
    %v5459 = vadd.f32 %v5346, %v5458
    %v5460 = vpop.f32.mrf.mxu0
    %v5461 = vadd.f32 %v5348, %v5460
    %v5462 = vpop.f32.mrf.mxu0
    %v5463 = vadd.f32 %v5350, %v5462
    %5464 = vdwg.mxu0
    %5465 = vmatprep.subr.bf16.mxu0 %v4418
    %5466 = vmatpush1.bf16.msra.mxu0 %v4417
    %5467 = vmatprep.subr.bf16.mxu0 %v4416
    %5468 = vmatpush1.bf16.msra.mxu0 %v4415
    %5469 = vmatprep.subr.bf16.mxu0 %v4414
    %5470 = vmatpush1.bf16.msra.mxu0 %v4413
    %5471 = vmatprep.subr.bf16.mxu0 %v4412
    %5472 = vmatpush1.bf16.msra.mxu0 %v4411
    %5473 = vmatprep.subr.bf16.mxu0 %v4410
    %5474 = vmatpush1.bf16.msra.mxu0 %v4409
    %5475 = vmatprep.subr.bf16.mxu0 %v4408
    %5476 = vmatpush1.bf16.msra.mxu0 %v4407
    %5477 = vmatprep.subr.bf16.mxu0 %v4406
    %5478 = vmatpush1.bf16.msra.mxu0 %v4405
    %5479 = vmatprep.subr.bf16.mxu0 %v4404
    %5480 = vmatpush1.bf16.msra.mxu0 %v4403
    %5481 = vmatprep.subr.bf16.mxu0 %v4434
    %5482 = vmatpush2.bf16.msra.mxu0 %v4433
    %5483 = vmatprep.subr.bf16.mxu0 %v4432
    %5484 = vmatpush2.bf16.msra.mxu0 %v4431
    %5485 = vmatprep.subr.bf16.mxu0 %v4430
    %5486 = vmatpush2.bf16.msra.mxu0 %v4429
    %5487 = vmatprep.subr.bf16.mxu0 %v4428
    %5488 = vmatpush2.bf16.msra.mxu0 %v4427
    %5489 = vmatprep.subr.bf16.mxu0 %v4426
    %5490 = vmatpush2.bf16.msra.mxu0 %v4425
    %5491 = vmatprep.subr.bf16.mxu0 %v4424
    %5492 = vmatpush2.bf16.msra.mxu0 %v4423
    %5493 = vmatprep.subr.bf16.mxu0 %v4422
    %5494 = vmatpush2.bf16.msra.mxu0 %v4421
    %5495 = vmatprep.subr.bf16.mxu0 %v4420
    %5496 = vmatpush2.bf16.msra.mxu0 %v4419
    %5497 = vmatprep.mubr.bf16.mxu0 %v3072
    %5498 = vmatmul.mubr.bf16.gmra.mxu0 %v3071
    %v5499 = vpop.f32.mrf.mxu0
    %v5500 = vadd.f32 %v5387, %v5499
    %v5501 = vpop.f32.mrf.mxu0
    %v5502 = vadd.f32 %v5389, %v5501
    %v5503 = vpop.f32.mrf.mxu0
    %v5504 = vadd.f32 %v5391, %v5503
    %v5505 = vpop.f32.mrf.mxu0
    %v5506 = vadd.f32 %v5393, %v5505
    %5507 = vmatprep.mubr.bf16.mxu0 %v3090
    %5508 = vmatmul.mubr.bf16.gmra.mxu0 %v3089
    %v5509 = vpop.f32.mrf.mxu0
    %v5510 = vadd.f32 %v5397, %v5509
    %v5511 = vpop.f32.mrf.mxu0
    %v5512 = vadd.f32 %v5399, %v5511
    %v5513 = vpop.f32.mrf.mxu0
    %v5514 = vadd.f32 %v5401, %v5513
    %v5515 = vpop.f32.mrf.mxu0
    %v5516 = vadd.f32 %v5403, %v5515
    %5517 = vmatprep.mubr.bf16.mxu0 %v3108
    %5518 = vmatmul.mubr.bf16.gmra.mxu0 %v3107
    %v5519 = vpop.f32.mrf.mxu0
    %v5520 = vadd.f32 %v5407, %v5519
    %v5521 = vpop.f32.mrf.mxu0
    %v5522 = vadd.f32 %v5409, %v5521
    %v5523 = vpop.f32.mrf.mxu0
    %v5524 = vadd.f32 %v5411, %v5523
    %v5525 = vpop.f32.mrf.mxu0
    %v5526 = vadd.f32 %v5413, %v5525
    %5527 = vmatprep.mubr.bf16.mxu0 %v3126
    %5528 = vmatmul.mubr.bf16.gmra.mxu0 %v3125
    %v5529 = vpop.f32.mrf.mxu0
    %v5530 = vadd.f32 %v5417, %v5529
    %v5531 = vpop.f32.mrf.mxu0
    %v5532 = vadd.f32 %v5419, %v5531
    %v5533 = vpop.f32.mrf.mxu0
    %v5534 = vadd.f32 %v5421, %v5533
    %v5535 = vpop.f32.mrf.mxu0
    %v5536 = vadd.f32 %v5423, %v5535
    %5537 = vmatprep.mubr.bf16.mxu0 %v3144
    %5538 = vmatmul.mubr.bf16.gmra.mxu0 %v3143
    %v5539 = vpop.f32.mrf.mxu0
    %v5540 = vadd.f32 %v5427, %v5539
    %v5541 = vpop.f32.mrf.mxu0
    %v5542 = vadd.f32 %v5429, %v5541
    %v5543 = vpop.f32.mrf.mxu0
    %v5544 = vadd.f32 %v5431, %v5543
    %v5545 = vpop.f32.mrf.mxu0
    %v5546 = vadd.f32 %v5433, %v5545
    %5547 = vmatprep.mubr.bf16.mxu0 %v3162
    %5548 = vmatmul.mubr.bf16.gmra.mxu0 %v3161
    %v5549 = vpop.f32.mrf.mxu0
    %v5550 = vadd.f32 %v5437, %v5549
    %v5551 = vpop.f32.mrf.mxu0
    %v5552 = vadd.f32 %v5439, %v5551
    %v5553 = vpop.f32.mrf.mxu0
    %v5554 = vadd.f32 %v5441, %v5553
    %v5555 = vpop.f32.mrf.mxu0
    %v5556 = vadd.f32 %v5443, %v5555
    %5557 = vmatprep.mubr.bf16.mxu0 %v3180
    %5558 = vmatmul.mubr.bf16.gmra.mxu0 %v3179
    %v5559 = vpop.f32.mrf.mxu0
    %v5560 = vadd.f32 %v5447, %v5559
    %v5561 = vpop.f32.mrf.mxu0
    %v5562 = vadd.f32 %v5449, %v5561
    %v5563 = vpop.f32.mrf.mxu0
    %v5564 = vadd.f32 %v5451, %v5563
    %v5565 = vpop.f32.mrf.mxu0
    %v5566 = vadd.f32 %v5453, %v5565
    %5567 = vmatprep.mubr.bf16.mxu0 %v3198
    %5568 = vmatmul.mubr.bf16.gmra.mxu0 %v3197
    %v5569 = vpop.f32.mrf.mxu0
    %v5570 = vadd.f32 %v5457, %v5569
    %v5571 = vpop.f32.mrf.mxu0
    %v5572 = vadd.f32 %v5459, %v5571
    %v5573 = vpop.f32.mrf.mxu0
    %v5574 = vadd.f32 %v5461, %v5573
    %v5575 = vpop.f32.mrf.mxu0
    %v5576 = vadd.f32 %v5463, %v5575
    %5577 = vdwg.mxu0
    %5578 = vmatprep.subr.bf16.mxu0 %v4450
    %5579 = vmatpush1.bf16.msra.mxu0 %v4449
    %5580 = vmatprep.subr.bf16.mxu0 %v4448
    %5581 = vmatpush1.bf16.msra.mxu0 %v4447
    %5582 = vmatprep.subr.bf16.mxu0 %v4446
    %5583 = vmatpush1.bf16.msra.mxu0 %v4445
    %5584 = vmatprep.subr.bf16.mxu0 %v4444
    %5585 = vmatpush1.bf16.msra.mxu0 %v4443
    %5586 = vmatprep.subr.bf16.mxu0 %v4442
    %5587 = vmatpush1.bf16.msra.mxu0 %v4441
    %5588 = vmatprep.subr.bf16.mxu0 %v4440
    %5589 = vmatpush1.bf16.msra.mxu0 %v4439
    %5590 = vmatprep.subr.bf16.mxu0 %v4438
    %5591 = vmatpush1.bf16.msra.mxu0 %v4437
    %5592 = vmatprep.subr.bf16.mxu0 %v4436
    %5593 = vmatpush1.bf16.msra.mxu0 %v4435
    %5594 = vmatprep.subr.bf16.mxu0 %v4466
    %5595 = vmatpush2.bf16.msra.mxu0 %v4465
    %5596 = vmatprep.subr.bf16.mxu0 %v4464
    %5597 = vmatpush2.bf16.msra.mxu0 %v4463
    %5598 = vmatprep.subr.bf16.mxu0 %v4462
    %5599 = vmatpush2.bf16.msra.mxu0 %v4461
    %5600 = vmatprep.subr.bf16.mxu0 %v4460
    %5601 = vmatpush2.bf16.msra.mxu0 %v4459
    %5602 = vmatprep.subr.bf16.mxu0 %v4458
    %5603 = vmatpush2.bf16.msra.mxu0 %v4457
    %5604 = vmatprep.subr.bf16.mxu0 %v4456
    %5605 = vmatpush2.bf16.msra.mxu0 %v4455
    %5606 = vmatprep.subr.bf16.mxu0 %v4454
    %5607 = vmatpush2.bf16.msra.mxu0 %v4453
    %5608 = vmatprep.subr.bf16.mxu0 %v4452
    %5609 = vmatpush2.bf16.msra.mxu0 %v4451
    %5610 = vmatprep.mubr.bf16.mxu0 %v3074
    %5611 = vmatmul.mubr.bf16.gmra.mxu0 %v3073
    %v5612 = vpop.f32.mrf.mxu0
    %v5613 = vadd.f32 %v5500, %v5612
    %v5614 = vpop.f32.mrf.mxu0
    %v5615 = vadd.f32 %v5502, %v5614
    %v5616 = vpop.f32.mrf.mxu0
    %v5617 = vadd.f32 %v5504, %v5616
    %v5618 = vpop.f32.mrf.mxu0
    %v5619 = vadd.f32 %v5506, %v5618
    %5620 = vmatprep.mubr.bf16.mxu0 %v3092
    %5621 = vmatmul.mubr.bf16.gmra.mxu0 %v3091
    %v5622 = vpop.f32.mrf.mxu0
    %v5623 = vadd.f32 %v5510, %v5622
    %v5624 = vpop.f32.mrf.mxu0
    %v5625 = vadd.f32 %v5512, %v5624
    %v5626 = vpop.f32.mrf.mxu0
    %v5627 = vadd.f32 %v5514, %v5626
    %v5628 = vpop.f32.mrf.mxu0
    %v5629 = vadd.f32 %v5516, %v5628
    %5630 = vmatprep.mubr.bf16.mxu0 %v3110
    %5631 = vmatmul.mubr.bf16.gmra.mxu0 %v3109
    %v5632 = vpop.f32.mrf.mxu0
    %v5633 = vadd.f32 %v5520, %v5632
    %v5634 = vpop.f32.mrf.mxu0
    %v5635 = vadd.f32 %v5522, %v5634
    %v5636 = vpop.f32.mrf.mxu0
    %v5637 = vadd.f32 %v5524, %v5636
    %v5638 = vpop.f32.mrf.mxu0
    %v5639 = vadd.f32 %v5526, %v5638
    %5640 = vmatprep.mubr.bf16.mxu0 %v3128
    %5641 = vmatmul.mubr.bf16.gmra.mxu0 %v3127
    %v5642 = vpop.f32.mrf.mxu0
    %v5643 = vadd.f32 %v5530, %v5642
    %v5644 = vpop.f32.mrf.mxu0
    %v5645 = vadd.f32 %v5532, %v5644
    %v5646 = vpop.f32.mrf.mxu0
    %v5647 = vadd.f32 %v5534, %v5646
    %v5648 = vpop.f32.mrf.mxu0
    %v5649 = vadd.f32 %v5536, %v5648
    %5650 = vmatprep.mubr.bf16.mxu0 %v3146
    %5651 = vmatmul.mubr.bf16.gmra.mxu0 %v3145
    %v5652 = vpop.f32.mrf.mxu0
    %v5653 = vadd.f32 %v5540, %v5652
    %v5654 = vpop.f32.mrf.mxu0
    %v5655 = vadd.f32 %v5542, %v5654
    %v5656 = vpop.f32.mrf.mxu0
    %v5657 = vadd.f32 %v5544, %v5656
    %v5658 = vpop.f32.mrf.mxu0
    %v5659 = vadd.f32 %v5546, %v5658
    %5660 = vmatprep.mubr.bf16.mxu0 %v3164
    %5661 = vmatmul.mubr.bf16.gmra.mxu0 %v3163
    %v5662 = vpop.f32.mrf.mxu0
    %v5663 = vadd.f32 %v5550, %v5662
    %v5664 = vpop.f32.mrf.mxu0
    %v5665 = vadd.f32 %v5552, %v5664
    %v5666 = vpop.f32.mrf.mxu0
    %v5667 = vadd.f32 %v5554, %v5666
    %v5668 = vpop.f32.mrf.mxu0
    %v5669 = vadd.f32 %v5556, %v5668
    %5670 = vmatprep.mubr.bf16.mxu0 %v3182
    %5671 = vmatmul.mubr.bf16.gmra.mxu0 %v3181
    %v5672 = vpop.f32.mrf.mxu0
    %v5673 = vadd.f32 %v5560, %v5672
    %v5674 = vpop.f32.mrf.mxu0
    %v5675 = vadd.f32 %v5562, %v5674
    %v5676 = vpop.f32.mrf.mxu0
    %v5677 = vadd.f32 %v5564, %v5676
    %v5678 = vpop.f32.mrf.mxu0
    %v5679 = vadd.f32 %v5566, %v5678
    %5680 = vmatprep.mubr.bf16.mxu0 %v3200
    %5681 = vmatmul.mubr.bf16.gmra.mxu0 %v3199
    %v5682 = vpop.f32.mrf.mxu0
    %v5683 = vadd.f32 %v5570, %v5682
    %v5684 = vpop.f32.mrf.mxu0
    %v5685 = vadd.f32 %v5572, %v5684
    %v5686 = vpop.f32.mrf.mxu0
    %v5687 = vadd.f32 %v5574, %v5686
    %v5688 = vpop.f32.mrf.mxu0
    %v5689 = vadd.f32 %v5576, %v5688
    %5690 = vdwg.mxu0
    %5691 = vmatprep.subr.bf16.mxu0 %v4482
    %5692 = vmatpush1.bf16.msra.mxu0 %v4481
    %5693 = vmatprep.subr.bf16.mxu0 %v4480
    %5694 = vmatpush1.bf16.msra.mxu0 %v4479
    %5695 = vmatprep.subr.bf16.mxu0 %v4478
    %5696 = vmatpush1.bf16.msra.mxu0 %v4477
    %5697 = vmatprep.subr.bf16.mxu0 %v4476
    %5698 = vmatpush1.bf16.msra.mxu0 %v4475
    %5699 = vmatprep.subr.bf16.mxu0 %v4474
    %5700 = vmatpush1.bf16.msra.mxu0 %v4473
    %5701 = vmatprep.subr.bf16.mxu0 %v4472
    %5702 = vmatpush1.bf16.msra.mxu0 %v4471
    %5703 = vmatprep.subr.bf16.mxu0 %v4470
    %5704 = vmatpush1.bf16.msra.mxu0 %v4469
    %5705 = vmatprep.subr.bf16.mxu0 %v4468
    %5706 = vmatpush1.bf16.msra.mxu0 %v4467
    %5707 = vmatprep.subr.bf16.mxu0 %v4498
    %5708 = vmatpush2.bf16.msra.mxu0 %v4497
    %5709 = vmatprep.subr.bf16.mxu0 %v4496
    %5710 = vmatpush2.bf16.msra.mxu0 %v4495
    %5711 = vmatprep.subr.bf16.mxu0 %v4494
    %5712 = vmatpush2.bf16.msra.mxu0 %v4493
    %5713 = vmatprep.subr.bf16.mxu0 %v4492
    %5714 = vmatpush2.bf16.msra.mxu0 %v4491
    %5715 = vmatprep.subr.bf16.mxu0 %v4490
    %5716 = vmatpush2.bf16.msra.mxu0 %v4489
    %5717 = vmatprep.subr.bf16.mxu0 %v4488
    %5718 = vmatpush2.bf16.msra.mxu0 %v4487
    %5719 = vmatprep.subr.bf16.mxu0 %v4486
    %5720 = vmatpush2.bf16.msra.mxu0 %v4485
    %5721 = vmatprep.subr.bf16.mxu0 %v4484
    %5722 = vmatpush2.bf16.msra.mxu0 %v4483
    %5723 = vmatprep.mubr.bf16.mxu0 %v3076
    %5724 = vmatmul.mubr.bf16.gmra.mxu0 %v3075
    %v5725 = vpop.f32.mrf.mxu0
    %v5726 = vadd.f32 %v5613, %v5725
    %v5727 = vpop.f32.mrf.mxu0
    %v5728 = vadd.f32 %v5615, %v5727
    %v5729 = vpop.f32.mrf.mxu0
    %v5730 = vadd.f32 %v5617, %v5729
    %v5731 = vpop.f32.mrf.mxu0
    %v5732 = vadd.f32 %v5619, %v5731
    %5733 = vmatprep.mubr.bf16.mxu0 %v3094
    %5734 = vmatmul.mubr.bf16.gmra.mxu0 %v3093
    %v5735 = vpop.f32.mrf.mxu0
    %v5736 = vadd.f32 %v5623, %v5735
    %v5737 = vpop.f32.mrf.mxu0
    %v5738 = vadd.f32 %v5625, %v5737
    %v5739 = vpop.f32.mrf.mxu0
    %v5740 = vadd.f32 %v5627, %v5739
    %v5741 = vpop.f32.mrf.mxu0
    %v5742 = vadd.f32 %v5629, %v5741
    %5743 = vmatprep.mubr.bf16.mxu0 %v3112
    %5744 = vmatmul.mubr.bf16.gmra.mxu0 %v3111
    %v5745 = vpop.f32.mrf.mxu0
    %v5746 = vadd.f32 %v5633, %v5745
    %v5747 = vpop.f32.mrf.mxu0
    %v5748 = vadd.f32 %v5635, %v5747
    %v5749 = vpop.f32.mrf.mxu0
    %v5750 = vadd.f32 %v5637, %v5749
    %v5751 = vpop.f32.mrf.mxu0
    %v5752 = vadd.f32 %v5639, %v5751
    %5753 = vmatprep.mubr.bf16.mxu0 %v3130
    %5754 = vmatmul.mubr.bf16.gmra.mxu0 %v3129
    %v5755 = vpop.f32.mrf.mxu0
    %v5756 = vadd.f32 %v5643, %v5755
    %v5757 = vpop.f32.mrf.mxu0
    %v5758 = vadd.f32 %v5645, %v5757
    %v5759 = vpop.f32.mrf.mxu0
    %v5760 = vadd.f32 %v5647, %v5759
    %v5761 = vpop.f32.mrf.mxu0
    %v5762 = vadd.f32 %v5649, %v5761
    %5763 = vmatprep.mubr.bf16.mxu0 %v3148
    %5764 = vmatmul.mubr.bf16.gmra.mxu0 %v3147
    %v5765 = vpop.f32.mrf.mxu0
    %v5766 = vadd.f32 %v5653, %v5765
    %v5767 = vpop.f32.mrf.mxu0
    %v5768 = vadd.f32 %v5655, %v5767
    %v5769 = vpop.f32.mrf.mxu0
    %v5770 = vadd.f32 %v5657, %v5769
    %v5771 = vpop.f32.mrf.mxu0
    %v5772 = vadd.f32 %v5659, %v5771
    %5773 = vmatprep.mubr.bf16.mxu0 %v3166
    %5774 = vmatmul.mubr.bf16.gmra.mxu0 %v3165
    %v5775 = vpop.f32.mrf.mxu0
    %v5776 = vadd.f32 %v5663, %v5775
    %v5777 = vpop.f32.mrf.mxu0
    %v5778 = vadd.f32 %v5665, %v5777
    %v5779 = vpop.f32.mrf.mxu0
    %v5780 = vadd.f32 %v5667, %v5779
    %v5781 = vpop.f32.mrf.mxu0
    %v5782 = vadd.f32 %v5669, %v5781
    %5783 = vmatprep.mubr.bf16.mxu0 %v3184
    %5784 = vmatmul.mubr.bf16.gmra.mxu0 %v3183
    %v5785 = vpop.f32.mrf.mxu0
    %v5786 = vadd.f32 %v5673, %v5785
    %v5787 = vpop.f32.mrf.mxu0
    %v5788 = vadd.f32 %v5675, %v5787
    %v5789 = vpop.f32.mrf.mxu0
    %v5790 = vadd.f32 %v5677, %v5789
    %v5791 = vpop.f32.mrf.mxu0
    %v5792 = vadd.f32 %v5679, %v5791
    %5793 = vmatprep.mubr.bf16.mxu0 %v3202
    %5794 = vmatmul.mubr.bf16.gmra.mxu0 %v3201
    %v5795 = vpop.f32.mrf.mxu0
    %v5796 = vadd.f32 %v5683, %v5795
    %v5797 = vpop.f32.mrf.mxu0
    %v5798 = vadd.f32 %v5685, %v5797
    %v5799 = vpop.f32.mrf.mxu0
    %v5800 = vadd.f32 %v5687, %v5799
    %v5801 = vpop.f32.mrf.mxu0
    %v5802 = vadd.f32 %v5689, %v5801
    %5803 = vdwg.mxu0
    %v5804 = vmax.f32 %v5726, 0.0
    %v5805 = vmax.f32 %v5728, 0.0
    %v5806 = vmax.f32 %v5730, 0.0
    %v5807 = vmax.f32 %v5732, 0.0
    %v5808 = vmax.f32 %v5736, 0.0
    %v5809 = vmax.f32 %v5738, 0.0
    %v5810 = vmax.f32 %v5740, 0.0
    %v5811 = vmax.f32 %v5742, 0.0
    %v5812 = vmax.f32 %v5746, 0.0
    %v5813 = vmax.f32 %v5748, 0.0
    %v5814 = vmax.f32 %v5750, 0.0
    %v5815 = vmax.f32 %v5752, 0.0
    %v5816 = vmax.f32 %v5756, 0.0
    %v5817 = vmax.f32 %v5758, 0.0
    %v5818 = vmax.f32 %v5760, 0.0
    %v5819 = vmax.f32 %v5762, 0.0
    %v5820 = vmax.f32 %v5766, 0.0
    %v5821 = vmax.f32 %v5768, 0.0
    %v5822 = vmax.f32 %v5770, 0.0
    %v5823 = vmax.f32 %v5772, 0.0
    %v5824 = vmax.f32 %v5776, 0.0
    %v5825 = vmax.f32 %v5778, 0.0
    %v5826 = vmax.f32 %v5780, 0.0
    %v5827 = vmax.f32 %v5782, 0.0
    %v5828 = vmax.f32 %v5786, 0.0
    %v5829 = vmax.f32 %v5788, 0.0
    %v5830 = vmax.f32 %v5790, 0.0
    %v5831 = vmax.f32 %v5792, 0.0
    %v5832 = vmax.f32 %v5796, 0.0
    %v5833 = vmax.f32 %v5798, 0.0
    %v5834 = vmax.f32 %v5800, 0.0
    %v5835 = vmax.f32 %v5802, 0.0
    %v5836 = vpack.c.bf16 %v5806, %v5804
    %v5837 = vpack.c.bf16 %v5807, %v5805
    %v5838 = vpack.c.bf16 %v5810, %v5808
    %v5839 = vpack.c.bf16 %v5811, %v5809
    %v5840 = vpack.c.bf16 %v5814, %v5812
    %v5841 = vpack.c.bf16 %v5815, %v5813
    %v5842 = vpack.c.bf16 %v5818, %v5816
    %v5843 = vpack.c.bf16 %v5819, %v5817
    %v5844 = vpack.c.bf16 %v5822, %v5820
    %v5845 = vpack.c.bf16 %v5823, %v5821
    %v5846 = vpack.c.bf16 %v5826, %v5824
    %v5847 = vpack.c.bf16 %v5827, %v5825
    %v5848 = vpack.c.bf16 %v5830, %v5828
    %v5849 = vpack.c.bf16 %v5831, %v5829
    %v5850 = vpack.c.bf16 %v5834, %v5832
    %v5851 = vpack.c.bf16 %v5835, %v5833
    %v5868 = vunpack.c.l.b16 %v5836
    %v5869 = vunpack.c.l.b16 %v5837
    %v5870 = vunpack.c.h.b16 %v5836
    %v5871 = vunpack.c.h.b16 %v5837
    %v5872 = vunpack.c.l.b16 %v5838
    %v5873 = vunpack.c.l.b16 %v5839
    %v5874 = vunpack.c.h.b16 %v5838
    %v5875 = vunpack.c.h.b16 %v5839
    %v5876 = vunpack.c.l.b16 %v5840
    %v5877 = vunpack.c.l.b16 %v5841
    %v5878 = vunpack.c.h.b16 %v5840
    %v5879 = vunpack.c.h.b16 %v5841
    %v5880 = vunpack.c.l.b16 %v5842
    %v5881 = vunpack.c.l.b16 %v5843
    %v5882 = vunpack.c.h.b16 %v5842
    %v5883 = vunpack.c.h.b16 %v5843
    %v5884 = vunpack.c.l.b16 %v5844
    %v5885 = vunpack.c.l.b16 %v5845
    %v5886 = vunpack.c.h.b16 %v5844
    %v5887 = vunpack.c.h.b16 %v5845
    %v5888 = vunpack.c.l.b16 %v5846
    %v5889 = vunpack.c.l.b16 %v5847
    %v5890 = vunpack.c.h.b16 %v5846
    %v5891 = vunpack.c.h.b16 %v5847
    %v5892 = vunpack.c.l.b16 %v5848
    %v5893 = vunpack.c.l.b16 %v5849
    %v5894 = vunpack.c.h.b16 %v5848
    %v5895 = vunpack.c.h.b16 %v5849
    %v5896 = vunpack.c.l.b16 %v5850
    %v5897 = vunpack.c.l.b16 %v5851
    %v5898 = vunpack.c.h.b16 %v5850
    %v5899 = vunpack.c.h.b16 %v5851
    %v5900 = vpack.c.b16 %v5869, %v5868
    %v5901 = vpack.c.b16 %v5871, %v5870
    %v5902 = vpack.c.b16 %v5873, %v5872
    %v5903 = vpack.c.b16 %v5875, %v5874
    %v5904 = vpack.c.b16 %v5877, %v5876
    %v5905 = vpack.c.b16 %v5879, %v5878
    %v5906 = vpack.c.b16 %v5881, %v5880
    %v5907 = vpack.c.b16 %v5883, %v5882
    %v5908 = vpack.c.b16 %v5885, %v5884
    %v5909 = vpack.c.b16 %v5887, %v5886
    %v5910 = vpack.c.b16 %v5889, %v5888
    %v5911 = vpack.c.b16 %v5891, %v5890
    %v5912 = vpack.c.b16 %v5893, %v5892
    %v5913 = vpack.c.b16 %v5895, %v5894
    %v5914 = vpack.c.b16 %v5897, %v5896
    %v5915 = vpack.c.b16 %v5899, %v5898
    %v5917 = vshrl.u32 %v5900, 16
    %v5919 = vrot.slane %v5917, 7
    %v5920 = vshll.u32 %v5900, 16
    %v5922 = vor.u32 %v5919, %v5920
    %v5923 = vrot.slane %v5919, 4
    %v5925 = vshrl.u32 %v5901, 16
    %v5927 = vrot.slane %v5925, 7
    %v5928 = vshll.u32 %v5901, 16
    %v5930 = vor.u32 %v5927, %v5928
    %v5931 = vrot.slane %v5927, 4
    %v5933 = vshrl.u32 %v5902, 16
    %v5935 = vrot.slane %v5933, 7
    %v5936 = vshll.u32 %v5902, 16
    %v5938 = vor.u32 %v5935, %v5936
    %v5939 = vrot.slane %v5935, 4
    %v5941 = vshrl.u32 %v5903, 16
    %v5943 = vrot.slane %v5941, 7
    %v5944 = vshll.u32 %v5903, 16
    %v5946 = vor.u32 %v5943, %v5944
    %v5947 = vrot.slane %v5943, 4
    %v5949 = vshrl.u32 %v5904, 16
    %v5951 = vrot.slane %v5949, 7
    %v5952 = vshll.u32 %v5904, 16
    %v5954 = vor.u32 %v5951, %v5952
    %v5955 = vrot.slane %v5951, 4
    %v5957 = vshrl.u32 %v5905, 16
    %v5959 = vrot.slane %v5957, 7
    %v5960 = vshll.u32 %v5905, 16
    %v5962 = vor.u32 %v5959, %v5960
    %v5963 = vrot.slane %v5959, 4
    %v5965 = vshrl.u32 %v5906, 16
    %v5967 = vrot.slane %v5965, 7
    %v5968 = vshll.u32 %v5906, 16
    %v5970 = vor.u32 %v5967, %v5968
    %v5971 = vrot.slane %v5967, 4
    %v5973 = vshrl.u32 %v5907, 16
    %v5975 = vrot.slane %v5973, 7
    %v5976 = vshll.u32 %v5907, 16
    %v5978 = vor.u32 %v5975, %v5976
    %v5979 = vrot.slane %v5975, 4
    %v5981 = vshrl.u32 %v5908, 16
    %v5983 = vrot.slane %v5981, 7
    %v5984 = vshll.u32 %v5908, 16
    %v5986 = vor.u32 %v5983, %v5984
    %v5987 = vrot.slane %v5983, 4
    %v5989 = vshrl.u32 %v5909, 16
    %v5991 = vrot.slane %v5989, 7
    %v5992 = vshll.u32 %v5909, 16
    %v5994 = vor.u32 %v5991, %v5992
    %v5995 = vrot.slane %v5991, 4
    %v5997 = vshrl.u32 %v5910, 16
    %v5999 = vrot.slane %v5997, 7
    %v6000 = vshll.u32 %v5910, 16
    %v6002 = vor.u32 %v5999, %v6000
    %v6003 = vrot.slane %v5999, 4
    %v6005 = vshrl.u32 %v5911, 16
    %v6007 = vrot.slane %v6005, 7
    %v6008 = vshll.u32 %v5911, 16
    %v6010 = vor.u32 %v6007, %v6008
    %v6011 = vrot.slane %v6007, 4
    %v6013 = vshrl.u32 %v5912, 16
    %v6015 = vrot.slane %v6013, 7
    %v6016 = vshll.u32 %v5912, 16
    %v6018 = vor.u32 %v6015, %v6016
    %v6019 = vrot.slane %v6015, 4
    %v6021 = vshrl.u32 %v5913, 16
    %v6023 = vrot.slane %v6021, 7
    %v6024 = vshll.u32 %v5913, 16
    %v6026 = vor.u32 %v6023, %v6024
    %v6027 = vrot.slane %v6023, 4
    %v6029 = vshrl.u32 %v5914, 16
    %v6031 = vrot.slane %v6029, 7
    %v6032 = vshll.u32 %v5914, 16
    %v6034 = vor.u32 %v6031, %v6032
    %v6035 = vrot.slane %v6031, 4
    %v6037 = vshrl.u32 %v5915, 16
    %v6039 = vrot.slane %v6037, 7
    %v6040 = vshll.u32 %v5915, 16
    %v6042 = vor.u32 %v6039, %v6040
    %v6043 = vrot.slane %v6039, 4
    %v6076 = vld [vmem:[%s778] sm:$0xff]
    %v6077 = vsel %vm783, %v5922, %v6076
    %6078 = vst [vmem:[%s778] sm:$0xff] %v6077
    %v6079 = vld [vmem:[%s778 + $0x8] sm:$0x11]
    %v6080 = vsel %vm150, %v5923, %v6079
    %6081 = vst [vmem:[%s778 + $0x8] sm:$0x11] %v6080
    %v6082 = vld [vmem:[%s778 + $0x10] sm:$0xff]
    %v6083 = vsel %vm783, %v5930, %v6082
    %6084 = vst [vmem:[%s778 + $0x10] sm:$0xff] %v6083
    %v6085 = vld [vmem:[%s778 + $0x18] sm:$0x11]
    %v6086 = vsel %vm150, %v5931, %v6085
    %6087 = vst [vmem:[%s778 + $0x18] sm:$0x11] %v6086
    %v6088 = vld [vmem:[%s778 + $0x20] sm:$0xff]
    %v6089 = vsel %vm783, %v5938, %v6088
    %6090 = vst [vmem:[%s778 + $0x20] sm:$0xff] %v6089
    %v6091 = vld [vmem:[%s778 + $0x28] sm:$0x11]
    %v6092 = vsel %vm150, %v5939, %v6091
    %6093 = vst [vmem:[%s778 + $0x28] sm:$0x11] %v6092
    %v6094 = vld [vmem:[%s778 + $0x30] sm:$0xff]
    %v6095 = vsel %vm783, %v5946, %v6094
    %6096 = vst [vmem:[%s778 + $0x30] sm:$0xff] %v6095
    %v6097 = vld [vmem:[%s778 + $0x38] sm:$0x11]
    %v6098 = vsel %vm150, %v5947, %v6097
    %6099 = vst [vmem:[%s778 + $0x38] sm:$0x11] %v6098
    %v6100 = vld [vmem:[%s778 + $0x40] sm:$0xff]
    %v6101 = vsel %vm783, %v5954, %v6100
    %6102 = vst [vmem:[%s778 + $0x40] sm:$0xff] %v6101
    %v6103 = vld [vmem:[%s778 + $0x48] sm:$0x11]
    %v6104 = vsel %vm150, %v5955, %v6103
    %6105 = vst [vmem:[%s778 + $0x48] sm:$0x11] %v6104
    %v6106 = vld [vmem:[%s778 + $0x50] sm:$0xff]
    %v6107 = vsel %vm783, %v5962, %v6106
    %6108 = vst [vmem:[%s778 + $0x50] sm:$0xff] %v6107
    %v6109 = vld [vmem:[%s778 + $0x58] sm:$0x11]
    %v6110 = vsel %vm150, %v5963, %v6109
    %6111 = vst [vmem:[%s778 + $0x58] sm:$0x11] %v6110
    %v6112 = vld [vmem:[%s778 + $0x60] sm:$0xff]
    %v6113 = vsel %vm783, %v5970, %v6112
    %6114 = vst [vmem:[%s778 + $0x60] sm:$0xff] %v6113
    %v6115 = vld [vmem:[%s778 + $0x68] sm:$0x11]
    %v6116 = vsel %vm150, %v5971, %v6115
    %6117 = vst [vmem:[%s778 + $0x68] sm:$0x11] %v6116
    %v6118 = vld [vmem:[%s778 + $0x70] sm:$0xff]
    %v6119 = vsel %vm783, %v5978, %v6118
    %6120 = vst [vmem:[%s778 + $0x70] sm:$0xff] %v6119
    %v6121 = vld [vmem:[%s778 + $0x78] sm:$0x11]
    %v6122 = vsel %vm150, %v5979, %v6121
    %6123 = vst [vmem:[%s778 + $0x78] sm:$0x11] %v6122
    %v6124 = vld [vmem:[%s778 + $0xa0] sm:$0xff]
    %v6125 = vsel %vm783, %v5986, %v6124
    %6126 = vst [vmem:[%s778 + $0xa0] sm:$0xff] %v6125
    %v6127 = vld [vmem:[%s778 + $0xa8] sm:$0x11]
    %v6128 = vsel %vm150, %v5987, %v6127
    %6129 = vst [vmem:[%s778 + $0xa8] sm:$0x11] %v6128
    %v6130 = vld [vmem:[%s778 + $0xb0] sm:$0xff]
    %v6131 = vsel %vm783, %v5994, %v6130
    %6132 = vst [vmem:[%s778 + $0xb0] sm:$0xff] %v6131
    %v6133 = vld [vmem:[%s778 + $0xb8] sm:$0x11]
    %v6134 = vsel %vm150, %v5995, %v6133
    %6135 = vst [vmem:[%s778 + $0xb8] sm:$0x11] %v6134
    %v6136 = vld [vmem:[%s778 + $0xc0] sm:$0xff]
    %v6137 = vsel %vm783, %v6002, %v6136
    %6138 = vst [vmem:[%s778 + $0xc0] sm:$0xff] %v6137
    %v6139 = vld [vmem:[%s778 + $0xc8] sm:$0x11]
    %v6140 = vsel %vm150, %v6003, %v6139
    %6141 = vst [vmem:[%s778 + $0xc8] sm:$0x11] %v6140
    %v6142 = vld [vmem:[%s778 + $0xd0] sm:$0xff]
    %v6143 = vsel %vm783, %v6010, %v6142
    %6144 = vst [vmem:[%s778 + $0xd0] sm:$0xff] %v6143
    %v6145 = vld [vmem:[%s778 + $0xd8] sm:$0x11]
    %v6146 = vsel %vm150, %v6011, %v6145
    %6147 = vst [vmem:[%s778 + $0xd8] sm:$0x11] %v6146
    %v6148 = vld [vmem:[%s778 + $0xe0] sm:$0xff]
    %v6149 = vsel %vm783, %v6018, %v6148
    %6150 = vst [vmem:[%s778 + $0xe0] sm:$0xff] %v6149
    %v6151 = vld [vmem:[%s778 + $0xe8] sm:$0x11]
    %v6152 = vsel %vm150, %v6019, %v6151
    %6153 = vst [vmem:[%s778 + $0xe8] sm:$0x11] %v6152
    %v6154 = vld [vmem:[%s778 + $0xf0] sm:$0xff]
    %v6155 = vsel %vm783, %v6026, %v6154
    %6156 = vst [vmem:[%s778 + $0xf0] sm:$0xff] %v6155
    %v6157 = vld [vmem:[%s778 + $0xf8] sm:$0x11]
    %v6158 = vsel %vm150, %v6027, %v6157
    %6159 = vst [vmem:[%s778 + $0xf8] sm:$0x11] %v6158
    %v6160 = vld [vmem:[%s778 + $0x100] sm:$0xff]
    %v6161 = vsel %vm783, %v6034, %v6160
    %6162 = vst [vmem:[%s778 + $0x100] sm:$0xff] %v6161
    %v6163 = vld [vmem:[%s778 + $0x108] sm:$0x11]
    %v6164 = vsel %vm150, %v6035, %v6163
    %6165 = vst [vmem:[%s778 + $0x108] sm:$0x11] %v6164
    %v6166 = vld [vmem:[%s778 + $0x110] sm:$0xff]
    %v6167 = vsel %vm783, %v6042, %v6166
    %6168 = vst [vmem:[%s778 + $0x110] sm:$0xff] %v6167
    %v6169 = vld [vmem:[%s778 + $0x118] sm:$0x11]
    %v6170 = vsel %vm150, %v6043, %v6169
    %6171 = vst [vmem:[%s778 + $0x118] sm:$0x11] %v6170
    %v6172 = vld [vmem:[#allocation2] sm:$0xff]
    %v6173 = vld [vmem:[#allocation2 + $0x8] sm:$0x11]
    %v6174 = vld [vmem:[#allocation2 + $0x10] sm:$0xff]
    %v6175 = vld [vmem:[#allocation2 + $0x18] sm:$0x11]
    %v6176 = vld [vmem:[#allocation2 + $0x20] sm:$0xff]
    %v6177 = vld [vmem:[#allocation2 + $0x28] sm:$0x11]
    %v6178 = vld [vmem:[#allocation2 + $0x30] sm:$0xff]
    %v6179 = vld [vmem:[#allocation2 + $0x38] sm:$0x11]
    %v6180 = vld [vmem:[#allocation2 + $0x40] sm:$0xff]
    %v6181 = vld [vmem:[#allocation2 + $0x48] sm:$0x11]
    %v6182 = vld [vmem:[#allocation2 + $0x50] sm:$0xff]
    %v6183 = vld [vmem:[#allocation2 + $0x58] sm:$0x11]
    %v6184 = vld [vmem:[#allocation2 + $0x60] sm:$0xff]
    %v6185 = vld [vmem:[#allocation2 + $0x68] sm:$0x11]
    %v6186 = vld [vmem:[#allocation2 + $0x70] sm:$0xff]
    %v6187 = vld [vmem:[#allocation2 + $0x78] sm:$0x11]
    %v6188 = vld [vmem:[#allocation2 + $0xa0] sm:$0xff]
    %v6189 = vld [vmem:[#allocation2 + $0xa8] sm:$0x11]
    %v6190 = vld [vmem:[#allocation2 + $0xb0] sm:$0xff]
    %v6191 = vld [vmem:[#allocation2 + $0xb8] sm:$0x11]
    %v6192 = vld [vmem:[#allocation2 + $0xc0] sm:$0xff]
    %v6193 = vld [vmem:[#allocation2 + $0xc8] sm:$0x11]
    %v6194 = vld [vmem:[#allocation2 + $0xd0] sm:$0xff]
    %v6195 = vld [vmem:[#allocation2 + $0xd8] sm:$0x11]
    %v6196 = vld [vmem:[#allocation2 + $0xe0] sm:$0xff]
    %v6197 = vld [vmem:[#allocation2 + $0xe8] sm:$0x11]
    %v6198 = vld [vmem:[#allocation2 + $0xf0] sm:$0xff]
    %v6199 = vld [vmem:[#allocation2 + $0xf8] sm:$0x11]
    %v6200 = vld [vmem:[#allocation2 + $0x100] sm:$0xff]
    %v6201 = vld [vmem:[#allocation2 + $0x108] sm:$0x11]
    %v6202 = vld [vmem:[#allocation2 + $0x110] sm:$0xff]
    %v6203 = vld [vmem:[#allocation2 + $0x118] sm:$0x11]
    %6204 = vst [vmem:[#allocation3] sm:$0xff] %v6172
    %6205 = vst [vmem:[#allocation3 + $0x48] sm:$0xff] %v6174
    %6206 = vst [vmem:[#allocation3 + $0x90] sm:$0xff] %v6176
    %6207 = vst [vmem:[#allocation3 + $0xd8] sm:$0xff] %v6178
    %6208 = vst [vmem:[#allocation3 + $0x120] sm:$0xff] %v6180
    %6209 = vst [vmem:[#allocation3 + $0x168] sm:$0xff] %v6182
    %6210 = vst [vmem:[#allocation3 + $0x1b0] sm:$0xff] %v6184
    %6211 = vst [vmem:[#allocation3 + $0x1f8] sm:$0xff] %v6186
    %6212 = vst [vmem:[#allocation3 + $0x240] sm:$0xff] %v6188
    %6213 = vst [vmem:[#allocation3 + $0x288] sm:$0xff] %v6190
    %6214 = vst [vmem:[#allocation3 + $0x2d0] sm:$0xff] %v6192
    %6215 = vst [vmem:[#allocation3 + $0x318] sm:$0xff] %v6194
    %6216 = vst [vmem:[#allocation3 + $0x360] sm:$0xff] %v6196
    %6217 = vst [vmem:[#allocation3 + $0x3a8] sm:$0xff] %v6198
    %6218 = vst [vmem:[#allocation3 + $0x3f0] sm:$0xff] %v6200
    %6219 = vst [vmem:[#allocation3 + $0x438] sm:$0xff] %v6202
    %v6221 = vshrl.u32 %v6172, 16
    %v6223 = vrot.slane %v6221, 4
    %v6224 = vshll.u32 %v6172, 16
    %v6226 = vrot.slane %v6224, 5
    %v6227 = vor.u32 %v6223, %v6226
    %v6228 = vrot.slane %v6227, 4
    %v6230 = vshll.u32 %v6173, 16
    %v6232 = vrot.slane %v6230, 5
    %v6233 = vsel %vm930, %v6228, %v6232
    %v6235 = vshrl.u32 %v6174, 16
    %v6237 = vrot.slane %v6235, 4
    %v6238 = vshll.u32 %v6174, 16
    %v6240 = vrot.slane %v6238, 5
    %v6241 = vor.u32 %v6237, %v6240
    %v6242 = vrot.slane %v6241, 4
    %v6244 = vshll.u32 %v6175, 16
    %v6246 = vrot.slane %v6244, 5
    %v6247 = vsel %vm930, %v6242, %v6246
    %v6249 = vshrl.u32 %v6176, 16
    %v6251 = vrot.slane %v6249, 4
    %v6252 = vshll.u32 %v6176, 16
    %v6254 = vrot.slane %v6252, 5
    %v6255 = vor.u32 %v6251, %v6254
    %v6256 = vrot.slane %v6255, 4
    %v6258 = vshll.u32 %v6177, 16
    %v6260 = vrot.slane %v6258, 5
    %v6261 = vsel %vm930, %v6256, %v6260
    %v6263 = vshrl.u32 %v6178, 16
    %v6265 = vrot.slane %v6263, 4
    %v6266 = vshll.u32 %v6178, 16
    %v6268 = vrot.slane %v6266, 5
    %v6269 = vor.u32 %v6265, %v6268
    %v6270 = vrot.slane %v6269, 4
    %v6272 = vshll.u32 %v6179, 16
    %v6274 = vrot.slane %v6272, 5
    %v6275 = vsel %vm930, %v6270, %v6274
    %v6277 = vshrl.u32 %v6180, 16
    %v6279 = vrot.slane %v6277, 4
    %v6280 = vshll.u32 %v6180, 16
    %v6282 = vrot.slane %v6280, 5
    %v6283 = vor.u32 %v6279, %v6282
    %v6284 = vrot.slane %v6283, 4
    %v6286 = vshll.u32 %v6181, 16
    %v6288 = vrot.slane %v6286, 5
    %v6289 = vsel %vm930, %v6284, %v6288
    %v6291 = vshrl.u32 %v6182, 16
    %v6293 = vrot.slane %v6291, 4
    %v6294 = vshll.u32 %v6182, 16
    %v6296 = vrot.slane %v6294, 5
    %v6297 = vor.u32 %v6293, %v6296
    %v6298 = vrot.slane %v6297, 4
    %v6300 = vshll.u32 %v6183, 16
    %v6302 = vrot.slane %v6300, 5
    %v6303 = vsel %vm930, %v6298, %v6302
    %v6305 = vshrl.u32 %v6184, 16
    %v6307 = vrot.slane %v6305, 4
    %v6308 = vshll.u32 %v6184, 16
    %v6310 = vrot.slane %v6308, 5
    %v6311 = vor.u32 %v6307, %v6310
    %v6312 = vrot.slane %v6311, 4
    %v6314 = vshll.u32 %v6185, 16
    %v6316 = vrot.slane %v6314, 5
    %v6317 = vsel %vm930, %v6312, %v6316
    %v6319 = vshrl.u32 %v6186, 16
    %v6321 = vrot.slane %v6319, 4
    %v6322 = vshll.u32 %v6186, 16
    %v6324 = vrot.slane %v6322, 5
    %v6325 = vor.u32 %v6321, %v6324
    %v6326 = vrot.slane %v6325, 4
    %v6328 = vshll.u32 %v6187, 16
    %v6330 = vrot.slane %v6328, 5
    %v6331 = vsel %vm930, %v6326, %v6330
    %v6333 = vshrl.u32 %v6188, 16
    %v6335 = vrot.slane %v6333, 4
    %v6336 = vshll.u32 %v6188, 16
    %v6338 = vrot.slane %v6336, 5
    %v6339 = vor.u32 %v6335, %v6338
    %v6340 = vrot.slane %v6339, 4
    %v6342 = vshll.u32 %v6189, 16
    %v6344 = vrot.slane %v6342, 5
    %v6345 = vsel %vm930, %v6340, %v6344
    %v6347 = vshrl.u32 %v6190, 16
    %v6349 = vrot.slane %v6347, 4
    %v6350 = vshll.u32 %v6190, 16
    %v6352 = vrot.slane %v6350, 5
    %v6353 = vor.u32 %v6349, %v6352
    %v6354 = vrot.slane %v6353, 4
    %v6356 = vshll.u32 %v6191, 16
    %v6358 = vrot.slane %v6356, 5
    %v6359 = vsel %vm930, %v6354, %v6358
    %v6361 = vshrl.u32 %v6192, 16
    %v6363 = vrot.slane %v6361, 4
    %v6364 = vshll.u32 %v6192, 16
    %v6366 = vrot.slane %v6364, 5
    %v6367 = vor.u32 %v6363, %v6366
    %v6368 = vrot.slane %v6367, 4
    %v6370 = vshll.u32 %v6193, 16
    %v6372 = vrot.slane %v6370, 5
    %v6373 = vsel %vm930, %v6368, %v6372
    %v6375 = vshrl.u32 %v6194, 16
    %v6377 = vrot.slane %v6375, 4
    %v6378 = vshll.u32 %v6194, 16
    %v6380 = vrot.slane %v6378, 5
    %v6381 = vor.u32 %v6377, %v6380
    %v6382 = vrot.slane %v6381, 4
    %v6384 = vshll.u32 %v6195, 16
    %v6386 = vrot.slane %v6384, 5
    %v6387 = vsel %vm930, %v6382, %v6386
    %v6389 = vshrl.u32 %v6196, 16
    %v6391 = vrot.slane %v6389, 4
    %v6392 = vshll.u32 %v6196, 16
    %v6394 = vrot.slane %v6392, 5
    %v6395 = vor.u32 %v6391, %v6394
    %v6396 = vrot.slane %v6395, 4
    %v6398 = vshll.u32 %v6197, 16
    %v6400 = vrot.slane %v6398, 5
    %v6401 = vsel %vm930, %v6396, %v6400
    %v6403 = vshrl.u32 %v6198, 16
    %v6405 = vrot.slane %v6403, 4
    %v6406 = vshll.u32 %v6198, 16
    %v6408 = vrot.slane %v6406, 5
    %v6409 = vor.u32 %v6405, %v6408
    %v6410 = vrot.slane %v6409, 4
    %v6412 = vshll.u32 %v6199, 16
    %v6414 = vrot.slane %v6412, 5
    %v6415 = vsel %vm930, %v6410, %v6414
    %v6417 = vshrl.u32 %v6200, 16
    %v6419 = vrot.slane %v6417, 4
    %v6420 = vshll.u32 %v6200, 16
    %v6422 = vrot.slane %v6420, 5
    %v6423 = vor.u32 %v6419, %v6422
    %v6424 = vrot.slane %v6423, 4
    %v6426 = vshll.u32 %v6201, 16
    %v6428 = vrot.slane %v6426, 5
    %v6429 = vsel %vm930, %v6424, %v6428
    %v6431 = vshrl.u32 %v6202, 16
    %v6433 = vrot.slane %v6431, 4
    %v6434 = vshll.u32 %v6202, 16
    %v6436 = vrot.slane %v6434, 5
    %v6437 = vor.u32 %v6433, %v6436
    %v6438 = vrot.slane %v6437, 4
    %v6440 = vshll.u32 %v6203, 16
    %v6442 = vrot.slane %v6440, 5
    %v6443 = vsel %vm930, %v6438, %v6442
    %6460 = vst [vmem:[#allocation3 + $0x8] sm:$0xff] %v6233
    %6461 = vst [vmem:[#allocation3 + $0x50] sm:$0xff] %v6247
    %6462 = vst [vmem:[#allocation3 + $0x98] sm:$0xff] %v6261
    %6463 = vst [vmem:[#allocation3 + $0xe0] sm:$0xff] %v6275
    %6464 = vst [vmem:[#allocation3 + $0x128] sm:$0xff] %v6289
    %6465 = vst [vmem:[#allocation3 + $0x170] sm:$0xff] %v6303
    %6466 = vst [vmem:[#allocation3 + $0x1b8] sm:$0xff] %v6317
    %6467 = vst [vmem:[#allocation3 + $0x200] sm:$0xff] %v6331
    %6468 = vst [vmem:[#allocation3 + $0x248] sm:$0xff] %v6345
    %6469 = vst [vmem:[#allocation3 + $0x290] sm:$0xff] %v6359
    %6470 = vst [vmem:[#allocation3 + $0x2d8] sm:$0xff] %v6373
    %6471 = vst [vmem:[#allocation3 + $0x320] sm:$0xff] %v6387
    %6472 = vst [vmem:[#allocation3 + $0x368] sm:$0xff] %v6401
    %6473 = vst [vmem:[#allocation3 + $0x3b0] sm:$0xff] %v6415
    %6474 = vst [vmem:[#allocation3 + $0x3f8] sm:$0xff] %v6429
    %6475 = vst [vmem:[#allocation3 + $0x440] sm:$0xff] %v6443
    %v6508 = vrot.slane %v6172, 5
    %v6509 = vrot.slane %v6508, 4
    %v6510 = vrot.slane %v6173, 5
    %v6511 = vsel %vm1221, %v6509, %v6510
    %v6512 = vrot.slane %v6174, 5
    %v6513 = vrot.slane %v6512, 4
    %v6514 = vrot.slane %v6175, 5
    %v6515 = vsel %vm1221, %v6513, %v6514
    %v6516 = vrot.slane %v6176, 5
    %v6517 = vrot.slane %v6516, 4
    %v6518 = vrot.slane %v6177, 5
    %v6519 = vsel %vm1221, %v6517, %v6518
    %v6520 = vrot.slane %v6178, 5
    %v6521 = vrot.slane %v6520, 4
    %v6522 = vrot.slane %v6179, 5
    %v6523 = vsel %vm1221, %v6521, %v6522
    %v6524 = vrot.slane %v6180, 5
    %v6525 = vrot.slane %v6524, 4
    %v6526 = vrot.slane %v6181, 5
    %v6527 = vsel %vm1221, %v6525, %v6526
    %v6528 = vrot.slane %v6182, 5
    %v6529 = vrot.slane %v6528, 4
    %v6530 = vrot.slane %v6183, 5
    %v6531 = vsel %vm1221, %v6529, %v6530
    %v6532 = vrot.slane %v6184, 5
    %v6533 = vrot.slane %v6532, 4
    %v6534 = vrot.slane %v6185, 5
    %v6535 = vsel %vm1221, %v6533, %v6534
    %v6536 = vrot.slane %v6186, 5
    %v6537 = vrot.slane %v6536, 4
    %v6538 = vrot.slane %v6187, 5
    %v6539 = vsel %vm1221, %v6537, %v6538
    %v6540 = vrot.slane %v6188, 5
    %v6541 = vrot.slane %v6540, 4
    %v6542 = vrot.slane %v6189, 5
    %v6543 = vsel %vm1221, %v6541, %v6542
    %v6544 = vrot.slane %v6190, 5
    %v6545 = vrot.slane %v6544, 4
    %v6546 = vrot.slane %v6191, 5
    %v6547 = vsel %vm1221, %v6545, %v6546
    %v6548 = vrot.slane %v6192, 5
    %v6549 = vrot.slane %v6548, 4
    %v6550 = vrot.slane %v6193, 5
    %v6551 = vsel %vm1221, %v6549, %v6550
    %v6552 = vrot.slane %v6194, 5
    %v6553 = vrot.slane %v6552, 4
    %v6554 = vrot.slane %v6195, 5
    %v6555 = vsel %vm1221, %v6553, %v6554
    %v6556 = vrot.slane %v6196, 5
    %v6557 = vrot.slane %v6556, 4
    %v6558 = vrot.slane %v6197, 5
    %v6559 = vsel %vm1221, %v6557, %v6558
    %v6560 = vrot.slane %v6198, 5
    %v6561 = vrot.slane %v6560, 4
    %v6562 = vrot.slane %v6199, 5
    %v6563 = vsel %vm1221, %v6561, %v6562
    %v6564 = vrot.slane %v6200, 5
    %v6565 = vrot.slane %v6564, 4
    %v6566 = vrot.slane %v6201, 5
    %v6567 = vsel %vm1221, %v6565, %v6566
    %v6568 = vrot.slane %v6202, 5
    %v6569 = vrot.slane %v6568, 4
    %v6570 = vrot.slane %v6203, 5
    %v6571 = vsel %vm1221, %v6569, %v6570
    %6588 = vst [vmem:[#allocation3 + $0x10] sm:$0xff] %v6511
    %6589 = vst [vmem:[#allocation3 + $0x58] sm:$0xff] %v6515
    %6590 = vst [vmem:[#allocation3 + $0xa0] sm:$0xff] %v6519
    %6591 = vst [vmem:[#allocation3 + $0xe8] sm:$0xff] %v6523
    %6592 = vst [vmem:[#allocation3 + $0x130] sm:$0xff] %v6527
    %6593 = vst [vmem:[#allocation3 + $0x178] sm:$0xff] %v6531
    %6594 = vst [vmem:[#allocation3 + $0x1c0] sm:$0xff] %v6535
    %6595 = vst [vmem:[#allocation3 + $0x208] sm:$0xff] %v6539
    %6596 = vst [vmem:[#allocation3 + $0x250] sm:$0xff] %v6543
    %6597 = vst [vmem:[#allocation3 + $0x298] sm:$0xff] %v6547
    %6598 = vst [vmem:[#allocation3 + $0x2e0] sm:$0xff] %v6551
    %6599 = vst [vmem:[#allocation3 + $0x328] sm:$0xff] %v6555
    %6600 = vst [vmem:[#allocation3 + $0x370] sm:$0xff] %v6559
    %6601 = vst [vmem:[#allocation3 + $0x3b8] sm:$0xff] %v6563
    %6602 = vst [vmem:[#allocation3 + $0x400] sm:$0xff] %v6567
    %6603 = vst [vmem:[#allocation3 + $0x448] sm:$0xff] %v6571
    %v6604 = vld [vmem:[%s778] sm:$0xff]
    %v6605 = vld [vmem:[%s778 + $0x8] sm:$0x11]
    %v6606 = vld [vmem:[%s778 + $0x10] sm:$0xff]
    %v6607 = vld [vmem:[%s778 + $0x18] sm:$0x11]
    %v6608 = vld [vmem:[%s778 + $0x20] sm:$0xff]
    %v6609 = vld [vmem:[%s778 + $0x28] sm:$0x11]
    %v6610 = vld [vmem:[%s778 + $0x30] sm:$0xff]
    %v6611 = vld [vmem:[%s778 + $0x38] sm:$0x11]
    %v6612 = vld [vmem:[%s778 + $0x40] sm:$0xff]
    %v6613 = vld [vmem:[%s778 + $0x48] sm:$0x11]
    %v6614 = vld [vmem:[%s778 + $0x50] sm:$0xff]
    %v6615 = vld [vmem:[%s778 + $0x58] sm:$0x11]
    %v6616 = vld [vmem:[%s778 + $0x60] sm:$0xff]
    %v6617 = vld [vmem:[%s778 + $0x68] sm:$0x11]
    %v6618 = vld [vmem:[%s778 + $0x70] sm:$0xff]
    %v6619 = vld [vmem:[%s778 + $0x78] sm:$0x11]
    %v6620 = vld [vmem:[%s778 + $0xa0] sm:$0xff]
    %v6621 = vld [vmem:[%s778 + $0xa8] sm:$0x11]
    %v6622 = vld [vmem:[%s778 + $0xb0] sm:$0xff]
    %v6623 = vld [vmem:[%s778 + $0xb8] sm:$0x11]
    %v6624 = vld [vmem:[%s778 + $0xc0] sm:$0xff]
    %v6625 = vld [vmem:[%s778 + $0xc8] sm:$0x11]
    %v6626 = vld [vmem:[%s778 + $0xd0] sm:$0xff]
    %v6627 = vld [vmem:[%s778 + $0xd8] sm:$0x11]
    %v6628 = vld [vmem:[%s778 + $0xe0] sm:$0xff]
    %v6629 = vld [vmem:[%s778 + $0xe8] sm:$0x11]
    %v6630 = vld [vmem:[%s778 + $0xf0] sm:$0xff]
    %v6631 = vld [vmem:[%s778 + $0xf8] sm:$0x11]
    %v6632 = vld [vmem:[%s778 + $0x100] sm:$0xff]
    %v6633 = vld [vmem:[%s778 + $0x108] sm:$0x11]
    %v6634 = vld [vmem:[%s778 + $0x110] sm:$0xff]
    %v6635 = vld [vmem:[%s778 + $0x118] sm:$0x11]
    %6636 = vst [vmem:[#allocation3 + $0x18] sm:$0xff] %v6604
    %6637 = vst [vmem:[#allocation3 + $0x60] sm:$0xff] %v6606
    %6638 = vst [vmem:[#allocation3 + $0xa8] sm:$0xff] %v6608
    %6639 = vst [vmem:[#allocation3 + $0xf0] sm:$0xff] %v6610
    %6640 = vst [vmem:[#allocation3 + $0x138] sm:$0xff] %v6612
    %6641 = vst [vmem:[#allocation3 + $0x180] sm:$0xff] %v6614
    %6642 = vst [vmem:[#allocation3 + $0x1c8] sm:$0xff] %v6616
    %6643 = vst [vmem:[#allocation3 + $0x210] sm:$0xff] %v6618
    %6644 = vst [vmem:[#allocation3 + $0x258] sm:$0xff] %v6620
    %6645 = vst [vmem:[#allocation3 + $0x2a0] sm:$0xff] %v6622
    %6646 = vst [vmem:[#allocation3 + $0x2e8] sm:$0xff] %v6624
    %6647 = vst [vmem:[#allocation3 + $0x330] sm:$0xff] %v6626
    %6648 = vst [vmem:[#allocation3 + $0x378] sm:$0xff] %v6628
    %6649 = vst [vmem:[#allocation3 + $0x3c0] sm:$0xff] %v6630
    %6650 = vst [vmem:[#allocation3 + $0x408] sm:$0xff] %v6632
    %6651 = vst [vmem:[#allocation3 + $0x450] sm:$0xff] %v6634
    %v6653 = vshrl.u32 %v6604, 16
    %v6655 = vrot.slane %v6653, 4
    %v6656 = vshll.u32 %v6604, 16
    %v6658 = vrot.slane %v6656, 5
    %v6659 = vor.u32 %v6655, %v6658
    %v6660 = vrot.slane %v6659, 4
    %v6662 = vshll.u32 %v6605, 16
    %v6664 = vrot.slane %v6662, 5
    %v6665 = vsel %vm930, %v6660, %v6664
    %v6667 = vshrl.u32 %v6606, 16
    %v6669 = vrot.slane %v6667, 4
    %v6670 = vshll.u32 %v6606, 16
    %v6672 = vrot.slane %v6670, 5
    %v6673 = vor.u32 %v6669, %v6672
    %v6674 = vrot.slane %v6673, 4
    %v6676 = vshll.u32 %v6607, 16
    %v6678 = vrot.slane %v6676, 5
    %v6679 = vsel %vm930, %v6674, %v6678
    %v6681 = vshrl.u32 %v6608, 16
    %v6683 = vrot.slane %v6681, 4
    %v6684 = vshll.u32 %v6608, 16
    %v6686 = vrot.slane %v6684, 5
    %v6687 = vor.u32 %v6683, %v6686
    %v6688 = vrot.slane %v6687, 4
    %v6690 = vshll.u32 %v6609, 16
    %v6692 = vrot.slane %v6690, 5
    %v6693 = vsel %vm930, %v6688, %v6692
    %v6695 = vshrl.u32 %v6610, 16
    %v6697 = vrot.slane %v6695, 4
    %v6698 = vshll.u32 %v6610, 16
    %v6700 = vrot.slane %v6698, 5
    %v6701 = vor.u32 %v6697, %v6700
    %v6702 = vrot.slane %v6701, 4
    %v6704 = vshll.u32 %v6611, 16
    %v6706 = vrot.slane %v6704, 5
    %v6707 = vsel %vm930, %v6702, %v6706
    %v6709 = vshrl.u32 %v6612, 16
    %v6711 = vrot.slane %v6709, 4
    %v6712 = vshll.u32 %v6612, 16
    %v6714 = vrot.slane %v6712, 5
    %v6715 = vor.u32 %v6711, %v6714
    %v6716 = vrot.slane %v6715, 4
    %v6718 = vshll.u32 %v6613, 16
    %v6720 = vrot.slane %v6718, 5
    %v6721 = vsel %vm930, %v6716, %v6720
    %v6723 = vshrl.u32 %v6614, 16
    %v6725 = vrot.slane %v6723, 4
    %v6726 = vshll.u32 %v6614, 16
    %v6728 = vrot.slane %v6726, 5
    %v6729 = vor.u32 %v6725, %v6728
    %v6730 = vrot.slane %v6729, 4
    %v6732 = vshll.u32 %v6615, 16
    %v6734 = vrot.slane %v6732, 5
    %v6735 = vsel %vm930, %v6730, %v6734
    %v6737 = vshrl.u32 %v6616, 16
    %v6739 = vrot.slane %v6737, 4
    %v6740 = vshll.u32 %v6616, 16
    %v6742 = vrot.slane %v6740, 5
    %v6743 = vor.u32 %v6739, %v6742
    %v6744 = vrot.slane %v6743, 4
    %v6746 = vshll.u32 %v6617, 16
    %v6748 = vrot.slane %v6746, 5
    %v6749 = vsel %vm930, %v6744, %v6748
    %v6751 = vshrl.u32 %v6618, 16
    %v6753 = vrot.slane %v6751, 4
    %v6754 = vshll.u32 %v6618, 16
    %v6756 = vrot.slane %v6754, 5
    %v6757 = vor.u32 %v6753, %v6756
    %v6758 = vrot.slane %v6757, 4
    %v6760 = vshll.u32 %v6619, 16
    %v6762 = vrot.slane %v6760, 5
    %v6763 = vsel %vm930, %v6758, %v6762
    %v6765 = vshrl.u32 %v6620, 16
    %v6767 = vrot.slane %v6765, 4
    %v6768 = vshll.u32 %v6620, 16
    %v6770 = vrot.slane %v6768, 5
    %v6771 = vor.u32 %v6767, %v6770
    %v6772 = vrot.slane %v6771, 4
    %v6774 = vshll.u32 %v6621, 16
    %v6776 = vrot.slane %v6774, 5
    %v6777 = vsel %vm930, %v6772, %v6776
    %v6779 = vshrl.u32 %v6622, 16
    %v6781 = vrot.slane %v6779, 4
    %v6782 = vshll.u32 %v6622, 16
    %v6784 = vrot.slane %v6782, 5
    %v6785 = vor.u32 %v6781, %v6784
    %v6786 = vrot.slane %v6785, 4
    %v6788 = vshll.u32 %v6623, 16
    %v6790 = vrot.slane %v6788, 5
    %v6791 = vsel %vm930, %v6786, %v6790
    %v6793 = vshrl.u32 %v6624, 16
    %v6795 = vrot.slane %v6793, 4
    %v6796 = vshll.u32 %v6624, 16
    %v6798 = vrot.slane %v6796, 5
    %v6799 = vor.u32 %v6795, %v6798
    %v6800 = vrot.slane %v6799, 4
    %v6802 = vshll.u32 %v6625, 16
    %v6804 = vrot.slane %v6802, 5
    %v6805 = vsel %vm930, %v6800, %v6804
    %v6807 = vshrl.u32 %v6626, 16
    %v6809 = vrot.slane %v6807, 4
    %v6810 = vshll.u32 %v6626, 16
    %v6812 = vrot.slane %v6810, 5
    %v6813 = vor.u32 %v6809, %v6812
    %v6814 = vrot.slane %v6813, 4
    %v6816 = vshll.u32 %v6627, 16
    %v6818 = vrot.slane %v6816, 5
    %v6819 = vsel %vm930, %v6814, %v6818
    %v6821 = vshrl.u32 %v6628, 16
    %v6823 = vrot.slane %v6821, 4
    %v6824 = vshll.u32 %v6628, 16
    %v6826 = vrot.slane %v6824, 5
    %v6827 = vor.u32 %v6823, %v6826
    %v6828 = vrot.slane %v6827, 4
    %v6830 = vshll.u32 %v6629, 16
    %v6832 = vrot.slane %v6830, 5
    %v6833 = vsel %vm930, %v6828, %v6832
    %v6835 = vshrl.u32 %v6630, 16
    %v6837 = vrot.slane %v6835, 4
    %v6838 = vshll.u32 %v6630, 16
    %v6840 = vrot.slane %v6838, 5
    %v6841 = vor.u32 %v6837, %v6840
    %v6842 = vrot.slane %v6841, 4
    %v6844 = vshll.u32 %v6631, 16
    %v6846 = vrot.slane %v6844, 5
    %v6847 = vsel %vm930, %v6842, %v6846
    %v6849 = vshrl.u32 %v6632, 16
    %v6851 = vrot.slane %v6849, 4
    %v6852 = vshll.u32 %v6632, 16
    %v6854 = vrot.slane %v6852, 5
    %v6855 = vor.u32 %v6851, %v6854
    %v6856 = vrot.slane %v6855, 4
    %v6858 = vshll.u32 %v6633, 16
    %v6860 = vrot.slane %v6858, 5
    %v6861 = vsel %vm930, %v6856, %v6860
    %v6863 = vshrl.u32 %v6634, 16
    %v6865 = vrot.slane %v6863, 4
    %v6866 = vshll.u32 %v6634, 16
    %v6868 = vrot.slane %v6866, 5
    %v6869 = vor.u32 %v6865, %v6868
    %v6870 = vrot.slane %v6869, 4
    %v6872 = vshll.u32 %v6635, 16
    %v6874 = vrot.slane %v6872, 5
    %v6875 = vsel %vm930, %v6870, %v6874
    %6892 = vst [vmem:[#allocation3 + $0x20] sm:$0xff] %v6665
    %6893 = vst [vmem:[#allocation3 + $0x68] sm:$0xff] %v6679
    %6894 = vst [vmem:[#allocation3 + $0xb0] sm:$0xff] %v6693
    %6895 = vst [vmem:[#allocation3 + $0xf8] sm:$0xff] %v6707
    %6896 = vst [vmem:[#allocation3 + $0x140] sm:$0xff] %v6721
    %6897 = vst [vmem:[#allocation3 + $0x188] sm:$0xff] %v6735
    %6898 = vst [vmem:[#allocation3 + $0x1d0] sm:$0xff] %v6749
    %6899 = vst [vmem:[#allocation3 + $0x218] sm:$0xff] %v6763
    %6900 = vst [vmem:[#allocation3 + $0x260] sm:$0xff] %v6777
    %6901 = vst [vmem:[#allocation3 + $0x2a8] sm:$0xff] %v6791
    %6902 = vst [vmem:[#allocation3 + $0x2f0] sm:$0xff] %v6805
    %6903 = vst [vmem:[#allocation3 + $0x338] sm:$0xff] %v6819
    %6904 = vst [vmem:[#allocation3 + $0x380] sm:$0xff] %v6833
    %6905 = vst [vmem:[#allocation3 + $0x3c8] sm:$0xff] %v6847
    %6906 = vst [vmem:[#allocation3 + $0x410] sm:$0xff] %v6861
    %6907 = vst [vmem:[#allocation3 + $0x458] sm:$0xff] %v6875
    %v6940 = vrot.slane %v6604, 5
    %v6941 = vrot.slane %v6940, 4
    %v6942 = vrot.slane %v6605, 5
    %v6943 = vsel %vm1221, %v6941, %v6942
    %v6944 = vrot.slane %v6606, 5
    %v6945 = vrot.slane %v6944, 4
    %v6946 = vrot.slane %v6607, 5
    %v6947 = vsel %vm1221, %v6945, %v6946
    %v6948 = vrot.slane %v6608, 5
    %v6949 = vrot.slane %v6948, 4
    %v6950 = vrot.slane %v6609, 5
    %v6951 = vsel %vm1221, %v6949, %v6950
    %v6952 = vrot.slane %v6610, 5
    %v6953 = vrot.slane %v6952, 4
    %v6954 = vrot.slane %v6611, 5
    %v6955 = vsel %vm1221, %v6953, %v6954
    %v6956 = vrot.slane %v6612, 5
    %v6957 = vrot.slane %v6956, 4
    %v6958 = vrot.slane %v6613, 5
    %v6959 = vsel %vm1221, %v6957, %v6958
    %v6960 = vrot.slane %v6614, 5
    %v6961 = vrot.slane %v6960, 4
    %v6962 = vrot.slane %v6615, 5
    %v6963 = vsel %vm1221, %v6961, %v6962
    %v6964 = vrot.slane %v6616, 5
    %v6965 = vrot.slane %v6964, 4
    %v6966 = vrot.slane %v6617, 5
    %v6967 = vsel %vm1221, %v6965, %v6966
    %v6968 = vrot.slane %v6618, 5
    %v6969 = vrot.slane %v6968, 4
    %v6970 = vrot.slane %v6619, 5
    %v6971 = vsel %vm1221, %v6969, %v6970
    %v6972 = vrot.slane %v6620, 5
    %v6973 = vrot.slane %v6972, 4
    %v6974 = vrot.slane %v6621, 5
    %v6975 = vsel %vm1221, %v6973, %v6974
    %v6976 = vrot.slane %v6622, 5
    %v6977 = vrot.slane %v6976, 4
    %v6978 = vrot.slane %v6623, 5
    %v6979 = vsel %vm1221, %v6977, %v6978
    %v6980 = vrot.slane %v6624, 5
    %v6981 = vrot.slane %v6980, 4
    %v6982 = vrot.slane %v6625, 5
    %v6983 = vsel %vm1221, %v6981, %v6982
    %v6984 = vrot.slane %v6626, 5
    %v6985 = vrot.slane %v6984, 4
    %v6986 = vrot.slane %v6627, 5
    %v6987 = vsel %vm1221, %v6985, %v6986
    %v6988 = vrot.slane %v6628, 5
    %v6989 = vrot.slane %v6988, 4
    %v6990 = vrot.slane %v6629, 5
    %v6991 = vsel %vm1221, %v6989, %v6990
    %v6992 = vrot.slane %v6630, 5
    %v6993 = vrot.slane %v6992, 4
    %v6994 = vrot.slane %v6631, 5
    %v6995 = vsel %vm1221, %v6993, %v6994
    %v6996 = vrot.slane %v6632, 5
    %v6997 = vrot.slane %v6996, 4
    %v6998 = vrot.slane %v6633, 5
    %v6999 = vsel %vm1221, %v6997, %v6998
    %v7000 = vrot.slane %v6634, 5
    %v7001 = vrot.slane %v7000, 4
    %v7002 = vrot.slane %v6635, 5
    %v7003 = vsel %vm1221, %v7001, %v7002
    %7020 = vst [vmem:[#allocation3 + $0x28] sm:$0xff] %v6943
    %7021 = vst [vmem:[#allocation3 + $0x70] sm:$0xff] %v6947
    %7022 = vst [vmem:[#allocation3 + $0xb8] sm:$0xff] %v6951
    %7023 = vst [vmem:[#allocation3 + $0x100] sm:$0xff] %v6955
    %7024 = vst [vmem:[#allocation3 + $0x148] sm:$0xff] %v6959
    %7025 = vst [vmem:[#allocation3 + $0x190] sm:$0xff] %v6963
    %7026 = vst [vmem:[#allocation3 + $0x1d8] sm:$0xff] %v6967
    %7027 = vst [vmem:[#allocation3 + $0x220] sm:$0xff] %v6971
    %7028 = vst [vmem:[#allocation3 + $0x268] sm:$0xff] %v6975
    %7029 = vst [vmem:[#allocation3 + $0x2b0] sm:$0xff] %v6979
    %7030 = vst [vmem:[#allocation3 + $0x2f8] sm:$0xff] %v6983
    %7031 = vst [vmem:[#allocation3 + $0x340] sm:$0xff] %v6987
    %7032 = vst [vmem:[#allocation3 + $0x388] sm:$0xff] %v6991
    %7033 = vst [vmem:[#allocation3 + $0x3d0] sm:$0xff] %v6995
    %7034 = vst [vmem:[#allocation3 + $0x418] sm:$0xff] %v6999
    %7035 = vst [vmem:[#allocation3 + $0x460] sm:$0xff] %v7003
    %v7036 = vld [vmem:[%s1750] sm:$0xff]
    %v7037 = vld [vmem:[%s1750 + $0x8] sm:$0x11]
    %v7038 = vld [vmem:[%s1750 + $0x10] sm:$0xff]
    %v7039 = vld [vmem:[%s1750 + $0x18] sm:$0x11]
    %v7040 = vld [vmem:[%s1750 + $0x20] sm:$0xff]
    %v7041 = vld [vmem:[%s1750 + $0x28] sm:$0x11]
    %v7042 = vld [vmem:[%s1750 + $0x30] sm:$0xff]
    %v7043 = vld [vmem:[%s1750 + $0x38] sm:$0x11]
    %v7044 = vld [vmem:[%s1750 + $0x40] sm:$0xff]
    %v7045 = vld [vmem:[%s1750 + $0x48] sm:$0x11]
    %v7046 = vld [vmem:[%s1750 + $0x50] sm:$0xff]
    %v7047 = vld [vmem:[%s1750 + $0x58] sm:$0x11]
    %v7048 = vld [vmem:[%s1750 + $0x60] sm:$0xff]
    %v7049 = vld [vmem:[%s1750 + $0x68] sm:$0x11]
    %v7050 = vld [vmem:[%s1750 + $0x70] sm:$0xff]
    %v7051 = vld [vmem:[%s1750 + $0x78] sm:$0x11]
    %v7052 = vld [vmem:[%s1750 + $0xa0] sm:$0xff]
    %v7053 = vld [vmem:[%s1750 + $0xa8] sm:$0x11]
    %v7054 = vld [vmem:[%s1750 + $0xb0] sm:$0xff]
    %v7055 = vld [vmem:[%s1750 + $0xb8] sm:$0x11]
    %v7056 = vld [vmem:[%s1750 + $0xc0] sm:$0xff]
    %v7057 = vld [vmem:[%s1750 + $0xc8] sm:$0x11]
    %v7058 = vld [vmem:[%s1750 + $0xd0] sm:$0xff]
    %v7059 = vld [vmem:[%s1750 + $0xd8] sm:$0x11]
    %v7060 = vld [vmem:[%s1750 + $0xe0] sm:$0xff]
    %v7061 = vld [vmem:[%s1750 + $0xe8] sm:$0x11]
    %v7062 = vld [vmem:[%s1750 + $0xf0] sm:$0xff]
    %v7063 = vld [vmem:[%s1750 + $0xf8] sm:$0x11]
    %v7064 = vld [vmem:[%s1750 + $0x100] sm:$0xff]
    %v7065 = vld [vmem:[%s1750 + $0x108] sm:$0x11]
    %v7066 = vld [vmem:[%s1750 + $0x110] sm:$0xff]
    %v7067 = vld [vmem:[%s1750 + $0x118] sm:$0x11]
    %7068 = vst [vmem:[#allocation3 + $0x30] sm:$0xff] %v7036
    %7069 = vst [vmem:[#allocation3 + $0x78] sm:$0xff] %v7038
    %7070 = vst [vmem:[#allocation3 + $0xc0] sm:$0xff] %v7040
    %7071 = vst [vmem:[#allocation3 + $0x108] sm:$0xff] %v7042
    %7072 = vst [vmem:[#allocation3 + $0x150] sm:$0xff] %v7044
    %7073 = vst [vmem:[#allocation3 + $0x198] sm:$0xff] %v7046
    %7074 = vst [vmem:[#allocation3 + $0x1e0] sm:$0xff] %v7048
    %7075 = vst [vmem:[#allocation3 + $0x228] sm:$0xff] %v7050
    %7076 = vst [vmem:[#allocation3 + $0x270] sm:$0xff] %v7052
    %7077 = vst [vmem:[#allocation3 + $0x2b8] sm:$0xff] %v7054
    %7078 = vst [vmem:[#allocation3 + $0x300] sm:$0xff] %v7056
    %7079 = vst [vmem:[#allocation3 + $0x348] sm:$0xff] %v7058
    %7080 = vst [vmem:[#allocation3 + $0x390] sm:$0xff] %v7060
    %7081 = vst [vmem:[#allocation3 + $0x3d8] sm:$0xff] %v7062
    %7082 = vst [vmem:[#allocation3 + $0x420] sm:$0xff] %v7064
    %7083 = vst [vmem:[#allocation3 + $0x468] sm:$0xff] %v7066
    %v7085 = vshrl.u32 %v7036, 16
    %v7087 = vrot.slane %v7085, 4
    %v7088 = vshll.u32 %v7036, 16
    %v7090 = vrot.slane %v7088, 5
    %v7091 = vor.u32 %v7087, %v7090
    %v7092 = vrot.slane %v7091, 4
    %v7094 = vshll.u32 %v7037, 16
    %v7096 = vrot.slane %v7094, 5
    %v7097 = vsel %vm930, %v7092, %v7096
    %v7099 = vshrl.u32 %v7038, 16
    %v7101 = vrot.slane %v7099, 4
    %v7102 = vshll.u32 %v7038, 16
    %v7104 = vrot.slane %v7102, 5
    %v7105 = vor.u32 %v7101, %v7104
    %v7106 = vrot.slane %v7105, 4
    %v7108 = vshll.u32 %v7039, 16
    %v7110 = vrot.slane %v7108, 5
    %v7111 = vsel %vm930, %v7106, %v7110
    %v7113 = vshrl.u32 %v7040, 16
    %v7115 = vrot.slane %v7113, 4
    %v7116 = vshll.u32 %v7040, 16
    %v7118 = vrot.slane %v7116, 5
    %v7119 = vor.u32 %v7115, %v7118
    %v7120 = vrot.slane %v7119, 4
    %v7122 = vshll.u32 %v7041, 16
    %v7124 = vrot.slane %v7122, 5
    %v7125 = vsel %vm930, %v7120, %v7124
    %v7127 = vshrl.u32 %v7042, 16
    %v7129 = vrot.slane %v7127, 4
    %v7130 = vshll.u32 %v7042, 16
    %v7132 = vrot.slane %v7130, 5
    %v7133 = vor.u32 %v7129, %v7132
    %v7134 = vrot.slane %v7133, 4
    %v7136 = vshll.u32 %v7043, 16
    %v7138 = vrot.slane %v7136, 5
    %v7139 = vsel %vm930, %v7134, %v7138
    %v7141 = vshrl.u32 %v7044, 16
    %v7143 = vrot.slane %v7141, 4
    %v7144 = vshll.u32 %v7044, 16
    %v7146 = vrot.slane %v7144, 5
    %v7147 = vor.u32 %v7143, %v7146
    %v7148 = vrot.slane %v7147, 4
    %v7150 = vshll.u32 %v7045, 16
    %v7152 = vrot.slane %v7150, 5
    %v7153 = vsel %vm930, %v7148, %v7152
    %v7155 = vshrl.u32 %v7046, 16
    %v7157 = vrot.slane %v7155, 4
    %v7158 = vshll.u32 %v7046, 16
    %v7160 = vrot.slane %v7158, 5
    %v7161 = vor.u32 %v7157, %v7160
    %v7162 = vrot.slane %v7161, 4
    %v7164 = vshll.u32 %v7047, 16
    %v7166 = vrot.slane %v7164, 5
    %v7167 = vsel %vm930, %v7162, %v7166
    %v7169 = vshrl.u32 %v7048, 16
    %v7171 = vrot.slane %v7169, 4
    %v7172 = vshll.u32 %v7048, 16
    %v7174 = vrot.slane %v7172, 5
    %v7175 = vor.u32 %v7171, %v7174
    %v7176 = vrot.slane %v7175, 4
    %v7178 = vshll.u32 %v7049, 16
    %v7180 = vrot.slane %v7178, 5
    %v7181 = vsel %vm930, %v7176, %v7180
    %v7183 = vshrl.u32 %v7050, 16
    %v7185 = vrot.slane %v7183, 4
    %v7186 = vshll.u32 %v7050, 16
    %v7188 = vrot.slane %v7186, 5
    %v7189 = vor.u32 %v7185, %v7188
    %v7190 = vrot.slane %v7189, 4
    %v7192 = vshll.u32 %v7051, 16
    %v7194 = vrot.slane %v7192, 5
    %v7195 = vsel %vm930, %v7190, %v7194
    %v7197 = vshrl.u32 %v7052, 16
    %v7199 = vrot.slane %v7197, 4
    %v7200 = vshll.u32 %v7052, 16
    %v7202 = vrot.slane %v7200, 5
    %v7203 = vor.u32 %v7199, %v7202
    %v7204 = vrot.slane %v7203, 4
    %v7206 = vshll.u32 %v7053, 16
    %v7208 = vrot.slane %v7206, 5
    %v7209 = vsel %vm930, %v7204, %v7208
    %v7211 = vshrl.u32 %v7054, 16
    %v7213 = vrot.slane %v7211, 4
    %v7214 = vshll.u32 %v7054, 16
    %v7216 = vrot.slane %v7214, 5
    %v7217 = vor.u32 %v7213, %v7216
    %v7218 = vrot.slane %v7217, 4
    %v7220 = vshll.u32 %v7055, 16
    %v7222 = vrot.slane %v7220, 5
    %v7223 = vsel %vm930, %v7218, %v7222
    %v7225 = vshrl.u32 %v7056, 16
    %v7227 = vrot.slane %v7225, 4
    %v7228 = vshll.u32 %v7056, 16
    %v7230 = vrot.slane %v7228, 5
    %v7231 = vor.u32 %v7227, %v7230
    %v7232 = vrot.slane %v7231, 4
    %v7234 = vshll.u32 %v7057, 16
    %v7236 = vrot.slane %v7234, 5
    %v7237 = vsel %vm930, %v7232, %v7236
    %v7239 = vshrl.u32 %v7058, 16
    %v7241 = vrot.slane %v7239, 4
    %v7242 = vshll.u32 %v7058, 16
    %v7244 = vrot.slane %v7242, 5
    %v7245 = vor.u32 %v7241, %v7244
    %v7246 = vrot.slane %v7245, 4
    %v7248 = vshll.u32 %v7059, 16
    %v7250 = vrot.slane %v7248, 5
    %v7251 = vsel %vm930, %v7246, %v7250
    %v7253 = vshrl.u32 %v7060, 16
    %v7255 = vrot.slane %v7253, 4
    %v7256 = vshll.u32 %v7060, 16
    %v7258 = vrot.slane %v7256, 5
    %v7259 = vor.u32 %v7255, %v7258
    %v7260 = vrot.slane %v7259, 4
    %v7262 = vshll.u32 %v7061, 16
    %v7264 = vrot.slane %v7262, 5
    %v7265 = vsel %vm930, %v7260, %v7264
    %v7267 = vshrl.u32 %v7062, 16
    %v7269 = vrot.slane %v7267, 4
    %v7270 = vshll.u32 %v7062, 16
    %v7272 = vrot.slane %v7270, 5
    %v7273 = vor.u32 %v7269, %v7272
    %v7274 = vrot.slane %v7273, 4
    %v7276 = vshll.u32 %v7063, 16
    %v7278 = vrot.slane %v7276, 5
    %v7279 = vsel %vm930, %v7274, %v7278
    %v7281 = vshrl.u32 %v7064, 16
    %v7283 = vrot.slane %v7281, 4
    %v7284 = vshll.u32 %v7064, 16
    %v7286 = vrot.slane %v7284, 5
    %v7287 = vor.u32 %v7283, %v7286
    %v7288 = vrot.slane %v7287, 4
    %v7290 = vshll.u32 %v7065, 16
    %v7292 = vrot.slane %v7290, 5
    %v7293 = vsel %vm930, %v7288, %v7292
    %v7295 = vshrl.u32 %v7066, 16
    %v7297 = vrot.slane %v7295, 4
    %v7298 = vshll.u32 %v7066, 16
    %v7300 = vrot.slane %v7298, 5
    %v7301 = vor.u32 %v7297, %v7300
    %v7302 = vrot.slane %v7301, 4
    %v7304 = vshll.u32 %v7067, 16
    %v7306 = vrot.slane %v7304, 5
    %v7307 = vsel %vm930, %v7302, %v7306
    %7324 = vst [vmem:[#allocation3 + $0x38] sm:$0xff] %v7097
    %7325 = vst [vmem:[#allocation3 + $0x80] sm:$0xff] %v7111
    %7326 = vst [vmem:[#allocation3 + $0xc8] sm:$0xff] %v7125
    %7327 = vst [vmem:[#allocation3 + $0x110] sm:$0xff] %v7139
    %7328 = vst [vmem:[#allocation3 + $0x158] sm:$0xff] %v7153
    %7329 = vst [vmem:[#allocation3 + $0x1a0] sm:$0xff] %v7167
    %7330 = vst [vmem:[#allocation3 + $0x1e8] sm:$0xff] %v7181
    %7331 = vst [vmem:[#allocation3 + $0x230] sm:$0xff] %v7195
    %7332 = vst [vmem:[#allocation3 + $0x278] sm:$0xff] %v7209
    %7333 = vst [vmem:[#allocation3 + $0x2c0] sm:$0xff] %v7223
    %7334 = vst [vmem:[#allocation3 + $0x308] sm:$0xff] %v7237
    %7335 = vst [vmem:[#allocation3 + $0x350] sm:$0xff] %v7251
    %7336 = vst [vmem:[#allocation3 + $0x398] sm:$0xff] %v7265
    %7337 = vst [vmem:[#allocation3 + $0x3e0] sm:$0xff] %v7279
    %7338 = vst [vmem:[#allocation3 + $0x428] sm:$0xff] %v7293
    %7339 = vst [vmem:[#allocation3 + $0x470] sm:$0xff] %v7307
    %v7372 = vrot.slane %v7036, 5
    %v7373 = vrot.slane %v7372, 4
    %v7374 = vrot.slane %v7037, 5
    %v7375 = vsel %vm1221, %v7373, %v7374
    %v7376 = vrot.slane %v7038, 5
    %v7377 = vrot.slane %v7376, 4
    %v7378 = vrot.slane %v7039, 5
    %v7379 = vsel %vm1221, %v7377, %v7378
    %v7380 = vrot.slane %v7040, 5
    %v7381 = vrot.slane %v7380, 4
    %v7382 = vrot.slane %v7041, 5
    %v7383 = vsel %vm1221, %v7381, %v7382
    %v7384 = vrot.slane %v7042, 5
    %v7385 = vrot.slane %v7384, 4
    %v7386 = vrot.slane %v7043, 5
    %v7387 = vsel %vm1221, %v7385, %v7386
    %v7388 = vrot.slane %v7044, 5
    %v7389 = vrot.slane %v7388, 4
    %v7390 = vrot.slane %v7045, 5
    %v7391 = vsel %vm1221, %v7389, %v7390
    %v7392 = vrot.slane %v7046, 5
    %v7393 = vrot.slane %v7392, 4
    %v7394 = vrot.slane %v7047, 5
    %v7395 = vsel %vm1221, %v7393, %v7394
    %v7396 = vrot.slane %v7048, 5
    %v7397 = vrot.slane %v7396, 4
    %v7398 = vrot.slane %v7049, 5
    %v7399 = vsel %vm1221, %v7397, %v7398
    %v7400 = vrot.slane %v7050, 5
    %v7401 = vrot.slane %v7400, 4
    %v7402 = vrot.slane %v7051, 5
    %v7403 = vsel %vm1221, %v7401, %v7402
    %v7404 = vrot.slane %v7052, 5
    %v7405 = vrot.slane %v7404, 4
    %v7406 = vrot.slane %v7053, 5
    %v7407 = vsel %vm1221, %v7405, %v7406
    %v7408 = vrot.slane %v7054, 5
    %v7409 = vrot.slane %v7408, 4
    %v7410 = vrot.slane %v7055, 5
    %v7411 = vsel %vm1221, %v7409, %v7410
    %v7412 = vrot.slane %v7056, 5
    %v7413 = vrot.slane %v7412, 4
    %v7414 = vrot.slane %v7057, 5
    %v7415 = vsel %vm1221, %v7413, %v7414
    %v7416 = vrot.slane %v7058, 5
    %v7417 = vrot.slane %v7416, 4
    %v7418 = vrot.slane %v7059, 5
    %v7419 = vsel %vm1221, %v7417, %v7418
    %v7420 = vrot.slane %v7060, 5
    %v7421 = vrot.slane %v7420, 4
    %v7422 = vrot.slane %v7061, 5
    %v7423 = vsel %vm1221, %v7421, %v7422
    %v7424 = vrot.slane %v7062, 5
    %v7425 = vrot.slane %v7424, 4
    %v7426 = vrot.slane %v7063, 5
    %v7427 = vsel %vm1221, %v7425, %v7426
    %v7428 = vrot.slane %v7064, 5
    %v7429 = vrot.slane %v7428, 4
    %v7430 = vrot.slane %v7065, 5
    %v7431 = vsel %vm1221, %v7429, %v7430
    %v7432 = vrot.slane %v7066, 5
    %v7433 = vrot.slane %v7432, 4
    %v7434 = vrot.slane %v7067, 5
    %v7435 = vsel %vm1221, %v7433, %v7434
    %7452 = vst [vmem:[#allocation3 + $0x40] sm:$0xff] %v7375
    %7453 = vst [vmem:[#allocation3 + $0x88] sm:$0xff] %v7379
    %7454 = vst [vmem:[#allocation3 + $0xd0] sm:$0xff] %v7383
    %7455 = vst [vmem:[#allocation3 + $0x118] sm:$0xff] %v7387
    %7456 = vst [vmem:[#allocation3 + $0x160] sm:$0xff] %v7391
    %7457 = vst [vmem:[#allocation3 + $0x1a8] sm:$0xff] %v7395
    %7458 = vst [vmem:[#allocation3 + $0x1f0] sm:$0xff] %v7399
    %7459 = vst [vmem:[#allocation3 + $0x238] sm:$0xff] %v7403
    %7460 = vst [vmem:[#allocation3 + $0x280] sm:$0xff] %v7407
    %7461 = vst [vmem:[#allocation3 + $0x2c8] sm:$0xff] %v7411
    %7462 = vst [vmem:[#allocation3 + $0x310] sm:$0xff] %v7415
    %7463 = vst [vmem:[#allocation3 + $0x358] sm:$0xff] %v7419
    %7464 = vst [vmem:[#allocation3 + $0x3a0] sm:$0xff] %v7423
    %7465 = vst [vmem:[#allocation3 + $0x3e8] sm:$0xff] %v7427
    %7466 = vst [vmem:[#allocation3 + $0x430] sm:$0xff] %v7431
    %7467 = vst [vmem:[#allocation3 + $0x478] sm:$0xff] %v7435
    %v7468 = vld [vmem:[#allocation3] sm:$0xff]
    %v7469 = vld [vmem:[#allocation3 + $0x8] sm:$0xff]
    %v7470 = vld [vmem:[#allocation3 + $0x10] sm:$0xff]
    %v7471 = vld [vmem:[#allocation3 + $0x18] sm:$0xff]
    %v7472 = vld [vmem:[#allocation3 + $0x20] sm:$0xff]
    %v7473 = vld [vmem:[#allocation3 + $0x28] sm:$0xff]
    %v7474 = vld [vmem:[#allocation3 + $0x30] sm:$0xff]
    %v7475 = vld [vmem:[#allocation3 + $0x38] sm:$0xff]
    %v7476 = vld [vmem:[#allocation3 + $0x40] sm:$0xff]
    %v7477 = vld [vmem:[#allocation3 + $0x48] sm:$0xff]
    %v7478 = vld [vmem:[#allocation3 + $0x50] sm:$0xff]
    %v7479 = vld [vmem:[#allocation3 + $0x58] sm:$0xff]
    %v7480 = vld [vmem:[#allocation3 + $0x60] sm:$0xff]
    %v7481 = vld [vmem:[#allocation3 + $0x68] sm:$0xff]
    %v7482 = vld [vmem:[#allocation3 + $0x70] sm:$0xff]
    %v7483 = vld [vmem:[#allocation3 + $0x78] sm:$0xff]
    %v7484 = vld [vmem:[#allocation3 + $0x80] sm:$0xff]
    %v7485 = vld [vmem:[#allocation3 + $0x88] sm:$0xff]
    %v7486 = vld [vmem:[#allocation3 + $0x90] sm:$0xff]
    %v7487 = vld [vmem:[#allocation3 + $0x98] sm:$0xff]
    %v7488 = vld [vmem:[#allocation3 + $0xa0] sm:$0xff]
    %v7489 = vld [vmem:[#allocation3 + $0xa8] sm:$0xff]
    %v7490 = vld [vmem:[#allocation3 + $0xb0] sm:$0xff]
    %v7491 = vld [vmem:[#allocation3 + $0xb8] sm:$0xff]
    %v7492 = vld [vmem:[#allocation3 + $0xc0] sm:$0xff]
    %v7493 = vld [vmem:[#allocation3 + $0xc8] sm:$0xff]
    %v7494 = vld [vmem:[#allocation3 + $0xd0] sm:$0xff]
    %v7495 = vld [vmem:[#allocation3 + $0xd8] sm:$0xff]
    %v7496 = vld [vmem:[#allocation3 + $0xe0] sm:$0xff]
    %v7497 = vld [vmem:[#allocation3 + $0xe8] sm:$0xff]
    %v7498 = vld [vmem:[#allocation3 + $0xf0] sm:$0xff]
    %v7499 = vld [vmem:[#allocation3 + $0xf8] sm:$0xff]
    %v7500 = vld [vmem:[#allocation3 + $0x100] sm:$0xff]
    %v7501 = vld [vmem:[#allocation3 + $0x108] sm:$0xff]
    %v7502 = vld [vmem:[#allocation3 + $0x110] sm:$0xff]
    %v7503 = vld [vmem:[#allocation3 + $0x118] sm:$0xff]
    %v7504 = vld [vmem:[#allocation3 + $0x120] sm:$0xff]
    %v7505 = vld [vmem:[#allocation3 + $0x128] sm:$0xff]
    %v7506 = vld [vmem:[#allocation3 + $0x130] sm:$0xff]
    %v7507 = vld [vmem:[#allocation3 + $0x138] sm:$0xff]
    %v7508 = vld [vmem:[#allocation3 + $0x140] sm:$0xff]
    %v7509 = vld [vmem:[#allocation3 + $0x148] sm:$0xff]
    %v7510 = vld [vmem:[#allocation3 + $0x150] sm:$0xff]
    %v7511 = vld [vmem:[#allocation3 + $0x158] sm:$0xff]
    %v7512 = vld [vmem:[#allocation3 + $0x160] sm:$0xff]
    %v7513 = vld [vmem:[#allocation3 + $0x168] sm:$0xff]
    %v7514 = vld [vmem:[#allocation3 + $0x170] sm:$0xff]
    %v7515 = vld [vmem:[#allocation3 + $0x178] sm:$0xff]
    %v7516 = vld [vmem:[#allocation3 + $0x180] sm:$0xff]
    %v7517 = vld [vmem:[#allocation3 + $0x188] sm:$0xff]
    %v7518 = vld [vmem:[#allocation3 + $0x190] sm:$0xff]
    %v7519 = vld [vmem:[#allocation3 + $0x198] sm:$0xff]
    %v7520 = vld [vmem:[#allocation3 + $0x1a0] sm:$0xff]
    %v7521 = vld [vmem:[#allocation3 + $0x1a8] sm:$0xff]
    %v7522 = vld [vmem:[#allocation3 + $0x1b0] sm:$0xff]
    %v7523 = vld [vmem:[#allocation3 + $0x1b8] sm:$0xff]
    %v7524 = vld [vmem:[#allocation3 + $0x1c0] sm:$0xff]
    %v7525 = vld [vmem:[#allocation3 + $0x1c8] sm:$0xff]
    %v7526 = vld [vmem:[#allocation3 + $0x1d0] sm:$0xff]
    %v7527 = vld [vmem:[#allocation3 + $0x1d8] sm:$0xff]
    %v7528 = vld [vmem:[#allocation3 + $0x1e0] sm:$0xff]
    %v7529 = vld [vmem:[#allocation3 + $0x1e8] sm:$0xff]
    %v7530 = vld [vmem:[#allocation3 + $0x1f0] sm:$0xff]
    %v7531 = vld [vmem:[#allocation3 + $0x1f8] sm:$0xff]
    %v7532 = vld [vmem:[#allocation3 + $0x200] sm:$0xff]
    %v7533 = vld [vmem:[#allocation3 + $0x208] sm:$0xff]
    %v7534 = vld [vmem:[#allocation3 + $0x210] sm:$0xff]
    %v7535 = vld [vmem:[#allocation3 + $0x218] sm:$0xff]
    %v7536 = vld [vmem:[#allocation3 + $0x220] sm:$0xff]
    %v7537 = vld [vmem:[#allocation3 + $0x228] sm:$0xff]
    %v7538 = vld [vmem:[#allocation3 + $0x230] sm:$0xff]
    %v7539 = vld [vmem:[#allocation3 + $0x238] sm:$0xff]
    %v7540 = vld [vmem:[#allocation3 + $0x240] sm:$0xff]
    %v7541 = vld [vmem:[#allocation3 + $0x248] sm:$0xff]
    %v7542 = vld [vmem:[#allocation3 + $0x250] sm:$0xff]
    %v7543 = vld [vmem:[#allocation3 + $0x258] sm:$0xff]
    %v7544 = vld [vmem:[#allocation3 + $0x260] sm:$0xff]
    %v7545 = vld [vmem:[#allocation3 + $0x268] sm:$0xff]
    %v7546 = vld [vmem:[#allocation3 + $0x270] sm:$0xff]
    %v7547 = vld [vmem:[#allocation3 + $0x278] sm:$0xff]
    %v7548 = vld [vmem:[#allocation3 + $0x280] sm:$0xff]
    %v7549 = vld [vmem:[#allocation3 + $0x288] sm:$0xff]
    %v7550 = vld [vmem:[#allocation3 + $0x290] sm:$0xff]
    %v7551 = vld [vmem:[#allocation3 + $0x298] sm:$0xff]
    %v7552 = vld [vmem:[#allocation3 + $0x2a0] sm:$0xff]
    %v7553 = vld [vmem:[#allocation3 + $0x2a8] sm:$0xff]
    %v7554 = vld [vmem:[#allocation3 + $0x2b0] sm:$0xff]
    %v7555 = vld [vmem:[#allocation3 + $0x2b8] sm:$0xff]
    %v7556 = vld [vmem:[#allocation3 + $0x2c0] sm:$0xff]
    %v7557 = vld [vmem:[#allocation3 + $0x2c8] sm:$0xff]
    %v7558 = vld [vmem:[#allocation3 + $0x2d0] sm:$0xff]
    %v7559 = vld [vmem:[#allocation3 + $0x2d8] sm:$0xff]
    %v7560 = vld [vmem:[#allocation3 + $0x2e0] sm:$0xff]
    %v7561 = vld [vmem:[#allocation3 + $0x2e8] sm:$0xff]
    %v7562 = vld [vmem:[#allocation3 + $0x2f0] sm:$0xff]
    %v7563 = vld [vmem:[#allocation3 + $0x2f8] sm:$0xff]
    %v7564 = vld [vmem:[#allocation3 + $0x300] sm:$0xff]
    %v7565 = vld [vmem:[#allocation3 + $0x308] sm:$0xff]
    %v7566 = vld [vmem:[#allocation3 + $0x310] sm:$0xff]
    %v7567 = vld [vmem:[#allocation3 + $0x318] sm:$0xff]
    %v7568 = vld [vmem:[#allocation3 + $0x320] sm:$0xff]
    %v7569 = vld [vmem:[#allocation3 + $0x328] sm:$0xff]
    %v7570 = vld [vmem:[#allocation3 + $0x330] sm:$0xff]
    %v7571 = vld [vmem:[#allocation3 + $0x338] sm:$0xff]
    %v7572 = vld [vmem:[#allocation3 + $0x340] sm:$0xff]
    %v7573 = vld [vmem:[#allocation3 + $0x348] sm:$0xff]
    %v7574 = vld [vmem:[#allocation3 + $0x350] sm:$0xff]
    %v7575 = vld [vmem:[#allocation3 + $0x358] sm:$0xff]
    %v7576 = vld [vmem:[#allocation3 + $0x360] sm:$0xff]
    %v7577 = vld [vmem:[#allocation3 + $0x368] sm:$0xff]
    %v7578 = vld [vmem:[#allocation3 + $0x370] sm:$0xff]
    %v7579 = vld [vmem:[#allocation3 + $0x378] sm:$0xff]
    %v7580 = vld [vmem:[#allocation3 + $0x380] sm:$0xff]
    %v7581 = vld [vmem:[#allocation3 + $0x388] sm:$0xff]
    %v7582 = vld [vmem:[#allocation3 + $0x390] sm:$0xff]
    %v7583 = vld [vmem:[#allocation3 + $0x398] sm:$0xff]
    %v7584 = vld [vmem:[#allocation3 + $0x3a0] sm:$0xff]
    %v7585 = vld [vmem:[#allocation3 + $0x3a8] sm:$0xff]
    %v7586 = vld [vmem:[#allocation3 + $0x3b0] sm:$0xff]
    %v7587 = vld [vmem:[#allocation3 + $0x3b8] sm:$0xff]
    %v7588 = vld [vmem:[#allocation3 + $0x3c0] sm:$0xff]
    %v7589 = vld [vmem:[#allocation3 + $0x3c8] sm:$0xff]
    %v7590 = vld [vmem:[#allocation3 + $0x3d0] sm:$0xff]
    %v7591 = vld [vmem:[#allocation3 + $0x3d8] sm:$0xff]
    %v7592 = vld [vmem:[#allocation3 + $0x3e0] sm:$0xff]
    %v7593 = vld [vmem:[#allocation3 + $0x3e8] sm:$0xff]
    %v7594 = vld [vmem:[#allocation3 + $0x3f0] sm:$0xff]
    %v7595 = vld [vmem:[#allocation3 + $0x3f8] sm:$0xff]
    %v7596 = vld [vmem:[#allocation3 + $0x400] sm:$0xff]
    %v7597 = vld [vmem:[#allocation3 + $0x408] sm:$0xff]
    %v7598 = vld [vmem:[#allocation3 + $0x410] sm:$0xff]
    %v7599 = vld [vmem:[#allocation3 + $0x418] sm:$0xff]
    %v7600 = vld [vmem:[#allocation3 + $0x420] sm:$0xff]
    %v7601 = vld [vmem:[#allocation3 + $0x428] sm:$0xff]
    %v7602 = vld [vmem:[#allocation3 + $0x430] sm:$0xff]
    %v7603 = vld [vmem:[#allocation3 + $0x438] sm:$0xff]
    %v7604 = vld [vmem:[#allocation3 + $0x440] sm:$0xff]
    %v7605 = vld [vmem:[#allocation3 + $0x448] sm:$0xff]
    %v7606 = vld [vmem:[#allocation3 + $0x450] sm:$0xff]
    %v7607 = vld [vmem:[#allocation3 + $0x458] sm:$0xff]
    %v7608 = vld [vmem:[#allocation3 + $0x460] sm:$0xff]
    %v7609 = vld [vmem:[#allocation3 + $0x468] sm:$0xff]
    %v7610 = vld [vmem:[#allocation3 + $0x470] sm:$0xff]
    %v7611 = vld [vmem:[#allocation3 + $0x478] sm:$0xff]
    %v7612 = vld [vmem:[#allocation13] sm:$0xff]
    %v7613 = vld [vmem:[#allocation13 + $0x8] sm:$0xff]
    %v7614 = vld [vmem:[#allocation13 + $0x10] sm:$0xff]
    %v7615 = vld [vmem:[#allocation13 + $0x18] sm:$0xff]
    %v7616 = vld [vmem:[#allocation13 + $0x20] sm:$0xff]
    %v7617 = vld [vmem:[#allocation13 + $0x28] sm:$0xff]
    %v7618 = vld [vmem:[#allocation13 + $0x30] sm:$0xff]
    %v7619 = vld [vmem:[#allocation13 + $0x38] sm:$0xff]
    %v7620 = vld [vmem:[#allocation13 + $0x40] sm:$0xff]
    %v7621 = vld [vmem:[#allocation13 + $0x48] sm:$0xff]
    %v7622 = vld [vmem:[#allocation13 + $0x50] sm:$0xff]
    %v7623 = vld [vmem:[#allocation13 + $0x58] sm:$0xff]
    %v7624 = vld [vmem:[#allocation13 + $0x60] sm:$0xff]
    %v7625 = vld [vmem:[#allocation13 + $0x68] sm:$0xff]
    %v7626 = vld [vmem:[#allocation13 + $0x70] sm:$0xff]
    %v7627 = vld [vmem:[#allocation13 + $0x78] sm:$0xff]
    %v7628 = vld [vmem:[#allocation13 + $0x80] sm:$0xff]
    %v7629 = vld [vmem:[#allocation13 + $0x88] sm:$0xff]
    %v7630 = vld [vmem:[#allocation13 + $0x90] sm:$0xff]
    %v7631 = vld [vmem:[#allocation13 + $0x98] sm:$0xff]
    %v7632 = vld [vmem:[#allocation13 + $0xa0] sm:$0xff]
    %v7633 = vld [vmem:[#allocation13 + $0xa8] sm:$0xff]
    %v7634 = vld [vmem:[#allocation13 + $0xb0] sm:$0xff]
    %v7635 = vld [vmem:[#allocation13 + $0xb8] sm:$0xff]
    %v7636 = vld [vmem:[#allocation13 + $0xc0] sm:$0xff]
    %v7637 = vld [vmem:[#allocation13 + $0xc8] sm:$0xff]
    %v7638 = vld [vmem:[#allocation13 + $0xd0] sm:$0xff]
    %v7639 = vld [vmem:[#allocation13 + $0xd8] sm:$0xff]
    %v7640 = vld [vmem:[#allocation13 + $0xe0] sm:$0xff]
    %v7641 = vld [vmem:[#allocation13 + $0xe8] sm:$0xff]
    %v7642 = vld [vmem:[#allocation13 + $0xf0] sm:$0xff]
    %v7643 = vld [vmem:[#allocation13 + $0xf8] sm:$0xff]
    %v7644 = vld [vmem:[#allocation13 + $0x100] sm:$0xff]
    %v7645 = vld [vmem:[#allocation13 + $0x108] sm:$0xff]
    %v7646 = vld [vmem:[#allocation13 + $0x110] sm:$0xff]
    %v7647 = vld [vmem:[#allocation13 + $0x118] sm:$0xff]
    %v7648 = vld [vmem:[#allocation13 + $0x120] sm:$0xff]
    %v7649 = vld [vmem:[#allocation13 + $0x128] sm:$0xff]
    %v7650 = vld [vmem:[#allocation13 + $0x130] sm:$0xff]
    %v7651 = vld [vmem:[#allocation13 + $0x138] sm:$0xff]
    %v7652 = vld [vmem:[#allocation13 + $0x140] sm:$0xff]
    %v7653 = vld [vmem:[#allocation13 + $0x148] sm:$0xff]
    %v7654 = vld [vmem:[#allocation13 + $0x150] sm:$0xff]
    %v7655 = vld [vmem:[#allocation13 + $0x158] sm:$0xff]
    %v7656 = vld [vmem:[#allocation13 + $0x160] sm:$0xff]
    %v7657 = vld [vmem:[#allocation13 + $0x168] sm:$0xff]
    %v7658 = vld [vmem:[#allocation13 + $0x170] sm:$0xff]
    %v7659 = vld [vmem:[#allocation13 + $0x178] sm:$0xff]
    %v7660 = vld [vmem:[#allocation13 + $0x180] sm:$0xff]
    %v7661 = vld [vmem:[#allocation13 + $0x188] sm:$0xff]
    %v7662 = vld [vmem:[#allocation13 + $0x190] sm:$0xff]
    %v7663 = vld [vmem:[#allocation13 + $0x198] sm:$0xff]
    %v7664 = vld [vmem:[#allocation13 + $0x1a0] sm:$0xff]
    %v7665 = vld [vmem:[#allocation13 + $0x1a8] sm:$0xff]
    %v7666 = vld [vmem:[#allocation13 + $0x1b0] sm:$0xff]
    %v7667 = vld [vmem:[#allocation13 + $0x1b8] sm:$0xff]
    %v7668 = vld [vmem:[#allocation13 + $0x1c0] sm:$0xff]
    %v7669 = vld [vmem:[#allocation13 + $0x1c8] sm:$0xff]
    %v7670 = vld [vmem:[#allocation13 + $0x1d0] sm:$0xff]
    %v7671 = vld [vmem:[#allocation13 + $0x1d8] sm:$0xff]
    %v7672 = vld [vmem:[#allocation13 + $0x1e0] sm:$0xff]
    %v7673 = vld [vmem:[#allocation13 + $0x1e8] sm:$0xff]
    %v7674 = vld [vmem:[#allocation13 + $0x1f0] sm:$0xff]
    %v7675 = vld [vmem:[#allocation13 + $0x1f8] sm:$0xff]
    %v7676 = vld [vmem:[#allocation13 + $0x200] sm:$0xff]
    %v7677 = vld [vmem:[#allocation13 + $0x208] sm:$0xff]
    %v7678 = vld [vmem:[#allocation13 + $0x210] sm:$0xff]
    %v7679 = vld [vmem:[#allocation13 + $0x218] sm:$0xff]
    %v7680 = vld [vmem:[#allocation13 + $0x220] sm:$0xff]
    %v7681 = vld [vmem:[#allocation13 + $0x228] sm:$0xff]
    %v7682 = vld [vmem:[#allocation13 + $0x230] sm:$0xff]
    %v7683 = vld [vmem:[#allocation13 + $0x238] sm:$0xff]
    %v7684 = vld [vmem:[#allocation13 + $0x240] sm:$0xff]
    %v7685 = vld [vmem:[#allocation13 + $0x248] sm:$0xff]
    %v7686 = vld [vmem:[#allocation13 + $0x250] sm:$0xff]
    %v7687 = vld [vmem:[#allocation13 + $0x258] sm:$0xff]
    %v7688 = vld [vmem:[#allocation13 + $0x260] sm:$0xff]
    %v7689 = vld [vmem:[#allocation13 + $0x268] sm:$0xff]
    %v7690 = vld [vmem:[#allocation13 + $0x270] sm:$0xff]
    %v7691 = vld [vmem:[#allocation13 + $0x278] sm:$0xff]
    %v7692 = vld [vmem:[#allocation13 + $0x280] sm:$0xff]
    %v7693 = vld [vmem:[#allocation13 + $0x288] sm:$0xff]
    %v7694 = vld [vmem:[#allocation13 + $0x290] sm:$0xff]
    %v7695 = vld [vmem:[#allocation13 + $0x298] sm:$0xff]
    %v7696 = vld [vmem:[#allocation13 + $0x2a0] sm:$0xff]
    %v7697 = vld [vmem:[#allocation13 + $0x2a8] sm:$0xff]
    %v7698 = vld [vmem:[#allocation13 + $0x2b0] sm:$0xff]
    %v7699 = vld [vmem:[#allocation13 + $0x2b8] sm:$0xff]
    %v7700 = vld [vmem:[#allocation13 + $0x2c0] sm:$0xff]
    %v7701 = vld [vmem:[#allocation13 + $0x2c8] sm:$0xff]
    %v7702 = vld [vmem:[#allocation13 + $0x2d0] sm:$0xff]
    %v7703 = vld [vmem:[#allocation13 + $0x2d8] sm:$0xff]
    %v7704 = vld [vmem:[#allocation13 + $0x2e0] sm:$0xff]
    %v7705 = vld [vmem:[#allocation13 + $0x2e8] sm:$0xff]
    %v7706 = vld [vmem:[#allocation13 + $0x2f0] sm:$0xff]
    %v7707 = vld [vmem:[#allocation13 + $0x2f8] sm:$0xff]
    %v7708 = vld [vmem:[#allocation13 + $0x300] sm:$0xff]
    %v7709 = vld [vmem:[#allocation13 + $0x308] sm:$0xff]
    %v7710 = vld [vmem:[#allocation13 + $0x310] sm:$0xff]
    %v7711 = vld [vmem:[#allocation13 + $0x318] sm:$0xff]
    %v7712 = vld [vmem:[#allocation13 + $0x320] sm:$0xff]
    %v7713 = vld [vmem:[#allocation13 + $0x328] sm:$0xff]
    %v7714 = vld [vmem:[#allocation13 + $0x330] sm:$0xff]
    %v7715 = vld [vmem:[#allocation13 + $0x338] sm:$0xff]
    %v7716 = vld [vmem:[#allocation13 + $0x340] sm:$0xff]
    %v7717 = vld [vmem:[#allocation13 + $0x348] sm:$0xff]
    %v7718 = vld [vmem:[#allocation13 + $0x350] sm:$0xff]
    %v7719 = vld [vmem:[#allocation13 + $0x358] sm:$0xff]
    %v7720 = vld [vmem:[#allocation13 + $0x360] sm:$0xff]
    %v7721 = vld [vmem:[#allocation13 + $0x368] sm:$0xff]
    %v7722 = vld [vmem:[#allocation13 + $0x370] sm:$0xff]
    %v7723 = vld [vmem:[#allocation13 + $0x378] sm:$0xff]
    %v7724 = vld [vmem:[#allocation13 + $0x380] sm:$0xff]
    %v7725 = vld [vmem:[#allocation13 + $0x388] sm:$0xff]
    %v7726 = vld [vmem:[#allocation13 + $0x390] sm:$0xff]
    %v7727 = vld [vmem:[#allocation13 + $0x398] sm:$0xff]
    %v7728 = vld [vmem:[#allocation13 + $0x3a0] sm:$0xff]
    %v7729 = vld [vmem:[#allocation13 + $0x3a8] sm:$0xff]
    %v7730 = vld [vmem:[#allocation13 + $0x3b0] sm:$0xff]
    %v7731 = vld [vmem:[#allocation13 + $0x3b8] sm:$0xff]
    %v7732 = vld [vmem:[#allocation13 + $0x3c0] sm:$0xff]
    %v7733 = vld [vmem:[#allocation13 + $0x3c8] sm:$0xff]
    %v7734 = vld [vmem:[#allocation13 + $0x3d0] sm:$0xff]
    %v7735 = vld [vmem:[#allocation13 + $0x3d8] sm:$0xff]
    %v7736 = vld [vmem:[#allocation13 + $0x3e0] sm:$0xff]
    %v7737 = vld [vmem:[#allocation13 + $0x3e8] sm:$0xff]
    %v7738 = vld [vmem:[#allocation13 + $0x3f0] sm:$0xff]
    %v7739 = vld [vmem:[#allocation13 + $0x3f8] sm:$0xff]
    %v7740 = vld [vmem:[#allocation13 + $0x400] sm:$0xff]
    %v7741 = vld [vmem:[#allocation13 + $0x408] sm:$0xff]
    %v7742 = vld [vmem:[#allocation13 + $0x410] sm:$0xff]
    %v7743 = vld [vmem:[#allocation13 + $0x418] sm:$0xff]
    %v7744 = vld [vmem:[#allocation13 + $0x420] sm:$0xff]
    %v7745 = vld [vmem:[#allocation13 + $0x428] sm:$0xff]
    %v7746 = vld [vmem:[#allocation13 + $0x430] sm:$0xff]
    %v7747 = vld [vmem:[#allocation13 + $0x438] sm:$0xff]
    %v7748 = vld [vmem:[#allocation13 + $0x440] sm:$0xff]
    %v7749 = vld [vmem:[#allocation13 + $0x448] sm:$0xff]
    %v7750 = vld [vmem:[#allocation13 + $0x450] sm:$0xff]
    %v7751 = vld [vmem:[#allocation13 + $0x458] sm:$0xff]
    %v7752 = vld [vmem:[#allocation13 + $0x460] sm:$0xff]
    %v7753 = vld [vmem:[#allocation13 + $0x468] sm:$0xff]
    %v7754 = vld [vmem:[#allocation13 + $0x470] sm:$0xff]
    %v7755 = vld [vmem:[#allocation13 + $0x478] sm:$0xff]
    %v7756 = vld [vmem:[#allocation13 + $0x480] sm:$0xff]
    %v7757 = vld [vmem:[#allocation13 + $0x488] sm:$0xff]
    %v7758 = vld [vmem:[#allocation13 + $0x490] sm:$0xff]
    %v7759 = vld [vmem:[#allocation13 + $0x498] sm:$0xff]
    %v7760 = vld [vmem:[#allocation13 + $0x4a0] sm:$0xff]
    %v7761 = vld [vmem:[#allocation13 + $0x4a8] sm:$0xff]
    %v7762 = vld [vmem:[#allocation13 + $0x4b0] sm:$0xff]
    %v7763 = vld [vmem:[#allocation13 + $0x4b8] sm:$0xff]
    %v7764 = vld [vmem:[#allocation13 + $0x4c0] sm:$0xff]
    %v7765 = vld [vmem:[#allocation13 + $0x4c8] sm:$0xff]
    %v7766 = vld [vmem:[#allocation13 + $0x4d0] sm:$0xff]
    %v7767 = vld [vmem:[#allocation13 + $0x4d8] sm:$0xff]
    %v7768 = vld [vmem:[#allocation13 + $0x4e0] sm:$0xff]
    %v7769 = vld [vmem:[#allocation13 + $0x4e8] sm:$0xff]
    %v7770 = vld [vmem:[#allocation13 + $0x4f0] sm:$0xff]
    %v7771 = vld [vmem:[#allocation13 + $0x4f8] sm:$0xff]
    %v7772 = vld [vmem:[#allocation13 + $0x500] sm:$0xff]
    %v7773 = vld [vmem:[#allocation13 + $0x508] sm:$0xff]
    %v7774 = vld [vmem:[#allocation13 + $0x510] sm:$0xff]
    %v7775 = vld [vmem:[#allocation13 + $0x518] sm:$0xff]
    %v7776 = vld [vmem:[#allocation13 + $0x520] sm:$0xff]
    %v7777 = vld [vmem:[#allocation13 + $0x528] sm:$0xff]
    %v7778 = vld [vmem:[#allocation13 + $0x530] sm:$0xff]
    %v7779 = vld [vmem:[#allocation13 + $0x538] sm:$0xff]
    %v7780 = vld [vmem:[#allocation13 + $0x540] sm:$0xff]
    %v7781 = vld [vmem:[#allocation13 + $0x548] sm:$0xff]
    %v7782 = vld [vmem:[#allocation13 + $0x550] sm:$0xff]
    %v7783 = vld [vmem:[#allocation13 + $0x558] sm:$0xff]
    %v7784 = vld [vmem:[#allocation13 + $0x560] sm:$0xff]
    %v7785 = vld [vmem:[#allocation13 + $0x568] sm:$0xff]
    %v7786 = vld [vmem:[#allocation13 + $0x570] sm:$0xff]
    %v7787 = vld [vmem:[#allocation13 + $0x578] sm:$0xff]
    %v7788 = vld [vmem:[#allocation13 + $0x580] sm:$0xff]
    %v7789 = vld [vmem:[#allocation13 + $0x588] sm:$0xff]
    %v7790 = vld [vmem:[#allocation13 + $0x590] sm:$0xff]
    %v7791 = vld [vmem:[#allocation13 + $0x598] sm:$0xff]
    %v7792 = vld [vmem:[#allocation13 + $0x5a0] sm:$0xff]
    %v7793 = vld [vmem:[#allocation13 + $0x5a8] sm:$0xff]
    %v7794 = vld [vmem:[#allocation13 + $0x5b0] sm:$0xff]
    %v7795 = vld [vmem:[#allocation13 + $0x5b8] sm:$0xff]
    %v7796 = vld [vmem:[#allocation13 + $0x5c0] sm:$0xff]
    %v7797 = vld [vmem:[#allocation13 + $0x5c8] sm:$0xff]
    %v7798 = vld [vmem:[#allocation13 + $0x5d0] sm:$0xff]
    %v7799 = vld [vmem:[#allocation13 + $0x5d8] sm:$0xff]
    %v7800 = vld [vmem:[#allocation13 + $0x5e0] sm:$0xff]
    %v7801 = vld [vmem:[#allocation13 + $0x5e8] sm:$0xff]
    %v7802 = vld [vmem:[#allocation13 + $0x5f0] sm:$0xff]
    %v7803 = vld [vmem:[#allocation13 + $0x5f8] sm:$0xff]
    %v7804 = vld [vmem:[#allocation13 + $0x600] sm:$0xff]
    %v7805 = vld [vmem:[#allocation13 + $0x608] sm:$0xff]
    %v7806 = vld [vmem:[#allocation13 + $0x610] sm:$0xff]
    %v7807 = vld [vmem:[#allocation13 + $0x618] sm:$0xff]
    %v7808 = vld [vmem:[#allocation13 + $0x620] sm:$0xff]
    %v7809 = vld [vmem:[#allocation13 + $0x628] sm:$0xff]
    %v7810 = vld [vmem:[#allocation13 + $0x630] sm:$0xff]
    %v7811 = vld [vmem:[#allocation13 + $0x638] sm:$0xff]
    %v7812 = vld [vmem:[#allocation13 + $0x640] sm:$0xff]
    %v7813 = vld [vmem:[#allocation13 + $0x648] sm:$0xff]
    %v7814 = vld [vmem:[#allocation13 + $0x650] sm:$0xff]
    %v7815 = vld [vmem:[#allocation13 + $0x658] sm:$0xff]
    %v7816 = vld [vmem:[#allocation13 + $0x660] sm:$0xff]
    %v7817 = vld [vmem:[#allocation13 + $0x668] sm:$0xff]
    %v7818 = vld [vmem:[#allocation13 + $0x670] sm:$0xff]
    %v7819 = vld [vmem:[#allocation13 + $0x678] sm:$0xff]
    %v7820 = vld [vmem:[#allocation13 + $0x680] sm:$0xff]
    %v7821 = vld [vmem:[#allocation13 + $0x688] sm:$0xff]
    %v7822 = vld [vmem:[#allocation13 + $0x690] sm:$0xff]
    %v7823 = vld [vmem:[#allocation13 + $0x698] sm:$0xff]
    %v7824 = vld [vmem:[#allocation13 + $0x6a0] sm:$0xff]
    %v7825 = vld [vmem:[#allocation13 + $0x6a8] sm:$0xff]
    %v7826 = vld [vmem:[#allocation13 + $0x6b0] sm:$0xff]
    %v7827 = vld [vmem:[#allocation13 + $0x6b8] sm:$0xff]
    %v7828 = vld [vmem:[#allocation13 + $0x6c0] sm:$0xff]
    %v7829 = vld [vmem:[#allocation13 + $0x6c8] sm:$0xff]
    %v7830 = vld [vmem:[#allocation13 + $0x6d0] sm:$0xff]
    %v7831 = vld [vmem:[#allocation13 + $0x6d8] sm:$0xff]
    %v7832 = vld [vmem:[#allocation13 + $0x6e0] sm:$0xff]
    %v7833 = vld [vmem:[#allocation13 + $0x6e8] sm:$0xff]
    %v7834 = vld [vmem:[#allocation13 + $0x6f0] sm:$0xff]
    %v7835 = vld [vmem:[#allocation13 + $0x6f8] sm:$0xff]
    %v7836 = vld [vmem:[#allocation13 + $0x700] sm:$0xff]
    %v7837 = vld [vmem:[#allocation13 + $0x708] sm:$0xff]
    %v7838 = vld [vmem:[#allocation13 + $0x710] sm:$0xff]
    %v7839 = vld [vmem:[#allocation13 + $0x718] sm:$0xff]
    %v7840 = vld [vmem:[#allocation13 + $0x720] sm:$0xff]
    %v7841 = vld [vmem:[#allocation13 + $0x728] sm:$0xff]
    %v7842 = vld [vmem:[#allocation13 + $0x730] sm:$0xff]
    %v7843 = vld [vmem:[#allocation13 + $0x738] sm:$0xff]
    %v7844 = vld [vmem:[#allocation13 + $0x740] sm:$0xff]
    %v7845 = vld [vmem:[#allocation13 + $0x748] sm:$0xff]
    %v7846 = vld [vmem:[#allocation13 + $0x750] sm:$0xff]
    %v7847 = vld [vmem:[#allocation13 + $0x758] sm:$0xff]
    %v7848 = vld [vmem:[#allocation13 + $0x760] sm:$0xff]
    %v7849 = vld [vmem:[#allocation13 + $0x768] sm:$0xff]
    %v7850 = vld [vmem:[#allocation13 + $0x770] sm:$0xff]
    %v7851 = vld [vmem:[#allocation13 + $0x778] sm:$0xff]
    %v7852 = vld [vmem:[#allocation13 + $0x780] sm:$0xff]
    %v7853 = vld [vmem:[#allocation13 + $0x788] sm:$0xff]
    %v7854 = vld [vmem:[#allocation13 + $0x790] sm:$0xff]
    %v7855 = vld [vmem:[#allocation13 + $0x798] sm:$0xff]
    %v7856 = vld [vmem:[#allocation13 + $0x7a0] sm:$0xff]
    %v7857 = vld [vmem:[#allocation13 + $0x7a8] sm:$0xff]
    %v7858 = vld [vmem:[#allocation13 + $0x7b0] sm:$0xff]
    %v7859 = vld [vmem:[#allocation13 + $0x7b8] sm:$0xff]
    %v7860 = vld [vmem:[#allocation13 + $0x7c0] sm:$0xff]
    %v7861 = vld [vmem:[#allocation13 + $0x7c8] sm:$0xff]
    %v7862 = vld [vmem:[#allocation13 + $0x7d0] sm:$0xff]
    %v7863 = vld [vmem:[#allocation13 + $0x7d8] sm:$0xff]
    %v7864 = vld [vmem:[#allocation13 + $0x7e0] sm:$0xff]
    %v7865 = vld [vmem:[#allocation13 + $0x7e8] sm:$0xff]
    %v7866 = vld [vmem:[#allocation13 + $0x7f0] sm:$0xff]
    %v7867 = vld [vmem:[#allocation13 + $0x7f8] sm:$0xff]
    %v7868 = vld [vmem:[#allocation13 + $0x800] sm:$0xff]
    %v7869 = vld [vmem:[#allocation13 + $0x808] sm:$0xff]
    %v7870 = vld [vmem:[#allocation13 + $0x810] sm:$0xff]
    %v7871 = vld [vmem:[#allocation13 + $0x818] sm:$0xff]
    %v7872 = vld [vmem:[#allocation13 + $0x820] sm:$0xff]
    %v7873 = vld [vmem:[#allocation13 + $0x828] sm:$0xff]
    %v7874 = vld [vmem:[#allocation13 + $0x830] sm:$0xff]
    %v7875 = vld [vmem:[#allocation13 + $0x838] sm:$0xff]
    %v7876 = vld [vmem:[#allocation13 + $0x840] sm:$0xff]
    %v7877 = vld [vmem:[#allocation13 + $0x848] sm:$0xff]
    %v7878 = vld [vmem:[#allocation13 + $0x850] sm:$0xff]
    %v7879 = vld [vmem:[#allocation13 + $0x858] sm:$0xff]
    %v7880 = vld [vmem:[#allocation13 + $0x860] sm:$0xff]
    %v7881 = vld [vmem:[#allocation13 + $0x868] sm:$0xff]
    %v7882 = vld [vmem:[#allocation13 + $0x870] sm:$0xff]
    %v7883 = vld [vmem:[#allocation13 + $0x878] sm:$0xff]
    %v7884 = vld [vmem:[#allocation13 + $0x880] sm:$0xff]
    %v7885 = vld [vmem:[#allocation13 + $0x888] sm:$0xff]
    %v7886 = vld [vmem:[#allocation13 + $0x890] sm:$0xff]
    %v7887 = vld [vmem:[#allocation13 + $0x898] sm:$0xff]
    %v7888 = vld [vmem:[#allocation13 + $0x8a0] sm:$0xff]
    %v7889 = vld [vmem:[#allocation13 + $0x8a8] sm:$0xff]
    %v7890 = vld [vmem:[#allocation13 + $0x8b0] sm:$0xff]
    %v7891 = vld [vmem:[#allocation13 + $0x8b8] sm:$0xff]
    %v7892 = vld [vmem:[#allocation13 + $0x8c0] sm:$0xff]
    %v7893 = vld [vmem:[#allocation13 + $0x8c8] sm:$0xff]
    %v7894 = vld [vmem:[#allocation13 + $0x8d0] sm:$0xff]
    %v7895 = vld [vmem:[#allocation13 + $0x8d8] sm:$0xff]
    %v7896 = vld [vmem:[#allocation13 + $0x8e0] sm:$0xff]
    %v7897 = vld [vmem:[#allocation13 + $0x8e8] sm:$0xff]
    %v7898 = vld [vmem:[#allocation13 + $0x8f0] sm:$0xff]
    %v7899 = vld [vmem:[#allocation13 + $0x8f8] sm:$0xff]
    %v7900 = vld [vmem:[#allocation15] sm:$0x3]
    %v7902 = vlaneseq
    %v7903 = vshrl.u32 %v7902, 7
    %v7904 = vsub.s32 0, %v7903
    %v7905 = vrot.slane %v7900, %v7904
    %v7906 = vlaneseq
    %v7907 = vshrl.u32 %v7906, 7
    %v7908 = vsub.s32 1, %v7907
    %v7909 = vrot.slane %v7900, %v7908
    %v8056 = vunpack.c.l.b16 %v7468
    %v8057 = vunpack.c.h.b16 %v7468
    %v8058 = vunpack.c.l.b16 %v7469
    %v8059 = vunpack.c.h.b16 %v7469
    %v8060 = vunpack.c.l.b16 %v7470
    %v8061 = vunpack.c.h.b16 %v7470
    %v8062 = vunpack.c.l.b16 %v7471
    %v8063 = vunpack.c.h.b16 %v7471
    %v8064 = vunpack.c.l.b16 %v7472
    %v8065 = vunpack.c.h.b16 %v7472
    %v8066 = vunpack.c.l.b16 %v7473
    %v8067 = vunpack.c.h.b16 %v7473
    %v8068 = vunpack.c.l.b16 %v7474
    %v8069 = vunpack.c.h.b16 %v7474
    %v8070 = vunpack.c.l.b16 %v7475
    %v8071 = vunpack.c.h.b16 %v7475
    %v8072 = vunpack.c.l.b16 %v7476
    %v8073 = vunpack.c.h.b16 %v7476
    %v8074 = vunpack.c.l.b16 %v7477
    %v8075 = vunpack.c.h.b16 %v7477
    %v8076 = vunpack.c.l.b16 %v7478
    %v8077 = vunpack.c.h.b16 %v7478
    %v8078 = vunpack.c.l.b16 %v7479
    %v8079 = vunpack.c.h.b16 %v7479
    %v8080 = vunpack.c.l.b16 %v7480
    %v8081 = vunpack.c.h.b16 %v7480
    %v8082 = vunpack.c.l.b16 %v7481
    %v8083 = vunpack.c.h.b16 %v7481
    %v8084 = vunpack.c.l.b16 %v7482
    %v8085 = vunpack.c.h.b16 %v7482
    %v8086 = vunpack.c.l.b16 %v7483
    %v8087 = vunpack.c.h.b16 %v7483
    %v8088 = vunpack.c.l.b16 %v7484
    %v8089 = vunpack.c.h.b16 %v7484
    %v8090 = vunpack.c.l.b16 %v7485
    %v8091 = vunpack.c.h.b16 %v7485
    %v8092 = vunpack.c.l.b16 %v7486
    %v8093 = vunpack.c.h.b16 %v7486
    %v8094 = vunpack.c.l.b16 %v7487
    %v8095 = vunpack.c.h.b16 %v7487
    %v8096 = vunpack.c.l.b16 %v7488
    %v8097 = vunpack.c.h.b16 %v7488
    %v8098 = vunpack.c.l.b16 %v7489
    %v8099 = vunpack.c.h.b16 %v7489
    %v8100 = vunpack.c.l.b16 %v7490
    %v8101 = vunpack.c.h.b16 %v7490
    %v8102 = vunpack.c.l.b16 %v7491
    %v8103 = vunpack.c.h.b16 %v7491
    %v8104 = vunpack.c.l.b16 %v7492
    %v8105 = vunpack.c.h.b16 %v7492
    %v8106 = vunpack.c.l.b16 %v7493
    %v8107 = vunpack.c.h.b16 %v7493
    %v8108 = vunpack.c.l.b16 %v7494
    %v8109 = vunpack.c.h.b16 %v7494
    %v8110 = vunpack.c.l.b16 %v7495
    %v8111 = vunpack.c.h.b16 %v7495
    %v8112 = vunpack.c.l.b16 %v7496
    %v8113 = vunpack.c.h.b16 %v7496
    %v8114 = vunpack.c.l.b16 %v7497
    %v8115 = vunpack.c.h.b16 %v7497
    %v8116 = vunpack.c.l.b16 %v7498
    %v8117 = vunpack.c.h.b16 %v7498
    %v8118 = vunpack.c.l.b16 %v7499
    %v8119 = vunpack.c.h.b16 %v7499
    %v8120 = vunpack.c.l.b16 %v7500
    %v8121 = vunpack.c.h.b16 %v7500
    %v8122 = vunpack.c.l.b16 %v7501
    %v8123 = vunpack.c.h.b16 %v7501
    %v8124 = vunpack.c.l.b16 %v7502
    %v8125 = vunpack.c.h.b16 %v7502
    %v8126 = vunpack.c.l.b16 %v7503
    %v8127 = vunpack.c.h.b16 %v7503
    %v8128 = vunpack.c.l.b16 %v7504
    %v8129 = vunpack.c.h.b16 %v7504
    %v8130 = vunpack.c.l.b16 %v7505
    %v8131 = vunpack.c.h.b16 %v7505
    %v8132 = vunpack.c.l.b16 %v7506
    %v8133 = vunpack.c.h.b16 %v7506
    %v8134 = vunpack.c.l.b16 %v7507
    %v8135 = vunpack.c.h.b16 %v7507
    %v8136 = vunpack.c.l.b16 %v7508
    %v8137 = vunpack.c.h.b16 %v7508
    %v8138 = vunpack.c.l.b16 %v7509
    %v8139 = vunpack.c.h.b16 %v7509
    %v8140 = vunpack.c.l.b16 %v7510
    %v8141 = vunpack.c.h.b16 %v7510
    %v8142 = vunpack.c.l.b16 %v7511
    %v8143 = vunpack.c.h.b16 %v7511
    %v8144 = vunpack.c.l.b16 %v7512
    %v8145 = vunpack.c.h.b16 %v7512
    %v8146 = vunpack.c.l.b16 %v7513
    %v8147 = vunpack.c.h.b16 %v7513
    %v8148 = vunpack.c.l.b16 %v7514
    %v8149 = vunpack.c.h.b16 %v7514
    %v8150 = vunpack.c.l.b16 %v7515
    %v8151 = vunpack.c.h.b16 %v7515
    %v8152 = vunpack.c.l.b16 %v7516
    %v8153 = vunpack.c.h.b16 %v7516
    %v8154 = vunpack.c.l.b16 %v7517
    %v8155 = vunpack.c.h.b16 %v7517
    %v8156 = vunpack.c.l.b16 %v7518
    %v8157 = vunpack.c.h.b16 %v7518
    %v8158 = vunpack.c.l.b16 %v7519
    %v8159 = vunpack.c.h.b16 %v7519
    %v8160 = vunpack.c.l.b16 %v7520
    %v8161 = vunpack.c.h.b16 %v7520
    %v8162 = vunpack.c.l.b16 %v7521
    %v8163 = vunpack.c.h.b16 %v7521
    %v8164 = vunpack.c.l.b16 %v7522
    %v8165 = vunpack.c.h.b16 %v7522
    %v8166 = vunpack.c.l.b16 %v7523
    %v8167 = vunpack.c.h.b16 %v7523
    %v8168 = vunpack.c.l.b16 %v7524
    %v8169 = vunpack.c.h.b16 %v7524
    %v8170 = vunpack.c.l.b16 %v7525
    %v8171 = vunpack.c.h.b16 %v7525
    %v8172 = vunpack.c.l.b16 %v7526
    %v8173 = vunpack.c.h.b16 %v7526
    %v8174 = vunpack.c.l.b16 %v7527
    %v8175 = vunpack.c.h.b16 %v7527
    %v8176 = vunpack.c.l.b16 %v7528
    %v8177 = vunpack.c.h.b16 %v7528
    %v8178 = vunpack.c.l.b16 %v7529
    %v8179 = vunpack.c.h.b16 %v7529
    %v8180 = vunpack.c.l.b16 %v7530
    %v8181 = vunpack.c.h.b16 %v7530
    %v8182 = vunpack.c.l.b16 %v7531
    %v8183 = vunpack.c.h.b16 %v7531
    %v8184 = vunpack.c.l.b16 %v7532
    %v8185 = vunpack.c.h.b16 %v7532
    %v8186 = vunpack.c.l.b16 %v7533
    %v8187 = vunpack.c.h.b16 %v7533
    %v8188 = vunpack.c.l.b16 %v7534
    %v8189 = vunpack.c.h.b16 %v7534
    %v8190 = vunpack.c.l.b16 %v7535
    %v8191 = vunpack.c.h.b16 %v7535
    %v8192 = vunpack.c.l.b16 %v7536
    %v8193 = vunpack.c.h.b16 %v7536
    %v8194 = vunpack.c.l.b16 %v7537
    %v8195 = vunpack.c.h.b16 %v7537
    %v8196 = vunpack.c.l.b16 %v7538
    %v8197 = vunpack.c.h.b16 %v7538
    %v8198 = vunpack.c.l.b16 %v7539
    %v8199 = vunpack.c.h.b16 %v7539
    %v8200 = vunpack.c.l.b16 %v7540
    %v8201 = vunpack.c.h.b16 %v7540
    %v8202 = vunpack.c.l.b16 %v7541
    %v8203 = vunpack.c.h.b16 %v7541
    %v8204 = vunpack.c.l.b16 %v7542
    %v8205 = vunpack.c.h.b16 %v7542
    %v8206 = vunpack.c.l.b16 %v7543
    %v8207 = vunpack.c.h.b16 %v7543
    %v8208 = vunpack.c.l.b16 %v7544
    %v8209 = vunpack.c.h.b16 %v7544
    %v8210 = vunpack.c.l.b16 %v7545
    %v8211 = vunpack.c.h.b16 %v7545
    %v8212 = vunpack.c.l.b16 %v7546
    %v8213 = vunpack.c.h.b16 %v7546
    %v8214 = vunpack.c.l.b16 %v7547
    %v8215 = vunpack.c.h.b16 %v7547
    %v8216 = vunpack.c.l.b16 %v7548
    %v8217 = vunpack.c.h.b16 %v7548
    %v8218 = vunpack.c.l.b16 %v7549
    %v8219 = vunpack.c.h.b16 %v7549
    %v8220 = vunpack.c.l.b16 %v7550
    %v8221 = vunpack.c.h.b16 %v7550
    %v8222 = vunpack.c.l.b16 %v7551
    %v8223 = vunpack.c.h.b16 %v7551
    %v8224 = vunpack.c.l.b16 %v7552
    %v8225 = vunpack.c.h.b16 %v7552
    %v8226 = vunpack.c.l.b16 %v7553
    %v8227 = vunpack.c.h.b16 %v7553
    %v8228 = vunpack.c.l.b16 %v7554
    %v8229 = vunpack.c.h.b16 %v7554
    %v8230 = vunpack.c.l.b16 %v7555
    %v8231 = vunpack.c.h.b16 %v7555
    %v8232 = vunpack.c.l.b16 %v7556
    %v8233 = vunpack.c.h.b16 %v7556
    %v8234 = vunpack.c.l.b16 %v7557
    %v8235 = vunpack.c.h.b16 %v7557
    %v8236 = vunpack.c.l.b16 %v7558
    %v8237 = vunpack.c.h.b16 %v7558
    %v8238 = vunpack.c.l.b16 %v7559
    %v8239 = vunpack.c.h.b16 %v7559
    %v8240 = vunpack.c.l.b16 %v7560
    %v8241 = vunpack.c.h.b16 %v7560
    %v8242 = vunpack.c.l.b16 %v7561
    %v8243 = vunpack.c.h.b16 %v7561
    %v8244 = vunpack.c.l.b16 %v7562
    %v8245 = vunpack.c.h.b16 %v7562
    %v8246 = vunpack.c.l.b16 %v7563
    %v8247 = vunpack.c.h.b16 %v7563
    %v8248 = vunpack.c.l.b16 %v7564
    %v8249 = vunpack.c.h.b16 %v7564
    %v8250 = vunpack.c.l.b16 %v7565
    %v8251 = vunpack.c.h.b16 %v7565
    %v8252 = vunpack.c.l.b16 %v7566
    %v8253 = vunpack.c.h.b16 %v7566
    %v8254 = vunpack.c.l.b16 %v7567
    %v8255 = vunpack.c.h.b16 %v7567
    %v8256 = vunpack.c.l.b16 %v7568
    %v8257 = vunpack.c.h.b16 %v7568
    %v8258 = vunpack.c.l.b16 %v7569
    %v8259 = vunpack.c.h.b16 %v7569
    %v8260 = vunpack.c.l.b16 %v7570
    %v8261 = vunpack.c.h.b16 %v7570
    %v8262 = vunpack.c.l.b16 %v7571
    %v8263 = vunpack.c.h.b16 %v7571
    %v8264 = vunpack.c.l.b16 %v7572
    %v8265 = vunpack.c.h.b16 %v7572
    %v8266 = vunpack.c.l.b16 %v7573
    %v8267 = vunpack.c.h.b16 %v7573
    %v8268 = vunpack.c.l.b16 %v7574
    %v8269 = vunpack.c.h.b16 %v7574
    %v8270 = vunpack.c.l.b16 %v7575
    %v8271 = vunpack.c.h.b16 %v7575
    %v8272 = vunpack.c.l.b16 %v7576
    %v8273 = vunpack.c.h.b16 %v7576
    %v8274 = vunpack.c.l.b16 %v7577
    %v8275 = vunpack.c.h.b16 %v7577
    %v8276 = vunpack.c.l.b16 %v7578
    %v8277 = vunpack.c.h.b16 %v7578
    %v8278 = vunpack.c.l.b16 %v7579
    %v8279 = vunpack.c.h.b16 %v7579
    %v8280 = vunpack.c.l.b16 %v7580
    %v8281 = vunpack.c.h.b16 %v7580
    %v8282 = vunpack.c.l.b16 %v7581
    %v8283 = vunpack.c.h.b16 %v7581
    %v8284 = vunpack.c.l.b16 %v7582
    %v8285 = vunpack.c.h.b16 %v7582
    %v8286 = vunpack.c.l.b16 %v7583
    %v8287 = vunpack.c.h.b16 %v7583
    %v8288 = vunpack.c.l.b16 %v7584
    %v8289 = vunpack.c.h.b16 %v7584
    %v8290 = vunpack.c.l.b16 %v7585
    %v8291 = vunpack.c.h.b16 %v7585
    %v8292 = vunpack.c.l.b16 %v7586
    %v8293 = vunpack.c.h.b16 %v7586
    %v8294 = vunpack.c.l.b16 %v7587
    %v8295 = vunpack.c.h.b16 %v7587
    %v8296 = vunpack.c.l.b16 %v7588
    %v8297 = vunpack.c.h.b16 %v7588
    %v8298 = vunpack.c.l.b16 %v7589
    %v8299 = vunpack.c.h.b16 %v7589
    %v8300 = vunpack.c.l.b16 %v7590
    %v8301 = vunpack.c.h.b16 %v7590
    %v8302 = vunpack.c.l.b16 %v7591
    %v8303 = vunpack.c.h.b16 %v7591
    %v8304 = vunpack.c.l.b16 %v7592
    %v8305 = vunpack.c.h.b16 %v7592
    %v8306 = vunpack.c.l.b16 %v7593
    %v8307 = vunpack.c.h.b16 %v7593
    %v8308 = vunpack.c.l.b16 %v7594
    %v8309 = vunpack.c.h.b16 %v7594
    %v8310 = vunpack.c.l.b16 %v7595
    %v8311 = vunpack.c.h.b16 %v7595
    %v8312 = vunpack.c.l.b16 %v7596
    %v8313 = vunpack.c.h.b16 %v7596
    %v8314 = vunpack.c.l.b16 %v7597
    %v8315 = vunpack.c.h.b16 %v7597
    %v8316 = vunpack.c.l.b16 %v7598
    %v8317 = vunpack.c.h.b16 %v7598
    %v8318 = vunpack.c.l.b16 %v7599
    %v8319 = vunpack.c.h.b16 %v7599
    %v8320 = vunpack.c.l.b16 %v7600
    %v8321 = vunpack.c.h.b16 %v7600
    %v8322 = vunpack.c.l.b16 %v7601
    %v8323 = vunpack.c.h.b16 %v7601
    %v8324 = vunpack.c.l.b16 %v7602
    %v8325 = vunpack.c.h.b16 %v7602
    %v8326 = vunpack.c.l.b16 %v7603
    %v8327 = vunpack.c.h.b16 %v7603
    %v8328 = vunpack.c.l.b16 %v7604
    %v8329 = vunpack.c.h.b16 %v7604
    %v8330 = vunpack.c.l.b16 %v7605
    %v8331 = vunpack.c.h.b16 %v7605
    %v8332 = vunpack.c.l.b16 %v7606
    %v8333 = vunpack.c.h.b16 %v7606
    %v8334 = vunpack.c.l.b16 %v7607
    %v8335 = vunpack.c.h.b16 %v7607
    %v8336 = vunpack.c.l.b16 %v7608
    %v8337 = vunpack.c.h.b16 %v7608
    %v8338 = vunpack.c.l.b16 %v7609
    %v8339 = vunpack.c.h.b16 %v7609
    %v8340 = vunpack.c.l.b16 %v7610
    %v8341 = vunpack.c.h.b16 %v7610
    %v8342 = vunpack.c.l.b16 %v7611
    %v8343 = vunpack.c.h.b16 %v7611
    %v8344 = vpack.c.b16 %v8074, %v8056
    %v8345 = vpack.c.b16 %v8075, %v8057
    %v8346 = vpack.c.b16 %v8076, %v8058
    %v8347 = vpack.c.b16 %v8077, %v8059
    %v8348 = vpack.c.b16 %v8078, %v8060
    %v8349 = vpack.c.b16 %v8079, %v8061
    %v8350 = vpack.c.b16 %v8080, %v8062
    %v8351 = vpack.c.b16 %v8081, %v8063
    %v8352 = vpack.c.b16 %v8082, %v8064
    %v8353 = vpack.c.b16 %v8083, %v8065
    %v8354 = vpack.c.b16 %v8084, %v8066
    %v8355 = vpack.c.b16 %v8085, %v8067
    %v8356 = vpack.c.b16 %v8086, %v8068
    %v8357 = vpack.c.b16 %v8087, %v8069
    %v8358 = vpack.c.b16 %v8088, %v8070
    %v8359 = vpack.c.b16 %v8089, %v8071
    %v8360 = vpack.c.b16 %v8090, %v8072
    %v8361 = vpack.c.b16 %v8091, %v8073
    %v8362 = vpack.c.b16 %v8110, %v8092
    %v8363 = vpack.c.b16 %v8111, %v8093
    %v8364 = vpack.c.b16 %v8112, %v8094
    %v8365 = vpack.c.b16 %v8113, %v8095
    %v8366 = vpack.c.b16 %v8114, %v8096
    %v8367 = vpack.c.b16 %v8115, %v8097
    %v8368 = vpack.c.b16 %v8116, %v8098
    %v8369 = vpack.c.b16 %v8117, %v8099
    %v8370 = vpack.c.b16 %v8118, %v8100
    %v8371 = vpack.c.b16 %v8119, %v8101
    %v8372 = vpack.c.b16 %v8120, %v8102
    %v8373 = vpack.c.b16 %v8121, %v8103
    %v8374 = vpack.c.b16 %v8122, %v8104
    %v8375 = vpack.c.b16 %v8123, %v8105
    %v8376 = vpack.c.b16 %v8124, %v8106
    %v8377 = vpack.c.b16 %v8125, %v8107
    %v8378 = vpack.c.b16 %v8126, %v8108
    %v8379 = vpack.c.b16 %v8127, %v8109
    %v8380 = vpack.c.b16 %v8146, %v8128
    %v8381 = vpack.c.b16 %v8147, %v8129
    %v8382 = vpack.c.b16 %v8148, %v8130
    %v8383 = vpack.c.b16 %v8149, %v8131
    %v8384 = vpack.c.b16 %v8150, %v8132
    %v8385 = vpack.c.b16 %v8151, %v8133
    %v8386 = vpack.c.b16 %v8152, %v8134
    %v8387 = vpack.c.b16 %v8153, %v8135
    %v8388 = vpack.c.b16 %v8154, %v8136
    %v8389 = vpack.c.b16 %v8155, %v8137
    %v8390 = vpack.c.b16 %v8156, %v8138
    %v8391 = vpack.c.b16 %v8157, %v8139
    %v8392 = vpack.c.b16 %v8158, %v8140
    %v8393 = vpack.c.b16 %v8159, %v8141
    %v8394 = vpack.c.b16 %v8160, %v8142
    %v8395 = vpack.c.b16 %v8161, %v8143
    %v8396 = vpack.c.b16 %v8162, %v8144
    %v8397 = vpack.c.b16 %v8163, %v8145
    %v8398 = vpack.c.b16 %v8182, %v8164
    %v8399 = vpack.c.b16 %v8183, %v8165
    %v8400 = vpack.c.b16 %v8184, %v8166
    %v8401 = vpack.c.b16 %v8185, %v8167
    %v8402 = vpack.c.b16 %v8186, %v8168
    %v8403 = vpack.c.b16 %v8187, %v8169
    %v8404 = vpack.c.b16 %v8188, %v8170
    %v8405 = vpack.c.b16 %v8189, %v8171
    %v8406 = vpack.c.b16 %v8190, %v8172
    %v8407 = vpack.c.b16 %v8191, %v8173
    %v8408 = vpack.c.b16 %v8192, %v8174
    %v8409 = vpack.c.b16 %v8193, %v8175
    %v8410 = vpack.c.b16 %v8194, %v8176
    %v8411 = vpack.c.b16 %v8195, %v8177
    %v8412 = vpack.c.b16 %v8196, %v8178
    %v8413 = vpack.c.b16 %v8197, %v8179
    %v8414 = vpack.c.b16 %v8198, %v8180
    %v8415 = vpack.c.b16 %v8199, %v8181
    %v8416 = vpack.c.b16 %v8218, %v8200
    %v8417 = vpack.c.b16 %v8219, %v8201
    %v8418 = vpack.c.b16 %v8220, %v8202
    %v8419 = vpack.c.b16 %v8221, %v8203
    %v8420 = vpack.c.b16 %v8222, %v8204
    %v8421 = vpack.c.b16 %v8223, %v8205
    %v8422 = vpack.c.b16 %v8224, %v8206
    %v8423 = vpack.c.b16 %v8225, %v8207
    %v8424 = vpack.c.b16 %v8226, %v8208
    %v8425 = vpack.c.b16 %v8227, %v8209
    %v8426 = vpack.c.b16 %v8228, %v8210
    %v8427 = vpack.c.b16 %v8229, %v8211
    %v8428 = vpack.c.b16 %v8230, %v8212
    %v8429 = vpack.c.b16 %v8231, %v8213
    %v8430 = vpack.c.b16 %v8232, %v8214
    %v8431 = vpack.c.b16 %v8233, %v8215
    %v8432 = vpack.c.b16 %v8234, %v8216
    %v8433 = vpack.c.b16 %v8235, %v8217
    %v8434 = vpack.c.b16 %v8254, %v8236
    %v8435 = vpack.c.b16 %v8255, %v8237
    %v8436 = vpack.c.b16 %v8256, %v8238
    %v8437 = vpack.c.b16 %v8257, %v8239
    %v8438 = vpack.c.b16 %v8258, %v8240
    %v8439 = vpack.c.b16 %v8259, %v8241
    %v8440 = vpack.c.b16 %v8260, %v8242
    %v8441 = vpack.c.b16 %v8261, %v8243
    %v8442 = vpack.c.b16 %v8262, %v8244
    %v8443 = vpack.c.b16 %v8263, %v8245
    %v8444 = vpack.c.b16 %v8264, %v8246
    %v8445 = vpack.c.b16 %v8265, %v8247
    %v8446 = vpack.c.b16 %v8266, %v8248
    %v8447 = vpack.c.b16 %v8267, %v8249
    %v8448 = vpack.c.b16 %v8268, %v8250
    %v8449 = vpack.c.b16 %v8269, %v8251
    %v8450 = vpack.c.b16 %v8270, %v8252
    %v8451 = vpack.c.b16 %v8271, %v8253
    %v8452 = vpack.c.b16 %v8290, %v8272
    %v8453 = vpack.c.b16 %v8291, %v8273
    %v8454 = vpack.c.b16 %v8292, %v8274
    %v8455 = vpack.c.b16 %v8293, %v8275
    %v8456 = vpack.c.b16 %v8294, %v8276
    %v8457 = vpack.c.b16 %v8295, %v8277
    %v8458 = vpack.c.b16 %v8296, %v8278
    %v8459 = vpack.c.b16 %v8297, %v8279
    %v8460 = vpack.c.b16 %v8298, %v8280
    %v8461 = vpack.c.b16 %v8299, %v8281
    %v8462 = vpack.c.b16 %v8300, %v8282
    %v8463 = vpack.c.b16 %v8301, %v8283
    %v8464 = vpack.c.b16 %v8302, %v8284
    %v8465 = vpack.c.b16 %v8303, %v8285
    %v8466 = vpack.c.b16 %v8304, %v8286
    %v8467 = vpack.c.b16 %v8305, %v8287
    %v8468 = vpack.c.b16 %v8306, %v8288
    %v8469 = vpack.c.b16 %v8307, %v8289
    %v8470 = vpack.c.b16 %v8326, %v8308
    %v8471 = vpack.c.b16 %v8327, %v8309
    %v8472 = vpack.c.b16 %v8328, %v8310
    %v8473 = vpack.c.b16 %v8329, %v8311
    %v8474 = vpack.c.b16 %v8330, %v8312
    %v8475 = vpack.c.b16 %v8331, %v8313
    %v8476 = vpack.c.b16 %v8332, %v8314
    %v8477 = vpack.c.b16 %v8333, %v8315
    %v8478 = vpack.c.b16 %v8334, %v8316
    %v8479 = vpack.c.b16 %v8335, %v8317
    %v8480 = vpack.c.b16 %v8336, %v8318
    %v8481 = vpack.c.b16 %v8337, %v8319
    %v8482 = vpack.c.b16 %v8338, %v8320
    %v8483 = vpack.c.b16 %v8339, %v8321
    %v8484 = vpack.c.b16 %v8340, %v8322
    %v8485 = vpack.c.b16 %v8341, %v8323
    %v8486 = vpack.c.b16 %v8342, %v8324
    %v8487 = vpack.c.b16 %v8343, %v8325
    %v8920 = vunpack.c.l.b16 %v7612
    %v8921 = vunpack.c.h.b16 %v7612
    %v8922 = vunpack.c.l.b16 %v7613
    %v8923 = vunpack.c.h.b16 %v7613
    %v8924 = vunpack.c.l.b16 %v7614
    %v8925 = vunpack.c.h.b16 %v7614
    %v8926 = vunpack.c.l.b16 %v7615
    %v8927 = vunpack.c.h.b16 %v7615
    %v8928 = vunpack.c.l.b16 %v7616
    %v8929 = vunpack.c.h.b16 %v7616
    %v8930 = vunpack.c.l.b16 %v7617
    %v8931 = vunpack.c.h.b16 %v7617
    %v8932 = vunpack.c.l.b16 %v7618
    %v8933 = vunpack.c.h.b16 %v7618
    %v8934 = vunpack.c.l.b16 %v7619
    %v8935 = vunpack.c.h.b16 %v7619
    %v8936 = vunpack.c.l.b16 %v7620
    %v8937 = vunpack.c.h.b16 %v7620
    %v8938 = vunpack.c.l.b16 %v7621
    %v8939 = vunpack.c.h.b16 %v7621
    %v8940 = vunpack.c.l.b16 %v7622
    %v8941 = vunpack.c.h.b16 %v7622
    %v8942 = vunpack.c.l.b16 %v7623
    %v8943 = vunpack.c.h.b16 %v7623
    %v8944 = vunpack.c.l.b16 %v7624
    %v8945 = vunpack.c.h.b16 %v7624
    %v8946 = vunpack.c.l.b16 %v7625
    %v8947 = vunpack.c.h.b16 %v7625
    %v8948 = vunpack.c.l.b16 %v7626
    %v8949 = vunpack.c.h.b16 %v7626
    %v8950 = vunpack.c.l.b16 %v7627
    %v8951 = vunpack.c.h.b16 %v7627
    %v8952 = vunpack.c.l.b16 %v7628
    %v8953 = vunpack.c.h.b16 %v7628
    %v8954 = vunpack.c.l.b16 %v7629
    %v8955 = vunpack.c.h.b16 %v7629
    %v8956 = vunpack.c.l.b16 %v7630
    %v8957 = vunpack.c.h.b16 %v7630
    %v8958 = vunpack.c.l.b16 %v7631
    %v8959 = vunpack.c.h.b16 %v7631
    %v8960 = vunpack.c.l.b16 %v7632
    %v8961 = vunpack.c.h.b16 %v7632
    %v8962 = vunpack.c.l.b16 %v7633
    %v8963 = vunpack.c.h.b16 %v7633
    %v8964 = vunpack.c.l.b16 %v7634
    %v8965 = vunpack.c.h.b16 %v7634
    %v8966 = vunpack.c.l.b16 %v7635
    %v8967 = vunpack.c.h.b16 %v7635
    %v8968 = vunpack.c.l.b16 %v7636
    %v8969 = vunpack.c.h.b16 %v7636
    %v8970 = vunpack.c.l.b16 %v7637
    %v8971 = vunpack.c.h.b16 %v7637
    %v8972 = vunpack.c.l.b16 %v7638
    %v8973 = vunpack.c.h.b16 %v7638
    %v8974 = vunpack.c.l.b16 %v7639
    %v8975 = vunpack.c.h.b16 %v7639
    %v8976 = vunpack.c.l.b16 %v7640
    %v8977 = vunpack.c.h.b16 %v7640
    %v8978 = vunpack.c.l.b16 %v7641
    %v8979 = vunpack.c.h.b16 %v7641
    %v8980 = vunpack.c.l.b16 %v7642
    %v8981 = vunpack.c.h.b16 %v7642
    %v8982 = vunpack.c.l.b16 %v7643
    %v8983 = vunpack.c.h.b16 %v7643
    %v8984 = vunpack.c.l.b16 %v7644
    %v8985 = vunpack.c.h.b16 %v7644
    %v8986 = vunpack.c.l.b16 %v7645
    %v8987 = vunpack.c.h.b16 %v7645
    %v8988 = vunpack.c.l.b16 %v7646
    %v8989 = vunpack.c.h.b16 %v7646
    %v8990 = vunpack.c.l.b16 %v7647
    %v8991 = vunpack.c.h.b16 %v7647
    %v8992 = vunpack.c.l.b16 %v7648
    %v8993 = vunpack.c.h.b16 %v7648
    %v8994 = vunpack.c.l.b16 %v7649
    %v8995 = vunpack.c.h.b16 %v7649
    %v8996 = vunpack.c.l.b16 %v7650
    %v8997 = vunpack.c.h.b16 %v7650
    %v8998 = vunpack.c.l.b16 %v7651
    %v8999 = vunpack.c.h.b16 %v7651
    %v9000 = vunpack.c.l.b16 %v7652
    %v9001 = vunpack.c.h.b16 %v7652
    %v9002 = vunpack.c.l.b16 %v7653
    %v9003 = vunpack.c.h.b16 %v7653
    %v9004 = vunpack.c.l.b16 %v7654
    %v9005 = vunpack.c.h.b16 %v7654
    %v9006 = vunpack.c.l.b16 %v7655
    %v9007 = vunpack.c.h.b16 %v7655
    %v9008 = vunpack.c.l.b16 %v7656
    %v9009 = vunpack.c.h.b16 %v7656
    %v9010 = vunpack.c.l.b16 %v7657
    %v9011 = vunpack.c.h.b16 %v7657
    %v9012 = vunpack.c.l.b16 %v7658
    %v9013 = vunpack.c.h.b16 %v7658
    %v9014 = vunpack.c.l.b16 %v7659
    %v9015 = vunpack.c.h.b16 %v7659
    %v9016 = vunpack.c.l.b16 %v7660
    %v9017 = vunpack.c.h.b16 %v7660
    %v9018 = vunpack.c.l.b16 %v7661
    %v9019 = vunpack.c.h.b16 %v7661
    %v9020 = vunpack.c.l.b16 %v7662
    %v9021 = vunpack.c.h.b16 %v7662
    %v9022 = vunpack.c.l.b16 %v7663
    %v9023 = vunpack.c.h.b16 %v7663
    %v9024 = vunpack.c.l.b16 %v7664
    %v9025 = vunpack.c.h.b16 %v7664
    %v9026 = vunpack.c.l.b16 %v7665
    %v9027 = vunpack.c.h.b16 %v7665
    %v9028 = vunpack.c.l.b16 %v7666
    %v9029 = vunpack.c.h.b16 %v7666
    %v9030 = vunpack.c.l.b16 %v7667
    %v9031 = vunpack.c.h.b16 %v7667
    %v9032 = vunpack.c.l.b16 %v7668
    %v9033 = vunpack.c.h.b16 %v7668
    %v9034 = vunpack.c.l.b16 %v7669
    %v9035 = vunpack.c.h.b16 %v7669
    %v9036 = vunpack.c.l.b16 %v7670
    %v9037 = vunpack.c.h.b16 %v7670
    %v9038 = vunpack.c.l.b16 %v7671
    %v9039 = vunpack.c.h.b16 %v7671
    %v9040 = vunpack.c.l.b16 %v7672
    %v9041 = vunpack.c.h.b16 %v7672
    %v9042 = vunpack.c.l.b16 %v7673
    %v9043 = vunpack.c.h.b16 %v7673
    %v9044 = vunpack.c.l.b16 %v7674
    %v9045 = vunpack.c.h.b16 %v7674
    %v9046 = vunpack.c.l.b16 %v7675
    %v9047 = vunpack.c.h.b16 %v7675
    %v9048 = vunpack.c.l.b16 %v7676
    %v9049 = vunpack.c.h.b16 %v7676
    %v9050 = vunpack.c.l.b16 %v7677
    %v9051 = vunpack.c.h.b16 %v7677
    %v9052 = vunpack.c.l.b16 %v7678
    %v9053 = vunpack.c.h.b16 %v7678
    %v9054 = vunpack.c.l.b16 %v7679
    %v9055 = vunpack.c.h.b16 %v7679
    %v9056 = vunpack.c.l.b16 %v7680
    %v9057 = vunpack.c.h.b16 %v7680
    %v9058 = vunpack.c.l.b16 %v7681
    %v9059 = vunpack.c.h.b16 %v7681
    %v9060 = vunpack.c.l.b16 %v7682
    %v9061 = vunpack.c.h.b16 %v7682
    %v9062 = vunpack.c.l.b16 %v7683
    %v9063 = vunpack.c.h.b16 %v7683
    %v9064 = vunpack.c.l.b16 %v7684
    %v9065 = vunpack.c.h.b16 %v7684
    %v9066 = vunpack.c.l.b16 %v7685
    %v9067 = vunpack.c.h.b16 %v7685
    %v9068 = vunpack.c.l.b16 %v7686
    %v9069 = vunpack.c.h.b16 %v7686
    %v9070 = vunpack.c.l.b16 %v7687
    %v9071 = vunpack.c.h.b16 %v7687
    %v9072 = vunpack.c.l.b16 %v7688
    %v9073 = vunpack.c.h.b16 %v7688
    %v9074 = vunpack.c.l.b16 %v7689
    %v9075 = vunpack.c.h.b16 %v7689
    %v9076 = vunpack.c.l.b16 %v7690
    %v9077 = vunpack.c.h.b16 %v7690
    %v9078 = vunpack.c.l.b16 %v7691
    %v9079 = vunpack.c.h.b16 %v7691
    %v9080 = vunpack.c.l.b16 %v7692
    %v9081 = vunpack.c.h.b16 %v7692
    %v9082 = vunpack.c.l.b16 %v7693
    %v9083 = vunpack.c.h.b16 %v7693
    %v9084 = vunpack.c.l.b16 %v7694
    %v9085 = vunpack.c.h.b16 %v7694
    %v9086 = vunpack.c.l.b16 %v7695
    %v9087 = vunpack.c.h.b16 %v7695
    %v9088 = vunpack.c.l.b16 %v7696
    %v9089 = vunpack.c.h.b16 %v7696
    %v9090 = vunpack.c.l.b16 %v7697
    %v9091 = vunpack.c.h.b16 %v7697
    %v9092 = vunpack.c.l.b16 %v7698
    %v9093 = vunpack.c.h.b16 %v7698
    %v9094 = vunpack.c.l.b16 %v7699
    %v9095 = vunpack.c.h.b16 %v7699
    %v9096 = vunpack.c.l.b16 %v7700
    %v9097 = vunpack.c.h.b16 %v7700
    %v9098 = vunpack.c.l.b16 %v7701
    %v9099 = vunpack.c.h.b16 %v7701
    %v9100 = vunpack.c.l.b16 %v7702
    %v9101 = vunpack.c.h.b16 %v7702
    %v9102 = vunpack.c.l.b16 %v7703
    %v9103 = vunpack.c.h.b16 %v7703
    %v9104 = vunpack.c.l.b16 %v7704
    %v9105 = vunpack.c.h.b16 %v7704
    %v9106 = vunpack.c.l.b16 %v7705
    %v9107 = vunpack.c.h.b16 %v7705
    %v9108 = vunpack.c.l.b16 %v7706
    %v9109 = vunpack.c.h.b16 %v7706
    %v9110 = vunpack.c.l.b16 %v7707
    %v9111 = vunpack.c.h.b16 %v7707
    %v9112 = vunpack.c.l.b16 %v7708
    %v9113 = vunpack.c.h.b16 %v7708
    %v9114 = vunpack.c.l.b16 %v7709
    %v9115 = vunpack.c.h.b16 %v7709
    %v9116 = vunpack.c.l.b16 %v7710
    %v9117 = vunpack.c.h.b16 %v7710
    %v9118 = vunpack.c.l.b16 %v7711
    %v9119 = vunpack.c.h.b16 %v7711
    %v9120 = vunpack.c.l.b16 %v7712
    %v9121 = vunpack.c.h.b16 %v7712
    %v9122 = vunpack.c.l.b16 %v7713
    %v9123 = vunpack.c.h.b16 %v7713
    %v9124 = vunpack.c.l.b16 %v7714
    %v9125 = vunpack.c.h.b16 %v7714
    %v9126 = vunpack.c.l.b16 %v7715
    %v9127 = vunpack.c.h.b16 %v7715
    %v9128 = vunpack.c.l.b16 %v7716
    %v9129 = vunpack.c.h.b16 %v7716
    %v9130 = vunpack.c.l.b16 %v7717
    %v9131 = vunpack.c.h.b16 %v7717
    %v9132 = vunpack.c.l.b16 %v7718
    %v9133 = vunpack.c.h.b16 %v7718
    %v9134 = vunpack.c.l.b16 %v7719
    %v9135 = vunpack.c.h.b16 %v7719
    %v9136 = vunpack.c.l.b16 %v7720
    %v9137 = vunpack.c.h.b16 %v7720
    %v9138 = vunpack.c.l.b16 %v7721
    %v9139 = vunpack.c.h.b16 %v7721
    %v9140 = vunpack.c.l.b16 %v7722
    %v9141 = vunpack.c.h.b16 %v7722
    %v9142 = vunpack.c.l.b16 %v7723
    %v9143 = vunpack.c.h.b16 %v7723
    %v9144 = vunpack.c.l.b16 %v7724
    %v9145 = vunpack.c.h.b16 %v7724
    %v9146 = vunpack.c.l.b16 %v7725
    %v9147 = vunpack.c.h.b16 %v7725
    %v9148 = vunpack.c.l.b16 %v7726
    %v9149 = vunpack.c.h.b16 %v7726
    %v9150 = vunpack.c.l.b16 %v7727
    %v9151 = vunpack.c.h.b16 %v7727
    %v9152 = vunpack.c.l.b16 %v7728
    %v9153 = vunpack.c.h.b16 %v7728
    %v9154 = vunpack.c.l.b16 %v7729
    %v9155 = vunpack.c.h.b16 %v7729
    %v9156 = vunpack.c.l.b16 %v7730
    %v9157 = vunpack.c.h.b16 %v7730
    %v9158 = vunpack.c.l.b16 %v7731
    %v9159 = vunpack.c.h.b16 %v7731
    %v9160 = vunpack.c.l.b16 %v7732
    %v9161 = vunpack.c.h.b16 %v7732
    %v9162 = vunpack.c.l.b16 %v7733
    %v9163 = vunpack.c.h.b16 %v7733
    %v9164 = vunpack.c.l.b16 %v7734
    %v9165 = vunpack.c.h.b16 %v7734
    %v9166 = vunpack.c.l.b16 %v7735
    %v9167 = vunpack.c.h.b16 %v7735
    %v9168 = vunpack.c.l.b16 %v7736
    %v9169 = vunpack.c.h.b16 %v7736
    %v9170 = vunpack.c.l.b16 %v7737
    %v9171 = vunpack.c.h.b16 %v7737
    %v9172 = vunpack.c.l.b16 %v7738
    %v9173 = vunpack.c.h.b16 %v7738
    %v9174 = vunpack.c.l.b16 %v7739
    %v9175 = vunpack.c.h.b16 %v7739
    %v9176 = vunpack.c.l.b16 %v7740
    %v9177 = vunpack.c.h.b16 %v7740
    %v9178 = vunpack.c.l.b16 %v7741
    %v9179 = vunpack.c.h.b16 %v7741
    %v9180 = vunpack.c.l.b16 %v7742
    %v9181 = vunpack.c.h.b16 %v7742
    %v9182 = vunpack.c.l.b16 %v7743
    %v9183 = vunpack.c.h.b16 %v7743
    %v9184 = vunpack.c.l.b16 %v7744
    %v9185 = vunpack.c.h.b16 %v7744
    %v9186 = vunpack.c.l.b16 %v7745
    %v9187 = vunpack.c.h.b16 %v7745
    %v9188 = vunpack.c.l.b16 %v7746
    %v9189 = vunpack.c.h.b16 %v7746
    %v9190 = vunpack.c.l.b16 %v7747
    %v9191 = vunpack.c.h.b16 %v7747
    %v9192 = vunpack.c.l.b16 %v7748
    %v9193 = vunpack.c.h.b16 %v7748
    %v9194 = vunpack.c.l.b16 %v7749
    %v9195 = vunpack.c.h.b16 %v7749
    %v9196 = vunpack.c.l.b16 %v7750
    %v9197 = vunpack.c.h.b16 %v7750
    %v9198 = vunpack.c.l.b16 %v7751
    %v9199 = vunpack.c.h.b16 %v7751
    %v9200 = vunpack.c.l.b16 %v7752
    %v9201 = vunpack.c.h.b16 %v7752
    %v9202 = vunpack.c.l.b16 %v7753
    %v9203 = vunpack.c.h.b16 %v7753
    %v9204 = vunpack.c.l.b16 %v7754
    %v9205 = vunpack.c.h.b16 %v7754
    %v9206 = vunpack.c.l.b16 %v7755
    %v9207 = vunpack.c.h.b16 %v7755
    %v9208 = vunpack.c.l.b16 %v7756
    %v9209 = vunpack.c.h.b16 %v7756
    %v9210 = vunpack.c.l.b16 %v7757
    %v9211 = vunpack.c.h.b16 %v7757
    %v9212 = vunpack.c.l.b16 %v7758
    %v9213 = vunpack.c.h.b16 %v7758
    %v9214 = vunpack.c.l.b16 %v7759
    %v9215 = vunpack.c.h.b16 %v7759
    %v9216 = vunpack.c.l.b16 %v7760
    %v9217 = vunpack.c.h.b16 %v7760
    %v9218 = vunpack.c.l.b16 %v7761
    %v9219 = vunpack.c.h.b16 %v7761
    %v9220 = vunpack.c.l.b16 %v7762
    %v9221 = vunpack.c.h.b16 %v7762
    %v9222 = vunpack.c.l.b16 %v7763
    %v9223 = vunpack.c.h.b16 %v7763
    %v9224 = vunpack.c.l.b16 %v7764
    %v9225 = vunpack.c.h.b16 %v7764
    %v9226 = vunpack.c.l.b16 %v7765
    %v9227 = vunpack.c.h.b16 %v7765
    %v9228 = vunpack.c.l.b16 %v7766
    %v9229 = vunpack.c.h.b16 %v7766
    %v9230 = vunpack.c.l.b16 %v7767
    %v9231 = vunpack.c.h.b16 %v7767
    %v9232 = vunpack.c.l.b16 %v7768
    %v9233 = vunpack.c.h.b16 %v7768
    %v9234 = vunpack.c.l.b16 %v7769
    %v9235 = vunpack.c.h.b16 %v7769
    %v9236 = vunpack.c.l.b16 %v7770
    %v9237 = vunpack.c.h.b16 %v7770
    %v9238 = vunpack.c.l.b16 %v7771
    %v9239 = vunpack.c.h.b16 %v7771
    %v9240 = vunpack.c.l.b16 %v7772
    %v9241 = vunpack.c.h.b16 %v7772
    %v9242 = vunpack.c.l.b16 %v7773
    %v9243 = vunpack.c.h.b16 %v7773
    %v9244 = vunpack.c.l.b16 %v7774
    %v9245 = vunpack.c.h.b16 %v7774
    %v9246 = vunpack.c.l.b16 %v7775
    %v9247 = vunpack.c.h.b16 %v7775
    %v9248 = vunpack.c.l.b16 %v7776
    %v9249 = vunpack.c.h.b16 %v7776
    %v9250 = vunpack.c.l.b16 %v7777
    %v9251 = vunpack.c.h.b16 %v7777
    %v9252 = vunpack.c.l.b16 %v7778
    %v9253 = vunpack.c.h.b16 %v7778
    %v9254 = vunpack.c.l.b16 %v7779
    %v9255 = vunpack.c.h.b16 %v7779
    %v9256 = vunpack.c.l.b16 %v7780
    %v9257 = vunpack.c.h.b16 %v7780
    %v9258 = vunpack.c.l.b16 %v7781
    %v9259 = vunpack.c.h.b16 %v7781
    %v9260 = vunpack.c.l.b16 %v7782
    %v9261 = vunpack.c.h.b16 %v7782
    %v9262 = vunpack.c.l.b16 %v7783
    %v9263 = vunpack.c.h.b16 %v7783
    %v9264 = vunpack.c.l.b16 %v7784
    %v9265 = vunpack.c.h.b16 %v7784
    %v9266 = vunpack.c.l.b16 %v7785
    %v9267 = vunpack.c.h.b16 %v7785
    %v9268 = vunpack.c.l.b16 %v7786
    %v9269 = vunpack.c.h.b16 %v7786
    %v9270 = vunpack.c.l.b16 %v7787
    %v9271 = vunpack.c.h.b16 %v7787
    %v9272 = vunpack.c.l.b16 %v7788
    %v9273 = vunpack.c.h.b16 %v7788
    %v9274 = vunpack.c.l.b16 %v7789
    %v9275 = vunpack.c.h.b16 %v7789
    %v9276 = vunpack.c.l.b16 %v7790
    %v9277 = vunpack.c.h.b16 %v7790
    %v9278 = vunpack.c.l.b16 %v7791
    %v9279 = vunpack.c.h.b16 %v7791
    %v9280 = vunpack.c.l.b16 %v7792
    %v9281 = vunpack.c.h.b16 %v7792
    %v9282 = vunpack.c.l.b16 %v7793
    %v9283 = vunpack.c.h.b16 %v7793
    %v9284 = vunpack.c.l.b16 %v7794
    %v9285 = vunpack.c.h.b16 %v7794
    %v9286 = vunpack.c.l.b16 %v7795
    %v9287 = vunpack.c.h.b16 %v7795
    %v9288 = vunpack.c.l.b16 %v7796
    %v9289 = vunpack.c.h.b16 %v7796
    %v9290 = vunpack.c.l.b16 %v7797
    %v9291 = vunpack.c.h.b16 %v7797
    %v9292 = vunpack.c.l.b16 %v7798
    %v9293 = vunpack.c.h.b16 %v7798
    %v9294 = vunpack.c.l.b16 %v7799
    %v9295 = vunpack.c.h.b16 %v7799
    %v9296 = vunpack.c.l.b16 %v7800
    %v9297 = vunpack.c.h.b16 %v7800
    %v9298 = vunpack.c.l.b16 %v7801
    %v9299 = vunpack.c.h.b16 %v7801
    %v9300 = vunpack.c.l.b16 %v7802
    %v9301 = vunpack.c.h.b16 %v7802
    %v9302 = vunpack.c.l.b16 %v7803
    %v9303 = vunpack.c.h.b16 %v7803
    %v9304 = vunpack.c.l.b16 %v7804
    %v9305 = vunpack.c.h.b16 %v7804
    %v9306 = vunpack.c.l.b16 %v7805
    %v9307 = vunpack.c.h.b16 %v7805
    %v9308 = vunpack.c.l.b16 %v7806
    %v9309 = vunpack.c.h.b16 %v7806
    %v9310 = vunpack.c.l.b16 %v7807
    %v9311 = vunpack.c.h.b16 %v7807
    %v9312 = vunpack.c.l.b16 %v7808
    %v9313 = vunpack.c.h.b16 %v7808
    %v9314 = vunpack.c.l.b16 %v7809
    %v9315 = vunpack.c.h.b16 %v7809
    %v9316 = vunpack.c.l.b16 %v7810
    %v9317 = vunpack.c.h.b16 %v7810
    %v9318 = vunpack.c.l.b16 %v7811
    %v9319 = vunpack.c.h.b16 %v7811
    %v9320 = vunpack.c.l.b16 %v7812
    %v9321 = vunpack.c.h.b16 %v7812
    %v9322 = vunpack.c.l.b16 %v7813
    %v9323 = vunpack.c.h.b16 %v7813
    %v9324 = vunpack.c.l.b16 %v7814
    %v9325 = vunpack.c.h.b16 %v7814
    %v9326 = vunpack.c.l.b16 %v7815
    %v9327 = vunpack.c.h.b16 %v7815
    %v9328 = vunpack.c.l.b16 %v7816
    %v9329 = vunpack.c.h.b16 %v7816
    %v9330 = vunpack.c.l.b16 %v7817
    %v9331 = vunpack.c.h.b16 %v7817
    %v9332 = vunpack.c.l.b16 %v7818
    %v9333 = vunpack.c.h.b16 %v7818
    %v9334 = vunpack.c.l.b16 %v7819
    %v9335 = vunpack.c.h.b16 %v7819
    %v9336 = vunpack.c.l.b16 %v7820
    %v9337 = vunpack.c.h.b16 %v7820
    %v9338 = vunpack.c.l.b16 %v7821
    %v9339 = vunpack.c.h.b16 %v7821
    %v9340 = vunpack.c.l.b16 %v7822
    %v9341 = vunpack.c.h.b16 %v7822
    %v9342 = vunpack.c.l.b16 %v7823
    %v9343 = vunpack.c.h.b16 %v7823
    %v9344 = vunpack.c.l.b16 %v7824
    %v9345 = vunpack.c.h.b16 %v7824
    %v9346 = vunpack.c.l.b16 %v7825
    %v9347 = vunpack.c.h.b16 %v7825
    %v9348 = vunpack.c.l.b16 %v7826
    %v9349 = vunpack.c.h.b16 %v7826
    %v9350 = vunpack.c.l.b16 %v7827
    %v9351 = vunpack.c.h.b16 %v7827
    %v9352 = vunpack.c.l.b16 %v7828
    %v9353 = vunpack.c.h.b16 %v7828
    %v9354 = vunpack.c.l.b16 %v7829
    %v9355 = vunpack.c.h.b16 %v7829
    %v9356 = vunpack.c.l.b16 %v7830
    %v9357 = vunpack.c.h.b16 %v7830
    %v9358 = vunpack.c.l.b16 %v7831
    %v9359 = vunpack.c.h.b16 %v7831
    %v9360 = vunpack.c.l.b16 %v7832
    %v9361 = vunpack.c.h.b16 %v7832
    %v9362 = vunpack.c.l.b16 %v7833
    %v9363 = vunpack.c.h.b16 %v7833
    %v9364 = vunpack.c.l.b16 %v7834
    %v9365 = vunpack.c.h.b16 %v7834
    %v9366 = vunpack.c.l.b16 %v7835
    %v9367 = vunpack.c.h.b16 %v7835
    %v9368 = vunpack.c.l.b16 %v7836
    %v9369 = vunpack.c.h.b16 %v7836
    %v9370 = vunpack.c.l.b16 %v7837
    %v9371 = vunpack.c.h.b16 %v7837
    %v9372 = vunpack.c.l.b16 %v7838
    %v9373 = vunpack.c.h.b16 %v7838
    %v9374 = vunpack.c.l.b16 %v7839
    %v9375 = vunpack.c.h.b16 %v7839
    %v9376 = vunpack.c.l.b16 %v7840
    %v9377 = vunpack.c.h.b16 %v7840
    %v9378 = vunpack.c.l.b16 %v7841
    %v9379 = vunpack.c.h.b16 %v7841
    %v9380 = vunpack.c.l.b16 %v7842
    %v9381 = vunpack.c.h.b16 %v7842
    %v9382 = vunpack.c.l.b16 %v7843
    %v9383 = vunpack.c.h.b16 %v7843
    %v9384 = vunpack.c.l.b16 %v7844
    %v9385 = vunpack.c.h.b16 %v7844
    %v9386 = vunpack.c.l.b16 %v7845
    %v9387 = vunpack.c.h.b16 %v7845
    %v9388 = vunpack.c.l.b16 %v7846
    %v9389 = vunpack.c.h.b16 %v7846
    %v9390 = vunpack.c.l.b16 %v7847
    %v9391 = vunpack.c.h.b16 %v7847
    %v9392 = vunpack.c.l.b16 %v7848
    %v9393 = vunpack.c.h.b16 %v7848
    %v9394 = vunpack.c.l.b16 %v7849
    %v9395 = vunpack.c.h.b16 %v7849
    %v9396 = vunpack.c.l.b16 %v7850
    %v9397 = vunpack.c.h.b16 %v7850
    %v9398 = vunpack.c.l.b16 %v7851
    %v9399 = vunpack.c.h.b16 %v7851
    %v9400 = vunpack.c.l.b16 %v7852
    %v9401 = vunpack.c.h.b16 %v7852
    %v9402 = vunpack.c.l.b16 %v7853
    %v9403 = vunpack.c.h.b16 %v7853
    %v9404 = vunpack.c.l.b16 %v7854
    %v9405 = vunpack.c.h.b16 %v7854
    %v9406 = vunpack.c.l.b16 %v7855
    %v9407 = vunpack.c.h.b16 %v7855
    %v9408 = vunpack.c.l.b16 %v7856
    %v9409 = vunpack.c.h.b16 %v7856
    %v9410 = vunpack.c.l.b16 %v7857
    %v9411 = vunpack.c.h.b16 %v7857
    %v9412 = vunpack.c.l.b16 %v7858
    %v9413 = vunpack.c.h.b16 %v7858
    %v9414 = vunpack.c.l.b16 %v7859
    %v9415 = vunpack.c.h.b16 %v7859
    %v9416 = vunpack.c.l.b16 %v7860
    %v9417 = vunpack.c.h.b16 %v7860
    %v9418 = vunpack.c.l.b16 %v7861
    %v9419 = vunpack.c.h.b16 %v7861
    %v9420 = vunpack.c.l.b16 %v7862
    %v9421 = vunpack.c.h.b16 %v7862
    %v9422 = vunpack.c.l.b16 %v7863
    %v9423 = vunpack.c.h.b16 %v7863
    %v9424 = vunpack.c.l.b16 %v7864
    %v9425 = vunpack.c.h.b16 %v7864
    %v9426 = vunpack.c.l.b16 %v7865
    %v9427 = vunpack.c.h.b16 %v7865
    %v9428 = vunpack.c.l.b16 %v7866
    %v9429 = vunpack.c.h.b16 %v7866
    %v9430 = vunpack.c.l.b16 %v7867
    %v9431 = vunpack.c.h.b16 %v7867
    %v9432 = vunpack.c.l.b16 %v7868
    %v9433 = vunpack.c.h.b16 %v7868
    %v9434 = vunpack.c.l.b16 %v7869
    %v9435 = vunpack.c.h.b16 %v7869
    %v9436 = vunpack.c.l.b16 %v7870
    %v9437 = vunpack.c.h.b16 %v7870
    %v9438 = vunpack.c.l.b16 %v7871
    %v9439 = vunpack.c.h.b16 %v7871
    %v9440 = vunpack.c.l.b16 %v7872
    %v9441 = vunpack.c.h.b16 %v7872
    %v9442 = vunpack.c.l.b16 %v7873
    %v9443 = vunpack.c.h.b16 %v7873
    %v9444 = vunpack.c.l.b16 %v7874
    %v9445 = vunpack.c.h.b16 %v7874
    %v9446 = vunpack.c.l.b16 %v7875
    %v9447 = vunpack.c.h.b16 %v7875
    %v9448 = vunpack.c.l.b16 %v7876
    %v9449 = vunpack.c.h.b16 %v7876
    %v9450 = vunpack.c.l.b16 %v7877
    %v9451 = vunpack.c.h.b16 %v7877
    %v9452 = vunpack.c.l.b16 %v7878
    %v9453 = vunpack.c.h.b16 %v7878
    %v9454 = vunpack.c.l.b16 %v7879
    %v9455 = vunpack.c.h.b16 %v7879
    %v9456 = vunpack.c.l.b16 %v7880
    %v9457 = vunpack.c.h.b16 %v7880
    %v9458 = vunpack.c.l.b16 %v7881
    %v9459 = vunpack.c.h.b16 %v7881
    %v9460 = vunpack.c.l.b16 %v7882
    %v9461 = vunpack.c.h.b16 %v7882
    %v9462 = vunpack.c.l.b16 %v7883
    %v9463 = vunpack.c.h.b16 %v7883
    %v9464 = vunpack.c.l.b16 %v7884
    %v9465 = vunpack.c.h.b16 %v7884
    %v9466 = vunpack.c.l.b16 %v7885
    %v9467 = vunpack.c.h.b16 %v7885
    %v9468 = vunpack.c.l.b16 %v7886
    %v9469 = vunpack.c.h.b16 %v7886
    %v9470 = vunpack.c.l.b16 %v7887
    %v9471 = vunpack.c.h.b16 %v7887
    %v9472 = vunpack.c.l.b16 %v7888
    %v9473 = vunpack.c.h.b16 %v7888
    %v9474 = vunpack.c.l.b16 %v7889
    %v9475 = vunpack.c.h.b16 %v7889
    %v9476 = vunpack.c.l.b16 %v7890
    %v9477 = vunpack.c.h.b16 %v7890
    %v9478 = vunpack.c.l.b16 %v7891
    %v9479 = vunpack.c.h.b16 %v7891
    %v9480 = vunpack.c.l.b16 %v7892
    %v9481 = vunpack.c.h.b16 %v7892
    %v9482 = vunpack.c.l.b16 %v7893
    %v9483 = vunpack.c.h.b16 %v7893
    %v9484 = vunpack.c.l.b16 %v7894
    %v9485 = vunpack.c.h.b16 %v7894
    %v9486 = vunpack.c.l.b16 %v7895
    %v9487 = vunpack.c.h.b16 %v7895
    %v9488 = vunpack.c.l.b16 %v7896
    %v9489 = vunpack.c.h.b16 %v7896
    %v9490 = vunpack.c.l.b16 %v7897
    %v9491 = vunpack.c.h.b16 %v7897
    %v9492 = vunpack.c.l.b16 %v7898
    %v9493 = vunpack.c.h.b16 %v7898
    %v9494 = vunpack.c.l.b16 %v7899
    %v9495 = vunpack.c.h.b16 %v7899
    %v9496 = vpack.c.b16 %v8922, %v8920
    %v9497 = vpack.c.b16 %v8923, %v8921
    %v9498 = vpack.c.b16 %v8926, %v8924
    %v9499 = vpack.c.b16 %v8927, %v8925
    %v9500 = vpack.c.b16 %v8930, %v8928
    %v9501 = vpack.c.b16 %v8931, %v8929
    %v9502 = vpack.c.b16 %v8934, %v8932
    %v9503 = vpack.c.b16 %v8935, %v8933
    %v9504 = vpack.c.b16 %v8938, %v8936
    %v9505 = vpack.c.b16 %v8939, %v8937
    %v9506 = vpack.c.b16 %v8942, %v8940
    %v9507 = vpack.c.b16 %v8943, %v8941
    %v9508 = vpack.c.b16 %v8946, %v8944
    %v9509 = vpack.c.b16 %v8947, %v8945
    %v9510 = vpack.c.b16 %v8950, %v8948
    %v9511 = vpack.c.b16 %v8951, %v8949
    %v9512 = vpack.c.b16 %v8954, %v8952
    %v9513 = vpack.c.b16 %v8955, %v8953
    %v9514 = vpack.c.b16 %v8958, %v8956
    %v9515 = vpack.c.b16 %v8959, %v8957
    %v9516 = vpack.c.b16 %v8962, %v8960
    %v9517 = vpack.c.b16 %v8963, %v8961
    %v9518 = vpack.c.b16 %v8966, %v8964
    %v9519 = vpack.c.b16 %v8967, %v8965
    %v9520 = vpack.c.b16 %v8970, %v8968
    %v9521 = vpack.c.b16 %v8971, %v8969
    %v9522 = vpack.c.b16 %v8974, %v8972
    %v9523 = vpack.c.b16 %v8975, %v8973
    %v9524 = vpack.c.b16 %v8978, %v8976
    %v9525 = vpack.c.b16 %v8979, %v8977
    %v9526 = vpack.c.b16 %v8982, %v8980
    %v9527 = vpack.c.b16 %v8983, %v8981
    %v9528 = vpack.c.b16 %v8986, %v8984
    %v9529 = vpack.c.b16 %v8987, %v8985
    %v9530 = vpack.c.b16 %v8990, %v8988
    %v9531 = vpack.c.b16 %v8991, %v8989
    %v9532 = vpack.c.b16 %v8994, %v8992
    %v9533 = vpack.c.b16 %v8995, %v8993
    %v9534 = vpack.c.b16 %v8998, %v8996
    %v9535 = vpack.c.b16 %v8999, %v8997
    %v9536 = vpack.c.b16 %v9002, %v9000
    %v9537 = vpack.c.b16 %v9003, %v9001
    %v9538 = vpack.c.b16 %v9006, %v9004
    %v9539 = vpack.c.b16 %v9007, %v9005
    %v9540 = vpack.c.b16 %v9010, %v9008
    %v9541 = vpack.c.b16 %v9011, %v9009
    %v9542 = vpack.c.b16 %v9014, %v9012
    %v9543 = vpack.c.b16 %v9015, %v9013
    %v9544 = vpack.c.b16 %v9018, %v9016
    %v9545 = vpack.c.b16 %v9019, %v9017
    %v9546 = vpack.c.b16 %v9022, %v9020
    %v9547 = vpack.c.b16 %v9023, %v9021
    %v9548 = vpack.c.b16 %v9026, %v9024
    %v9549 = vpack.c.b16 %v9027, %v9025
    %v9550 = vpack.c.b16 %v9030, %v9028
    %v9551 = vpack.c.b16 %v9031, %v9029
    %v9552 = vpack.c.b16 %v9034, %v9032
    %v9553 = vpack.c.b16 %v9035, %v9033
    %v9554 = vpack.c.b16 %v9038, %v9036
    %v9555 = vpack.c.b16 %v9039, %v9037
    %v9556 = vpack.c.b16 %v9042, %v9040
    %v9557 = vpack.c.b16 %v9043, %v9041
    %v9558 = vpack.c.b16 %v9046, %v9044
    %v9559 = vpack.c.b16 %v9047, %v9045
    %v9560 = vpack.c.b16 %v9050, %v9048
    %v9561 = vpack.c.b16 %v9051, %v9049
    %v9562 = vpack.c.b16 %v9054, %v9052
    %v9563 = vpack.c.b16 %v9055, %v9053
    %v9564 = vpack.c.b16 %v9058, %v9056
    %v9565 = vpack.c.b16 %v9059, %v9057
    %v9566 = vpack.c.b16 %v9062, %v9060
    %v9567 = vpack.c.b16 %v9063, %v9061
    %v9568 = vpack.c.b16 %v9066, %v9064
    %v9569 = vpack.c.b16 %v9067, %v9065
    %v9570 = vpack.c.b16 %v9070, %v9068
    %v9571 = vpack.c.b16 %v9071, %v9069
    %v9572 = vpack.c.b16 %v9074, %v9072
    %v9573 = vpack.c.b16 %v9075, %v9073
    %v9574 = vpack.c.b16 %v9078, %v9076
    %v9575 = vpack.c.b16 %v9079, %v9077
    %v9576 = vpack.c.b16 %v9082, %v9080
    %v9577 = vpack.c.b16 %v9083, %v9081
    %v9578 = vpack.c.b16 %v9086, %v9084
    %v9579 = vpack.c.b16 %v9087, %v9085
    %v9580 = vpack.c.b16 %v9090, %v9088
    %v9581 = vpack.c.b16 %v9091, %v9089
    %v9582 = vpack.c.b16 %v9094, %v9092
    %v9583 = vpack.c.b16 %v9095, %v9093
    %v9584 = vpack.c.b16 %v9098, %v9096
    %v9585 = vpack.c.b16 %v9099, %v9097
    %v9586 = vpack.c.b16 %v9102, %v9100
    %v9587 = vpack.c.b16 %v9103, %v9101
    %v9588 = vpack.c.b16 %v9106, %v9104
    %v9589 = vpack.c.b16 %v9107, %v9105
    %v9590 = vpack.c.b16 %v9110, %v9108
    %v9591 = vpack.c.b16 %v9111, %v9109
    %v9592 = vpack.c.b16 %v9114, %v9112
    %v9593 = vpack.c.b16 %v9115, %v9113
    %v9594 = vpack.c.b16 %v9118, %v9116
    %v9595 = vpack.c.b16 %v9119, %v9117
    %v9596 = vpack.c.b16 %v9122, %v9120
    %v9597 = vpack.c.b16 %v9123, %v9121
    %v9598 = vpack.c.b16 %v9126, %v9124
    %v9599 = vpack.c.b16 %v9127, %v9125
    %v9600 = vpack.c.b16 %v9130, %v9128
    %v9601 = vpack.c.b16 %v9131, %v9129
    %v9602 = vpack.c.b16 %v9134, %v9132
    %v9603 = vpack.c.b16 %v9135, %v9133
    %v9604 = vpack.c.b16 %v9138, %v9136
    %v9605 = vpack.c.b16 %v9139, %v9137
    %v9606 = vpack.c.b16 %v9142, %v9140
    %v9607 = vpack.c.b16 %v9143, %v9141
    %v9608 = vpack.c.b16 %v9146, %v9144
    %v9609 = vpack.c.b16 %v9147, %v9145
    %v9610 = vpack.c.b16 %v9150, %v9148
    %v9611 = vpack.c.b16 %v9151, %v9149
    %v9612 = vpack.c.b16 %v9154, %v9152
    %v9613 = vpack.c.b16 %v9155, %v9153
    %v9614 = vpack.c.b16 %v9158, %v9156
    %v9615 = vpack.c.b16 %v9159, %v9157
    %v9616 = vpack.c.b16 %v9162, %v9160
    %v9617 = vpack.c.b16 %v9163, %v9161
    %v9618 = vpack.c.b16 %v9166, %v9164
    %v9619 = vpack.c.b16 %v9167, %v9165
    %v9620 = vpack.c.b16 %v9170, %v9168
    %v9621 = vpack.c.b16 %v9171, %v9169
    %v9622 = vpack.c.b16 %v9174, %v9172
    %v9623 = vpack.c.b16 %v9175, %v9173
    %v9624 = vpack.c.b16 %v9178, %v9176
    %v9625 = vpack.c.b16 %v9179, %v9177
    %v9626 = vpack.c.b16 %v9182, %v9180
    %v9627 = vpack.c.b16 %v9183, %v9181
    %v9628 = vpack.c.b16 %v9186, %v9184
    %v9629 = vpack.c.b16 %v9187, %v9185
    %v9630 = vpack.c.b16 %v9190, %v9188
    %v9631 = vpack.c.b16 %v9191, %v9189
    %v9632 = vpack.c.b16 %v9194, %v9192
    %v9633 = vpack.c.b16 %v9195, %v9193
    %v9634 = vpack.c.b16 %v9198, %v9196
    %v9635 = vpack.c.b16 %v9199, %v9197
    %v9636 = vpack.c.b16 %v9202, %v9200
    %v9637 = vpack.c.b16 %v9203, %v9201
    %v9638 = vpack.c.b16 %v9206, %v9204
    %v9639 = vpack.c.b16 %v9207, %v9205
    %v9640 = vpack.c.b16 %v9210, %v9208
    %v9641 = vpack.c.b16 %v9211, %v9209
    %v9642 = vpack.c.b16 %v9214, %v9212
    %v9643 = vpack.c.b16 %v9215, %v9213
    %v9644 = vpack.c.b16 %v9218, %v9216
    %v9645 = vpack.c.b16 %v9219, %v9217
    %v9646 = vpack.c.b16 %v9222, %v9220
    %v9647 = vpack.c.b16 %v9223, %v9221
    %v9648 = vpack.c.b16 %v9226, %v9224
    %v9649 = vpack.c.b16 %v9227, %v9225
    %v9650 = vpack.c.b16 %v9230, %v9228
    %v9651 = vpack.c.b16 %v9231, %v9229
    %v9652 = vpack.c.b16 %v9234, %v9232
    %v9653 = vpack.c.b16 %v9235, %v9233
    %v9654 = vpack.c.b16 %v9238, %v9236
    %v9655 = vpack.c.b16 %v9239, %v9237
    %v9656 = vpack.c.b16 %v9242, %v9240
    %v9657 = vpack.c.b16 %v9243, %v9241
    %v9658 = vpack.c.b16 %v9246, %v9244
    %v9659 = vpack.c.b16 %v9247, %v9245
    %v9660 = vpack.c.b16 %v9250, %v9248
    %v9661 = vpack.c.b16 %v9251, %v9249
    %v9662 = vpack.c.b16 %v9254, %v9252
    %v9663 = vpack.c.b16 %v9255, %v9253
    %v9664 = vpack.c.b16 %v9258, %v9256
    %v9665 = vpack.c.b16 %v9259, %v9257
    %v9666 = vpack.c.b16 %v9262, %v9260
    %v9667 = vpack.c.b16 %v9263, %v9261
    %v9668 = vpack.c.b16 %v9266, %v9264
    %v9669 = vpack.c.b16 %v9267, %v9265
    %v9670 = vpack.c.b16 %v9270, %v9268
    %v9671 = vpack.c.b16 %v9271, %v9269
    %v9672 = vpack.c.b16 %v9274, %v9272
    %v9673 = vpack.c.b16 %v9275, %v9273
    %v9674 = vpack.c.b16 %v9278, %v9276
    %v9675 = vpack.c.b16 %v9279, %v9277
    %v9676 = vpack.c.b16 %v9282, %v9280
    %v9677 = vpack.c.b16 %v9283, %v9281
    %v9678 = vpack.c.b16 %v9286, %v9284
    %v9679 = vpack.c.b16 %v9287, %v9285
    %v9680 = vpack.c.b16 %v9290, %v9288
    %v9681 = vpack.c.b16 %v9291, %v9289
    %v9682 = vpack.c.b16 %v9294, %v9292
    %v9683 = vpack.c.b16 %v9295, %v9293
    %v9684 = vpack.c.b16 %v9298, %v9296
    %v9685 = vpack.c.b16 %v9299, %v9297
    %v9686 = vpack.c.b16 %v9302, %v9300
    %v9687 = vpack.c.b16 %v9303, %v9301
    %v9688 = vpack.c.b16 %v9306, %v9304
    %v9689 = vpack.c.b16 %v9307, %v9305
    %v9690 = vpack.c.b16 %v9310, %v9308
    %v9691 = vpack.c.b16 %v9311, %v9309
    %v9692 = vpack.c.b16 %v9314, %v9312
    %v9693 = vpack.c.b16 %v9315, %v9313
    %v9694 = vpack.c.b16 %v9318, %v9316
    %v9695 = vpack.c.b16 %v9319, %v9317
    %v9696 = vpack.c.b16 %v9322, %v9320
    %v9697 = vpack.c.b16 %v9323, %v9321
    %v9698 = vpack.c.b16 %v9326, %v9324
    %v9699 = vpack.c.b16 %v9327, %v9325
    %v9700 = vpack.c.b16 %v9330, %v9328
    %v9701 = vpack.c.b16 %v9331, %v9329
    %v9702 = vpack.c.b16 %v9334, %v9332
    %v9703 = vpack.c.b16 %v9335, %v9333
    %v9704 = vpack.c.b16 %v9338, %v9336
    %v9705 = vpack.c.b16 %v9339, %v9337
    %v9706 = vpack.c.b16 %v9342, %v9340
    %v9707 = vpack.c.b16 %v9343, %v9341
    %v9708 = vpack.c.b16 %v9346, %v9344
    %v9709 = vpack.c.b16 %v9347, %v9345
    %v9710 = vpack.c.b16 %v9350, %v9348
    %v9711 = vpack.c.b16 %v9351, %v9349
    %v9712 = vpack.c.b16 %v9354, %v9352
    %v9713 = vpack.c.b16 %v9355, %v9353
    %v9714 = vpack.c.b16 %v9358, %v9356
    %v9715 = vpack.c.b16 %v9359, %v9357
    %v9716 = vpack.c.b16 %v9362, %v9360
    %v9717 = vpack.c.b16 %v9363, %v9361
    %v9718 = vpack.c.b16 %v9366, %v9364
    %v9719 = vpack.c.b16 %v9367, %v9365
    %v9720 = vpack.c.b16 %v9370, %v9368
    %v9721 = vpack.c.b16 %v9371, %v9369
    %v9722 = vpack.c.b16 %v9374, %v9372
    %v9723 = vpack.c.b16 %v9375, %v9373
    %v9724 = vpack.c.b16 %v9378, %v9376
    %v9725 = vpack.c.b16 %v9379, %v9377
    %v9726 = vpack.c.b16 %v9382, %v9380
    %v9727 = vpack.c.b16 %v9383, %v9381
    %v9728 = vpack.c.b16 %v9386, %v9384
    %v9729 = vpack.c.b16 %v9387, %v9385
    %v9730 = vpack.c.b16 %v9390, %v9388
    %v9731 = vpack.c.b16 %v9391, %v9389
    %v9732 = vpack.c.b16 %v9394, %v9392
    %v9733 = vpack.c.b16 %v9395, %v9393
    %v9734 = vpack.c.b16 %v9398, %v9396
    %v9735 = vpack.c.b16 %v9399, %v9397
    %v9736 = vpack.c.b16 %v9402, %v9400
    %v9737 = vpack.c.b16 %v9403, %v9401
    %v9738 = vpack.c.b16 %v9406, %v9404
    %v9739 = vpack.c.b16 %v9407, %v9405
    %v9740 = vpack.c.b16 %v9410, %v9408
    %v9741 = vpack.c.b16 %v9411, %v9409
    %v9742 = vpack.c.b16 %v9414, %v9412
    %v9743 = vpack.c.b16 %v9415, %v9413
    %v9744 = vpack.c.b16 %v9418, %v9416
    %v9745 = vpack.c.b16 %v9419, %v9417
    %v9746 = vpack.c.b16 %v9422, %v9420
    %v9747 = vpack.c.b16 %v9423, %v9421
    %v9748 = vpack.c.b16 %v9426, %v9424
    %v9749 = vpack.c.b16 %v9427, %v9425
    %v9750 = vpack.c.b16 %v9430, %v9428
    %v9751 = vpack.c.b16 %v9431, %v9429
    %v9752 = vpack.c.b16 %v9434, %v9432
    %v9753 = vpack.c.b16 %v9435, %v9433
    %v9754 = vpack.c.b16 %v9438, %v9436
    %v9755 = vpack.c.b16 %v9439, %v9437
    %v9756 = vpack.c.b16 %v9442, %v9440
    %v9757 = vpack.c.b16 %v9443, %v9441
    %v9758 = vpack.c.b16 %v9446, %v9444
    %v9759 = vpack.c.b16 %v9447, %v9445
    %v9760 = vpack.c.b16 %v9450, %v9448
    %v9761 = vpack.c.b16 %v9451, %v9449
    %v9762 = vpack.c.b16 %v9454, %v9452
    %v9763 = vpack.c.b16 %v9455, %v9453
    %v9764 = vpack.c.b16 %v9458, %v9456
    %v9765 = vpack.c.b16 %v9459, %v9457
    %v9766 = vpack.c.b16 %v9462, %v9460
    %v9767 = vpack.c.b16 %v9463, %v9461
    %v9768 = vpack.c.b16 %v9466, %v9464
    %v9769 = vpack.c.b16 %v9467, %v9465
    %v9770 = vpack.c.b16 %v9470, %v9468
    %v9771 = vpack.c.b16 %v9471, %v9469
    %v9772 = vpack.c.b16 %v9474, %v9472
    %v9773 = vpack.c.b16 %v9475, %v9473
    %v9774 = vpack.c.b16 %v9478, %v9476
    %v9775 = vpack.c.b16 %v9479, %v9477
    %v9776 = vpack.c.b16 %v9482, %v9480
    %v9777 = vpack.c.b16 %v9483, %v9481
    %v9778 = vpack.c.b16 %v9486, %v9484
    %v9779 = vpack.c.b16 %v9487, %v9485
    %v9780 = vpack.c.b16 %v9490, %v9488
    %v9781 = vpack.c.b16 %v9491, %v9489
    %v9782 = vpack.c.b16 %v9494, %v9492
    %v9783 = vpack.c.b16 %v9495, %v9493
    %10072 = vmatprep.subr.bf16.mxu0 %v9511
    %10073 = vmatpush1.bf16.msra.mxu0 %v9510
    %10074 = vmatprep.subr.bf16.mxu0 %v9509
    %10075 = vmatpush1.bf16.msra.mxu0 %v9508
    %10076 = vmatprep.subr.bf16.mxu0 %v9507
    %10077 = vmatpush1.bf16.msra.mxu0 %v9506
    %10078 = vmatprep.subr.bf16.mxu0 %v9505
    %10079 = vmatpush1.bf16.msra.mxu0 %v9504
    %10080 = vmatprep.subr.bf16.mxu0 %v9503
    %10081 = vmatpush1.bf16.msra.mxu0 %v9502
    %10082 = vmatprep.subr.bf16.mxu0 %v9501
    %10083 = vmatpush1.bf16.msra.mxu0 %v9500
    %10084 = vmatprep.subr.bf16.mxu0 %v9499
    %10085 = vmatpush1.bf16.msra.mxu0 %v9498
    %10086 = vmatprep.subr.bf16.mxu0 %v9497
    %10087 = vmatpush1.bf16.msra.mxu0 %v9496
    %10088 = vmatprep.subr.bf16.mxu0 %v9527
    %10089 = vmatpush2.bf16.msra.mxu0 %v9526
    %10090 = vmatprep.subr.bf16.mxu0 %v9525
    %10091 = vmatpush2.bf16.msra.mxu0 %v9524
    %10092 = vmatprep.subr.bf16.mxu0 %v9523
    %10093 = vmatpush2.bf16.msra.mxu0 %v9522
    %10094 = vmatprep.subr.bf16.mxu0 %v9521
    %10095 = vmatpush2.bf16.msra.mxu0 %v9520
    %10096 = vmatprep.subr.bf16.mxu0 %v9519
    %10097 = vmatpush2.bf16.msra.mxu0 %v9518
    %10098 = vmatprep.subr.bf16.mxu0 %v9517
    %10099 = vmatpush2.bf16.msra.mxu0 %v9516
    %10100 = vmatprep.subr.bf16.mxu0 %v9515
    %10101 = vmatpush2.bf16.msra.mxu0 %v9514
    %10102 = vmatprep.subr.bf16.mxu0 %v9513
    %10103 = vmatpush2.bf16.msra.mxu0 %v9512
    %10104 = vmatprep.mubr.bf16.mxu0 %v8345
    %10105 = vmatmul.mubr.bf16.gmra.mxu0 %v8344
    %v10106 = vpop.f32.mrf.mxu0
    %v10107 = vadd.f32 %v7905, %v10106
    %v10108 = vpop.f32.mrf.mxu0
    %v10109 = vadd.f32 %v7909, %v10108
    %v10110 = vpop.f32.mrf.mxu0
    %v10111 = vadd.f32 %v7905, %v10110
    %v10112 = vpop.f32.mrf.mxu0
    %v10113 = vadd.f32 %v7909, %v10112
    %10114 = vmatprep.mubr.bf16.mxu0 %v8363
    %10115 = vmatmul.mubr.bf16.gmra.mxu0 %v8362
    %v10116 = vpop.f32.mrf.mxu0
    %v10117 = vadd.f32 %v7905, %v10116
    %v10118 = vpop.f32.mrf.mxu0
    %v10119 = vadd.f32 %v7909, %v10118
    %v10120 = vpop.f32.mrf.mxu0
    %v10121 = vadd.f32 %v7905, %v10120
    %v10122 = vpop.f32.mrf.mxu0
    %v10123 = vadd.f32 %v7909, %v10122
    %10124 = vmatprep.mubr.bf16.mxu0 %v8381
    %10125 = vmatmul.mubr.bf16.gmra.mxu0 %v8380
    %v10126 = vpop.f32.mrf.mxu0
    %v10127 = vadd.f32 %v7905, %v10126
    %v10128 = vpop.f32.mrf.mxu0
    %v10129 = vadd.f32 %v7909, %v10128
    %v10130 = vpop.f32.mrf.mxu0
    %v10131 = vadd.f32 %v7905, %v10130
    %v10132 = vpop.f32.mrf.mxu0
    %v10133 = vadd.f32 %v7909, %v10132
    %10134 = vmatprep.mubr.bf16.mxu0 %v8399
    %10135 = vmatmul.mubr.bf16.gmra.mxu0 %v8398
    %v10136 = vpop.f32.mrf.mxu0
    %v10137 = vadd.f32 %v7905, %v10136
    %v10138 = vpop.f32.mrf.mxu0
    %v10139 = vadd.f32 %v7909, %v10138
    %v10140 = vpop.f32.mrf.mxu0
    %v10141 = vadd.f32 %v7905, %v10140
    %v10142 = vpop.f32.mrf.mxu0
    %v10143 = vadd.f32 %v7909, %v10142
    %10144 = vmatprep.mubr.bf16.mxu0 %v8417
    %10145 = vmatmul.mubr.bf16.gmra.mxu0 %v8416
    %v10146 = vpop.f32.mrf.mxu0
    %v10147 = vadd.f32 %v7905, %v10146
    %v10148 = vpop.f32.mrf.mxu0
    %v10149 = vadd.f32 %v7909, %v10148
    %v10150 = vpop.f32.mrf.mxu0
    %v10151 = vadd.f32 %v7905, %v10150
    %v10152 = vpop.f32.mrf.mxu0
    %v10153 = vadd.f32 %v7909, %v10152
    %10154 = vmatprep.mubr.bf16.mxu0 %v8435
    %10155 = vmatmul.mubr.bf16.gmra.mxu0 %v8434
    %v10156 = vpop.f32.mrf.mxu0
    %v10157 = vadd.f32 %v7905, %v10156
    %v10158 = vpop.f32.mrf.mxu0
    %v10159 = vadd.f32 %v7909, %v10158
    %v10160 = vpop.f32.mrf.mxu0
    %v10161 = vadd.f32 %v7905, %v10160
    %v10162 = vpop.f32.mrf.mxu0
    %v10163 = vadd.f32 %v7909, %v10162
    %10164 = vmatprep.mubr.bf16.mxu0 %v8453
    %10165 = vmatmul.mubr.bf16.gmra.mxu0 %v8452
    %v10166 = vpop.f32.mrf.mxu0
    %v10167 = vadd.f32 %v7905, %v10166
    %v10168 = vpop.f32.mrf.mxu0
    %v10169 = vadd.f32 %v7909, %v10168
    %v10170 = vpop.f32.mrf.mxu0
    %v10171 = vadd.f32 %v7905, %v10170
    %v10172 = vpop.f32.mrf.mxu0
    %v10173 = vadd.f32 %v7909, %v10172
    %10174 = vmatprep.mubr.bf16.mxu0 %v8471
    %10175 = vmatmul.mubr.bf16.gmra.mxu0 %v8470
    %v10176 = vpop.f32.mrf.mxu0
    %v10177 = vadd.f32 %v7905, %v10176
    %v10178 = vpop.f32.mrf.mxu0
    %v10179 = vadd.f32 %v7909, %v10178
    %v10180 = vpop.f32.mrf.mxu0
    %v10181 = vadd.f32 %v7905, %v10180
    %v10182 = vpop.f32.mrf.mxu0
    %v10183 = vadd.f32 %v7909, %v10182
    %10184 = vdwg.mxu0
    %10185 = vmatprep.subr.bf16.mxu0 %v9543
    %10186 = vmatpush1.bf16.msra.mxu0 %v9542
    %10187 = vmatprep.subr.bf16.mxu0 %v9541
    %10188 = vmatpush1.bf16.msra.mxu0 %v9540
    %10189 = vmatprep.subr.bf16.mxu0 %v9539
    %10190 = vmatpush1.bf16.msra.mxu0 %v9538
    %10191 = vmatprep.subr.bf16.mxu0 %v9537
    %10192 = vmatpush1.bf16.msra.mxu0 %v9536
    %10193 = vmatprep.subr.bf16.mxu0 %v9535
    %10194 = vmatpush1.bf16.msra.mxu0 %v9534
    %10195 = vmatprep.subr.bf16.mxu0 %v9533
    %10196 = vmatpush1.bf16.msra.mxu0 %v9532
    %10197 = vmatprep.subr.bf16.mxu0 %v9531
    %10198 = vmatpush1.bf16.msra.mxu0 %v9530
    %10199 = vmatprep.subr.bf16.mxu0 %v9529
    %10200 = vmatpush1.bf16.msra.mxu0 %v9528
    %10201 = vmatprep.subr.bf16.mxu0 %v9559
    %10202 = vmatpush2.bf16.msra.mxu0 %v9558
    %10203 = vmatprep.subr.bf16.mxu0 %v9557
    %10204 = vmatpush2.bf16.msra.mxu0 %v9556
    %10205 = vmatprep.subr.bf16.mxu0 %v9555
    %10206 = vmatpush2.bf16.msra.mxu0 %v9554
    %10207 = vmatprep.subr.bf16.mxu0 %v9553
    %10208 = vmatpush2.bf16.msra.mxu0 %v9552
    %10209 = vmatprep.subr.bf16.mxu0 %v9551
    %10210 = vmatpush2.bf16.msra.mxu0 %v9550
    %10211 = vmatprep.subr.bf16.mxu0 %v9549
    %10212 = vmatpush2.bf16.msra.mxu0 %v9548
    %10213 = vmatprep.subr.bf16.mxu0 %v9547
    %10214 = vmatpush2.bf16.msra.mxu0 %v9546
    %10215 = vmatprep.subr.bf16.mxu0 %v9545
    %10216 = vmatpush2.bf16.msra.mxu0 %v9544
    %10217 = vmatprep.mubr.bf16.mxu0 %v8347
    %10218 = vmatmul.mubr.bf16.gmra.mxu0 %v8346
    %v10219 = vpop.f32.mrf.mxu0
    %v10220 = vadd.f32 %v10107, %v10219
    %v10221 = vpop.f32.mrf.mxu0
    %v10222 = vadd.f32 %v10109, %v10221
    %v10223 = vpop.f32.mrf.mxu0
    %v10224 = vadd.f32 %v10111, %v10223
    %v10225 = vpop.f32.mrf.mxu0
    %v10226 = vadd.f32 %v10113, %v10225
    %10227 = vmatprep.mubr.bf16.mxu0 %v8365
    %10228 = vmatmul.mubr.bf16.gmra.mxu0 %v8364
    %v10229 = vpop.f32.mrf.mxu0
    %v10230 = vadd.f32 %v10117, %v10229
    %v10231 = vpop.f32.mrf.mxu0
    %v10232 = vadd.f32 %v10119, %v10231
    %v10233 = vpop.f32.mrf.mxu0
    %v10234 = vadd.f32 %v10121, %v10233
    %v10235 = vpop.f32.mrf.mxu0
    %v10236 = vadd.f32 %v10123, %v10235
    %10237 = vmatprep.mubr.bf16.mxu0 %v8383
    %10238 = vmatmul.mubr.bf16.gmra.mxu0 %v8382
    %v10239 = vpop.f32.mrf.mxu0
    %v10240 = vadd.f32 %v10127, %v10239
    %v10241 = vpop.f32.mrf.mxu0
    %v10242 = vadd.f32 %v10129, %v10241
    %v10243 = vpop.f32.mrf.mxu0
    %v10244 = vadd.f32 %v10131, %v10243
    %v10245 = vpop.f32.mrf.mxu0
    %v10246 = vadd.f32 %v10133, %v10245
    %10247 = vmatprep.mubr.bf16.mxu0 %v8401
    %10248 = vmatmul.mubr.bf16.gmra.mxu0 %v8400
    %v10249 = vpop.f32.mrf.mxu0
    %v10250 = vadd.f32 %v10137, %v10249
    %v10251 = vpop.f32.mrf.mxu0
    %v10252 = vadd.f32 %v10139, %v10251
    %v10253 = vpop.f32.mrf.mxu0
    %v10254 = vadd.f32 %v10141, %v10253
    %v10255 = vpop.f32.mrf.mxu0
    %v10256 = vadd.f32 %v10143, %v10255
    %10257 = vmatprep.mubr.bf16.mxu0 %v8419
    %10258 = vmatmul.mubr.bf16.gmra.mxu0 %v8418
    %v10259 = vpop.f32.mrf.mxu0
    %v10260 = vadd.f32 %v10147, %v10259
    %v10261 = vpop.f32.mrf.mxu0
    %v10262 = vadd.f32 %v10149, %v10261
    %v10263 = vpop.f32.mrf.mxu0
    %v10264 = vadd.f32 %v10151, %v10263
    %v10265 = vpop.f32.mrf.mxu0
    %v10266 = vadd.f32 %v10153, %v10265
    %10267 = vmatprep.mubr.bf16.mxu0 %v8437
    %10268 = vmatmul.mubr.bf16.gmra.mxu0 %v8436
    %v10269 = vpop.f32.mrf.mxu0
    %v10270 = vadd.f32 %v10157, %v10269
    %v10271 = vpop.f32.mrf.mxu0
    %v10272 = vadd.f32 %v10159, %v10271
    %v10273 = vpop.f32.mrf.mxu0
    %v10274 = vadd.f32 %v10161, %v10273
    %v10275 = vpop.f32.mrf.mxu0
    %v10276 = vadd.f32 %v10163, %v10275
    %10277 = vmatprep.mubr.bf16.mxu0 %v8455
    %10278 = vmatmul.mubr.bf16.gmra.mxu0 %v8454
    %v10279 = vpop.f32.mrf.mxu0
    %v10280 = vadd.f32 %v10167, %v10279
    %v10281 = vpop.f32.mrf.mxu0
    %v10282 = vadd.f32 %v10169, %v10281
    %v10283 = vpop.f32.mrf.mxu0
    %v10284 = vadd.f32 %v10171, %v10283
    %v10285 = vpop.f32.mrf.mxu0
    %v10286 = vadd.f32 %v10173, %v10285
    %10287 = vmatprep.mubr.bf16.mxu0 %v8473
    %10288 = vmatmul.mubr.bf16.gmra.mxu0 %v8472
    %v10289 = vpop.f32.mrf.mxu0
    %v10290 = vadd.f32 %v10177, %v10289
    %v10291 = vpop.f32.mrf.mxu0
    %v10292 = vadd.f32 %v10179, %v10291
    %v10293 = vpop.f32.mrf.mxu0
    %v10294 = vadd.f32 %v10181, %v10293
    %v10295 = vpop.f32.mrf.mxu0
    %v10296 = vadd.f32 %v10183, %v10295
    %10297 = vdwg.mxu0
    %10298 = vmatprep.subr.bf16.mxu0 %v9575
    %10299 = vmatpush1.bf16.msra.mxu0 %v9574
    %10300 = vmatprep.subr.bf16.mxu0 %v9573
    %10301 = vmatpush1.bf16.msra.mxu0 %v9572
    %10302 = vmatprep.subr.bf16.mxu0 %v9571
    %10303 = vmatpush1.bf16.msra.mxu0 %v9570
    %10304 = vmatprep.subr.bf16.mxu0 %v9569
    %10305 = vmatpush1.bf16.msra.mxu0 %v9568
    %10306 = vmatprep.subr.bf16.mxu0 %v9567
    %10307 = vmatpush1.bf16.msra.mxu0 %v9566
    %10308 = vmatprep.subr.bf16.mxu0 %v9565
    %10309 = vmatpush1.bf16.msra.mxu0 %v9564
    %10310 = vmatprep.subr.bf16.mxu0 %v9563
    %10311 = vmatpush1.bf16.msra.mxu0 %v9562
    %10312 = vmatprep.subr.bf16.mxu0 %v9561
    %10313 = vmatpush1.bf16.msra.mxu0 %v9560
    %10314 = vmatprep.subr.bf16.mxu0 %v9591
    %10315 = vmatpush2.bf16.msra.mxu0 %v9590
    %10316 = vmatprep.subr.bf16.mxu0 %v9589
    %10317 = vmatpush2.bf16.msra.mxu0 %v9588
    %10318 = vmatprep.subr.bf16.mxu0 %v9587
    %10319 = vmatpush2.bf16.msra.mxu0 %v9586
    %10320 = vmatprep.subr.bf16.mxu0 %v9585
    %10321 = vmatpush2.bf16.msra.mxu0 %v9584
    %10322 = vmatprep.subr.bf16.mxu0 %v9583
    %10323 = vmatpush2.bf16.msra.mxu0 %v9582
    %10324 = vmatprep.subr.bf16.mxu0 %v9581
    %10325 = vmatpush2.bf16.msra.mxu0 %v9580
    %10326 = vmatprep.subr.bf16.mxu0 %v9579
    %10327 = vmatpush2.bf16.msra.mxu0 %v9578
    %10328 = vmatprep.subr.bf16.mxu0 %v9577
    %10329 = vmatpush2.bf16.msra.mxu0 %v9576
    %10330 = vmatprep.mubr.bf16.mxu0 %v8349
    %10331 = vmatmul.mubr.bf16.gmra.mxu0 %v8348
    %v10332 = vpop.f32.mrf.mxu0
    %v10333 = vadd.f32 %v10220, %v10332
    %v10334 = vpop.f32.mrf.mxu0
    %v10335 = vadd.f32 %v10222, %v10334
    %v10336 = vpop.f32.mrf.mxu0
    %v10337 = vadd.f32 %v10224, %v10336
    %v10338 = vpop.f32.mrf.mxu0
    %v10339 = vadd.f32 %v10226, %v10338
    %10340 = vmatprep.mubr.bf16.mxu0 %v8367
    %10341 = vmatmul.mubr.bf16.gmra.mxu0 %v8366
    %v10342 = vpop.f32.mrf.mxu0
    %v10343 = vadd.f32 %v10230, %v10342
    %v10344 = vpop.f32.mrf.mxu0
    %v10345 = vadd.f32 %v10232, %v10344
    %v10346 = vpop.f32.mrf.mxu0
    %v10347 = vadd.f32 %v10234, %v10346
    %v10348 = vpop.f32.mrf.mxu0
    %v10349 = vadd.f32 %v10236, %v10348
    %10350 = vmatprep.mubr.bf16.mxu0 %v8385
    %10351 = vmatmul.mubr.bf16.gmra.mxu0 %v8384
    %v10352 = vpop.f32.mrf.mxu0
    %v10353 = vadd.f32 %v10240, %v10352
    %v10354 = vpop.f32.mrf.mxu0
    %v10355 = vadd.f32 %v10242, %v10354
    %v10356 = vpop.f32.mrf.mxu0
    %v10357 = vadd.f32 %v10244, %v10356
    %v10358 = vpop.f32.mrf.mxu0
    %v10359 = vadd.f32 %v10246, %v10358
    %10360 = vmatprep.mubr.bf16.mxu0 %v8403
    %10361 = vmatmul.mubr.bf16.gmra.mxu0 %v8402
    %v10362 = vpop.f32.mrf.mxu0
    %v10363 = vadd.f32 %v10250, %v10362
    %v10364 = vpop.f32.mrf.mxu0
    %v10365 = vadd.f32 %v10252, %v10364
    %v10366 = vpop.f32.mrf.mxu0
    %v10367 = vadd.f32 %v10254, %v10366
    %v10368 = vpop.f32.mrf.mxu0
    %v10369 = vadd.f32 %v10256, %v10368
    %10370 = vmatprep.mubr.bf16.mxu0 %v8421
    %10371 = vmatmul.mubr.bf16.gmra.mxu0 %v8420
    %v10372 = vpop.f32.mrf.mxu0
    %v10373 = vadd.f32 %v10260, %v10372
    %v10374 = vpop.f32.mrf.mxu0
    %v10375 = vadd.f32 %v10262, %v10374
    %v10376 = vpop.f32.mrf.mxu0
    %v10377 = vadd.f32 %v10264, %v10376
    %v10378 = vpop.f32.mrf.mxu0
    %v10379 = vadd.f32 %v10266, %v10378
    %10380 = vmatprep.mubr.bf16.mxu0 %v8439
    %10381 = vmatmul.mubr.bf16.gmra.mxu0 %v8438
    %v10382 = vpop.f32.mrf.mxu0
    %v10383 = vadd.f32 %v10270, %v10382
    %v10384 = vpop.f32.mrf.mxu0
    %v10385 = vadd.f32 %v10272, %v10384
    %v10386 = vpop.f32.mrf.mxu0
    %v10387 = vadd.f32 %v10274, %v10386
    %v10388 = vpop.f32.mrf.mxu0
    %v10389 = vadd.f32 %v10276, %v10388
    %10390 = vmatprep.mubr.bf16.mxu0 %v8457
    %10391 = vmatmul.mubr.bf16.gmra.mxu0 %v8456
    %v10392 = vpop.f32.mrf.mxu0
    %v10393 = vadd.f32 %v10280, %v10392
    %v10394 = vpop.f32.mrf.mxu0
    %v10395 = vadd.f32 %v10282, %v10394
    %v10396 = vpop.f32.mrf.mxu0
    %v10397 = vadd.f32 %v10284, %v10396
    %v10398 = vpop.f32.mrf.mxu0
    %v10399 = vadd.f32 %v10286, %v10398
    %10400 = vmatprep.mubr.bf16.mxu0 %v8475
    %10401 = vmatmul.mubr.bf16.gmra.mxu0 %v8474
    %v10402 = vpop.f32.mrf.mxu0
    %v10403 = vadd.f32 %v10290, %v10402
    %v10404 = vpop.f32.mrf.mxu0
    %v10405 = vadd.f32 %v10292, %v10404
    %v10406 = vpop.f32.mrf.mxu0
    %v10407 = vadd.f32 %v10294, %v10406
    %v10408 = vpop.f32.mrf.mxu0
    %v10409 = vadd.f32 %v10296, %v10408
    %10410 = vdwg.mxu0
    %10411 = vmatprep.subr.bf16.mxu0 %v9607
    %10412 = vmatpush1.bf16.msra.mxu0 %v9606
    %10413 = vmatprep.subr.bf16.mxu0 %v9605
    %10414 = vmatpush1.bf16.msra.mxu0 %v9604
    %10415 = vmatprep.subr.bf16.mxu0 %v9603
    %10416 = vmatpush1.bf16.msra.mxu0 %v9602
    %10417 = vmatprep.subr.bf16.mxu0 %v9601
    %10418 = vmatpush1.bf16.msra.mxu0 %v9600
    %10419 = vmatprep.subr.bf16.mxu0 %v9599
    %10420 = vmatpush1.bf16.msra.mxu0 %v9598
    %10421 = vmatprep.subr.bf16.mxu0 %v9597
    %10422 = vmatpush1.bf16.msra.mxu0 %v9596
    %10423 = vmatprep.subr.bf16.mxu0 %v9595
    %10424 = vmatpush1.bf16.msra.mxu0 %v9594
    %10425 = vmatprep.subr.bf16.mxu0 %v9593
    %10426 = vmatpush1.bf16.msra.mxu0 %v9592
    %10427 = vmatprep.subr.bf16.mxu0 %v9623
    %10428 = vmatpush2.bf16.msra.mxu0 %v9622
    %10429 = vmatprep.subr.bf16.mxu0 %v9621
    %10430 = vmatpush2.bf16.msra.mxu0 %v9620
    %10431 = vmatprep.subr.bf16.mxu0 %v9619
    %10432 = vmatpush2.bf16.msra.mxu0 %v9618
    %10433 = vmatprep.subr.bf16.mxu0 %v9617
    %10434 = vmatpush2.bf16.msra.mxu0 %v9616
    %10435 = vmatprep.subr.bf16.mxu0 %v9615
    %10436 = vmatpush2.bf16.msra.mxu0 %v9614
    %10437 = vmatprep.subr.bf16.mxu0 %v9613
    %10438 = vmatpush2.bf16.msra.mxu0 %v9612
    %10439 = vmatprep.subr.bf16.mxu0 %v9611
    %10440 = vmatpush2.bf16.msra.mxu0 %v9610
    %10441 = vmatprep.subr.bf16.mxu0 %v9609
    %10442 = vmatpush2.bf16.msra.mxu0 %v9608
    %10443 = vmatprep.mubr.bf16.mxu0 %v8351
    %10444 = vmatmul.mubr.bf16.gmra.mxu0 %v8350
    %v10445 = vpop.f32.mrf.mxu0
    %v10446 = vadd.f32 %v10333, %v10445
    %v10447 = vpop.f32.mrf.mxu0
    %v10448 = vadd.f32 %v10335, %v10447
    %v10449 = vpop.f32.mrf.mxu0
    %v10450 = vadd.f32 %v10337, %v10449
    %v10451 = vpop.f32.mrf.mxu0
    %v10452 = vadd.f32 %v10339, %v10451
    %10453 = vmatprep.mubr.bf16.mxu0 %v8369
    %10454 = vmatmul.mubr.bf16.gmra.mxu0 %v8368
    %v10455 = vpop.f32.mrf.mxu0
    %v10456 = vadd.f32 %v10343, %v10455
    %v10457 = vpop.f32.mrf.mxu0
    %v10458 = vadd.f32 %v10345, %v10457
    %v10459 = vpop.f32.mrf.mxu0
    %v10460 = vadd.f32 %v10347, %v10459
    %v10461 = vpop.f32.mrf.mxu0
    %v10462 = vadd.f32 %v10349, %v10461
    %10463 = vmatprep.mubr.bf16.mxu0 %v8387
    %10464 = vmatmul.mubr.bf16.gmra.mxu0 %v8386
    %v10465 = vpop.f32.mrf.mxu0
    %v10466 = vadd.f32 %v10353, %v10465
    %v10467 = vpop.f32.mrf.mxu0
    %v10468 = vadd.f32 %v10355, %v10467
    %v10469 = vpop.f32.mrf.mxu0
    %v10470 = vadd.f32 %v10357, %v10469
    %v10471 = vpop.f32.mrf.mxu0
    %v10472 = vadd.f32 %v10359, %v10471
    %10473 = vmatprep.mubr.bf16.mxu0 %v8405
    %10474 = vmatmul.mubr.bf16.gmra.mxu0 %v8404
    %v10475 = vpop.f32.mrf.mxu0
    %v10476 = vadd.f32 %v10363, %v10475
    %v10477 = vpop.f32.mrf.mxu0
    %v10478 = vadd.f32 %v10365, %v10477
    %v10479 = vpop.f32.mrf.mxu0
    %v10480 = vadd.f32 %v10367, %v10479
    %v10481 = vpop.f32.mrf.mxu0
    %v10482 = vadd.f32 %v10369, %v10481
    %10483 = vmatprep.mubr.bf16.mxu0 %v8423
    %10484 = vmatmul.mubr.bf16.gmra.mxu0 %v8422
    %v10485 = vpop.f32.mrf.mxu0
    %v10486 = vadd.f32 %v10373, %v10485
    %v10487 = vpop.f32.mrf.mxu0
    %v10488 = vadd.f32 %v10375, %v10487
    %v10489 = vpop.f32.mrf.mxu0
    %v10490 = vadd.f32 %v10377, %v10489
    %v10491 = vpop.f32.mrf.mxu0
    %v10492 = vadd.f32 %v10379, %v10491
    %10493 = vmatprep.mubr.bf16.mxu0 %v8441
    %10494 = vmatmul.mubr.bf16.gmra.mxu0 %v8440
    %v10495 = vpop.f32.mrf.mxu0
    %v10496 = vadd.f32 %v10383, %v10495
    %v10497 = vpop.f32.mrf.mxu0
    %v10498 = vadd.f32 %v10385, %v10497
    %v10499 = vpop.f32.mrf.mxu0
    %v10500 = vadd.f32 %v10387, %v10499
    %v10501 = vpop.f32.mrf.mxu0
    %v10502 = vadd.f32 %v10389, %v10501
    %10503 = vmatprep.mubr.bf16.mxu0 %v8459
    %10504 = vmatmul.mubr.bf16.gmra.mxu0 %v8458
    %v10505 = vpop.f32.mrf.mxu0
    %v10506 = vadd.f32 %v10393, %v10505
    %v10507 = vpop.f32.mrf.mxu0
    %v10508 = vadd.f32 %v10395, %v10507
    %v10509 = vpop.f32.mrf.mxu0
    %v10510 = vadd.f32 %v10397, %v10509
    %v10511 = vpop.f32.mrf.mxu0
    %v10512 = vadd.f32 %v10399, %v10511
    %10513 = vmatprep.mubr.bf16.mxu0 %v8477
    %10514 = vmatmul.mubr.bf16.gmra.mxu0 %v8476
    %v10515 = vpop.f32.mrf.mxu0
    %v10516 = vadd.f32 %v10403, %v10515
    %v10517 = vpop.f32.mrf.mxu0
    %v10518 = vadd.f32 %v10405, %v10517
    %v10519 = vpop.f32.mrf.mxu0
    %v10520 = vadd.f32 %v10407, %v10519
    %v10521 = vpop.f32.mrf.mxu0
    %v10522 = vadd.f32 %v10409, %v10521
    %10523 = vdwg.mxu0
    %10524 = vmatprep.subr.bf16.mxu0 %v9639
    %10525 = vmatpush1.bf16.msra.mxu0 %v9638
    %10526 = vmatprep.subr.bf16.mxu0 %v9637
    %10527 = vmatpush1.bf16.msra.mxu0 %v9636
    %10528 = vmatprep.subr.bf16.mxu0 %v9635
    %10529 = vmatpush1.bf16.msra.mxu0 %v9634
    %10530 = vmatprep.subr.bf16.mxu0 %v9633
    %10531 = vmatpush1.bf16.msra.mxu0 %v9632
    %10532 = vmatprep.subr.bf16.mxu0 %v9631
    %10533 = vmatpush1.bf16.msra.mxu0 %v9630
    %10534 = vmatprep.subr.bf16.mxu0 %v9629
    %10535 = vmatpush1.bf16.msra.mxu0 %v9628
    %10536 = vmatprep.subr.bf16.mxu0 %v9627
    %10537 = vmatpush1.bf16.msra.mxu0 %v9626
    %10538 = vmatprep.subr.bf16.mxu0 %v9625
    %10539 = vmatpush1.bf16.msra.mxu0 %v9624
    %10540 = vmatprep.subr.bf16.mxu0 %v9655
    %10541 = vmatpush2.bf16.msra.mxu0 %v9654
    %10542 = vmatprep.subr.bf16.mxu0 %v9653
    %10543 = vmatpush2.bf16.msra.mxu0 %v9652
    %10544 = vmatprep.subr.bf16.mxu0 %v9651
    %10545 = vmatpush2.bf16.msra.mxu0 %v9650
    %10546 = vmatprep.subr.bf16.mxu0 %v9649
    %10547 = vmatpush2.bf16.msra.mxu0 %v9648
    %10548 = vmatprep.subr.bf16.mxu0 %v9647
    %10549 = vmatpush2.bf16.msra.mxu0 %v9646
    %10550 = vmatprep.subr.bf16.mxu0 %v9645
    %10551 = vmatpush2.bf16.msra.mxu0 %v9644
    %10552 = vmatprep.subr.bf16.mxu0 %v9643
    %10553 = vmatpush2.bf16.msra.mxu0 %v9642
    %10554 = vmatprep.subr.bf16.mxu0 %v9641
    %10555 = vmatpush2.bf16.msra.mxu0 %v9640
    %10556 = vmatprep.mubr.bf16.mxu0 %v8353
    %10557 = vmatmul.mubr.bf16.gmra.mxu0 %v8352
    %v10558 = vpop.f32.mrf.mxu0
    %v10559 = vadd.f32 %v10446, %v10558
    %v10560 = vpop.f32.mrf.mxu0
    %v10561 = vadd.f32 %v10448, %v10560
    %v10562 = vpop.f32.mrf.mxu0
    %v10563 = vadd.f32 %v10450, %v10562
    %v10564 = vpop.f32.mrf.mxu0
    %v10565 = vadd.f32 %v10452, %v10564
    %10566 = vmatprep.mubr.bf16.mxu0 %v8371
    %10567 = vmatmul.mubr.bf16.gmra.mxu0 %v8370
    %v10568 = vpop.f32.mrf.mxu0
    %v10569 = vadd.f32 %v10456, %v10568
    %v10570 = vpop.f32.mrf.mxu0
    %v10571 = vadd.f32 %v10458, %v10570
    %v10572 = vpop.f32.mrf.mxu0
    %v10573 = vadd.f32 %v10460, %v10572
    %v10574 = vpop.f32.mrf.mxu0
    %v10575 = vadd.f32 %v10462, %v10574
    %10576 = vmatprep.mubr.bf16.mxu0 %v8389
    %10577 = vmatmul.mubr.bf16.gmra.mxu0 %v8388
    %v10578 = vpop.f32.mrf.mxu0
    %v10579 = vadd.f32 %v10466, %v10578
    %v10580 = vpop.f32.mrf.mxu0
    %v10581 = vadd.f32 %v10468, %v10580
    %v10582 = vpop.f32.mrf.mxu0
    %v10583 = vadd.f32 %v10470, %v10582
    %v10584 = vpop.f32.mrf.mxu0
    %v10585 = vadd.f32 %v10472, %v10584
    %10586 = vmatprep.mubr.bf16.mxu0 %v8407
    %10587 = vmatmul.mubr.bf16.gmra.mxu0 %v8406
    %v10588 = vpop.f32.mrf.mxu0
    %v10589 = vadd.f32 %v10476, %v10588
    %v10590 = vpop.f32.mrf.mxu0
    %v10591 = vadd.f32 %v10478, %v10590
    %v10592 = vpop.f32.mrf.mxu0
    %v10593 = vadd.f32 %v10480, %v10592
    %v10594 = vpop.f32.mrf.mxu0
    %v10595 = vadd.f32 %v10482, %v10594
    %10596 = vmatprep.mubr.bf16.mxu0 %v8425
    %10597 = vmatmul.mubr.bf16.gmra.mxu0 %v8424
    %v10598 = vpop.f32.mrf.mxu0
    %v10599 = vadd.f32 %v10486, %v10598
    %v10600 = vpop.f32.mrf.mxu0
    %v10601 = vadd.f32 %v10488, %v10600
    %v10602 = vpop.f32.mrf.mxu0
    %v10603 = vadd.f32 %v10490, %v10602
    %v10604 = vpop.f32.mrf.mxu0
    %v10605 = vadd.f32 %v10492, %v10604
    %10606 = vmatprep.mubr.bf16.mxu0 %v8443
    %10607 = vmatmul.mubr.bf16.gmra.mxu0 %v8442
    %v10608 = vpop.f32.mrf.mxu0
    %v10609 = vadd.f32 %v10496, %v10608
    %v10610 = vpop.f32.mrf.mxu0
    %v10611 = vadd.f32 %v10498, %v10610
    %v10612 = vpop.f32.mrf.mxu0
    %v10613 = vadd.f32 %v10500, %v10612
    %v10614 = vpop.f32.mrf.mxu0
    %v10615 = vadd.f32 %v10502, %v10614
    %10616 = vmatprep.mubr.bf16.mxu0 %v8461
    %10617 = vmatmul.mubr.bf16.gmra.mxu0 %v8460
    %v10618 = vpop.f32.mrf.mxu0
    %v10619 = vadd.f32 %v10506, %v10618
    %v10620 = vpop.f32.mrf.mxu0
    %v10621 = vadd.f32 %v10508, %v10620
    %v10622 = vpop.f32.mrf.mxu0
    %v10623 = vadd.f32 %v10510, %v10622
    %v10624 = vpop.f32.mrf.mxu0
    %v10625 = vadd.f32 %v10512, %v10624
    %10626 = vmatprep.mubr.bf16.mxu0 %v8479
    %10627 = vmatmul.mubr.bf16.gmra.mxu0 %v8478
    %v10628 = vpop.f32.mrf.mxu0
    %v10629 = vadd.f32 %v10516, %v10628
    %v10630 = vpop.f32.mrf.mxu0
    %v10631 = vadd.f32 %v10518, %v10630
    %v10632 = vpop.f32.mrf.mxu0
    %v10633 = vadd.f32 %v10520, %v10632
    %v10634 = vpop.f32.mrf.mxu0
    %v10635 = vadd.f32 %v10522, %v10634
    %10636 = vdwg.mxu0
    %10637 = vmatprep.subr.bf16.mxu0 %v9671
    %10638 = vmatpush1.bf16.msra.mxu0 %v9670
    %10639 = vmatprep.subr.bf16.mxu0 %v9669
    %10640 = vmatpush1.bf16.msra.mxu0 %v9668
    %10641 = vmatprep.subr.bf16.mxu0 %v9667
    %10642 = vmatpush1.bf16.msra.mxu0 %v9666
    %10643 = vmatprep.subr.bf16.mxu0 %v9665
    %10644 = vmatpush1.bf16.msra.mxu0 %v9664
    %10645 = vmatprep.subr.bf16.mxu0 %v9663
    %10646 = vmatpush1.bf16.msra.mxu0 %v9662
    %10647 = vmatprep.subr.bf16.mxu0 %v9661
    %10648 = vmatpush1.bf16.msra.mxu0 %v9660
    %10649 = vmatprep.subr.bf16.mxu0 %v9659
    %10650 = vmatpush1.bf16.msra.mxu0 %v9658
    %10651 = vmatprep.subr.bf16.mxu0 %v9657
    %10652 = vmatpush1.bf16.msra.mxu0 %v9656
    %10653 = vmatprep.subr.bf16.mxu0 %v9687
    %10654 = vmatpush2.bf16.msra.mxu0 %v9686
    %10655 = vmatprep.subr.bf16.mxu0 %v9685
    %10656 = vmatpush2.bf16.msra.mxu0 %v9684
    %10657 = vmatprep.subr.bf16.mxu0 %v9683
    %10658 = vmatpush2.bf16.msra.mxu0 %v9682
    %10659 = vmatprep.subr.bf16.mxu0 %v9681
    %10660 = vmatpush2.bf16.msra.mxu0 %v9680
    %10661 = vmatprep.subr.bf16.mxu0 %v9679
    %10662 = vmatpush2.bf16.msra.mxu0 %v9678
    %10663 = vmatprep.subr.bf16.mxu0 %v9677
    %10664 = vmatpush2.bf16.msra.mxu0 %v9676
    %10665 = vmatprep.subr.bf16.mxu0 %v9675
    %10666 = vmatpush2.bf16.msra.mxu0 %v9674
    %10667 = vmatprep.subr.bf16.mxu0 %v9673
    %10668 = vmatpush2.bf16.msra.mxu0 %v9672
    %10669 = vmatprep.mubr.bf16.mxu0 %v8355
    %10670 = vmatmul.mubr.bf16.gmra.mxu0 %v8354
    %v10671 = vpop.f32.mrf.mxu0
    %v10672 = vadd.f32 %v10559, %v10671
    %v10673 = vpop.f32.mrf.mxu0
    %v10674 = vadd.f32 %v10561, %v10673
    %v10675 = vpop.f32.mrf.mxu0
    %v10676 = vadd.f32 %v10563, %v10675
    %v10677 = vpop.f32.mrf.mxu0
    %v10678 = vadd.f32 %v10565, %v10677
    %10679 = vmatprep.mubr.bf16.mxu0 %v8373
    %10680 = vmatmul.mubr.bf16.gmra.mxu0 %v8372
    %v10681 = vpop.f32.mrf.mxu0
    %v10682 = vadd.f32 %v10569, %v10681
    %v10683 = vpop.f32.mrf.mxu0
    %v10684 = vadd.f32 %v10571, %v10683
    %v10685 = vpop.f32.mrf.mxu0
    %v10686 = vadd.f32 %v10573, %v10685
    %v10687 = vpop.f32.mrf.mxu0
    %v10688 = vadd.f32 %v10575, %v10687
    %10689 = vmatprep.mubr.bf16.mxu0 %v8391
    %10690 = vmatmul.mubr.bf16.gmra.mxu0 %v8390
    %v10691 = vpop.f32.mrf.mxu0
    %v10692 = vadd.f32 %v10579, %v10691
    %v10693 = vpop.f32.mrf.mxu0
    %v10694 = vadd.f32 %v10581, %v10693
    %v10695 = vpop.f32.mrf.mxu0
    %v10696 = vadd.f32 %v10583, %v10695
    %v10697 = vpop.f32.mrf.mxu0
    %v10698 = vadd.f32 %v10585, %v10697
    %10699 = vmatprep.mubr.bf16.mxu0 %v8409
    %10700 = vmatmul.mubr.bf16.gmra.mxu0 %v8408
    %v10701 = vpop.f32.mrf.mxu0
    %v10702 = vadd.f32 %v10589, %v10701
    %v10703 = vpop.f32.mrf.mxu0
    %v10704 = vadd.f32 %v10591, %v10703
    %v10705 = vpop.f32.mrf.mxu0
    %v10706 = vadd.f32 %v10593, %v10705
    %v10707 = vpop.f32.mrf.mxu0
    %v10708 = vadd.f32 %v10595, %v10707
    %10709 = vmatprep.mubr.bf16.mxu0 %v8427
    %10710 = vmatmul.mubr.bf16.gmra.mxu0 %v8426
    %v10711 = vpop.f32.mrf.mxu0
    %v10712 = vadd.f32 %v10599, %v10711
    %v10713 = vpop.f32.mrf.mxu0
    %v10714 = vadd.f32 %v10601, %v10713
    %v10715 = vpop.f32.mrf.mxu0
    %v10716 = vadd.f32 %v10603, %v10715
    %v10717 = vpop.f32.mrf.mxu0
    %v10718 = vadd.f32 %v10605, %v10717
    %10719 = vmatprep.mubr.bf16.mxu0 %v8445
    %10720 = vmatmul.mubr.bf16.gmra.mxu0 %v8444
    %v10721 = vpop.f32.mrf.mxu0
    %v10722 = vadd.f32 %v10609, %v10721
    %v10723 = vpop.f32.mrf.mxu0
    %v10724 = vadd.f32 %v10611, %v10723
    %v10725 = vpop.f32.mrf.mxu0
    %v10726 = vadd.f32 %v10613, %v10725
    %v10727 = vpop.f32.mrf.mxu0
    %v10728 = vadd.f32 %v10615, %v10727
    %10729 = vmatprep.mubr.bf16.mxu0 %v8463
    %10730 = vmatmul.mubr.bf16.gmra.mxu0 %v8462
    %v10731 = vpop.f32.mrf.mxu0
    %v10732 = vadd.f32 %v10619, %v10731
    %v10733 = vpop.f32.mrf.mxu0
    %v10734 = vadd.f32 %v10621, %v10733
    %v10735 = vpop.f32.mrf.mxu0
    %v10736 = vadd.f32 %v10623, %v10735
    %v10737 = vpop.f32.mrf.mxu0
    %v10738 = vadd.f32 %v10625, %v10737
    %10739 = vmatprep.mubr.bf16.mxu0 %v8481
    %10740 = vmatmul.mubr.bf16.gmra.mxu0 %v8480
    %v10741 = vpop.f32.mrf.mxu0
    %v10742 = vadd.f32 %v10629, %v10741
    %v10743 = vpop.f32.mrf.mxu0
    %v10744 = vadd.f32 %v10631, %v10743
    %v10745 = vpop.f32.mrf.mxu0
    %v10746 = vadd.f32 %v10633, %v10745
    %v10747 = vpop.f32.mrf.mxu0
    %v10748 = vadd.f32 %v10635, %v10747
    %10749 = vdwg.mxu0
    %10750 = vmatprep.subr.bf16.mxu0 %v9703
    %10751 = vmatpush1.bf16.msra.mxu0 %v9702
    %10752 = vmatprep.subr.bf16.mxu0 %v9701
    %10753 = vmatpush1.bf16.msra.mxu0 %v9700
    %10754 = vmatprep.subr.bf16.mxu0 %v9699
    %10755 = vmatpush1.bf16.msra.mxu0 %v9698
    %10756 = vmatprep.subr.bf16.mxu0 %v9697
    %10757 = vmatpush1.bf16.msra.mxu0 %v9696
    %10758 = vmatprep.subr.bf16.mxu0 %v9695
    %10759 = vmatpush1.bf16.msra.mxu0 %v9694
    %10760 = vmatprep.subr.bf16.mxu0 %v9693
    %10761 = vmatpush1.bf16.msra.mxu0 %v9692
    %10762 = vmatprep.subr.bf16.mxu0 %v9691
    %10763 = vmatpush1.bf16.msra.mxu0 %v9690
    %10764 = vmatprep.subr.bf16.mxu0 %v9689
    %10765 = vmatpush1.bf16.msra.mxu0 %v9688
    %10766 = vmatprep.subr.bf16.mxu0 %v9719
    %10767 = vmatpush2.bf16.msra.mxu0 %v9718
    %10768 = vmatprep.subr.bf16.mxu0 %v9717
    %10769 = vmatpush2.bf16.msra.mxu0 %v9716
    %10770 = vmatprep.subr.bf16.mxu0 %v9715
    %10771 = vmatpush2.bf16.msra.mxu0 %v9714
    %10772 = vmatprep.subr.bf16.mxu0 %v9713
    %10773 = vmatpush2.bf16.msra.mxu0 %v9712
    %10774 = vmatprep.subr.bf16.mxu0 %v9711
    %10775 = vmatpush2.bf16.msra.mxu0 %v9710
    %10776 = vmatprep.subr.bf16.mxu0 %v9709
    %10777 = vmatpush2.bf16.msra.mxu0 %v9708
    %10778 = vmatprep.subr.bf16.mxu0 %v9707
    %10779 = vmatpush2.bf16.msra.mxu0 %v9706
    %10780 = vmatprep.subr.bf16.mxu0 %v9705
    %10781 = vmatpush2.bf16.msra.mxu0 %v9704
    %10782 = vmatprep.mubr.bf16.mxu0 %v8357
    %10783 = vmatmul.mubr.bf16.gmra.mxu0 %v8356
    %v10784 = vpop.f32.mrf.mxu0
    %v10785 = vadd.f32 %v10672, %v10784
    %v10786 = vpop.f32.mrf.mxu0
    %v10787 = vadd.f32 %v10674, %v10786
    %v10788 = vpop.f32.mrf.mxu0
    %v10789 = vadd.f32 %v10676, %v10788
    %v10790 = vpop.f32.mrf.mxu0
    %v10791 = vadd.f32 %v10678, %v10790
    %10792 = vmatprep.mubr.bf16.mxu0 %v8375
    %10793 = vmatmul.mubr.bf16.gmra.mxu0 %v8374
    %v10794 = vpop.f32.mrf.mxu0
    %v10795 = vadd.f32 %v10682, %v10794
    %v10796 = vpop.f32.mrf.mxu0
    %v10797 = vadd.f32 %v10684, %v10796
    %v10798 = vpop.f32.mrf.mxu0
    %v10799 = vadd.f32 %v10686, %v10798
    %v10800 = vpop.f32.mrf.mxu0
    %v10801 = vadd.f32 %v10688, %v10800
    %10802 = vmatprep.mubr.bf16.mxu0 %v8393
    %10803 = vmatmul.mubr.bf16.gmra.mxu0 %v8392
    %v10804 = vpop.f32.mrf.mxu0
    %v10805 = vadd.f32 %v10692, %v10804
    %v10806 = vpop.f32.mrf.mxu0
    %v10807 = vadd.f32 %v10694, %v10806
    %v10808 = vpop.f32.mrf.mxu0
    %v10809 = vadd.f32 %v10696, %v10808
    %v10810 = vpop.f32.mrf.mxu0
    %v10811 = vadd.f32 %v10698, %v10810
    %10812 = vmatprep.mubr.bf16.mxu0 %v8411
    %10813 = vmatmul.mubr.bf16.gmra.mxu0 %v8410
    %v10814 = vpop.f32.mrf.mxu0
    %v10815 = vadd.f32 %v10702, %v10814
    %v10816 = vpop.f32.mrf.mxu0
    %v10817 = vadd.f32 %v10704, %v10816
    %v10818 = vpop.f32.mrf.mxu0
    %v10819 = vadd.f32 %v10706, %v10818
    %v10820 = vpop.f32.mrf.mxu0
    %v10821 = vadd.f32 %v10708, %v10820
    %10822 = vmatprep.mubr.bf16.mxu0 %v8429
    %10823 = vmatmul.mubr.bf16.gmra.mxu0 %v8428
    %v10824 = vpop.f32.mrf.mxu0
    %v10825 = vadd.f32 %v10712, %v10824
    %v10826 = vpop.f32.mrf.mxu0
    %v10827 = vadd.f32 %v10714, %v10826
    %v10828 = vpop.f32.mrf.mxu0
    %v10829 = vadd.f32 %v10716, %v10828
    %v10830 = vpop.f32.mrf.mxu0
    %v10831 = vadd.f32 %v10718, %v10830
    %10832 = vmatprep.mubr.bf16.mxu0 %v8447
    %10833 = vmatmul.mubr.bf16.gmra.mxu0 %v8446
    %v10834 = vpop.f32.mrf.mxu0
    %v10835 = vadd.f32 %v10722, %v10834
    %v10836 = vpop.f32.mrf.mxu0
    %v10837 = vadd.f32 %v10724, %v10836
    %v10838 = vpop.f32.mrf.mxu0
    %v10839 = vadd.f32 %v10726, %v10838
    %v10840 = vpop.f32.mrf.mxu0
    %v10841 = vadd.f32 %v10728, %v10840
    %10842 = vmatprep.mubr.bf16.mxu0 %v8465
    %10843 = vmatmul.mubr.bf16.gmra.mxu0 %v8464
    %v10844 = vpop.f32.mrf.mxu0
    %v10845 = vadd.f32 %v10732, %v10844
    %v10846 = vpop.f32.mrf.mxu0
    %v10847 = vadd.f32 %v10734, %v10846
    %v10848 = vpop.f32.mrf.mxu0
    %v10849 = vadd.f32 %v10736, %v10848
    %v10850 = vpop.f32.mrf.mxu0
    %v10851 = vadd.f32 %v10738, %v10850
    %10852 = vmatprep.mubr.bf16.mxu0 %v8483
    %10853 = vmatmul.mubr.bf16.gmra.mxu0 %v8482
    %v10854 = vpop.f32.mrf.mxu0
    %v10855 = vadd.f32 %v10742, %v10854
    %v10856 = vpop.f32.mrf.mxu0
    %v10857 = vadd.f32 %v10744, %v10856
    %v10858 = vpop.f32.mrf.mxu0
    %v10859 = vadd.f32 %v10746, %v10858
    %v10860 = vpop.f32.mrf.mxu0
    %v10861 = vadd.f32 %v10748, %v10860
    %10862 = vdwg.mxu0
    %10863 = vmatprep.subr.bf16.mxu0 %v9735
    %10864 = vmatpush1.bf16.msra.mxu0 %v9734
    %10865 = vmatprep.subr.bf16.mxu0 %v9733
    %10866 = vmatpush1.bf16.msra.mxu0 %v9732
    %10867 = vmatprep.subr.bf16.mxu0 %v9731
    %10868 = vmatpush1.bf16.msra.mxu0 %v9730
    %10869 = vmatprep.subr.bf16.mxu0 %v9729
    %10870 = vmatpush1.bf16.msra.mxu0 %v9728
    %10871 = vmatprep.subr.bf16.mxu0 %v9727
    %10872 = vmatpush1.bf16.msra.mxu0 %v9726
    %10873 = vmatprep.subr.bf16.mxu0 %v9725
    %10874 = vmatpush1.bf16.msra.mxu0 %v9724
    %10875 = vmatprep.subr.bf16.mxu0 %v9723
    %10876 = vmatpush1.bf16.msra.mxu0 %v9722
    %10877 = vmatprep.subr.bf16.mxu0 %v9721
    %10878 = vmatpush1.bf16.msra.mxu0 %v9720
    %10879 = vmatprep.subr.bf16.mxu0 %v9751
    %10880 = vmatpush2.bf16.msra.mxu0 %v9750
    %10881 = vmatprep.subr.bf16.mxu0 %v9749
    %10882 = vmatpush2.bf16.msra.mxu0 %v9748
    %10883 = vmatprep.subr.bf16.mxu0 %v9747
    %10884 = vmatpush2.bf16.msra.mxu0 %v9746
    %10885 = vmatprep.subr.bf16.mxu0 %v9745
    %10886 = vmatpush2.bf16.msra.mxu0 %v9744
    %10887 = vmatprep.subr.bf16.mxu0 %v9743
    %10888 = vmatpush2.bf16.msra.mxu0 %v9742
    %10889 = vmatprep.subr.bf16.mxu0 %v9741
    %10890 = vmatpush2.bf16.msra.mxu0 %v9740
    %10891 = vmatprep.subr.bf16.mxu0 %v9739
    %10892 = vmatpush2.bf16.msra.mxu0 %v9738
    %10893 = vmatprep.subr.bf16.mxu0 %v9737
    %10894 = vmatpush2.bf16.msra.mxu0 %v9736
    %10895 = vmatprep.mubr.bf16.mxu0 %v8359
    %10896 = vmatmul.mubr.bf16.gmra.mxu0 %v8358
    %v10897 = vpop.f32.mrf.mxu0
    %v10898 = vadd.f32 %v10785, %v10897
    %v10899 = vpop.f32.mrf.mxu0
    %v10900 = vadd.f32 %v10787, %v10899
    %v10901 = vpop.f32.mrf.mxu0
    %v10902 = vadd.f32 %v10789, %v10901
    %v10903 = vpop.f32.mrf.mxu0
    %v10904 = vadd.f32 %v10791, %v10903
    %10905 = vmatprep.mubr.bf16.mxu0 %v8377
    %10906 = vmatmul.mubr.bf16.gmra.mxu0 %v8376
    %v10907 = vpop.f32.mrf.mxu0
    %v10908 = vadd.f32 %v10795, %v10907
    %v10909 = vpop.f32.mrf.mxu0
    %v10910 = vadd.f32 %v10797, %v10909
    %v10911 = vpop.f32.mrf.mxu0
    %v10912 = vadd.f32 %v10799, %v10911
    %v10913 = vpop.f32.mrf.mxu0
    %v10914 = vadd.f32 %v10801, %v10913
    %10915 = vmatprep.mubr.bf16.mxu0 %v8395
    %10916 = vmatmul.mubr.bf16.gmra.mxu0 %v8394
    %v10917 = vpop.f32.mrf.mxu0
    %v10918 = vadd.f32 %v10805, %v10917
    %v10919 = vpop.f32.mrf.mxu0
    %v10920 = vadd.f32 %v10807, %v10919
    %v10921 = vpop.f32.mrf.mxu0
    %v10922 = vadd.f32 %v10809, %v10921
    %v10923 = vpop.f32.mrf.mxu0
    %v10924 = vadd.f32 %v10811, %v10923
    %10925 = vmatprep.mubr.bf16.mxu0 %v8413
    %10926 = vmatmul.mubr.bf16.gmra.mxu0 %v8412
    %v10927 = vpop.f32.mrf.mxu0
    %v10928 = vadd.f32 %v10815, %v10927
    %v10929 = vpop.f32.mrf.mxu0
    %v10930 = vadd.f32 %v10817, %v10929
    %v10931 = vpop.f32.mrf.mxu0
    %v10932 = vadd.f32 %v10819, %v10931
    %v10933 = vpop.f32.mrf.mxu0
    %v10934 = vadd.f32 %v10821, %v10933
    %10935 = vmatprep.mubr.bf16.mxu0 %v8431
    %10936 = vmatmul.mubr.bf16.gmra.mxu0 %v8430
    %v10937 = vpop.f32.mrf.mxu0
    %v10938 = vadd.f32 %v10825, %v10937
    %v10939 = vpop.f32.mrf.mxu0
    %v10940 = vadd.f32 %v10827, %v10939
    %v10941 = vpop.f32.mrf.mxu0
    %v10942 = vadd.f32 %v10829, %v10941
    %v10943 = vpop.f32.mrf.mxu0
    %v10944 = vadd.f32 %v10831, %v10943
    %10945 = vmatprep.mubr.bf16.mxu0 %v8449
    %10946 = vmatmul.mubr.bf16.gmra.mxu0 %v8448
    %v10947 = vpop.f32.mrf.mxu0
    %v10948 = vadd.f32 %v10835, %v10947
    %v10949 = vpop.f32.mrf.mxu0
    %v10950 = vadd.f32 %v10837, %v10949
    %v10951 = vpop.f32.mrf.mxu0
    %v10952 = vadd.f32 %v10839, %v10951
    %v10953 = vpop.f32.mrf.mxu0
    %v10954 = vadd.f32 %v10841, %v10953
    %10955 = vmatprep.mubr.bf16.mxu0 %v8467
    %10956 = vmatmul.mubr.bf16.gmra.mxu0 %v8466
    %v10957 = vpop.f32.mrf.mxu0
    %v10958 = vadd.f32 %v10845, %v10957
    %v10959 = vpop.f32.mrf.mxu0
    %v10960 = vadd.f32 %v10847, %v10959
    %v10961 = vpop.f32.mrf.mxu0
    %v10962 = vadd.f32 %v10849, %v10961
    %v10963 = vpop.f32.mrf.mxu0
    %v10964 = vadd.f32 %v10851, %v10963
    %10965 = vmatprep.mubr.bf16.mxu0 %v8485
    %10966 = vmatmul.mubr.bf16.gmra.mxu0 %v8484
    %v10967 = vpop.f32.mrf.mxu0
    %v10968 = vadd.f32 %v10855, %v10967
    %v10969 = vpop.f32.mrf.mxu0
    %v10970 = vadd.f32 %v10857, %v10969
    %v10971 = vpop.f32.mrf.mxu0
    %v10972 = vadd.f32 %v10859, %v10971
    %v10973 = vpop.f32.mrf.mxu0
    %v10974 = vadd.f32 %v10861, %v10973
    %10975 = vdwg.mxu0
    %10976 = vmatprep.subr.bf16.mxu0 %v9767
    %10977 = vmatpush1.bf16.msra.mxu0 %v9766
    %10978 = vmatprep.subr.bf16.mxu0 %v9765
    %10979 = vmatpush1.bf16.msra.mxu0 %v9764
    %10980 = vmatprep.subr.bf16.mxu0 %v9763
    %10981 = vmatpush1.bf16.msra.mxu0 %v9762
    %10982 = vmatprep.subr.bf16.mxu0 %v9761
    %10983 = vmatpush1.bf16.msra.mxu0 %v9760
    %10984 = vmatprep.subr.bf16.mxu0 %v9759
    %10985 = vmatpush1.bf16.msra.mxu0 %v9758
    %10986 = vmatprep.subr.bf16.mxu0 %v9757
    %10987 = vmatpush1.bf16.msra.mxu0 %v9756
    %10988 = vmatprep.subr.bf16.mxu0 %v9755
    %10989 = vmatpush1.bf16.msra.mxu0 %v9754
    %10990 = vmatprep.subr.bf16.mxu0 %v9753
    %10991 = vmatpush1.bf16.msra.mxu0 %v9752
    %10992 = vmatprep.subr.bf16.mxu0 %v9783
    %10993 = vmatpush2.bf16.msra.mxu0 %v9782
    %10994 = vmatprep.subr.bf16.mxu0 %v9781
    %10995 = vmatpush2.bf16.msra.mxu0 %v9780
    %10996 = vmatprep.subr.bf16.mxu0 %v9779
    %10997 = vmatpush2.bf16.msra.mxu0 %v9778
    %10998 = vmatprep.subr.bf16.mxu0 %v9777
    %10999 = vmatpush2.bf16.msra.mxu0 %v9776
    %11000 = vmatprep.subr.bf16.mxu0 %v9775
    %11001 = vmatpush2.bf16.msra.mxu0 %v9774
    %11002 = vmatprep.subr.bf16.mxu0 %v9773
    %11003 = vmatpush2.bf16.msra.mxu0 %v9772
    %11004 = vmatprep.subr.bf16.mxu0 %v9771
    %11005 = vmatpush2.bf16.msra.mxu0 %v9770
    %11006 = vmatprep.subr.bf16.mxu0 %v9769
    %11007 = vmatpush2.bf16.msra.mxu0 %v9768
    %11008 = vmatprep.mubr.bf16.mxu0 %v8361
    %11009 = vmatmul.mubr.bf16.gmra.mxu0 %v8360
    %v11010 = vpop.f32.mrf.mxu0
    %v11011 = vadd.f32 %v10898, %v11010
    %v11012 = vpop.f32.mrf.mxu0
    %v11013 = vadd.f32 %v10900, %v11012
    %v11014 = vpop.f32.mrf.mxu0
    %v11015 = vadd.f32 %v10902, %v11014
    %v11016 = vpop.f32.mrf.mxu0
    %v11017 = vadd.f32 %v10904, %v11016
    %11018 = vmatprep.mubr.bf16.mxu0 %v8379
    %11019 = vmatmul.mubr.bf16.gmra.mxu0 %v8378
    %v11020 = vpop.f32.mrf.mxu0
    %v11021 = vadd.f32 %v10908, %v11020
    %v11022 = vpop.f32.mrf.mxu0
    %v11023 = vadd.f32 %v10910, %v11022
    %v11024 = vpop.f32.mrf.mxu0
    %v11025 = vadd.f32 %v10912, %v11024
    %v11026 = vpop.f32.mrf.mxu0
    %v11027 = vadd.f32 %v10914, %v11026
    %11028 = vmatprep.mubr.bf16.mxu0 %v8397
    %11029 = vmatmul.mubr.bf16.gmra.mxu0 %v8396
    %v11030 = vpop.f32.mrf.mxu0
    %v11031 = vadd.f32 %v10918, %v11030
    %v11032 = vpop.f32.mrf.mxu0
    %v11033 = vadd.f32 %v10920, %v11032
    %v11034 = vpop.f32.mrf.mxu0
    %v11035 = vadd.f32 %v10922, %v11034
    %v11036 = vpop.f32.mrf.mxu0
    %v11037 = vadd.f32 %v10924, %v11036
    %11038 = vmatprep.mubr.bf16.mxu0 %v8415
    %11039 = vmatmul.mubr.bf16.gmra.mxu0 %v8414
    %v11040 = vpop.f32.mrf.mxu0
    %v11041 = vadd.f32 %v10928, %v11040
    %v11042 = vpop.f32.mrf.mxu0
    %v11043 = vadd.f32 %v10930, %v11042
    %v11044 = vpop.f32.mrf.mxu0
    %v11045 = vadd.f32 %v10932, %v11044
    %v11046 = vpop.f32.mrf.mxu0
    %v11047 = vadd.f32 %v10934, %v11046
    %11048 = vmatprep.mubr.bf16.mxu0 %v8433
    %11049 = vmatmul.mubr.bf16.gmra.mxu0 %v8432
    %v11050 = vpop.f32.mrf.mxu0
    %v11051 = vadd.f32 %v10938, %v11050
    %v11052 = vpop.f32.mrf.mxu0
    %v11053 = vadd.f32 %v10940, %v11052
    %v11054 = vpop.f32.mrf.mxu0
    %v11055 = vadd.f32 %v10942, %v11054
    %v11056 = vpop.f32.mrf.mxu0
    %v11057 = vadd.f32 %v10944, %v11056
    %11058 = vmatprep.mubr.bf16.mxu0 %v8451
    %11059 = vmatmul.mubr.bf16.gmra.mxu0 %v8450
    %v11060 = vpop.f32.mrf.mxu0
    %v11061 = vadd.f32 %v10948, %v11060
    %v11062 = vpop.f32.mrf.mxu0
    %v11063 = vadd.f32 %v10950, %v11062
    %v11064 = vpop.f32.mrf.mxu0
    %v11065 = vadd.f32 %v10952, %v11064
    %v11066 = vpop.f32.mrf.mxu0
    %v11067 = vadd.f32 %v10954, %v11066
    %11068 = vmatprep.mubr.bf16.mxu0 %v8469
    %11069 = vmatmul.mubr.bf16.gmra.mxu0 %v8468
    %v11070 = vpop.f32.mrf.mxu0
    %v11071 = vadd.f32 %v10958, %v11070
    %v11072 = vpop.f32.mrf.mxu0
    %v11073 = vadd.f32 %v10960, %v11072
    %v11074 = vpop.f32.mrf.mxu0
    %v11075 = vadd.f32 %v10962, %v11074
    %v11076 = vpop.f32.mrf.mxu0
    %v11077 = vadd.f32 %v10964, %v11076
    %11078 = vmatprep.mubr.bf16.mxu0 %v8487
    %11079 = vmatmul.mubr.bf16.gmra.mxu0 %v8486
    %v11080 = vpop.f32.mrf.mxu0
    %v11081 = vadd.f32 %v10968, %v11080
    %v11082 = vpop.f32.mrf.mxu0
    %v11083 = vadd.f32 %v10970, %v11082
    %v11084 = vpop.f32.mrf.mxu0
    %v11085 = vadd.f32 %v10972, %v11084
    %v11086 = vpop.f32.mrf.mxu0
    %v11087 = vadd.f32 %v10974, %v11086
    %11088 = vdwg.mxu0
    %v11089 = vmax.f32 %v11011, 0.0
    %v11090 = vmax.f32 %v11013, 0.0
    %v11091 = vmax.f32 %v11015, 0.0
    %v11092 = vmax.f32 %v11017, 0.0
    %v11093 = vmax.f32 %v11021, 0.0
    %v11094 = vmax.f32 %v11023, 0.0
    %v11095 = vmax.f32 %v11025, 0.0
    %v11096 = vmax.f32 %v11027, 0.0
    %v11097 = vmax.f32 %v11031, 0.0
    %v11098 = vmax.f32 %v11033, 0.0
    %v11099 = vmax.f32 %v11035, 0.0
    %v11100 = vmax.f32 %v11037, 0.0
    %v11101 = vmax.f32 %v11041, 0.0
    %v11102 = vmax.f32 %v11043, 0.0
    %v11103 = vmax.f32 %v11045, 0.0
    %v11104 = vmax.f32 %v11047, 0.0
    %v11105 = vmax.f32 %v11051, 0.0
    %v11106 = vmax.f32 %v11053, 0.0
    %v11107 = vmax.f32 %v11055, 0.0
    %v11108 = vmax.f32 %v11057, 0.0
    %v11109 = vmax.f32 %v11061, 0.0
    %v11110 = vmax.f32 %v11063, 0.0
    %v11111 = vmax.f32 %v11065, 0.0
    %v11112 = vmax.f32 %v11067, 0.0
    %v11113 = vmax.f32 %v11071, 0.0
    %v11114 = vmax.f32 %v11073, 0.0
    %v11115 = vmax.f32 %v11075, 0.0
    %v11116 = vmax.f32 %v11077, 0.0
    %v11117 = vmax.f32 %v11081, 0.0
    %v11118 = vmax.f32 %v11083, 0.0
    %v11119 = vmax.f32 %v11085, 0.0
    %v11120 = vmax.f32 %v11087, 0.0
    %v11121 = vadd.f32 %v11089, %v11091
    %v11122 = vadd.f32 %v11121, %v11093
    %v11123 = vadd.f32 %v11122, %v11095
    %v11124 = vadd.f32 %v11123, %v11097
    %v11125 = vadd.f32 %v11124, %v11099
    %v11126 = vadd.f32 %v11125, %v11101
    %v11127 = vadd.f32 %v11126, %v11103
    %v11128 = vrot.slane %v11127, 4
    %v11129 = vadd.f32 %v11127, %v11128
    %v11130 = vrot.slane %v11129, 2
    %v11131 = vadd.f32 %v11129, %v11130
    %v11132 = vrot.slane %v11131, 1
    %v11133 = vadd.f32 %v11131, %v11132
    %v11134 = vadd.f32 %v11090, %v11092
    %v11135 = vadd.f32 %v11134, %v11094
    %v11136 = vadd.f32 %v11135, %v11096
    %v11137 = vadd.f32 %v11136, %v11098
    %v11138 = vadd.f32 %v11137, %v11100
    %v11139 = vadd.f32 %v11138, %v11102
    %v11140 = vadd.f32 %v11139, %v11104
    %v11141 = vrot.slane %v11140, 4
    %v11142 = vadd.f32 %v11140, %v11141
    %v11143 = vrot.slane %v11142, 2
    %v11144 = vadd.f32 %v11142, %v11143
    %v11145 = vrot.slane %v11144, 1
    %v11146 = vadd.f32 %v11144, %v11145
    %v11147 = vadd.f32 %v11105, %v11107
    %v11148 = vadd.f32 %v11147, %v11109
    %v11149 = vadd.f32 %v11148, %v11111
    %v11150 = vadd.f32 %v11149, %v11113
    %v11151 = vadd.f32 %v11150, %v11115
    %v11152 = vadd.f32 %v11151, %v11117
    %v11153 = vadd.f32 %v11152, %v11119
    %v11154 = vrot.slane %v11153, 4
    %v11155 = vadd.f32 %v11153, %v11154
    %v11156 = vrot.slane %v11155, 2
    %v11157 = vadd.f32 %v11155, %v11156
    %v11158 = vrot.slane %v11157, 1
    %v11159 = vadd.f32 %v11157, %v11158
    %v11160 = vadd.f32 %v11106, %v11108
    %v11161 = vadd.f32 %v11160, %v11110
    %v11162 = vadd.f32 %v11161, %v11112
    %v11163 = vadd.f32 %v11162, %v11114
    %v11164 = vadd.f32 %v11163, %v11116
    %v11165 = vadd.f32 %v11164, %v11118
    %v11166 = vadd.f32 %v11165, %v11120
    %v11167 = vrot.slane %v11166, 4
    %v11168 = vadd.f32 %v11166, %v11167
    %v11169 = vrot.slane %v11168, 2
    %v11170 = vadd.f32 %v11168, %v11169
    %v11171 = vrot.slane %v11170, 1
    %v11172 = vadd.f32 %v11170, %v11171
    %v11173 = vrcp.pop 64.0
    %v11174 = vmul.f32 %v11133, %v11173
    %v11175 = vmul.f32 %v11146, %v11173
    %v11176 = vmul.f32 %v11159, %v11173
    %v11177 = vmul.f32 %v11172, %v11173
    %v11178 = vpack.c.bf16 %v11174, %v11174
    %v11179 = vpack.c.bf16 %v11175, %v11175
    %v11180 = vpack.c.bf16 %v11176, %v11176
    %v11181 = vpack.c.bf16 %v11177, %v11177
    %v11182 = vld [vmem:[%s7] sm:$0xf]
    %v11183 = vld [vmem:[%s7 + $0x4] sm:$0xf]
    %v11184 = vld [vmem:[%s7 + $0x8] sm:$0xf]
    %v11185 = vld [vmem:[%s7 + $0xc] sm:$0xf]
    %v11186 = vld [vmem:[%s7 + $0x10] sm:$0xf]
    %v11187 = vld [vmem:[%s7 + $0x14] sm:$0xf]
    %v11188 = vld [vmem:[%s7 + $0x18] sm:$0xf]
    %v11189 = vld [vmem:[%s7 + $0x1c] sm:$0xf]
    %v11190 = vld [vmem:[%s7 + $0x20] sm:$0xf]
    %v11191 = vld [vmem:[%s7 + $0x24] sm:$0xf]
    %v11192 = vld [vmem:[%s7 + $0x28] sm:$0xf]
    %v11193 = vld [vmem:[%s7 + $0x2c] sm:$0xf]
    %v11194 = vld [vmem:[%s7 + $0x30] sm:$0xf]
    %v11195 = vld [vmem:[%s7 + $0x34] sm:$0xf]
    %v11196 = vld [vmem:[%s7 + $0x38] sm:$0xf]
    %v11197 = vld [vmem:[%s7 + $0x3c] sm:$0xf]
    %v11198 = vld [vmem:[%s7 + $0x40] sm:$0xf]
    %v11199 = vld [vmem:[%s7 + $0x44] sm:$0xf]
    %v11200 = vld [vmem:[%s7 + $0x48] sm:$0xf]
    %v11201 = vld [vmem:[%s7 + $0x4c] sm:$0xf]
    %v11202 = vld [vmem:[%s7 + $0x50] sm:$0xf]
    %v11203 = vld [vmem:[%s7 + $0x54] sm:$0xf]
    %v11204 = vld [vmem:[%s7 + $0x58] sm:$0xf]
    %v11205 = vld [vmem:[%s7 + $0x5c] sm:$0xf]
    %v11206 = vld [vmem:[%s7 + $0x60] sm:$0xf]
    %v11207 = vld [vmem:[%s7 + $0x64] sm:$0xf]
    %v11208 = vld [vmem:[%s7 + $0x68] sm:$0xf]
    %v11209 = vld [vmem:[%s7 + $0x6c] sm:$0xf]
    %v11210 = vld [vmem:[%s7 + $0x70] sm:$0xf]
    %v11211 = vld [vmem:[%s7 + $0x74] sm:$0xf]
    %v11212 = vld [vmem:[%s7 + $0x78] sm:$0xf]
    %v11213 = vld [vmem:[%s7 + $0x7c] sm:$0xf]
    %v11214 = vld [vmem:[#allocation16] sm:$0x1]
    %v11216 = vlaneseq
    %v11217 = vshrl.u32 %v11216, 7
    %v11218 = vsub.s32 0, %v11217
    %v11219 = vrot.slane %v11214, %v11218
    %v11225 = vunpack.c.l.b16 %v11178
    %v11226 = vunpack.c.l.b16 %v11179
    %v11227 = vunpack.c.l.b16 %v11180
    %v11228 = vunpack.c.l.b16 %v11181
    %vm11229 = vcmask 1041409
    %v11230 = vsel %vm11229, %v11227, %v11225
    %v11231 = vsel %vm11229, %v11228, %v11226
    %v11232 = vpack.c.b16 %v11230, %v11230
    %v11233 = vpack.c.b16 %v11231, %v11231
    %v11268 = vunpack.c.l.b16 %v11182
    %v11269 = vunpack.c.l.b16 %v11183
    %v11270 = vunpack.c.l.b16 %v11184
    %v11271 = vunpack.c.l.b16 %v11185
    %v11272 = vunpack.c.l.b16 %v11186
    %v11273 = vunpack.c.l.b16 %v11187
    %v11274 = vunpack.c.l.b16 %v11188
    %v11275 = vunpack.c.l.b16 %v11189
    %v11276 = vunpack.c.l.b16 %v11190
    %v11277 = vunpack.c.l.b16 %v11191
    %v11278 = vunpack.c.l.b16 %v11192
    %v11279 = vunpack.c.l.b16 %v11193
    %v11280 = vunpack.c.l.b16 %v11194
    %v11281 = vunpack.c.l.b16 %v11195
    %v11282 = vunpack.c.l.b16 %v11196
    %v11283 = vunpack.c.l.b16 %v11197
    %v11284 = vunpack.c.l.b16 %v11198
    %v11285 = vunpack.c.l.b16 %v11199
    %v11286 = vunpack.c.l.b16 %v11200
    %v11287 = vunpack.c.l.b16 %v11201
    %v11288 = vunpack.c.l.b16 %v11202
    %v11289 = vunpack.c.l.b16 %v11203
    %v11290 = vunpack.c.l.b16 %v11204
    %v11291 = vunpack.c.l.b16 %v11205
    %v11292 = vunpack.c.l.b16 %v11206
    %v11293 = vunpack.c.l.b16 %v11207
    %v11294 = vunpack.c.l.b16 %v11208
    %v11295 = vunpack.c.l.b16 %v11209
    %v11296 = vunpack.c.l.b16 %v11210
    %v11297 = vunpack.c.l.b16 %v11211
    %v11298 = vunpack.c.l.b16 %v11212
    %v11299 = vunpack.c.l.b16 %v11213
    %v11300 = vpack.c.b16 %v11269, %v11268
    %v11301 = vpack.c.b16 %v11271, %v11270
    %v11302 = vpack.c.b16 %v11273, %v11272
    %v11303 = vpack.c.b16 %v11275, %v11274
    %v11304 = vpack.c.b16 %v11277, %v11276
    %v11305 = vpack.c.b16 %v11279, %v11278
    %v11306 = vpack.c.b16 %v11281, %v11280
    %v11307 = vpack.c.b16 %v11283, %v11282
    %v11308 = vpack.c.b16 %v11285, %v11284
    %v11309 = vpack.c.b16 %v11287, %v11286
    %v11310 = vpack.c.b16 %v11289, %v11288
    %v11311 = vpack.c.b16 %v11291, %v11290
    %v11312 = vpack.c.b16 %v11293, %v11292
    %v11313 = vpack.c.b16 %v11295, %v11294
    %v11314 = vpack.c.b16 %v11297, %v11296
    %v11315 = vpack.c.b16 %v11299, %v11298
    %11332 = vmatprep.subr.bf16.mxu0 0
    %11333 = vmatpush1.bf16.msra.mxu0 %v11307
    %11334 = vmatprep.subr.bf16.mxu0 0
    %11335 = vmatpush1.bf16.msra.mxu0 %v11306
    %11336 = vmatprep.subr.bf16.mxu0 0
    %11337 = vmatpush1.bf16.msra.mxu0 %v11305
    %11338 = vmatprep.subr.bf16.mxu0 0
    %11339 = vmatpush1.bf16.msra.mxu0 %v11304
    %11340 = vmatprep.subr.bf16.mxu0 0
    %11341 = vmatpush1.bf16.msra.mxu0 %v11303
    %11342 = vmatprep.subr.bf16.mxu0 0
    %11343 = vmatpush1.bf16.msra.mxu0 %v11302
    %11344 = vmatprep.subr.bf16.mxu0 0
    %11345 = vmatpush1.bf16.msra.mxu0 %v11301
    %11346 = vmatprep.subr.bf16.mxu0 0
    %11347 = vmatpush1.bf16.msra.mxu0 %v11300
    %11348 = vmatprep.subr.bf16.mxu0 0
    %11349 = vmatpush2.bf16.msra.mxu0 %v11315
    %11350 = vmatprep.subr.bf16.mxu0 0
    %11351 = vmatpush2.bf16.msra.mxu0 %v11314
    %11352 = vmatprep.subr.bf16.mxu0 0
    %11353 = vmatpush2.bf16.msra.mxu0 %v11313
    %11354 = vmatprep.subr.bf16.mxu0 0
    %11355 = vmatpush2.bf16.msra.mxu0 %v11312
    %11356 = vmatprep.subr.bf16.mxu0 0
    %11357 = vmatpush2.bf16.msra.mxu0 %v11311
    %11358 = vmatprep.subr.bf16.mxu0 0
    %11359 = vmatpush2.bf16.msra.mxu0 %v11310
    %11360 = vmatprep.subr.bf16.mxu0 0
    %11361 = vmatpush2.bf16.msra.mxu0 %v11309
    %11362 = vmatprep.subr.bf16.mxu0 0
    %11363 = vmatpush2.bf16.msra.mxu0 %v11308
    %11364 = vmatprep.mubr.bf16.mxu0 %v11233
    %11365 = vmatmul.mubr.bf16.gmra.mxu0 %v11232
    %v11366 = vpop.f32.mrf.mxu0
    %v11367 = vadd.f32 %v11219, %v11366
    %v11368 = vpop.f32.mrf.mxu0
    %v11369 = vpop.f32.mrf.mxu0
    %v11370 = vpop.f32.mrf.mxu0
    %11371 = vdwg.mxu0
    %v11372 = vmul.f32 %v11367, 0.01
    %vm11373 = vcmask 41984
    %11374 = vst.msk [vmem:[#allocation18] sm:$0x3] %vm11373, %v11372
    // Predicated region
    $region70: #{tpu_custom_call.1} parent=1 // pred_check
      _
    $region71: #{tpu_custom_call.1} parent=1 // pred_check_branch
      %11376 = sbr.rel (0) target = $region73
    $region72: #{tpu_custom_call.1} parent=1 // pred_region
      %s11378 = ssub.s32 32, 32
      %11379 = vsyncadd [#allocation6], %s11378
      %s11381 = sshll.u32 [#allocation18], 4
      %s11382 = int_to_ptr.vmem [resolvable:$true] %s11381
      %11384 = dma.vmem_to_hbm [thread:$0]  %s11382, 32, %s9, [#allocation6]
    $region73: #{tpu_custom_call.1} parent=1 // pred_fallthru
      _
    // Predicated region
    $region74: #{tpu_custom_call.1} parent=1 // pred_check
      _
    $region75: #{tpu_custom_call.1} parent=1 // pred_check_branch
      %11386 = sbr.rel (0) target = $region77
    $region76: #{tpu_custom_call.1} parent=1 // pred_region
      %11387 = dma.done [#allocation6], 32
    $region77: #{tpu_custom_call.1} parent=1 // pred_fallthru
      _
    %11388 = vsyncpa [#allocation5], 1
    %11389 = vsyncpa [#allocation8], 1
    %11390 = vsyncpa [#allocation11], 1
    %11391 = vsyncpa [#allocation14], 1
    %11392 = vsyncpa [#allocation17], 1
    %11393 = vsyncpa [#allocation6], 1

</llo_original>
